<compile_context>
chip_gen: v6e
topology: v6e:2x2x1
jax: 0.10.0
libtpu: 0.0.40
codegen_flags: <defaults>
</compile_context>

<pallas_src>
import functools

import jax
import jax.numpy as jnp
import numpy as np
from jax import lax
from jax.experimental import pallas as pl
from jax.experimental.pallas import tpu as pltpu

HEAD_NAMES = ("xyz", "rot", "color", "scale", "opacity")
HEAD_DIMS = (3, 4, 3, 3, 1)
HEAD_OFFS = (0, 3, 7, 10, 13)

D_GS = 14                      # xyz(3)+rot(4)+color(3)+scale(3)+opacity(1)
D_IMG = 291                    # image-feature dim (input_dim = 14 + 291 = 305)
D_FEAT = D_GS + D_IMG          # 305
D_ENC = 64                     # feat_encoder output dim
HID1, HID2 = 128, 64           # GaussianParamPredictor hidden dims

# lane-dense padded dims (all minor dims are multiples of 128)
D_FEAT_P = 384                 # 305 -> 384
D_ENC_P = 128                  # 64  -> 128
H1_ALL = 5 * HID1              # 640
H2_ALL_P = 384                 # 5*64 = 320 -> 384
D_OUT_P = 128                  # 14  -> 128


# ------------------------------- kernel body --------------------------------


def _fused_update_kernel(feat_ref, we_ref, be_ref, w1e_ref, w1f_ref, b1_ref,
                         w2_ref, b2_ref, w3_ref, b3_ref, out_ref, *, tile_n):
    x = feat_ref[...]                                         # (tile_n, 384)

    # --- stand-in point-feature encoder (see TODO(synk) above) --------------
    e = jnp.dot(x, we_ref[...], preferred_element_type=jnp.float32) + be_ref[...]
    e = jnp.maximum(e, 0.0)                                   # (tile_n, 128)

    # --- 5 heads packed into 3 big matmuls (first layer split over [e|feat]) -
    h1 = (jnp.dot(e, w1e_ref[...], preferred_element_type=jnp.float32)
          + jnp.dot(x, w1f_ref[...], preferred_element_type=jnp.float32)
          + b1_ref[...])
    h1 = jnp.maximum(h1, 0.0)                                 # (tile_n, 640)
    h2 = jnp.maximum(
        jnp.dot(h1, w2_ref[...], preferred_element_type=jnp.float32) + b2_ref[...],
        0.0)                                                  # (tile_n, 384)
    d = jnp.dot(h2, w3_ref[...], preferred_element_type=jnp.float32) + b3_ref[...]

    # head output activations (columns: xyz 0:3, rot 3:7, color 7:10,
    # scale 10:13, opacity 13:14)
    d_xyz = jnp.tanh(d[:, 0:3]) * 0.1                         # Tanh then /10
    d_rot = d[:, 3:7]
    d_col = 1.0 / (1.0 + jnp.exp(-d[:, 7:10]))                # Sigmoid
    d_scl = d[:, 10:13]
    d_opa = d[:, 13:14]

    # original gaussian params are the first 14 feature columns
    xyz0 = x[:, 0:3]
    rot0 = x[:, 3:7]
    col0 = x[:, 7:10]
    scl0 = x[:, 10:13]
    opa0 = x[:, 13:14]

    # rot update: normalize delta quaternion, then q_new = q0 * dq (Hamilton)
    dnorm = jnp.sqrt(jnp.sum(d_rot * d_rot, axis=-1, keepdims=True))
    d_rot = d_rot / (dnorm + 1e-8)
    aw, ax, ay, az = rot0[:, 0:1], rot0[:, 1:2], rot0[:, 2:3], rot0[:, 3:4]
    bw, bx, by, bz = d_rot[:, 0:1], d_rot[:, 1:2], d_rot[:, 2:3], d_rot[:, 3:4]
    rw = aw * bw - ax * bx - ay * by - az * bz
    rx = aw * bx + ax * bw + ay * bz - az * by
    ry = aw * by - ax * bz + ay * bw + az * bx
    rz = aw * bz + ax * by - ay * bx + az * bw

    pad = jnp.zeros((tile_n, D_OUT_P - D_GS), jnp.float32)
    out_ref[...] = jnp.concatenate(
        [xyz0 + d_xyz, rw, rx, ry, rz, col0 + d_col, scl0 + d_scl,
         opa0 + d_opa, pad], axis=-1)                         # (tile_n, 128)


# --------------------------- weight packing (host) ---------------------------


def pack_params(enc_w, enc_b, heads):
    """Pack PyTorch-layout (out,in) weights into lane-dense block matrices."""
    w1_all = jnp.zeros((D_ENC + D_FEAT, H1_ALL), jnp.float32)
    b1_all = jnp.zeros((1, H1_ALL), jnp.float32)
    w2_blk = jnp.zeros((H1_ALL, H2_ALL_P), jnp.float32)
    b2_all = jnp.zeros((1, H2_ALL_P), jnp.float32)
    w3_blk = jnp.zeros((H2_ALL_P, D_OUT_P), jnp.float32)
    b3_all = jnp.zeros((1, D_OUT_P), jnp.float32)
    for i, h in enumerate(heads):
        c1 = slice(i * HID1, (i + 1) * HID1)
        c2 = slice(i * HID2, (i + 1) * HID2)
        c3 = slice(HEAD_OFFS[i], HEAD_OFFS[i] + HEAD_DIMS[i])
        w1_all = w1_all.at[:, c1].set(h["w1"].T)
        b1_all = b1_all.at[0, c1].set(h["b1"])
        w2_blk = w2_blk.at[c1, c2].set(h["w2"].T)
        b2_all = b2_all.at[0, c2].set(h["b2"])
        w3_blk = w3_blk.at[c2, c3].set(h["w3"].T)
        b3_all = b3_all.at[0, c3].set(h["b3"])
    w1e = jnp.zeros((D_ENC_P, H1_ALL), jnp.float32).at[:D_ENC].set(w1_all[:D_ENC])
    w1f = jnp.zeros((D_FEAT_P, H1_ALL), jnp.float32).at[:D_FEAT].set(w1_all[D_ENC:])
    we_p = jnp.zeros((D_FEAT_P, D_ENC_P), jnp.float32).at[:D_FEAT, :D_ENC].set(enc_w)
    be_p = jnp.zeros((1, D_ENC_P), jnp.float32).at[0, :D_ENC].set(enc_b)
    return dict(we=we_p, be=be_p, w1e=w1e, w1f=w1f, b1=b1_all,
                w2=w2_blk, b2=b2_all, w3=w3_blk, b3=b3_all)


# ------------------------------ forward wrapper ------------------------------


def gaussian_updater_forward(gaussians, feats_image, packed, tile_n=256):
    # feature concat in the dict key order (xyz, rot, color, scale, opacity)
    n = gaussians["xyz"].shape[0]
    feat = jnp.concatenate(
        [gaussians["xyz"], gaussians["rot"],
         gaussians["color"].reshape(n, -1),
         gaussians["scale"], gaussians["opacity"], feats_image], axis=1)
    n_pad = pl.cdiv(n, tile_n) * tile_n
    feat_p = jnp.zeros((n_pad, D_FEAT_P), jnp.float32).at[:n, :D_FEAT].set(feat)

    kernel = functools.partial(_fused_update_kernel, tile_n=tile_n)
    const = lambda i: (0, 0)
    out = pl.pallas_call(
        kernel,
        out_shape=jax.ShapeDtypeStruct((n_pad, D_OUT_P), jnp.float32),
        grid=(n_pad // tile_n,),
        in_specs=[
            pl.BlockSpec((tile_n, D_FEAT_P), lambda i: (i, 0)),   # features
            pl.BlockSpec((D_FEAT_P, D_ENC_P), const),             # encoder W
            pl.BlockSpec((1, D_ENC_P), const),                    # encoder b
            pl.BlockSpec((D_ENC_P, H1_ALL), const),               # W1 (enc part)
            pl.BlockSpec((D_FEAT_P, H1_ALL), const),              # W1 (feat part)
            pl.BlockSpec((1, H1_ALL), const),                     # b1
            pl.BlockSpec((H1_ALL, H2_ALL_P), const),              # W2 block-diag
            pl.BlockSpec((1, H2_ALL_P), const),                   # b2
            pl.BlockSpec((H2_ALL_P, D_OUT_P), const),             # W3 block-diag
            pl.BlockSpec((1, D_OUT_P), const),                    # b3
        ],
        out_specs=pl.BlockSpec((tile_n, D_OUT_P), lambda i: (i, 0)),
        compiler_params=pltpu.CompilerParams(dimension_semantics=("parallel",)),
    )(feat_p, packed["we"], packed["be"], packed["w1e"], packed["w1f"],
      packed["b1"], packed["w2"], packed["b2"], packed["w3"], packed["b3"])

    out = out[:n]
    return {"xyz": out[:, 0:3], "rot": out[:, 3:7], "color": out[:, 7:10],
            "scale": out[:, 10:13], "opacity": out[:, 13:14]}


# ----------------------------- pure-JAX reference ----------------------------


def _quat_mul(a, b):
    aw, ax, ay, az = jnp.split(a, 4, axis=-1)
    bw, bx, by, bz = jnp.split(b, 4, axis=-1)
    return jnp.concatenate([
        aw * bw - ax * bx - ay * by - az * bz,
        aw * bx + ax * bw + ay * bz - az * by,
        aw * by - ax * bz + ay * bw + az * bx,
        aw * bz + ax * by - ay * bx + az * bw], axis=-1)


def _ref_forward(gaussians, feats_image, enc_w, enc_b, heads):
    dot = functools.partial(jnp.dot, precision=lax.Precision.HIGHEST)
    n = gaussians["xyz"].shape[0]
    feat = jnp.concatenate(
        [gaussians["xyz"], gaussians["rot"], gaussians["color"].reshape(n, -1),
         gaussians["scale"], gaussians["opacity"], feats_image], axis=1)
    e = jnp.maximum(dot(feat, enc_w) + enc_b, 0.0)   # stand-in feat_encoder
    x = jnp.concatenate([e, feat], axis=1)

    deltas = {}
    for name, h in zip(HEAD_NAMES, heads):
        h1 = jnp.maximum(dot(x, h["w1"].T) + h["b1"], 0.0)
        h2 = jnp.maximum(dot(h1, h["w2"].T) + h["b2"], 0.0)
        deltas[name] = dot(h2, h["w3"].T) + h["b3"]
    deltas["xyz"] = jnp.tanh(deltas["xyz"]) / 10.0
    deltas["color"] = jax.nn.sigmoid(deltas["color"])

    dq = deltas["rot"]
    dq = dq / (jnp.linalg.norm(dq, axis=-1, keepdims=True) + 1e-8)
    return {
        "xyz": gaussians["xyz"] + deltas["xyz"],
        "rot": _quat_mul(gaussians["rot"], dq),
        "color": gaussians["color"] + deltas["color"],
        "scale": gaussians["scale"] + deltas["scale"],
        "opacity": gaussians["opacity"] + deltas["opacity"],
    }


# ----------------------------------- main ------------------------------------

if __name__ == "__main__":
    N = 512                                   # number of gaussians
    key = jax.random.PRNGKey(0)
    ks = jax.random.split(key, 16)

    xyz = jax.random.normal(ks[0], (N, 3), jnp.float32)
    rot = jax.random.normal(ks[1], (N, 4), jnp.float32)
    rot = rot / jnp.linalg.norm(rot, axis=-1, keepdims=True)
    color = jax.random.uniform(ks[2], (N, 3), dtype=jnp.float32)
    scale = 0.1 * jax.random.normal(ks[3], (N, 3), jnp.float32)
    opacity = jax.random.uniform(ks[4], (N, 1), dtype=jnp.float32)
    gaussians = {"xyz": xyz, "rot": rot, "color": color,
                 "scale": scale, "opacity": opacity}
    feats_image = jax.random.normal(ks[5], (N, D_IMG), jnp.float32)

    # stand-in encoder params + PyTorch-layout (out,in) head params
    enc_w = 0.05 * jax.random.normal(ks[6], (D_FEAT, D_ENC), jnp.float32)
    enc_b = 0.05 * jax.random.normal(ks[7], (D_ENC,), jnp.float32)
    heads = []
    for i, out_dim in enumerate(HEAD_DIMS):
        k1, k2, k3, k4, k5, k6 = jax.random.split(ks[8 + i], 6)
        heads.append({
            "w1": 0.08 * jax.random.normal(k1, (HID1, D_ENC + D_FEAT), jnp.float32),
            "b1": 0.05 * jax.random.normal(k2, (HID1,), jnp.float32),
            "w2": 0.10 * jax.random.normal(k3, (HID2, HID1), jnp.float32),
            "b2": 0.05 * jax.random.normal(k4, (HID2,), jnp.float32),
            "w3": 0.10 * jax.random.normal(k5, (out_dim, HID2), jnp.float32),
            "b3": 0.05 * jax.random.normal(k6, (out_dim,), jnp.float32),
        })

    packed = pack_params(enc_w, enc_b, heads)
    out = jax.block_until_ready(gaussian_updater_forward(gaussians, feats_image,
                                                         packed))

    ref = _ref_forward(gaussians, feats_image, enc_w, enc_b, heads)
    for k in HEAD_NAMES:
        np.testing.assert_allclose(np.asarray(out[k]), np.asarray(ref[k]),
                                   rtol=2e-3, atol=2e-3)
    print("KERNEL_OK")
</pallas_src>

<mosaic_0001>
module attributes {stable_mosaic.version = 11 : i64} {
  func.func @_fused_update_kernel(%arg0: i32, %arg1: memref<256x384xf32, #tpu.memory_space<vmem>>, %arg2: memref<384x128xf32, #tpu.memory_space<vmem>>, %arg3: memref<1x128xf32, #tpu.memory_space<vmem>>, %arg4: memref<128x640xf32, #tpu.memory_space<vmem>>, %arg5: memref<384x640xf32, #tpu.memory_space<vmem>>, %arg6: memref<1x640xf32, #tpu.memory_space<vmem>>, %arg7: memref<640x384xf32, #tpu.memory_space<vmem>>, %arg8: memref<1x384xf32, #tpu.memory_space<vmem>>, %arg9: memref<384x128xf32, #tpu.memory_space<vmem>>, %arg10: memref<1x128xf32, #tpu.memory_space<vmem>>, %arg11: memref<256x128xf32, #tpu.memory_space<vmem>>) attributes {dimension_semantics = [#tpu.dimension_semantics<parallel>], iteration_bounds = array<i64: 2>, scalar_prefetch = 0 : i64, scratch_operands = 0 : i64, tpu.core_type = #tpu.core_type<tc>, window_params = [{transform_indices = @transform_0, window_bounds = array<i64: 256, 384>}, {pipeline_mode = #tpu.pipeline_mode<synchronous>, transform_indices = @transform_1, window_bounds = array<i64: 384, 128>}, {pipeline_mode = #tpu.pipeline_mode<synchronous>, transform_indices = @transform_2, window_bounds = array<i64: 1, 128>}, {pipeline_mode = #tpu.pipeline_mode<synchronous>, transform_indices = @transform_3, window_bounds = array<i64: 128, 640>}, {pipeline_mode = #tpu.pipeline_mode<synchronous>, transform_indices = @transform_4, window_bounds = array<i64: 384, 640>}, {pipeline_mode = #tpu.pipeline_mode<synchronous>, transform_indices = @transform_5, window_bounds = array<i64: 1, 640>}, {pipeline_mode = #tpu.pipeline_mode<synchronous>, transform_indices = @transform_6, window_bounds = array<i64: 640, 384>}, {pipeline_mode = #tpu.pipeline_mode<synchronous>, transform_indices = @transform_7, window_bounds = array<i64: 1, 384>}, {pipeline_mode = #tpu.pipeline_mode<synchronous>, transform_indices = @transform_8, window_bounds = array<i64: 384, 128>}, {pipeline_mode = #tpu.pipeline_mode<synchronous>, transform_indices = @transform_9, window_bounds = array<i64: 1, 128>}, {transform_indices = @transform_10, window_bounds = array<i64: 256, 128>}]} {
    %c0 = arith.constant 0 : index
    %c0_0 = arith.constant 0 : index
    %0 = vector.load %arg1[%c0, %c0_0] : memref<256x384xf32, #tpu.memory_space<vmem>>, vector<256x384xf32>
    %c0_1 = arith.constant 0 : index
    %c0_2 = arith.constant 0 : index
    %1 = vector.load %arg2[%c0_1, %c0_2] : memref<384x128xf32, #tpu.memory_space<vmem>>, vector<384x128xf32>
    %cst = arith.constant dense<0.000000e+00> : vector<256x128xf32>
    %2 = tpu.matmul %0, %1, %cst {dimension_numbers = #tpu.dot_dimension_numbers<[1], [0], [0], [1], [0, 0, 1, 1], [], []>} : vector<256x384xf32>, vector<384x128xf32>, vector<256x128xf32> -> vector<256x128xf32>
    %c0_3 = arith.constant 0 : index
    %c0_4 = arith.constant 0 : index
    %3 = vector.load %arg3[%c0_3, %c0_4] : memref<1x128xf32, #tpu.memory_space<vmem>>, vector<1x128xf32>
    %4 = vector.broadcast %3 : vector<1x128xf32> to vector<256x128xf32>
    %5 = arith.addf %2, %4 : vector<256x128xf32>
    %cst_5 = arith.constant 0.000000e+00 : f32
    %6 = vector.broadcast %cst_5 : f32 to vector<256x128xf32>
    %7 = arith.maximumf %5, %6 : vector<256x128xf32>
    %c0_6 = arith.constant 0 : index
    %c0_7 = arith.constant 0 : index
    %8 = vector.load %arg4[%c0_6, %c0_7] : memref<128x640xf32, #tpu.memory_space<vmem>>, vector<128x640xf32>
    %cst_8 = arith.constant dense<0.000000e+00> : vector<256x640xf32>
    %9 = tpu.matmul %7, %8, %cst_8 {dimension_numbers = #tpu.dot_dimension_numbers<[1], [0], [0], [1], [0, 0, 1, 1], [], []>} : vector<256x128xf32>, vector<128x640xf32>, vector<256x640xf32> -> vector<256x640xf32>
    %c0_9 = arith.constant 0 : index
    %c0_10 = arith.constant 0 : index
    %10 = vector.load %arg5[%c0_9, %c0_10] : memref<384x640xf32, #tpu.memory_space<vmem>>, vector<384x640xf32>
    %cst_11 = arith.constant dense<0.000000e+00> : vector<256x640xf32>
    %11 = tpu.matmul %0, %10, %cst_11 {dimension_numbers = #tpu.dot_dimension_numbers<[1], [0], [0], [1], [0, 0, 1, 1], [], []>} : vector<256x384xf32>, vector<384x640xf32>, vector<256x640xf32> -> vector<256x640xf32>
    %12 = arith.addf %9, %11 : vector<256x640xf32>
    %c0_12 = arith.constant 0 : index
    %c0_13 = arith.constant 0 : index
    %13 = vector.load %arg6[%c0_12, %c0_13] : memref<1x640xf32, #tpu.memory_space<vmem>>, vector<1x640xf32>
    %14 = vector.broadcast %13 : vector<1x640xf32> to vector<256x640xf32>
    %15 = arith.addf %12, %14 : vector<256x640xf32>
    %cst_14 = arith.constant 0.000000e+00 : f32
    %16 = vector.broadcast %cst_14 : f32 to vector<256x640xf32>
    %17 = arith.maximumf %15, %16 : vector<256x640xf32>
    %c0_15 = arith.constant 0 : index
    %c0_16 = arith.constant 0 : index
    %18 = vector.load %arg7[%c0_15, %c0_16] : memref<640x384xf32, #tpu.memory_space<vmem>>, vector<640x384xf32>
    %cst_17 = arith.constant dense<0.000000e+00> : vector<256x384xf32>
    %19 = tpu.matmul %17, %18, %cst_17 {dimension_numbers = #tpu.dot_dimension_numbers<[1], [0], [0], [1], [0, 0, 1, 1], [], []>} : vector<256x640xf32>, vector<640x384xf32>, vector<256x384xf32> -> vector<256x384xf32>
    %c0_18 = arith.constant 0 : index
    %c0_19 = arith.constant 0 : index
    %20 = vector.load %arg8[%c0_18, %c0_19] : memref<1x384xf32, #tpu.memory_space<vmem>>, vector<1x384xf32>
    %21 = vector.broadcast %20 : vector<1x384xf32> to vector<256x384xf32>
    %22 = arith.addf %19, %21 : vector<256x384xf32>
    %cst_20 = arith.constant 0.000000e+00 : f32
    %23 = vector.broadcast %cst_20 : f32 to vector<256x384xf32>
    %24 = arith.maximumf %22, %23 : vector<256x384xf32>
    %c0_21 = arith.constant 0 : index
    %c0_22 = arith.constant 0 : index
    %25 = vector.load %arg9[%c0_21, %c0_22] : memref<384x128xf32, #tpu.memory_space<vmem>>, vector<384x128xf32>
    %cst_23 = arith.constant dense<0.000000e+00> : vector<256x128xf32>
    %26 = tpu.matmul %24, %25, %cst_23 {dimension_numbers = #tpu.dot_dimension_numbers<[1], [0], [0], [1], [0, 0, 1, 1], [], []>} : vector<256x384xf32>, vector<384x128xf32>, vector<256x128xf32> -> vector<256x128xf32>
    %c0_24 = arith.constant 0 : index
    %c0_25 = arith.constant 0 : index
    %27 = vector.load %arg10[%c0_24, %c0_25] : memref<1x128xf32, #tpu.memory_space<vmem>>, vector<1x128xf32>
    %28 = vector.broadcast %27 : vector<1x128xf32> to vector<256x128xf32>
    %29 = arith.addf %26, %28 : vector<256x128xf32>
    %30 = vector.extract_strided_slice %29 {offsets = [0, 0], sizes = [256, 3], strides = [1, 1]} : vector<256x128xf32> to vector<256x3xf32>
    %31 = math.tanh %30 : vector<256x3xf32>
    %cst_26 = arith.constant 1.000000e-01 : f32
    %32 = vector.broadcast %cst_26 : f32 to vector<256x3xf32>
    %33 = arith.mulf %31, %32 : vector<256x3xf32>
    %34 = vector.extract_strided_slice %29 {offsets = [0, 3], sizes = [256, 4], strides = [1, 1]} : vector<256x128xf32> to vector<256x4xf32>
    %35 = vector.extract_strided_slice %29 {offsets = [0, 7], sizes = [256, 3], strides = [1, 1]} : vector<256x128xf32> to vector<256x3xf32>
    %cst_27 = arith.constant 0.000000e+00 : f32
    %36 = vector.broadcast %cst_27 : f32 to vector<256x3xf32>
    %37 = arith.subf %36, %35 : vector<256x3xf32>
    %38 = math.exp %37 : vector<256x3xf32>
    %cst_28 = arith.constant 1.000000e+00 : f32
    %39 = vector.broadcast %cst_28 : f32 to vector<256x3xf32>
    %40 = arith.addf %39, %38 : vector<256x3xf32>
    %cst_29 = arith.constant 1.000000e+00 : f32
    %41 = vector.broadcast %cst_29 : f32 to vector<256x3xf32>
    %42 = arith.divf %41, %40 : vector<256x3xf32>
    %43 = vector.extract_strided_slice %29 {offsets = [0, 10], sizes = [256, 3], strides = [1, 1]} : vector<256x128xf32> to vector<256x3xf32>
    %44 = vector.extract_strided_slice %29 {offsets = [0, 13], sizes = [256, 1], strides = [1, 1]} : vector<256x128xf32> to vector<256x1xf32>
    %45 = vector.extract_strided_slice %0 {offsets = [0, 0], sizes = [256, 3], strides = [1, 1]} : vector<256x384xf32> to vector<256x3xf32>
    %46 = vector.extract_strided_slice %0 {offsets = [0, 3], sizes = [256, 4], strides = [1, 1]} : vector<256x384xf32> to vector<256x4xf32>
    %47 = vector.extract_strided_slice %0 {offsets = [0, 7], sizes = [256, 3], strides = [1, 1]} : vector<256x384xf32> to vector<256x3xf32>
    %48 = vector.extract_strided_slice %0 {offsets = [0, 10], sizes = [256, 3], strides = [1, 1]} : vector<256x384xf32> to vector<256x3xf32>
    %49 = vector.extract_strided_slice %0 {offsets = [0, 13], sizes = [256, 1], strides = [1, 1]} : vector<256x384xf32> to vector<256x1xf32>
    %50 = arith.mulf %34, %34 : vector<256x4xf32>
    %cst_30 = arith.constant dense<0.000000e+00> : vector<256xf32>
    %51 = vector.multi_reduction <add>, %50, %cst_30 [1] : vector<256x4xf32> to vector<256xf32>
    %52 = vector.shape_cast %51 : vector<256xf32> to vector<256x1xf32>
    %53 = math.sqrt %52 : vector<256x1xf32>
    %cst_31 = arith.constant 9.99999993E-9 : f32
    %54 = vector.broadcast %cst_31 : f32 to vector<256x1xf32>
    %55 = arith.addf %53, %54 : vector<256x1xf32>
    %56 = vector.broadcast %55 : vector<256x1xf32> to vector<256x4xf32>
    %57 = arith.divf %34, %56 : vector<256x4xf32>
    %58 = vector.extract_strided_slice %46 {offsets = [0, 0], sizes = [256, 1], strides = [1, 1]} : vector<256x4xf32> to vector<256x1xf32>
    %59 = vector.extract_strided_slice %46 {offsets = [0, 1], sizes = [256, 1], strides = [1, 1]} : vector<256x4xf32> to vector<256x1xf32>
    %60 = vector.extract_strided_slice %46 {offsets = [0, 2], sizes = [256, 1], strides = [1, 1]} : vector<256x4xf32> to vector<256x1xf32>
    %61 = vector.extract_strided_slice %46 {offsets = [0, 3], sizes = [256, 1], strides = [1, 1]} : vector<256x4xf32> to vector<256x1xf32>
    %62 = vector.extract_strided_slice %57 {offsets = [0, 0], sizes = [256, 1], strides = [1, 1]} : vector<256x4xf32> to vector<256x1xf32>
    %63 = vector.extract_strided_slice %57 {offsets = [0, 1], sizes = [256, 1], strides = [1, 1]} : vector<256x4xf32> to vector<256x1xf32>
    %64 = vector.extract_strided_slice %57 {offsets = [0, 2], sizes = [256, 1], strides = [1, 1]} : vector<256x4xf32> to vector<256x1xf32>
    %65 = vector.extract_strided_slice %57 {offsets = [0, 3], sizes = [256, 1], strides = [1, 1]} : vector<256x4xf32> to vector<256x1xf32>
    %66 = arith.mulf %58, %62 : vector<256x1xf32>
    %67 = arith.mulf %59, %63 : vector<256x1xf32>
    %68 = arith.subf %66, %67 : vector<256x1xf32>
    %69 = arith.mulf %60, %64 : vector<256x1xf32>
    %70 = arith.subf %68, %69 : vector<256x1xf32>
    %71 = arith.mulf %61, %65 : vector<256x1xf32>
    %72 = arith.subf %70, %71 : vector<256x1xf32>
    %73 = arith.mulf %58, %63 : vector<256x1xf32>
    %74 = arith.mulf %59, %62 : vector<256x1xf32>
    %75 = arith.addf %73, %74 : vector<256x1xf32>
    %76 = arith.mulf %60, %65 : vector<256x1xf32>
    %77 = arith.addf %75, %76 : vector<256x1xf32>
    %78 = arith.mulf %61, %64 : vector<256x1xf32>
    %79 = arith.subf %77, %78 : vector<256x1xf32>
    %80 = arith.mulf %58, %64 : vector<256x1xf32>
    %81 = arith.mulf %59, %65 : vector<256x1xf32>
    %82 = arith.subf %80, %81 : vector<256x1xf32>
    %83 = arith.mulf %60, %62 : vector<256x1xf32>
    %84 = arith.addf %82, %83 : vector<256x1xf32>
    %85 = arith.mulf %61, %63 : vector<256x1xf32>
    %86 = arith.addf %84, %85 : vector<256x1xf32>
    %87 = arith.mulf %58, %65 : vector<256x1xf32>
    %88 = arith.mulf %59, %64 : vector<256x1xf32>
    %89 = arith.addf %87, %88 : vector<256x1xf32>
    %90 = arith.mulf %60, %63 : vector<256x1xf32>
    %91 = arith.subf %89, %90 : vector<256x1xf32>
    %92 = arith.mulf %61, %62 : vector<256x1xf32>
    %93 = arith.addf %91, %92 : vector<256x1xf32>
    %cst_32 = arith.constant 0.000000e+00 : f32
    %94 = vector.broadcast %cst_32 : f32 to vector<256x114xf32>
    %95 = arith.addf %45, %33 : vector<256x3xf32>
    %96 = arith.addf %47, %42 : vector<256x3xf32>
    %97 = arith.addf %48, %43 : vector<256x3xf32>
    %98 = arith.addf %49, %44 : vector<256x1xf32>
    %99 = tpu.concatenate %95, %72, %79, %86, %93, %96, %97, %98, %94 in 1 : vector<256x3xf32>, vector<256x1xf32>, vector<256x1xf32>, vector<256x1xf32>, vector<256x1xf32>, vector<256x3xf32>, vector<256x3xf32>, vector<256x1xf32>, vector<256x114xf32> -> vector<256x128xf32>
    %c0_33 = arith.constant 0 : index
    %c0_34 = arith.constant 0 : index
    %100 = vector.load %arg11[%c0_33, %c0_34] : memref<256x128xf32, #tpu.memory_space<vmem>>, vector<256x128xf32>
    tpu.vector_store %arg11[%c0_33, %c0_34], %99 {strides = array<i32>} : memref<256x128xf32, #tpu.memory_space<vmem>>, vector<256x128xf32>,
    return
  }
  func.func @transform_0(%arg0: i32) -> (i32, i32) {
    %c0_i32 = arith.constant 0 : i32
    %c0_i32_0 = arith.constant 0 : i32
    return %arg0, %c0_i32 : i32, i32
  }
  func.func @transform_1(%arg0: i32) -> (i32, i32) {
    %c0_i32 = arith.constant 0 : i32
    %c0_i32_0 = arith.constant 0 : i32
    %c0_i32_1 = arith.constant 0 : i32
    return %c0_i32, %c0_i32_0 : i32, i32
  }
  func.func @transform_2(%arg0: i32) -> (i32, i32) {
    %c0_i32 = arith.constant 0 : i32
    %c0_i32_0 = arith.constant 0 : i32
    %c0_i32_1 = arith.constant 0 : i32
    return %c0_i32, %c0_i32_0 : i32, i32
  }
  func.func @transform_3(%arg0: i32) -> (i32, i32) {
    %c0_i32 = arith.constant 0 : i32
    %c0_i32_0 = arith.constant 0 : i32
    %c0_i32_1 = arith.constant 0 : i32
    return %c0_i32, %c0_i32_0 : i32, i32
  }
  func.func @transform_4(%arg0: i32) -> (i32, i32) {
    %c0_i32 = arith.constant 0 : i32
    %c0_i32_0 = arith.constant 0 : i32
    %c0_i32_1 = arith.constant 0 : i32
    return %c0_i32, %c0_i32_0 : i32, i32
  }
  func.func @transform_5(%arg0: i32) -> (i32, i32) {
    %c0_i32 = arith.constant 0 : i32
    %c0_i32_0 = arith.constant 0 : i32
    %c0_i32_1 = arith.constant 0 : i32
    return %c0_i32, %c0_i32_0 : i32, i32
  }
  func.func @transform_6(%arg0: i32) -> (i32, i32) {
    %c0_i32 = arith.constant 0 : i32
    %c0_i32_0 = arith.constant 0 : i32
    %c0_i32_1 = arith.constant 0 : i32
    return %c0_i32, %c0_i32_0 : i32, i32
  }
  func.func @transform_7(%arg0: i32) -> (i32, i32) {
    %c0_i32 = arith.constant 0 : i32
    %c0_i32_0 = arith.constant 0 : i32
    %c0_i32_1 = arith.constant 0 : i32
    return %c0_i32, %c0_i32_0 : i32, i32
  }
  func.func @transform_8(%arg0: i32) -> (i32, i32) {
    %c0_i32 = arith.constant 0 : i32
    %c0_i32_0 = arith.constant 0 : i32
    %c0_i32_1 = arith.constant 0 : i32
    return %c0_i32, %c0_i32_0 : i32, i32
  }
  func.func @transform_9(%arg0: i32) -> (i32, i32) {
    %c0_i32 = arith.constant 0 : i32
    %c0_i32_0 = arith.constant 0 : i32
    %c0_i32_1 = arith.constant 0 : i32
    return %c0_i32, %c0_i32_0 : i32, i32
  }
  func.func @transform_10(%arg0: i32) -> (i32, i32) {
    %c0_i32 = arith.constant 0 : i32
    %c0_i32_0 = arith.constant 0 : i32
    return %arg0, %c0_i32 : i32, i32
  }
}

</mosaic_0001>

<llo_original>
// kernel: tpu_custom_call.1
$region0: #{tpu_custom_call.1}
  #allocation0 [shape = 'u32[]', space=smem, size = 0x4, offset = 0x4, fixed_abs, tag = 'smem constant byte address 0x4 - core index']
  #allocation1 [shape = 'u32[144,128]{1,0:T(1,128)}', space=vmem, size = 0x12000, scoped, tag = 'internal scratch']
  %s0 = inlined_call_operand.hbm [shape: f32[512,384], index: 0, kind: input, shape index: {}]
  %s1 = inlined_call_operand.hbm [shape: f32[384,128], index: 1, kind: input, shape index: {}]
  %s2 = inlined_call_operand.vmem [shape: f32[1,128], index: 2, kind: input, shape index: {}]
  %s3 = inlined_call_operand.hbm [shape: f32[128,640], index: 3, kind: input, shape index: {}]
  %s4 = inlined_call_operand.hbm [shape: f32[384,640], index: 4, kind: input, shape index: {}]
  %s5 = inlined_call_operand.vmem [shape: f32[1,640], index: 5, kind: input, shape index: {}]
  %s6 = inlined_call_operand.hbm [shape: f32[640,384], index: 6, kind: input, shape index: {}]
  %s7 = inlined_call_operand.vmem [shape: f32[1,384], index: 7, kind: input, shape index: {}]
  %s8 = inlined_call_operand.hbm [shape: f32[384,128], index: 8, kind: input, shape index: {}]
  %s9 = inlined_call_operand.vmem [shape: f32[1,128], index: 9, kind: input, shape index: {}]
  %s10 = inlined_call_operand.hbm [shape: f32[512,128], index: 10, kind: output, shape index: {}]
  %s11 = sld [smem:[#allocation0]]
  $region97: #{tpu_custom_call.1} parent=0
    _
  %s13 = ssub.s32 1, %s11
  %s14 = scalar_select 0, %s13, %s11
  $region1: #{tpu_custom_call.1} parent=0
    #allocation2 [shape = 'u8[786432]{0}', space=vmem, size = 0xc0000, scoped, tag = 'input window, operand 0']
    #allocation3 [shape = 's32[2]{0}', space=sflag, size = 0x8, scoped, tag = 'scoped memory for tpu_custom_call.1']
    #allocation4 [shape = 's32[2]{0}', space=sflag, size = 0x8, scoped, tag = 'scoped memory for tpu_custom_call.1']
    #allocation5 [shape = 'u8[196608]{0}', space=vmem, size = 0x30000, scoped, tag = 'input window, operand 1, single buffered']
    #allocation6 [shape = 's32[1]{0}', space=sflag, size = 0x4, scoped, tag = 'scoped memory for tpu_custom_call.1']
    #allocation7 [shape = 'u8[327680]{0}', space=vmem, size = 0x50000, scoped, tag = 'input window, operand 3, single buffered']
    #allocation8 [shape = 'u8[983040]{0}', space=vmem, size = 0xf0000, scoped, tag = 'input window, operand 4, single buffered']
    #allocation9 [shape = 's32[1]{0}', space=sflag, size = 0x4, scoped, tag = 'scoped memory for tpu_custom_call.1']
    #allocation10 [shape = 'u8[983040]{0}', space=vmem, size = 0xf0000, scoped, tag = 'input window, operand 6, single buffered']
    #allocation11 [shape = 'u8[196608]{0}', space=vmem, size = 0x30000, scoped, tag = 'input window, operand 8, single buffered']
    #allocation12 [shape = 's32[1]{0}', space=sflag, size = 0x4, scoped, tag = 'scoped memory for tpu_custom_call.1']
    #allocation13 [shape = 'u8[262144]{0}', space=vmem, size = 0x40000, scoped, tag = 'output window, operand 0']
    %15 = vsyncpa [#allocation3], 0
    %s16 = scalar_lea.sflag [#allocation3], 1
    %17 = vsyncpa %s16, 0
    %18 = vsyncpa [#allocation6], 0
    %19 = vsyncpa [#allocation9], 0
    %20 = vsyncpa [#allocation12], 0
    %21 = vsyncpa [#allocation4], 0
    %s22 = scalar_lea.sflag [#allocation4], 1
    %23 = vsyncpa %s22, 0
    loop: start=0, step=1, limit=4
    $region2: #{tpu_custom_call.1} parent=1 // loop_pre_header
      _
    $region3: #{tpu_custom_call.1} parent=1 // loop_header
      %s25 = sphi 0, %s29
      %p26 = scmp.ge.s32.totalorder %s25, 4
      %s35 = sphi 0, %s37
      %s38 = sphi 0, %s35
      %s39 = sphi 0, %s38
      %s55 = sphi 0, %s39
      %s59 = sphi 0, %s59
      %s61 = sphi 0, %s59
      %s62 = sphi 0, %s61
      %s76 = sphi 0, %s62
      %s80 = sphi 0, %s80
      %s82 = sphi 0, %s80
      %s83 = sphi 0, %s82
      %s97 = sphi 0, %s83
      %s101 = sphi 0, %s101
      %s103 = sphi 0, %s101
      %s104 = sphi 0, %s103
      %s118 = sphi 0, %s104
      %s122 = sphi 0, %s122
      %s124 = sphi 0, %s122
      %s125 = sphi 0, %s124
      %s139 = sphi 0, %s125
      %s143 = sphi 0, %s143
      %s145 = sphi 0, %s143
      %s146 = sphi 0, %s145
      %s160 = sphi 0, %s146
      %s164 = sphi 0, %s164
      %s166 = sphi 0, %s164
      %s167 = sphi 0, %s166
      %s181 = sphi 0, %s167
      %s185 = sphi 0, %s185
      %s187 = sphi 0, %s185
      %s188 = sphi 0, %s187
      %s202 = sphi 0, %s188
      %s206 = sphi 0, %s206
      %s208 = sphi 0, %s206
      %s209 = sphi 0, %s208
      %s223 = sphi 0, %s209
      %s227 = sphi 0, %s227
      %s229 = sphi 0, %s227
      %s230 = sphi 0, %s229
      %s244 = sphi 0, %s230
      %s250 = sphi 0, %s252
      %s253 = sphi 0, %s250
      %s254 = sphi 0, %s253
      %s270 = sphi 0, %s254
    $region4: #{tpu_custom_call.1} parent=1 // loop_header_branch
      %28 = sbr.rel (%p26) target = $region8
    $region5: #{tpu_custom_call.1} parent=1 // loop_body
      %s30 = ssub.s32 %s25, 1
      %s31 = ssub.s32 %s25, 2
      %s32 = sadd.s32 %s25, 1
      %s33 = ssub.s32 %s25, %s32
      %p34 = scmp.eq.s32.totalorder %s33, 0
      %s36 = sadd.s32 %s35, 1
      %s37 = scalar_select %p34, %s35, %s36
      %p40 = pneg %p34
      %p41 = scmp.eq.s32.totalorder %s25, 1
      %p42 = por %p40, %p41
      %p43 = scmp.ne.s32.totalorder %s35, %s38
      %p44 = scmp.eq.s32.totalorder %s25, 0
      %p45 = por %p43, %p44
      %p46 = scmp.ne.s32.totalorder %s35, %s38
      %p47 = scmp.eq.s32.totalorder %s30, 1
      %p48 = por %p46, %p47
      %p49 = scmp.ne.s32.totalorder %s38, %s39
      %p50 = scmp.eq.s32.totalorder %s30, 0
      %p51 = por %p49, %p50
      %p52 = scmp.ne.s32.totalorder %s38, %s39
      %p53 = scmp.eq.s32.totalorder %s31, 1
      %p54 = por %p52, %p53
      %p56 = scmp.ne.s32.totalorder %s39, %s55
      %p57 = scmp.eq.s32.totalorder %s31, 0
      %p58 = por %p56, %p57
      %s60 = sadd.s32 %s59, 1
      %p63 = scmp.eq.s32.totalorder %s25, 1
      %p64 = scmp.ne.s32.totalorder %s59, %s61
      %p65 = scmp.eq.s32.totalorder %s25, 0
      %p66 = por %p64, %p65
      %p67 = scmp.ne.s32.totalorder %s59, %s61
      %p68 = scmp.eq.s32.totalorder %s30, 1
      %p69 = por %p67, %p68
      %p70 = scmp.ne.s32.totalorder %s61, %s62
      %p71 = scmp.eq.s32.totalorder %s30, 0
      %p72 = por %p70, %p71
      %p73 = scmp.ne.s32.totalorder %s61, %s62
      %p74 = scmp.eq.s32.totalorder %s31, 1
      %p75 = por %p73, %p74
      %p77 = scmp.ne.s32.totalorder %s62, %s76
      %p78 = scmp.eq.s32.totalorder %s31, 0
      %p79 = por %p77, %p78
      %s81 = sadd.s32 %s80, 1
      %p84 = scmp.eq.s32.totalorder %s25, 1
      %p85 = scmp.ne.s32.totalorder %s80, %s82
      %p86 = scmp.eq.s32.totalorder %s25, 0
      %p87 = por %p85, %p86
      %p88 = scmp.ne.s32.totalorder %s80, %s82
      %p89 = scmp.eq.s32.totalorder %s30, 1
      %p90 = por %p88, %p89
      %p91 = scmp.ne.s32.totalorder %s82, %s83
      %p92 = scmp.eq.s32.totalorder %s30, 0
      %p93 = por %p91, %p92
      %p94 = scmp.ne.s32.totalorder %s82, %s83
      %p95 = scmp.eq.s32.totalorder %s31, 1
      %p96 = por %p94, %p95
      %p98 = scmp.ne.s32.totalorder %s83, %s97
      %p99 = scmp.eq.s32.totalorder %s31, 0
      %p100 = por %p98, %p99
      %s102 = sadd.s32 %s101, 1
      %p105 = scmp.eq.s32.totalorder %s25, 1
      %p106 = scmp.ne.s32.totalorder %s101, %s103
      %p107 = scmp.eq.s32.totalorder %s25, 0
      %p108 = por %p106, %p107
      %p109 = scmp.ne.s32.totalorder %s101, %s103
      %p110 = scmp.eq.s32.totalorder %s30, 1
      %p111 = por %p109, %p110
      %p112 = scmp.ne.s32.totalorder %s103, %s104
      %p113 = scmp.eq.s32.totalorder %s30, 0
      %p114 = por %p112, %p113
      %p115 = scmp.ne.s32.totalorder %s103, %s104
      %p116 = scmp.eq.s32.totalorder %s31, 1
      %p117 = por %p115, %p116
      %p119 = scmp.ne.s32.totalorder %s104, %s118
      %p120 = scmp.eq.s32.totalorder %s31, 0
      %p121 = por %p119, %p120
      %s123 = sadd.s32 %s122, 1
      %p126 = scmp.eq.s32.totalorder %s25, 1
      %p127 = scmp.ne.s32.totalorder %s122, %s124
      %p128 = scmp.eq.s32.totalorder %s25, 0
      %p129 = por %p127, %p128
      %p130 = scmp.ne.s32.totalorder %s122, %s124
      %p131 = scmp.eq.s32.totalorder %s30, 1
      %p132 = por %p130, %p131
      %p133 = scmp.ne.s32.totalorder %s124, %s125
      %p134 = scmp.eq.s32.totalorder %s30, 0
      %p135 = por %p133, %p134
      %p136 = scmp.ne.s32.totalorder %s124, %s125
      %p137 = scmp.eq.s32.totalorder %s31, 1
      %p138 = por %p136, %p137
      %p140 = scmp.ne.s32.totalorder %s125, %s139
      %p141 = scmp.eq.s32.totalorder %s31, 0
      %p142 = por %p140, %p141
      %s144 = sadd.s32 %s143, 1
      %p147 = scmp.eq.s32.totalorder %s25, 1
      %p148 = scmp.ne.s32.totalorder %s143, %s145
      %p149 = scmp.eq.s32.totalorder %s25, 0
      %p150 = por %p148, %p149
      %p151 = scmp.ne.s32.totalorder %s143, %s145
      %p152 = scmp.eq.s32.totalorder %s30, 1
      %p153 = por %p151, %p152
      %p154 = scmp.ne.s32.totalorder %s145, %s146
      %p155 = scmp.eq.s32.totalorder %s30, 0
      %p156 = por %p154, %p155
      %p157 = scmp.ne.s32.totalorder %s145, %s146
      %p158 = scmp.eq.s32.totalorder %s31, 1
      %p159 = por %p157, %p158
      %p161 = scmp.ne.s32.totalorder %s146, %s160
      %p162 = scmp.eq.s32.totalorder %s31, 0
      %p163 = por %p161, %p162
      %s165 = sadd.s32 %s164, 1
      %p168 = scmp.eq.s32.totalorder %s25, 1
      %p169 = scmp.ne.s32.totalorder %s164, %s166
      %p170 = scmp.eq.s32.totalorder %s25, 0
      %p171 = por %p169, %p170
      %p172 = scmp.ne.s32.totalorder %s164, %s166
      %p173 = scmp.eq.s32.totalorder %s30, 1
      %p174 = por %p172, %p173
      %p175 = scmp.ne.s32.totalorder %s166, %s167
      %p176 = scmp.eq.s32.totalorder %s30, 0
      %p177 = por %p175, %p176
      %p178 = scmp.ne.s32.totalorder %s166, %s167
      %p179 = scmp.eq.s32.totalorder %s31, 1
      %p180 = por %p178, %p179
      %p182 = scmp.ne.s32.totalorder %s167, %s181
      %p183 = scmp.eq.s32.totalorder %s31, 0
      %p184 = por %p182, %p183
      %s186 = sadd.s32 %s185, 1
      %p189 = scmp.eq.s32.totalorder %s25, 1
      %p190 = scmp.ne.s32.totalorder %s185, %s187
      %p191 = scmp.eq.s32.totalorder %s25, 0
      %p192 = por %p190, %p191
      %p193 = scmp.ne.s32.totalorder %s185, %s187
      %p194 = scmp.eq.s32.totalorder %s30, 1
      %p195 = por %p193, %p194
      %p196 = scmp.ne.s32.totalorder %s187, %s188
      %p197 = scmp.eq.s32.totalorder %s30, 0
      %p198 = por %p196, %p197
      %p199 = scmp.ne.s32.totalorder %s187, %s188
      %p200 = scmp.eq.s32.totalorder %s31, 1
      %p201 = por %p199, %p200
      %p203 = scmp.ne.s32.totalorder %s188, %s202
      %p204 = scmp.eq.s32.totalorder %s31, 0
      %p205 = por %p203, %p204
      %s207 = sadd.s32 %s206, 1
      %p210 = scmp.eq.s32.totalorder %s25, 1
      %p211 = scmp.ne.s32.totalorder %s206, %s208
      %p212 = scmp.eq.s32.totalorder %s25, 0
      %p213 = por %p211, %p212
      %p214 = scmp.ne.s32.totalorder %s206, %s208
      %p215 = scmp.eq.s32.totalorder %s30, 1
      %p216 = por %p214, %p215
      %p217 = scmp.ne.s32.totalorder %s208, %s209
      %p218 = scmp.eq.s32.totalorder %s30, 0
      %p219 = por %p217, %p218
      %p220 = scmp.ne.s32.totalorder %s208, %s209
      %p221 = scmp.eq.s32.totalorder %s31, 1
      %p222 = por %p220, %p221
      %p224 = scmp.ne.s32.totalorder %s209, %s223
      %p225 = scmp.eq.s32.totalorder %s31, 0
      %p226 = por %p224, %p225
      %s228 = sadd.s32 %s227, 1
      %p231 = scmp.eq.s32.totalorder %s25, 1
      %p232 = scmp.ne.s32.totalorder %s227, %s229
      %p233 = scmp.eq.s32.totalorder %s25, 0
      %p234 = por %p232, %p233
      %p235 = scmp.ne.s32.totalorder %s227, %s229
      %p236 = scmp.eq.s32.totalorder %s30, 1
      %p237 = por %p235, %p236
      %p238 = scmp.ne.s32.totalorder %s229, %s230
      %p239 = scmp.eq.s32.totalorder %s30, 0
      %p240 = por %p238, %p239
      %p241 = scmp.ne.s32.totalorder %s229, %s230
      %p242 = scmp.eq.s32.totalorder %s31, 1
      %p243 = por %p241, %p242
      %p245 = scmp.ne.s32.totalorder %s230, %s244
      %p246 = scmp.eq.s32.totalorder %s31, 0
      %p247 = por %p245, %p246
      %s248 = ssub.s32 %s25, %s32
      %p249 = scmp.eq.s32.totalorder %s248, 0
      %s251 = sadd.s32 %s250, 1
      %s252 = scalar_select %p249, %s250, %s251
      %p255 = pneg %p249
      %p256 = scmp.eq.s32.totalorder %s25, 1
      %p257 = por %p255, %p256
      %p258 = scmp.ne.s32.totalorder %s250, %s253
      %p259 = scmp.eq.s32.totalorder %s25, 0
      %p260 = por %p258, %p259
      %p261 = scmp.ne.s32.totalorder %s250, %s253
      %p262 = scmp.eq.s32.totalorder %s30, 1
      %p263 = por %p261, %p262
      %p264 = scmp.ne.s32.totalorder %s253, %s254
      %p265 = scmp.eq.s32.totalorder %s30, 0
      %p266 = por %p264, %p265
      %p267 = scmp.ne.s32.totalorder %s253, %s254
      %p268 = scmp.eq.s32.totalorder %s31, 1
      %p269 = por %p267, %p268
      %p271 = scmp.ne.s32.totalorder %s254, %s270
      %p272 = scmp.eq.s32.totalorder %s31, 0
      %p273 = por %p271, %p272
      %p274 = scmp.le.s32.totalorder 1, %s25
      %p275 = scmp.lt.s32.totalorder %s25, 3
      %p276 = pnand %p274, %p275
      %p277 = pneg %p276
      // Predicated region
      $region9: #{tpu_custom_call.1} parent=5 // pred_check
        _
      $region10: #{tpu_custom_call.1} parent=5 // pred_check_branch
        %279 = sbr.rel (%p276) target = $region12
      $region11: #{tpu_custom_call.1} parent=5 // pred_region
        %s280 = ssub.s32 %s25, 1
        // Predicated region
        $region13: #{tpu_custom_call.1} parent=11 // pred_check
          %p281 = pneg %p72
        $region14: #{tpu_custom_call.1} parent=11 // pred_check_branch
          %283 = sbr.rel (%p281) target = $region16
        $region15: #{tpu_custom_call.1} parent=11 // pred_region
          %s285 = ssub.s32 6144, 6144
          %286 = vsyncadd [#allocation6], %s285
          %s287 = sshll.u32 [#allocation5], 4
          %s288 = int_to_ptr.vmem [resolvable:$true] %s287
          %293 = dma.hbm_to_vmem [thread:$0]  %s1, 6144, %s288, [#allocation6], 128, 128, 8
        $region16: #{tpu_custom_call.1} parent=11 // pred_fallthru
          _
        // Predicated region
        $region17: #{tpu_custom_call.1} parent=11 // pred_check
          %p294 = pneg %p93
        $region18: #{tpu_custom_call.1} parent=11 // pred_check_branch
          %296 = sbr.rel (%p294) target = $region20
        $region19: #{tpu_custom_call.1} parent=11 // pred_region
          _
        $region20: #{tpu_custom_call.1} parent=11 // pred_fallthru
          _
        // Predicated region
        $region21: #{tpu_custom_call.1} parent=11 // pred_check
          %p297 = pneg %p114
        $region22: #{tpu_custom_call.1} parent=11 // pred_check_branch
          %299 = sbr.rel (%p297) target = $region24
        $region23: #{tpu_custom_call.1} parent=11 // pred_region
          %s301 = ssub.s32 10240, 10240
          %302 = vsyncadd [#allocation6], %s301
          %s303 = sshll.u32 [#allocation7], 4
          %s304 = int_to_ptr.vmem [resolvable:$true] %s303
          %309 = dma.hbm_to_vmem [thread:$0]  %s3, 10240, %s304, [#allocation6], 640, 640, 40
        $region24: #{tpu_custom_call.1} parent=11 // pred_fallthru
          _
        // Predicated region
        $region25: #{tpu_custom_call.1} parent=11 // pred_check
          %p310 = pneg %p135
        $region26: #{tpu_custom_call.1} parent=11 // pred_check_branch
          %312 = sbr.rel (%p310) target = $region28
        $region27: #{tpu_custom_call.1} parent=11 // pred_region
          %s314 = ssub.s32 30720, 30720
          %315 = vsyncadd [#allocation9], %s314
          %s316 = sshll.u32 [#allocation8], 4
          %s317 = int_to_ptr.vmem [resolvable:$true] %s316
          %322 = dma.hbm_to_vmem [thread:$0]  %s4, 30720, %s317, [#allocation9], 640, 640, 40
        $region28: #{tpu_custom_call.1} parent=11 // pred_fallthru
          _
        // Predicated region
        $region29: #{tpu_custom_call.1} parent=11 // pred_check
          %p323 = pneg %p156
        $region30: #{tpu_custom_call.1} parent=11 // pred_check_branch
          %325 = sbr.rel (%p323) target = $region32
        $region31: #{tpu_custom_call.1} parent=11 // pred_region
          _
        $region32: #{tpu_custom_call.1} parent=11 // pred_fallthru
          _
        // Predicated region
        $region33: #{tpu_custom_call.1} parent=11 // pred_check
          %p326 = pneg %p177
        $region34: #{tpu_custom_call.1} parent=11 // pred_check_branch
          %328 = sbr.rel (%p326) target = $region36
        $region35: #{tpu_custom_call.1} parent=11 // pred_region
          %s330 = ssub.s32 30720, 30720
          %331 = vsyncadd [#allocation9], %s330
          %s332 = sshll.u32 [#allocation10], 4
          %s333 = int_to_ptr.vmem [resolvable:$true] %s332
          %338 = dma.hbm_to_vmem [thread:$0]  %s6, 30720, %s333, [#allocation9], 384, 384, 24
        $region36: #{tpu_custom_call.1} parent=11 // pred_fallthru
          _
        // Predicated region
        $region37: #{tpu_custom_call.1} parent=11 // pred_check
          %p339 = pneg %p198
        $region38: #{tpu_custom_call.1} parent=11 // pred_check_branch
          %341 = sbr.rel (%p339) target = $region40
        $region39: #{tpu_custom_call.1} parent=11 // pred_region
          _
        $region40: #{tpu_custom_call.1} parent=11 // pred_fallthru
          _
        // Predicated region
        $region41: #{tpu_custom_call.1} parent=11 // pred_check
          %p342 = pneg %p219
        $region42: #{tpu_custom_call.1} parent=11 // pred_check_branch
          %344 = sbr.rel (%p342) target = $region44
        $region43: #{tpu_custom_call.1} parent=11 // pred_region
          %s346 = ssub.s32 6144, 6144
          %347 = vsyncadd [#allocation12], %s346
          %s348 = sshll.u32 [#allocation11], 4
          %s349 = int_to_ptr.vmem [resolvable:$true] %s348
          %354 = dma.hbm_to_vmem [thread:$0]  %s8, 6144, %s349, [#allocation12], 128, 128, 8
        $region44: #{tpu_custom_call.1} parent=11 // pred_fallthru
          _
        // Predicated region
        $region45: #{tpu_custom_call.1} parent=11 // pred_check
          %p355 = pneg %p240
        $region46: #{tpu_custom_call.1} parent=11 // pred_check_branch
          %357 = sbr.rel (%p355) target = $region48
        $region47: #{tpu_custom_call.1} parent=11 // pred_region
          _
        $region48: #{tpu_custom_call.1} parent=11 // pred_fallthru
          _
      $region12: #{tpu_custom_call.1} parent=5 // pred_fallthru
        _
      %p358 = scmp.lt.s32.totalorder %s25, 2
      // Predicated region
      $region49: #{tpu_custom_call.1} parent=5 // pred_check
        %p359 = pneg %p358
      $region50: #{tpu_custom_call.1} parent=5 // pred_check_branch
        %361 = sbr.rel (%p359) target = $region52
      $region51: #{tpu_custom_call.1} parent=5 // pred_region
        // Predicated region
        $region53: #{tpu_custom_call.1} parent=51 // pred_check
          %p362 = pneg %p45
        $region54: #{tpu_custom_call.1} parent=51 // pred_check_branch
          %364 = sbr.rel (%p362) target = $region56
        $region55: #{tpu_custom_call.1} parent=51 // pred_region
          %s365 = sand.u32 %s35, 1
          %s366 = scalar_lea.sflag [#allocation3], %s365
          %s367 = sand.u32 %s35, 1
          %s368 = smul.addr %s367, 768
          %s369 = scalar_lea.vmem [#allocation2], %s368
          %s370 = smul.u32 32, %s25
          %s372 = ssub.s32 12288, 12288
          %373 = vsyncadd %s366, %s372
          %s374 = smul.addr %s370, 3
          %s375 = smul.addr %s374, 128
          %s376 = scalar_lea.hbm %s0, %s375
          %s377 = sshll.u32 %s369, 4
          %s378 = int_to_ptr.vmem [resolvable:$true] %s377
          %383 = dma.hbm_to_vmem [thread:$0]  %s376, 12288, %s378, %s366, 384, 384, 24
        $region56: #{tpu_custom_call.1} parent=51 // pred_fallthru
          _
      $region52: #{tpu_custom_call.1} parent=5 // pred_fallthru
        _
      %p384 = scmp.le.s32.totalorder 1, %s25
      %p385 = scmp.lt.s32.totalorder %s25, 3
      %p386 = pnand %p384, %p385
      %p387 = pneg %p386
      // Predicated region
      $region57: #{tpu_custom_call.1} parent=5 // pred_check
        _
      $region58: #{tpu_custom_call.1} parent=5 // pred_check_branch
        %389 = sbr.rel (%p386) target = $region60
      $region59: #{tpu_custom_call.1} parent=5 // pred_region
        %s390 = ssub.s32 %s25, 1
        %s391 = sand.u32 %s38, 1
        %s392 = scalar_lea.sflag [#allocation3], %s391
        %s393 = sand.u32 %s38, 1
        %s394 = smul.addr %s393, 768
        %s395 = scalar_lea.vmem [#allocation2], %s394
        // Predicated region
        $region61: #{tpu_custom_call.1} parent=59 // pred_check
          %p396 = pneg %p51
        $region62: #{tpu_custom_call.1} parent=59 // pred_check_branch
          %398 = sbr.rel (%p396) target = $region64
        $region63: #{tpu_custom_call.1} parent=59 // pred_region
          %399 = dma.done %s392, 12288
        $region64: #{tpu_custom_call.1} parent=59 // pred_fallthru
          _
        // Predicated region
        $region65: #{tpu_custom_call.1} parent=59 // pred_check
          %p400 = pneg %p72
        $region66: #{tpu_custom_call.1} parent=59 // pred_check_branch
          %402 = sbr.rel (%p400) target = $region68
        $region67: #{tpu_custom_call.1} parent=59 // pred_region
          %403 = dma.done [#allocation6], 6144
        $region68: #{tpu_custom_call.1} parent=59 // pred_fallthru
          _
        // Predicated region
        $region69: #{tpu_custom_call.1} parent=59 // pred_check
          %p404 = pneg %p114
        $region70: #{tpu_custom_call.1} parent=59 // pred_check_branch
          %406 = sbr.rel (%p404) target = $region72
        $region71: #{tpu_custom_call.1} parent=59 // pred_region
          %407 = dma.done [#allocation6], 10240
        $region72: #{tpu_custom_call.1} parent=59 // pred_fallthru
          _
        // Predicated region
        $region73: #{tpu_custom_call.1} parent=59 // pred_check
          %p408 = pneg %p135
        $region74: #{tpu_custom_call.1} parent=59 // pred_check_branch
          %410 = sbr.rel (%p408) target = $region76
        $region75: #{tpu_custom_call.1} parent=59 // pred_region
          %411 = dma.done [#allocation9], 30720
        $region76: #{tpu_custom_call.1} parent=59 // pred_fallthru
          _
        // Predicated region
        $region77: #{tpu_custom_call.1} parent=59 // pred_check
          %p412 = pneg %p177
        $region78: #{tpu_custom_call.1} parent=59 // pred_check_branch
          %414 = sbr.rel (%p412) target = $region80
        $region79: #{tpu_custom_call.1} parent=59 // pred_region
          %415 = dma.done [#allocation9], 30720
        $region80: #{tpu_custom_call.1} parent=59 // pred_fallthru
          _
        // Predicated region
        $region81: #{tpu_custom_call.1} parent=59 // pred_check
          %p416 = pneg %p219
        $region82: #{tpu_custom_call.1} parent=59 // pred_check_branch
          %418 = sbr.rel (%p416) target = $region84
        $region83: #{tpu_custom_call.1} parent=59 // pred_region
          %419 = dma.done [#allocation12], 6144
        $region84: #{tpu_custom_call.1} parent=59 // pred_fallthru
          _
        %s420 = sand.u32 %s38, 1
        %s421 = scalar_lea.sflag [#allocation3], %s420
        %s422 = sand.u32 %s38, 1
        %s423 = smul.addr %s422, 768
        %s424 = scalar_lea.vmem [#allocation2], %s423
        %p425 = pneg %p51
        %p426 = pneg %p48
        %p427 = pneg %p72
        %p428 = pneg %p69
        %p429 = pneg %p93
        %p430 = pneg %p90
        %p431 = pneg %p114
        %p432 = pneg %p111
        %p433 = pneg %p135
        %p434 = pneg %p132
        %p435 = pneg %p156
        %p436 = pneg %p153
        %p437 = pneg %p177
        %p438 = pneg %p174
        %p439 = pneg %p198
        %p440 = pneg %p195
        %p441 = pneg %p219
        %p442 = pneg %p216
        %p443 = pneg %p240
        %p444 = pneg %p237
        %p445 = pneg %p266
        %p446 = pneg %p263
        %s447 = sand.u32 %s253, 1
        %s448 = scalar_lea.sflag [#allocation4], %s447
        %s449 = sand.u32 %s253, 1
        %s450 = smul.addr %s449, 256
        %s451 = scalar_lea.vmem [#allocation13], %s450
        %s452 = smul.u32 32, %s30
        %s453 = smul.u32 32, %s30
        %v454 = vld [vmem:[%s395] sm:$0xff]
        %v455 = vld [vmem:[%s395 + $0x8] sm:$0xff]
        %v456 = vld [vmem:[%s395 + $0x10] sm:$0xff]
        %v457 = vld [vmem:[%s395 + $0x18] sm:$0xff]
        %v458 = vld [vmem:[%s395 + $0x20] sm:$0xff]
        %v459 = vld [vmem:[%s395 + $0x28] sm:$0xff]
        %v460 = vld [vmem:[%s395 + $0x30] sm:$0xff]
        %v461 = vld [vmem:[%s395 + $0x38] sm:$0xff]
        %v462 = vld [vmem:[%s395 + $0x40] sm:$0xff]
        %v463 = vld [vmem:[%s395 + $0x48] sm:$0xff]
        %v464 = vld [vmem:[%s395 + $0x50] sm:$0xff]
        %v465 = vld [vmem:[%s395 + $0x58] sm:$0xff]
        %v466 = vld [vmem:[%s395 + $0x60] sm:$0xff]
        %v467 = vld [vmem:[%s395 + $0x68] sm:$0xff]
        %v468 = vld [vmem:[%s395 + $0x70] sm:$0xff]
        %v469 = vld [vmem:[%s395 + $0x78] sm:$0xff]
        %v470 = vld [vmem:[%s395 + $0x80] sm:$0xff]
        %v471 = vld [vmem:[%s395 + $0x88] sm:$0xff]
        %v472 = vld [vmem:[%s395 + $0x90] sm:$0xff]
        %v473 = vld [vmem:[%s395 + $0x98] sm:$0xff]
        %v474 = vld [vmem:[%s395 + $0xa0] sm:$0xff]
        %v475 = vld [vmem:[%s395 + $0xa8] sm:$0xff]
        %v476 = vld [vmem:[%s395 + $0xb0] sm:$0xff]
        %v477 = vld [vmem:[%s395 + $0xb8] sm:$0xff]
        %v478 = vld [vmem:[%s395 + $0xc0] sm:$0xff]
        %v479 = vld [vmem:[%s395 + $0xc8] sm:$0xff]
        %v480 = vld [vmem:[%s395 + $0xd0] sm:$0xff]
        %v481 = vld [vmem:[%s395 + $0xd8] sm:$0xff]
        %v482 = vld [vmem:[%s395 + $0xe0] sm:$0xff]
        %v483 = vld [vmem:[%s395 + $0xe8] sm:$0xff]
        %v484 = vld [vmem:[%s395 + $0xf0] sm:$0xff]
        %v485 = vld [vmem:[%s395 + $0xf8] sm:$0xff]
        %v486 = vld [vmem:[%s395 + $0x100] sm:$0xff]
        %v487 = vld [vmem:[%s395 + $0x108] sm:$0xff]
        %v488 = vld [vmem:[%s395 + $0x110] sm:$0xff]
        %v489 = vld [vmem:[%s395 + $0x118] sm:$0xff]
        %v490 = vld [vmem:[%s395 + $0x120] sm:$0xff]
        %v491 = vld [vmem:[%s395 + $0x128] sm:$0xff]
        %v492 = vld [vmem:[%s395 + $0x130] sm:$0xff]
        %v493 = vld [vmem:[%s395 + $0x138] sm:$0xff]
        %v494 = vld [vmem:[%s395 + $0x140] sm:$0xff]
        %v495 = vld [vmem:[%s395 + $0x148] sm:$0xff]
        %v496 = vld [vmem:[%s395 + $0x150] sm:$0xff]
        %v497 = vld [vmem:[%s395 + $0x158] sm:$0xff]
        %v498 = vld [vmem:[%s395 + $0x160] sm:$0xff]
        %v499 = vld [vmem:[%s395 + $0x168] sm:$0xff]
        %v500 = vld [vmem:[%s395 + $0x170] sm:$0xff]
        %v501 = vld [vmem:[%s395 + $0x178] sm:$0xff]
        %v502 = vld [vmem:[%s395 + $0x180] sm:$0xff]
        %v503 = vld [vmem:[%s395 + $0x188] sm:$0xff]
        %v504 = vld [vmem:[%s395 + $0x190] sm:$0xff]
        %v505 = vld [vmem:[%s395 + $0x198] sm:$0xff]
        %v506 = vld [vmem:[%s395 + $0x1a0] sm:$0xff]
        %v507 = vld [vmem:[%s395 + $0x1a8] sm:$0xff]
        %v508 = vld [vmem:[%s395 + $0x1b0] sm:$0xff]
        %v509 = vld [vmem:[%s395 + $0x1b8] sm:$0xff]
        %v510 = vld [vmem:[%s395 + $0x1c0] sm:$0xff]
        %v511 = vld [vmem:[%s395 + $0x1c8] sm:$0xff]
        %v512 = vld [vmem:[%s395 + $0x1d0] sm:$0xff]
        %v513 = vld [vmem:[%s395 + $0x1d8] sm:$0xff]
        %v514 = vld [vmem:[%s395 + $0x1e0] sm:$0xff]
        %v515 = vld [vmem:[%s395 + $0x1e8] sm:$0xff]
        %v516 = vld [vmem:[%s395 + $0x1f0] sm:$0xff]
        %v517 = vld [vmem:[%s395 + $0x1f8] sm:$0xff]
        %v518 = vld [vmem:[%s395 + $0x200] sm:$0xff]
        %v519 = vld [vmem:[%s395 + $0x208] sm:$0xff]
        %v520 = vld [vmem:[%s395 + $0x210] sm:$0xff]
        %v521 = vld [vmem:[%s395 + $0x218] sm:$0xff]
        %v522 = vld [vmem:[%s395 + $0x220] sm:$0xff]
        %v523 = vld [vmem:[%s395 + $0x228] sm:$0xff]
        %v524 = vld [vmem:[%s395 + $0x230] sm:$0xff]
        %v525 = vld [vmem:[%s395 + $0x238] sm:$0xff]
        %v526 = vld [vmem:[%s395 + $0x240] sm:$0xff]
        %v527 = vld [vmem:[%s395 + $0x248] sm:$0xff]
        %v528 = vld [vmem:[%s395 + $0x250] sm:$0xff]
        %v529 = vld [vmem:[%s395 + $0x258] sm:$0xff]
        %v530 = vld [vmem:[%s395 + $0x260] sm:$0xff]
        %v531 = vld [vmem:[%s395 + $0x268] sm:$0xff]
        %v532 = vld [vmem:[%s395 + $0x270] sm:$0xff]
        %v533 = vld [vmem:[%s395 + $0x278] sm:$0xff]
        %v534 = vld [vmem:[%s395 + $0x280] sm:$0xff]
        %v535 = vld [vmem:[%s395 + $0x288] sm:$0xff]
        %v536 = vld [vmem:[%s395 + $0x290] sm:$0xff]
        %v537 = vld [vmem:[%s395 + $0x298] sm:$0xff]
        %v538 = vld [vmem:[%s395 + $0x2a0] sm:$0xff]
        %v539 = vld [vmem:[%s395 + $0x2a8] sm:$0xff]
        %v540 = vld [vmem:[%s395 + $0x2b0] sm:$0xff]
        %v541 = vld [vmem:[%s395 + $0x2b8] sm:$0xff]
        %v542 = vld [vmem:[%s395 + $0x2c0] sm:$0xff]
        %v543 = vld [vmem:[%s395 + $0x2c8] sm:$0xff]
        %v544 = vld [vmem:[%s395 + $0x2d0] sm:$0xff]
        %v545 = vld [vmem:[%s395 + $0x2d8] sm:$0xff]
        %v546 = vld [vmem:[%s395 + $0x2e0] sm:$0xff]
        %v547 = vld [vmem:[%s395 + $0x2e8] sm:$0xff]
        %v548 = vld [vmem:[%s395 + $0x2f0] sm:$0xff]
        %v549 = vld [vmem:[%s395 + $0x2f8] sm:$0xff]
        %v550 = vld [vmem:[#allocation5] sm:$0xff]
        %v551 = vld [vmem:[#allocation5 + $0x8] sm:$0xff]
        %v552 = vld [vmem:[#allocation5 + $0x10] sm:$0xff]
        %v553 = vld [vmem:[#allocation5 + $0x18] sm:$0xff]
        %v554 = vld [vmem:[#allocation5 + $0x20] sm:$0xff]
        %v555 = vld [vmem:[#allocation5 + $0x28] sm:$0xff]
        %v556 = vld [vmem:[#allocation5 + $0x30] sm:$0xff]
        %v557 = vld [vmem:[#allocation5 + $0x38] sm:$0xff]
        %v558 = vld [vmem:[#allocation5 + $0x40] sm:$0xff]
        %v559 = vld [vmem:[#allocation5 + $0x48] sm:$0xff]
        %v560 = vld [vmem:[#allocation5 + $0x50] sm:$0xff]
        %v561 = vld [vmem:[#allocation5 + $0x58] sm:$0xff]
        %v562 = vld [vmem:[#allocation5 + $0x60] sm:$0xff]
        %v563 = vld [vmem:[#allocation5 + $0x68] sm:$0xff]
        %v564 = vld [vmem:[#allocation5 + $0x70] sm:$0xff]
        %v565 = vld [vmem:[#allocation5 + $0x78] sm:$0xff]
        %v566 = vld [vmem:[#allocation5 + $0x80] sm:$0xff]
        %v567 = vld [vmem:[#allocation5 + $0x88] sm:$0xff]
        %v568 = vld [vmem:[#allocation5 + $0x90] sm:$0xff]
        %v569 = vld [vmem:[#allocation5 + $0x98] sm:$0xff]
        %v570 = vld [vmem:[#allocation5 + $0xa0] sm:$0xff]
        %v571 = vld [vmem:[#allocation5 + $0xa8] sm:$0xff]
        %v572 = vld [vmem:[#allocation5 + $0xb0] sm:$0xff]
        %v573 = vld [vmem:[#allocation5 + $0xb8] sm:$0xff]
        %v574 = vld [vmem:[#allocation5 + $0xc0] sm:$0xff]
        %v575 = vld [vmem:[#allocation5 + $0xc8] sm:$0xff]
        %v576 = vld [vmem:[#allocation5 + $0xd0] sm:$0xff]
        %v577 = vld [vmem:[#allocation5 + $0xd8] sm:$0xff]
        %v578 = vld [vmem:[#allocation5 + $0xe0] sm:$0xff]
        %v579 = vld [vmem:[#allocation5 + $0xe8] sm:$0xff]
        %v580 = vld [vmem:[#allocation5 + $0xf0] sm:$0xff]
        %v581 = vld [vmem:[#allocation5 + $0xf8] sm:$0xff]
        %v582 = vld [vmem:[#allocation5 + $0x100] sm:$0xff]
        %v583 = vld [vmem:[#allocation5 + $0x108] sm:$0xff]
        %v584 = vld [vmem:[#allocation5 + $0x110] sm:$0xff]
        %v585 = vld [vmem:[#allocation5 + $0x118] sm:$0xff]
        %v586 = vld [vmem:[#allocation5 + $0x120] sm:$0xff]
        %v587 = vld [vmem:[#allocation5 + $0x128] sm:$0xff]
        %v588 = vld [vmem:[#allocation5 + $0x130] sm:$0xff]
        %v589 = vld [vmem:[#allocation5 + $0x138] sm:$0xff]
        %v590 = vld [vmem:[#allocation5 + $0x140] sm:$0xff]
        %v591 = vld [vmem:[#allocation5 + $0x148] sm:$0xff]
        %v592 = vld [vmem:[#allocation5 + $0x150] sm:$0xff]
        %v593 = vld [vmem:[#allocation5 + $0x158] sm:$0xff]
        %v594 = vld [vmem:[#allocation5 + $0x160] sm:$0xff]
        %v595 = vld [vmem:[#allocation5 + $0x168] sm:$0xff]
        %v596 = vld [vmem:[#allocation5 + $0x170] sm:$0xff]
        %v597 = vld [vmem:[#allocation5 + $0x178] sm:$0xff]
        %v598 = vld [vmem:[%s2] sm:$0x1]
        %v600 = vlaneseq
        %v601 = vshrl.u32 %v600, 7
        %v602 = vsub.s32 0, %v601
        %v603 = vrot.slane %v598, %v602
        %605 = vmatprep.subr.mxu0 0.0
        %606 = vmatpush1.msra.mxu0 %v565
        %607 = vmatprep.subr.mxu0 0.0
        %608 = vmatpush1.msra.mxu0 %v564
        %609 = vmatprep.subr.mxu0 0.0
        %610 = vmatpush1.msra.mxu0 %v563
        %611 = vmatprep.subr.mxu0 0.0
        %612 = vmatpush1.msra.mxu0 %v562
        %613 = vmatprep.subr.mxu0 0.0
        %614 = vmatpush1.msra.mxu0 %v561
        %615 = vmatprep.subr.mxu0 0.0
        %616 = vmatpush1.msra.mxu0 %v560
        %617 = vmatprep.subr.mxu0 0.0
        %618 = vmatpush1.msra.mxu0 %v559
        %619 = vmatprep.subr.mxu0 0.0
        %620 = vmatpush1.msra.mxu0 %v558
        %621 = vmatprep.subr.mxu0 0.0
        %622 = vmatpush1.msra.mxu0 %v557
        %623 = vmatprep.subr.mxu0 0.0
        %624 = vmatpush1.msra.mxu0 %v556
        %625 = vmatprep.subr.mxu0 0.0
        %626 = vmatpush1.msra.mxu0 %v555
        %627 = vmatprep.subr.mxu0 0.0
        %628 = vmatpush1.msra.mxu0 %v554
        %629 = vmatprep.subr.mxu0 0.0
        %630 = vmatpush1.msra.mxu0 %v553
        %631 = vmatprep.subr.mxu0 0.0
        %632 = vmatpush1.msra.mxu0 %v552
        %633 = vmatprep.subr.mxu0 0.0
        %634 = vmatpush1.msra.mxu0 %v551
        %635 = vmatprep.subr.mxu0 0.0
        %636 = vmatpush1.msra.mxu0 %v550
        %637 = vmatprep.subr.mxu0 0.0
        %638 = vmatpush2.msra.mxu0 %v581
        %639 = vmatprep.subr.mxu0 0.0
        %640 = vmatpush2.msra.mxu0 %v580
        %641 = vmatprep.subr.mxu0 0.0
        %642 = vmatpush2.msra.mxu0 %v579
        %643 = vmatprep.subr.mxu0 0.0
        %644 = vmatpush2.msra.mxu0 %v578
        %645 = vmatprep.subr.mxu0 0.0
        %646 = vmatpush2.msra.mxu0 %v577
        %647 = vmatprep.subr.mxu0 0.0
        %648 = vmatpush2.msra.mxu0 %v576
        %649 = vmatprep.subr.mxu0 0.0
        %650 = vmatpush2.msra.mxu0 %v575
        %651 = vmatprep.subr.mxu0 0.0
        %652 = vmatpush2.msra.mxu0 %v574
        %653 = vmatprep.subr.mxu0 0.0
        %654 = vmatpush2.msra.mxu0 %v573
        %655 = vmatprep.subr.mxu0 0.0
        %656 = vmatpush2.msra.mxu0 %v572
        %657 = vmatprep.subr.mxu0 0.0
        %658 = vmatpush2.msra.mxu0 %v571
        %659 = vmatprep.subr.mxu0 0.0
        %660 = vmatpush2.msra.mxu0 %v570
        %661 = vmatprep.subr.mxu0 0.0
        %662 = vmatpush2.msra.mxu0 %v569
        %663 = vmatprep.subr.mxu0 0.0
        %664 = vmatpush2.msra.mxu0 %v568
        %665 = vmatprep.subr.mxu0 0.0
        %666 = vmatpush2.msra.mxu0 %v567
        %667 = vmatprep.subr.mxu0 0.0
        %668 = vmatpush2.msra.mxu0 %v566
        %669 = vmatprep.mubr.f32.mxu0 %v455
        %670 = vmatmul.mubr.f32.gmra.mxu0 %v454
        %v671 = vpop.f32.mrf.mxu0
        %v672 = vadd.f32 %v603, %v671
        %v673 = vpop.f32.mrf.mxu0
        %674 = vmatprep.mubr.f32.mxu0 %v458
        %675 = vmatmul.mubr.f32.gmra.mxu0 %v457
        %v676 = vpop.f32.mrf.mxu0
        %v677 = vadd.f32 %v603, %v676
        %v678 = vpop.f32.mrf.mxu0
        %679 = vmatprep.mubr.f32.mxu0 %v461
        %680 = vmatmul.mubr.f32.gmra.mxu0 %v460
        %v681 = vpop.f32.mrf.mxu0
        %v682 = vadd.f32 %v603, %v681
        %v683 = vpop.f32.mrf.mxu0
        %684 = vmatprep.mubr.f32.mxu0 %v464
        %685 = vmatmul.mubr.f32.gmra.mxu0 %v463
        %v686 = vpop.f32.mrf.mxu0
        %v687 = vadd.f32 %v603, %v686
        %v688 = vpop.f32.mrf.mxu0
        %689 = vmatprep.mubr.f32.mxu0 %v467
        %690 = vmatmul.mubr.f32.gmra.mxu0 %v466
        %v691 = vpop.f32.mrf.mxu0
        %v692 = vadd.f32 %v603, %v691
        %v693 = vpop.f32.mrf.mxu0
        %694 = vmatprep.mubr.f32.mxu0 %v470
        %695 = vmatmul.mubr.f32.gmra.mxu0 %v469
        %v696 = vpop.f32.mrf.mxu0
        %v697 = vadd.f32 %v603, %v696
        %v698 = vpop.f32.mrf.mxu0
        %699 = vmatprep.mubr.f32.mxu0 %v473
        %700 = vmatmul.mubr.f32.gmra.mxu0 %v472
        %v701 = vpop.f32.mrf.mxu0
        %v702 = vadd.f32 %v603, %v701
        %v703 = vpop.f32.mrf.mxu0
        %704 = vmatprep.mubr.f32.mxu0 %v476
        %705 = vmatmul.mubr.f32.gmra.mxu0 %v475
        %v706 = vpop.f32.mrf.mxu0
        %v707 = vadd.f32 %v603, %v706
        %v708 = vpop.f32.mrf.mxu0
        %709 = vmatprep.mubr.f32.mxu0 %v479
        %710 = vmatmul.mubr.f32.gmra.mxu0 %v478
        %v711 = vpop.f32.mrf.mxu0
        %v712 = vadd.f32 %v603, %v711
        %v713 = vpop.f32.mrf.mxu0
        %714 = vmatprep.mubr.f32.mxu0 %v482
        %715 = vmatmul.mubr.f32.gmra.mxu0 %v481
        %v716 = vpop.f32.mrf.mxu0
        %v717 = vadd.f32 %v603, %v716
        %v718 = vpop.f32.mrf.mxu0
        %719 = vmatprep.mubr.f32.mxu0 %v485
        %720 = vmatmul.mubr.f32.gmra.mxu0 %v484
        %v721 = vpop.f32.mrf.mxu0
        %v722 = vadd.f32 %v603, %v721
        %v723 = vpop.f32.mrf.mxu0
        %724 = vmatprep.mubr.f32.mxu0 %v488
        %725 = vmatmul.mubr.f32.gmra.mxu0 %v487
        %v726 = vpop.f32.mrf.mxu0
        %v727 = vadd.f32 %v603, %v726
        %v728 = vpop.f32.mrf.mxu0
        %729 = vmatprep.mubr.f32.mxu0 %v491
        %730 = vmatmul.mubr.f32.gmra.mxu0 %v490
        %v731 = vpop.f32.mrf.mxu0
        %v732 = vadd.f32 %v603, %v731
        %v733 = vpop.f32.mrf.mxu0
        %734 = vmatprep.mubr.f32.mxu0 %v494
        %735 = vmatmul.mubr.f32.gmra.mxu0 %v493
        %v736 = vpop.f32.mrf.mxu0
        %v737 = vadd.f32 %v603, %v736
        %v738 = vpop.f32.mrf.mxu0
        %739 = vmatprep.mubr.f32.mxu0 %v497
        %740 = vmatmul.mubr.f32.gmra.mxu0 %v496
        %v741 = vpop.f32.mrf.mxu0
        %v742 = vadd.f32 %v603, %v741
        %v743 = vpop.f32.mrf.mxu0
        %744 = vmatprep.mubr.f32.mxu0 %v500
        %745 = vmatmul.mubr.f32.gmra.mxu0 %v499
        %v746 = vpop.f32.mrf.mxu0
        %v747 = vadd.f32 %v603, %v746
        %v748 = vpop.f32.mrf.mxu0
        %749 = vmatprep.mubr.f32.mxu0 %v503
        %750 = vmatmul.mubr.f32.gmra.mxu0 %v502
        %v751 = vpop.f32.mrf.mxu0
        %v752 = vadd.f32 %v603, %v751
        %v753 = vpop.f32.mrf.mxu0
        %754 = vmatprep.mubr.f32.mxu0 %v506
        %755 = vmatmul.mubr.f32.gmra.mxu0 %v505
        %v756 = vpop.f32.mrf.mxu0
        %v757 = vadd.f32 %v603, %v756
        %v758 = vpop.f32.mrf.mxu0
        %759 = vmatprep.mubr.f32.mxu0 %v509
        %760 = vmatmul.mubr.f32.gmra.mxu0 %v508
        %v761 = vpop.f32.mrf.mxu0
        %v762 = vadd.f32 %v603, %v761
        %v763 = vpop.f32.mrf.mxu0
        %764 = vmatprep.mubr.f32.mxu0 %v512
        %765 = vmatmul.mubr.f32.gmra.mxu0 %v511
        %v766 = vpop.f32.mrf.mxu0
        %v767 = vadd.f32 %v603, %v766
        %v768 = vpop.f32.mrf.mxu0
        %769 = vmatprep.mubr.f32.mxu0 %v515
        %770 = vmatmul.mubr.f32.gmra.mxu0 %v514
        %v771 = vpop.f32.mrf.mxu0
        %v772 = vadd.f32 %v603, %v771
        %v773 = vpop.f32.mrf.mxu0
        %774 = vmatprep.mubr.f32.mxu0 %v518
        %775 = vmatmul.mubr.f32.gmra.mxu0 %v517
        %v776 = vpop.f32.mrf.mxu0
        %v777 = vadd.f32 %v603, %v776
        %v778 = vpop.f32.mrf.mxu0
        %779 = vmatprep.mubr.f32.mxu0 %v521
        %780 = vmatmul.mubr.f32.gmra.mxu0 %v520
        %v781 = vpop.f32.mrf.mxu0
        %v782 = vadd.f32 %v603, %v781
        %v783 = vpop.f32.mrf.mxu0
        %784 = vmatprep.mubr.f32.mxu0 %v524
        %785 = vmatmul.mubr.f32.gmra.mxu0 %v523
        %v786 = vpop.f32.mrf.mxu0
        %v787 = vadd.f32 %v603, %v786
        %v788 = vpop.f32.mrf.mxu0
        %789 = vmatprep.mubr.f32.mxu0 %v527
        %790 = vmatmul.mubr.f32.gmra.mxu0 %v526
        %v791 = vpop.f32.mrf.mxu0
        %v792 = vadd.f32 %v603, %v791
        %v793 = vpop.f32.mrf.mxu0
        %794 = vmatprep.mubr.f32.mxu0 %v530
        %795 = vmatmul.mubr.f32.gmra.mxu0 %v529
        %v796 = vpop.f32.mrf.mxu0
        %v797 = vadd.f32 %v603, %v796
        %v798 = vpop.f32.mrf.mxu0
        %799 = vmatprep.mubr.f32.mxu0 %v533
        %800 = vmatmul.mubr.f32.gmra.mxu0 %v532
        %v801 = vpop.f32.mrf.mxu0
        %v802 = vadd.f32 %v603, %v801
        %v803 = vpop.f32.mrf.mxu0
        %804 = vmatprep.mubr.f32.mxu0 %v536
        %805 = vmatmul.mubr.f32.gmra.mxu0 %v535
        %v806 = vpop.f32.mrf.mxu0
        %v807 = vadd.f32 %v603, %v806
        %v808 = vpop.f32.mrf.mxu0
        %809 = vmatprep.mubr.f32.mxu0 %v539
        %810 = vmatmul.mubr.f32.gmra.mxu0 %v538
        %v811 = vpop.f32.mrf.mxu0
        %v812 = vadd.f32 %v603, %v811
        %v813 = vpop.f32.mrf.mxu0
        %814 = vmatprep.mubr.f32.mxu0 %v542
        %815 = vmatmul.mubr.f32.gmra.mxu0 %v541
        %v816 = vpop.f32.mrf.mxu0
        %v817 = vadd.f32 %v603, %v816
        %v818 = vpop.f32.mrf.mxu0
        %819 = vmatprep.mubr.f32.mxu0 %v545
        %820 = vmatmul.mubr.f32.gmra.mxu0 %v544
        %v821 = vpop.f32.mrf.mxu0
        %v822 = vadd.f32 %v603, %v821
        %v823 = vpop.f32.mrf.mxu0
        %824 = vmatprep.mubr.f32.mxu0 %v548
        %825 = vmatmul.mubr.f32.gmra.mxu0 %v547
        %v826 = vpop.f32.mrf.mxu0
        %v827 = vadd.f32 %v603, %v826
        %v828 = vpop.f32.mrf.mxu0
        %829 = vdwg.mxu0
        %830 = vmatprep.subr.mxu0 0.0
        %831 = vmatpush1.msra.mxu0 %v597
        %832 = vmatprep.subr.mxu0 0.0
        %833 = vmatpush1.msra.mxu0 %v596
        %834 = vmatprep.subr.mxu0 0.0
        %835 = vmatpush1.msra.mxu0 %v595
        %836 = vmatprep.subr.mxu0 0.0
        %837 = vmatpush1.msra.mxu0 %v594
        %838 = vmatprep.subr.mxu0 0.0
        %839 = vmatpush1.msra.mxu0 %v593
        %840 = vmatprep.subr.mxu0 0.0
        %841 = vmatpush1.msra.mxu0 %v592
        %842 = vmatprep.subr.mxu0 0.0
        %843 = vmatpush1.msra.mxu0 %v591
        %844 = vmatprep.subr.mxu0 0.0
        %845 = vmatpush1.msra.mxu0 %v590
        %846 = vmatprep.subr.mxu0 0.0
        %847 = vmatpush1.msra.mxu0 %v589
        %848 = vmatprep.subr.mxu0 0.0
        %849 = vmatpush1.msra.mxu0 %v588
        %850 = vmatprep.subr.mxu0 0.0
        %851 = vmatpush1.msra.mxu0 %v587
        %852 = vmatprep.subr.mxu0 0.0
        %853 = vmatpush1.msra.mxu0 %v586
        %854 = vmatprep.subr.mxu0 0.0
        %855 = vmatpush1.msra.mxu0 %v585
        %856 = vmatprep.subr.mxu0 0.0
        %857 = vmatpush1.msra.mxu0 %v584
        %858 = vmatprep.subr.mxu0 0.0
        %859 = vmatpush1.msra.mxu0 %v583
        %860 = vmatprep.subr.mxu0 0.0
        %861 = vmatpush1.msra.mxu0 %v582
        %862 = vmatprep.subr.mxu0 0.0
        %863 = vmatpush2.msra.mxu0 0.0
        %864 = vmatprep.subr.mxu0 0.0
        %865 = vmatpush2.msra.mxu0 0.0
        %866 = vmatprep.subr.mxu0 0.0
        %867 = vmatpush2.msra.mxu0 0.0
        %868 = vmatprep.subr.mxu0 0.0
        %869 = vmatpush2.msra.mxu0 0.0
        %870 = vmatprep.subr.mxu0 0.0
        %871 = vmatpush2.msra.mxu0 0.0
        %872 = vmatprep.subr.mxu0 0.0
        %873 = vmatpush2.msra.mxu0 0.0
        %874 = vmatprep.subr.mxu0 0.0
        %875 = vmatpush2.msra.mxu0 0.0
        %876 = vmatprep.subr.mxu0 0.0
        %877 = vmatpush2.msra.mxu0 0.0
        %878 = vmatprep.subr.mxu0 0.0
        %879 = vmatpush2.msra.mxu0 0.0
        %880 = vmatprep.subr.mxu0 0.0
        %881 = vmatpush2.msra.mxu0 0.0
        %882 = vmatprep.subr.mxu0 0.0
        %883 = vmatpush2.msra.mxu0 0.0
        %884 = vmatprep.subr.mxu0 0.0
        %885 = vmatpush2.msra.mxu0 0.0
        %886 = vmatprep.subr.mxu0 0.0
        %887 = vmatpush2.msra.mxu0 0.0
        %888 = vmatprep.subr.mxu0 0.0
        %889 = vmatpush2.msra.mxu0 0.0
        %890 = vmatprep.subr.mxu0 0.0
        %891 = vmatpush2.msra.mxu0 0.0
        %892 = vmatprep.subr.mxu0 0.0
        %893 = vmatpush2.msra.mxu0 0.0
        %894 = vmatprep.mubr.f32.mxu0 0.0
        %895 = vmatmul.mubr.f32.gmra.mxu0 %v456
        %v896 = vpop.f32.mrf.mxu0
        %v897 = vadd.f32 %v672, %v896
        %v898 = vpop.f32.mrf.mxu0
        %899 = vmatprep.mubr.f32.mxu0 0.0
        %900 = vmatmul.mubr.f32.gmra.mxu0 %v459
        %v901 = vpop.f32.mrf.mxu0
        %v902 = vadd.f32 %v677, %v901
        %v903 = vpop.f32.mrf.mxu0
        %904 = vmatprep.mubr.f32.mxu0 0.0
        %905 = vmatmul.mubr.f32.gmra.mxu0 %v462
        %v906 = vpop.f32.mrf.mxu0
        %v907 = vadd.f32 %v682, %v906
        %v908 = vpop.f32.mrf.mxu0
        %909 = vmatprep.mubr.f32.mxu0 0.0
        %910 = vmatmul.mubr.f32.gmra.mxu0 %v465
        %v911 = vpop.f32.mrf.mxu0
        %v912 = vadd.f32 %v687, %v911
        %v913 = vpop.f32.mrf.mxu0
        %914 = vmatprep.mubr.f32.mxu0 0.0
        %915 = vmatmul.mubr.f32.gmra.mxu0 %v468
        %v916 = vpop.f32.mrf.mxu0
        %v917 = vadd.f32 %v692, %v916
        %v918 = vpop.f32.mrf.mxu0
        %919 = vmatprep.mubr.f32.mxu0 0.0
        %920 = vmatmul.mubr.f32.gmra.mxu0 %v471
        %v921 = vpop.f32.mrf.mxu0
        %v922 = vadd.f32 %v697, %v921
        %v923 = vpop.f32.mrf.mxu0
        %924 = vmatprep.mubr.f32.mxu0 0.0
        %925 = vmatmul.mubr.f32.gmra.mxu0 %v474
        %v926 = vpop.f32.mrf.mxu0
        %v927 = vadd.f32 %v702, %v926
        %v928 = vpop.f32.mrf.mxu0
        %929 = vmatprep.mubr.f32.mxu0 0.0
        %930 = vmatmul.mubr.f32.gmra.mxu0 %v477
        %v931 = vpop.f32.mrf.mxu0
        %v932 = vadd.f32 %v707, %v931
        %v933 = vpop.f32.mrf.mxu0
        %934 = vmatprep.mubr.f32.mxu0 0.0
        %935 = vmatmul.mubr.f32.gmra.mxu0 %v480
        %v936 = vpop.f32.mrf.mxu0
        %v937 = vadd.f32 %v712, %v936
        %v938 = vpop.f32.mrf.mxu0
        %939 = vmatprep.mubr.f32.mxu0 0.0
        %940 = vmatmul.mubr.f32.gmra.mxu0 %v483
        %v941 = vpop.f32.mrf.mxu0
        %v942 = vadd.f32 %v717, %v941
        %v943 = vpop.f32.mrf.mxu0
        %944 = vmatprep.mubr.f32.mxu0 0.0
        %945 = vmatmul.mubr.f32.gmra.mxu0 %v486
        %v946 = vpop.f32.mrf.mxu0
        %v947 = vadd.f32 %v722, %v946
        %v948 = vpop.f32.mrf.mxu0
        %949 = vmatprep.mubr.f32.mxu0 0.0
        %950 = vmatmul.mubr.f32.gmra.mxu0 %v489
        %v951 = vpop.f32.mrf.mxu0
        %v952 = vadd.f32 %v727, %v951
        %v953 = vpop.f32.mrf.mxu0
        %954 = vmatprep.mubr.f32.mxu0 0.0
        %955 = vmatmul.mubr.f32.gmra.mxu0 %v492
        %v956 = vpop.f32.mrf.mxu0
        %v957 = vadd.f32 %v732, %v956
        %v958 = vpop.f32.mrf.mxu0
        %959 = vmatprep.mubr.f32.mxu0 0.0
        %960 = vmatmul.mubr.f32.gmra.mxu0 %v495
        %v961 = vpop.f32.mrf.mxu0
        %v962 = vadd.f32 %v737, %v961
        %v963 = vpop.f32.mrf.mxu0
        %964 = vmatprep.mubr.f32.mxu0 0.0
        %965 = vmatmul.mubr.f32.gmra.mxu0 %v498
        %v966 = vpop.f32.mrf.mxu0
        %v967 = vadd.f32 %v742, %v966
        %v968 = vpop.f32.mrf.mxu0
        %969 = vmatprep.mubr.f32.mxu0 0.0
        %970 = vmatmul.mubr.f32.gmra.mxu0 %v501
        %v971 = vpop.f32.mrf.mxu0
        %v972 = vadd.f32 %v747, %v971
        %v973 = vpop.f32.mrf.mxu0
        %974 = vmatprep.mubr.f32.mxu0 0.0
        %975 = vmatmul.mubr.f32.gmra.mxu0 %v504
        %v976 = vpop.f32.mrf.mxu0
        %v977 = vadd.f32 %v752, %v976
        %v978 = vpop.f32.mrf.mxu0
        %979 = vmatprep.mubr.f32.mxu0 0.0
        %980 = vmatmul.mubr.f32.gmra.mxu0 %v507
        %v981 = vpop.f32.mrf.mxu0
        %v982 = vadd.f32 %v757, %v981
        %v983 = vpop.f32.mrf.mxu0
        %984 = vmatprep.mubr.f32.mxu0 0.0
        %985 = vmatmul.mubr.f32.gmra.mxu0 %v510
        %v986 = vpop.f32.mrf.mxu0
        %v987 = vadd.f32 %v762, %v986
        %v988 = vpop.f32.mrf.mxu0
        %989 = vmatprep.mubr.f32.mxu0 0.0
        %990 = vmatmul.mubr.f32.gmra.mxu0 %v513
        %v991 = vpop.f32.mrf.mxu0
        %v992 = vadd.f32 %v767, %v991
        %v993 = vpop.f32.mrf.mxu0
        %994 = vmatprep.mubr.f32.mxu0 0.0
        %995 = vmatmul.mubr.f32.gmra.mxu0 %v516
        %v996 = vpop.f32.mrf.mxu0
        %v997 = vadd.f32 %v772, %v996
        %v998 = vpop.f32.mrf.mxu0
        %999 = vmatprep.mubr.f32.mxu0 0.0
        %1000 = vmatmul.mubr.f32.gmra.mxu0 %v519
        %v1001 = vpop.f32.mrf.mxu0
        %v1002 = vadd.f32 %v777, %v1001
        %v1003 = vpop.f32.mrf.mxu0
        %1004 = vmatprep.mubr.f32.mxu0 0.0
        %1005 = vmatmul.mubr.f32.gmra.mxu0 %v522
        %v1006 = vpop.f32.mrf.mxu0
        %v1007 = vadd.f32 %v782, %v1006
        %v1008 = vpop.f32.mrf.mxu0
        %1009 = vmatprep.mubr.f32.mxu0 0.0
        %1010 = vmatmul.mubr.f32.gmra.mxu0 %v525
        %v1011 = vpop.f32.mrf.mxu0
        %v1012 = vadd.f32 %v787, %v1011
        %v1013 = vpop.f32.mrf.mxu0
        %1014 = vmatprep.mubr.f32.mxu0 0.0
        %1015 = vmatmul.mubr.f32.gmra.mxu0 %v528
        %v1016 = vpop.f32.mrf.mxu0
        %v1017 = vadd.f32 %v792, %v1016
        %v1018 = vpop.f32.mrf.mxu0
        %1019 = vmatprep.mubr.f32.mxu0 0.0
        %1020 = vmatmul.mubr.f32.gmra.mxu0 %v531
        %v1021 = vpop.f32.mrf.mxu0
        %v1022 = vadd.f32 %v797, %v1021
        %v1023 = vpop.f32.mrf.mxu0
        %1024 = vmatprep.mubr.f32.mxu0 0.0
        %1025 = vmatmul.mubr.f32.gmra.mxu0 %v534
        %v1026 = vpop.f32.mrf.mxu0
        %v1027 = vadd.f32 %v802, %v1026
        %v1028 = vpop.f32.mrf.mxu0
        %1029 = vmatprep.mubr.f32.mxu0 0.0
        %1030 = vmatmul.mubr.f32.gmra.mxu0 %v537
        %v1031 = vpop.f32.mrf.mxu0
        %v1032 = vadd.f32 %v807, %v1031
        %v1033 = vpop.f32.mrf.mxu0
        %1034 = vmatprep.mubr.f32.mxu0 0.0
        %1035 = vmatmul.mubr.f32.gmra.mxu0 %v540
        %v1036 = vpop.f32.mrf.mxu0
        %v1037 = vadd.f32 %v812, %v1036
        %v1038 = vpop.f32.mrf.mxu0
        %1039 = vmatprep.mubr.f32.mxu0 0.0
        %1040 = vmatmul.mubr.f32.gmra.mxu0 %v543
        %v1041 = vpop.f32.mrf.mxu0
        %v1042 = vadd.f32 %v817, %v1041
        %v1043 = vpop.f32.mrf.mxu0
        %1044 = vmatprep.mubr.f32.mxu0 0.0
        %1045 = vmatmul.mubr.f32.gmra.mxu0 %v546
        %v1046 = vpop.f32.mrf.mxu0
        %v1047 = vadd.f32 %v822, %v1046
        %v1048 = vpop.f32.mrf.mxu0
        %1049 = vmatprep.mubr.f32.mxu0 0.0
        %1050 = vmatmul.mubr.f32.gmra.mxu0 %v549
        %v1051 = vpop.f32.mrf.mxu0
        %v1052 = vadd.f32 %v827, %v1051
        %v1053 = vpop.f32.mrf.mxu0
        %1054 = vdwg.mxu0
        %v1055 = vmax.f32 %v897, 0.0
        %v1056 = vmax.f32 %v902, 0.0
        %v1057 = vmax.f32 %v907, 0.0
        %v1058 = vmax.f32 %v912, 0.0
        %v1059 = vmax.f32 %v917, 0.0
        %v1060 = vmax.f32 %v922, 0.0
        %v1061 = vmax.f32 %v927, 0.0
        %v1062 = vmax.f32 %v932, 0.0
        %v1063 = vmax.f32 %v937, 0.0
        %v1064 = vmax.f32 %v942, 0.0
        %v1065 = vmax.f32 %v947, 0.0
        %v1066 = vmax.f32 %v952, 0.0
        %v1067 = vmax.f32 %v957, 0.0
        %v1068 = vmax.f32 %v962, 0.0
        %v1069 = vmax.f32 %v967, 0.0
        %v1070 = vmax.f32 %v972, 0.0
        %v1071 = vmax.f32 %v977, 0.0
        %v1072 = vmax.f32 %v982, 0.0
        %v1073 = vmax.f32 %v987, 0.0
        %v1074 = vmax.f32 %v992, 0.0
        %v1075 = vmax.f32 %v997, 0.0
        %v1076 = vmax.f32 %v1002, 0.0
        %v1077 = vmax.f32 %v1007, 0.0
        %v1078 = vmax.f32 %v1012, 0.0
        %v1079 = vmax.f32 %v1017, 0.0
        %v1080 = vmax.f32 %v1022, 0.0
        %v1081 = vmax.f32 %v1027, 0.0
        %v1082 = vmax.f32 %v1032, 0.0
        %v1083 = vmax.f32 %v1037, 0.0
        %v1084 = vmax.f32 %v1042, 0.0
        %v1085 = vmax.f32 %v1047, 0.0
        %v1086 = vmax.f32 %v1052, 0.0
        %v1087 = vld [vmem:[#allocation7] sm:$0xff]
        %v1088 = vld [vmem:[#allocation7 + $0x8] sm:$0xff]
        %v1089 = vld [vmem:[#allocation7 + $0x10] sm:$0xff]
        %v1090 = vld [vmem:[#allocation7 + $0x18] sm:$0xff]
        %v1091 = vld [vmem:[#allocation7 + $0x20] sm:$0xff]
        %v1092 = vld [vmem:[#allocation7 + $0x28] sm:$0xff]
        %v1093 = vld [vmem:[#allocation7 + $0x30] sm:$0xff]
        %v1094 = vld [vmem:[#allocation7 + $0x38] sm:$0xff]
        %v1095 = vld [vmem:[#allocation7 + $0x40] sm:$0xff]
        %v1096 = vld [vmem:[#allocation7 + $0x48] sm:$0xff]
        %v1097 = vld [vmem:[#allocation7 + $0x50] sm:$0xff]
        %v1098 = vld [vmem:[#allocation7 + $0x58] sm:$0xff]
        %v1099 = vld [vmem:[#allocation7 + $0x60] sm:$0xff]
        %v1100 = vld [vmem:[#allocation7 + $0x68] sm:$0xff]
        %v1101 = vld [vmem:[#allocation7 + $0x70] sm:$0xff]
        %v1102 = vld [vmem:[#allocation7 + $0x78] sm:$0xff]
        %v1103 = vld [vmem:[#allocation7 + $0x80] sm:$0xff]
        %v1104 = vld [vmem:[#allocation7 + $0x88] sm:$0xff]
        %v1105 = vld [vmem:[#allocation7 + $0x90] sm:$0xff]
        %v1106 = vld [vmem:[#allocation7 + $0x98] sm:$0xff]
        %v1107 = vld [vmem:[#allocation7 + $0xa0] sm:$0xff]
        %v1108 = vld [vmem:[#allocation7 + $0xa8] sm:$0xff]
        %v1109 = vld [vmem:[#allocation7 + $0xb0] sm:$0xff]
        %v1110 = vld [vmem:[#allocation7 + $0xb8] sm:$0xff]
        %v1111 = vld [vmem:[#allocation7 + $0xc0] sm:$0xff]
        %v1112 = vld [vmem:[#allocation7 + $0xc8] sm:$0xff]
        %v1113 = vld [vmem:[#allocation7 + $0xd0] sm:$0xff]
        %v1114 = vld [vmem:[#allocation7 + $0xd8] sm:$0xff]
        %v1115 = vld [vmem:[#allocation7 + $0xe0] sm:$0xff]
        %v1116 = vld [vmem:[#allocation7 + $0xe8] sm:$0xff]
        %v1117 = vld [vmem:[#allocation7 + $0xf0] sm:$0xff]
        %v1118 = vld [vmem:[#allocation7 + $0xf8] sm:$0xff]
        %v1119 = vld [vmem:[#allocation7 + $0x100] sm:$0xff]
        %v1120 = vld [vmem:[#allocation7 + $0x108] sm:$0xff]
        %v1121 = vld [vmem:[#allocation7 + $0x110] sm:$0xff]
        %v1122 = vld [vmem:[#allocation7 + $0x118] sm:$0xff]
        %v1123 = vld [vmem:[#allocation7 + $0x120] sm:$0xff]
        %v1124 = vld [vmem:[#allocation7 + $0x128] sm:$0xff]
        %v1125 = vld [vmem:[#allocation7 + $0x130] sm:$0xff]
        %v1126 = vld [vmem:[#allocation7 + $0x138] sm:$0xff]
        %v1127 = vld [vmem:[#allocation7 + $0x140] sm:$0xff]
        %v1128 = vld [vmem:[#allocation7 + $0x148] sm:$0xff]
        %v1129 = vld [vmem:[#allocation7 + $0x150] sm:$0xff]
        %v1130 = vld [vmem:[#allocation7 + $0x158] sm:$0xff]
        %v1131 = vld [vmem:[#allocation7 + $0x160] sm:$0xff]
        %v1132 = vld [vmem:[#allocation7 + $0x168] sm:$0xff]
        %v1133 = vld [vmem:[#allocation7 + $0x170] sm:$0xff]
        %v1134 = vld [vmem:[#allocation7 + $0x178] sm:$0xff]
        %v1135 = vld [vmem:[#allocation7 + $0x180] sm:$0xff]
        %v1136 = vld [vmem:[#allocation7 + $0x188] sm:$0xff]
        %v1137 = vld [vmem:[#allocation7 + $0x190] sm:$0xff]
        %v1138 = vld [vmem:[#allocation7 + $0x198] sm:$0xff]
        %v1139 = vld [vmem:[#allocation7 + $0x1a0] sm:$0xff]
        %v1140 = vld [vmem:[#allocation7 + $0x1a8] sm:$0xff]
        %v1141 = vld [vmem:[#allocation7 + $0x1b0] sm:$0xff]
        %v1142 = vld [vmem:[#allocation7 + $0x1b8] sm:$0xff]
        %v1143 = vld [vmem:[#allocation7 + $0x1c0] sm:$0xff]
        %v1144 = vld [vmem:[#allocation7 + $0x1c8] sm:$0xff]
        %v1145 = vld [vmem:[#allocation7 + $0x1d0] sm:$0xff]
        %v1146 = vld [vmem:[#allocation7 + $0x1d8] sm:$0xff]
        %v1147 = vld [vmem:[#allocation7 + $0x1e0] sm:$0xff]
        %v1148 = vld [vmem:[#allocation7 + $0x1e8] sm:$0xff]
        %v1149 = vld [vmem:[#allocation7 + $0x1f0] sm:$0xff]
        %v1150 = vld [vmem:[#allocation7 + $0x1f8] sm:$0xff]
        %v1151 = vld [vmem:[#allocation7 + $0x200] sm:$0xff]
        %v1152 = vld [vmem:[#allocation7 + $0x208] sm:$0xff]
        %v1153 = vld [vmem:[#allocation7 + $0x210] sm:$0xff]
        %v1154 = vld [vmem:[#allocation7 + $0x218] sm:$0xff]
        %v1155 = vld [vmem:[#allocation7 + $0x220] sm:$0xff]
        %v1156 = vld [vmem:[#allocation7 + $0x228] sm:$0xff]
        %v1157 = vld [vmem:[#allocation7 + $0x230] sm:$0xff]
        %v1158 = vld [vmem:[#allocation7 + $0x238] sm:$0xff]
        %v1159 = vld [vmem:[#allocation7 + $0x240] sm:$0xff]
        %v1160 = vld [vmem:[#allocation7 + $0x248] sm:$0xff]
        %v1161 = vld [vmem:[#allocation7 + $0x250] sm:$0xff]
        %v1162 = vld [vmem:[#allocation7 + $0x258] sm:$0xff]
        %v1163 = vld [vmem:[#allocation7 + $0x260] sm:$0xff]
        %v1164 = vld [vmem:[#allocation7 + $0x268] sm:$0xff]
        %v1165 = vld [vmem:[#allocation7 + $0x270] sm:$0xff]
        %v1166 = vld [vmem:[#allocation7 + $0x278] sm:$0xff]
        %v1167 = vld [vmem:[#allocation8] sm:$0xff]
        %v1168 = vld [vmem:[#allocation8 + $0x8] sm:$0xff]
        %v1169 = vld [vmem:[#allocation8 + $0x10] sm:$0xff]
        %v1170 = vld [vmem:[#allocation8 + $0x18] sm:$0xff]
        %v1171 = vld [vmem:[#allocation8 + $0x20] sm:$0xff]
        %v1172 = vld [vmem:[#allocation8 + $0x28] sm:$0xff]
        %v1173 = vld [vmem:[#allocation8 + $0x30] sm:$0xff]
        %v1174 = vld [vmem:[#allocation8 + $0x38] sm:$0xff]
        %v1175 = vld [vmem:[#allocation8 + $0x40] sm:$0xff]
        %v1176 = vld [vmem:[#allocation8 + $0x48] sm:$0xff]
        %v1177 = vld [vmem:[#allocation8 + $0x50] sm:$0xff]
        %v1178 = vld [vmem:[#allocation8 + $0x58] sm:$0xff]
        %v1179 = vld [vmem:[#allocation8 + $0x60] sm:$0xff]
        %v1180 = vld [vmem:[#allocation8 + $0x68] sm:$0xff]
        %v1181 = vld [vmem:[#allocation8 + $0x70] sm:$0xff]
        %v1182 = vld [vmem:[#allocation8 + $0x78] sm:$0xff]
        %v1183 = vld [vmem:[#allocation8 + $0x80] sm:$0xff]
        %v1184 = vld [vmem:[#allocation8 + $0x88] sm:$0xff]
        %v1185 = vld [vmem:[#allocation8 + $0x90] sm:$0xff]
        %v1186 = vld [vmem:[#allocation8 + $0x98] sm:$0xff]
        %v1187 = vld [vmem:[#allocation8 + $0xa0] sm:$0xff]
        %v1188 = vld [vmem:[#allocation8 + $0xa8] sm:$0xff]
        %v1189 = vld [vmem:[#allocation8 + $0xb0] sm:$0xff]
        %v1190 = vld [vmem:[#allocation8 + $0xb8] sm:$0xff]
        %v1191 = vld [vmem:[#allocation8 + $0xc0] sm:$0xff]
        %v1192 = vld [vmem:[#allocation8 + $0xc8] sm:$0xff]
        %v1193 = vld [vmem:[#allocation8 + $0xd0] sm:$0xff]
        %v1194 = vld [vmem:[#allocation8 + $0xd8] sm:$0xff]
        %v1195 = vld [vmem:[#allocation8 + $0xe0] sm:$0xff]
        %v1196 = vld [vmem:[#allocation8 + $0xe8] sm:$0xff]
        %v1197 = vld [vmem:[#allocation8 + $0xf0] sm:$0xff]
        %v1198 = vld [vmem:[#allocation8 + $0xf8] sm:$0xff]
        %v1199 = vld [vmem:[#allocation8 + $0x100] sm:$0xff]
        %v1200 = vld [vmem:[#allocation8 + $0x108] sm:$0xff]
        %v1201 = vld [vmem:[#allocation8 + $0x110] sm:$0xff]
        %v1202 = vld [vmem:[#allocation8 + $0x118] sm:$0xff]
        %v1203 = vld [vmem:[#allocation8 + $0x120] sm:$0xff]
        %v1204 = vld [vmem:[#allocation8 + $0x128] sm:$0xff]
        %v1205 = vld [vmem:[#allocation8 + $0x130] sm:$0xff]
        %v1206 = vld [vmem:[#allocation8 + $0x138] sm:$0xff]
        %v1207 = vld [vmem:[#allocation8 + $0x140] sm:$0xff]
        %v1208 = vld [vmem:[#allocation8 + $0x148] sm:$0xff]
        %v1209 = vld [vmem:[#allocation8 + $0x150] sm:$0xff]
        %v1210 = vld [vmem:[#allocation8 + $0x158] sm:$0xff]
        %v1211 = vld [vmem:[#allocation8 + $0x160] sm:$0xff]
        %v1212 = vld [vmem:[#allocation8 + $0x168] sm:$0xff]
        %v1213 = vld [vmem:[#allocation8 + $0x170] sm:$0xff]
        %v1214 = vld [vmem:[#allocation8 + $0x178] sm:$0xff]
        %v1215 = vld [vmem:[#allocation8 + $0x180] sm:$0xff]
        %v1216 = vld [vmem:[#allocation8 + $0x188] sm:$0xff]
        %v1217 = vld [vmem:[#allocation8 + $0x190] sm:$0xff]
        %v1218 = vld [vmem:[#allocation8 + $0x198] sm:$0xff]
        %v1219 = vld [vmem:[#allocation8 + $0x1a0] sm:$0xff]
        %v1220 = vld [vmem:[#allocation8 + $0x1a8] sm:$0xff]
        %v1221 = vld [vmem:[#allocation8 + $0x1b0] sm:$0xff]
        %v1222 = vld [vmem:[#allocation8 + $0x1b8] sm:$0xff]
        %v1223 = vld [vmem:[#allocation8 + $0x1c0] sm:$0xff]
        %v1224 = vld [vmem:[#allocation8 + $0x1c8] sm:$0xff]
        %v1225 = vld [vmem:[#allocation8 + $0x1d0] sm:$0xff]
        %v1226 = vld [vmem:[#allocation8 + $0x1d8] sm:$0xff]
        %v1227 = vld [vmem:[#allocation8 + $0x1e0] sm:$0xff]
        %v1228 = vld [vmem:[#allocation8 + $0x1e8] sm:$0xff]
        %v1229 = vld [vmem:[#allocation8 + $0x1f0] sm:$0xff]
        %v1230 = vld [vmem:[#allocation8 + $0x1f8] sm:$0xff]
        %v1231 = vld [vmem:[#allocation8 + $0x200] sm:$0xff]
        %v1232 = vld [vmem:[#allocation8 + $0x208] sm:$0xff]
        %v1233 = vld [vmem:[#allocation8 + $0x210] sm:$0xff]
        %v1234 = vld [vmem:[#allocation8 + $0x218] sm:$0xff]
        %v1235 = vld [vmem:[#allocation8 + $0x220] sm:$0xff]
        %v1236 = vld [vmem:[#allocation8 + $0x228] sm:$0xff]
        %v1237 = vld [vmem:[#allocation8 + $0x230] sm:$0xff]
        %v1238 = vld [vmem:[#allocation8 + $0x238] sm:$0xff]
        %v1239 = vld [vmem:[#allocation8 + $0x240] sm:$0xff]
        %v1240 = vld [vmem:[#allocation8 + $0x248] sm:$0xff]
        %v1241 = vld [vmem:[#allocation8 + $0x250] sm:$0xff]
        %v1242 = vld [vmem:[#allocation8 + $0x258] sm:$0xff]
        %v1243 = vld [vmem:[#allocation8 + $0x260] sm:$0xff]
        %v1244 = vld [vmem:[#allocation8 + $0x268] sm:$0xff]
        %v1245 = vld [vmem:[#allocation8 + $0x270] sm:$0xff]
        %v1246 = vld [vmem:[#allocation8 + $0x278] sm:$0xff]
        %v1247 = vld [vmem:[#allocation8 + $0x280] sm:$0xff]
        %v1248 = vld [vmem:[#allocation8 + $0x288] sm:$0xff]
        %v1249 = vld [vmem:[#allocation8 + $0x290] sm:$0xff]
        %v1250 = vld [vmem:[#allocation8 + $0x298] sm:$0xff]
        %v1251 = vld [vmem:[#allocation8 + $0x2a0] sm:$0xff]
        %v1252 = vld [vmem:[#allocation8 + $0x2a8] sm:$0xff]
        %v1253 = vld [vmem:[#allocation8 + $0x2b0] sm:$0xff]
        %v1254 = vld [vmem:[#allocation8 + $0x2b8] sm:$0xff]
        %v1255 = vld [vmem:[#allocation8 + $0x2c0] sm:$0xff]
        %v1256 = vld [vmem:[#allocation8 + $0x2c8] sm:$0xff]
        %v1257 = vld [vmem:[#allocation8 + $0x2d0] sm:$0xff]
        %v1258 = vld [vmem:[#allocation8 + $0x2d8] sm:$0xff]
        %v1259 = vld [vmem:[#allocation8 + $0x2e0] sm:$0xff]
        %v1260 = vld [vmem:[#allocation8 + $0x2e8] sm:$0xff]
        %v1261 = vld [vmem:[#allocation8 + $0x2f0] sm:$0xff]
        %v1262 = vld [vmem:[#allocation8 + $0x2f8] sm:$0xff]
        %v1263 = vld [vmem:[#allocation8 + $0x300] sm:$0xff]
        %v1264 = vld [vmem:[#allocation8 + $0x308] sm:$0xff]
        %v1265 = vld [vmem:[#allocation8 + $0x310] sm:$0xff]
        %v1266 = vld [vmem:[#allocation8 + $0x318] sm:$0xff]
        %v1267 = vld [vmem:[#allocation8 + $0x320] sm:$0xff]
        %v1268 = vld [vmem:[#allocation8 + $0x328] sm:$0xff]
        %v1269 = vld [vmem:[#allocation8 + $0x330] sm:$0xff]
        %v1270 = vld [vmem:[#allocation8 + $0x338] sm:$0xff]
        %v1271 = vld [vmem:[#allocation8 + $0x340] sm:$0xff]
        %v1272 = vld [vmem:[#allocation8 + $0x348] sm:$0xff]
        %v1273 = vld [vmem:[#allocation8 + $0x350] sm:$0xff]
        %v1274 = vld [vmem:[#allocation8 + $0x358] sm:$0xff]
        %v1275 = vld [vmem:[#allocation8 + $0x360] sm:$0xff]
        %v1276 = vld [vmem:[#allocation8 + $0x368] sm:$0xff]
        %v1277 = vld [vmem:[#allocation8 + $0x370] sm:$0xff]
        %v1278 = vld [vmem:[#allocation8 + $0x378] sm:$0xff]
        %v1279 = vld [vmem:[#allocation8 + $0x380] sm:$0xff]
        %v1280 = vld [vmem:[#allocation8 + $0x388] sm:$0xff]
        %v1281 = vld [vmem:[#allocation8 + $0x390] sm:$0xff]
        %v1282 = vld [vmem:[#allocation8 + $0x398] sm:$0xff]
        %v1283 = vld [vmem:[#allocation8 + $0x3a0] sm:$0xff]
        %v1284 = vld [vmem:[#allocation8 + $0x3a8] sm:$0xff]
        %v1285 = vld [vmem:[#allocation8 + $0x3b0] sm:$0xff]
        %v1286 = vld [vmem:[#allocation8 + $0x3b8] sm:$0xff]
        %v1287 = vld [vmem:[#allocation8 + $0x3c0] sm:$0xff]
        %v1288 = vld [vmem:[#allocation8 + $0x3c8] sm:$0xff]
        %v1289 = vld [vmem:[#allocation8 + $0x3d0] sm:$0xff]
        %v1290 = vld [vmem:[#allocation8 + $0x3d8] sm:$0xff]
        %v1291 = vld [vmem:[#allocation8 + $0x3e0] sm:$0xff]
        %v1292 = vld [vmem:[#allocation8 + $0x3e8] sm:$0xff]
        %v1293 = vld [vmem:[#allocation8 + $0x3f0] sm:$0xff]
        %v1294 = vld [vmem:[#allocation8 + $0x3f8] sm:$0xff]
        %v1295 = vld [vmem:[#allocation8 + $0x400] sm:$0xff]
        %v1296 = vld [vmem:[#allocation8 + $0x408] sm:$0xff]
        %v1297 = vld [vmem:[#allocation8 + $0x410] sm:$0xff]
        %v1298 = vld [vmem:[#allocation8 + $0x418] sm:$0xff]
        %v1299 = vld [vmem:[#allocation8 + $0x420] sm:$0xff]
        %v1300 = vld [vmem:[#allocation8 + $0x428] sm:$0xff]
        %v1301 = vld [vmem:[#allocation8 + $0x430] sm:$0xff]
        %v1302 = vld [vmem:[#allocation8 + $0x438] sm:$0xff]
        %v1303 = vld [vmem:[#allocation8 + $0x440] sm:$0xff]
        %v1304 = vld [vmem:[#allocation8 + $0x448] sm:$0xff]
        %v1305 = vld [vmem:[#allocation8 + $0x450] sm:$0xff]
        %v1306 = vld [vmem:[#allocation8 + $0x458] sm:$0xff]
        %v1307 = vld [vmem:[#allocation8 + $0x460] sm:$0xff]
        %v1308 = vld [vmem:[#allocation8 + $0x468] sm:$0xff]
        %v1309 = vld [vmem:[#allocation8 + $0x470] sm:$0xff]
        %v1310 = vld [vmem:[#allocation8 + $0x478] sm:$0xff]
        %v1311 = vld [vmem:[#allocation8 + $0x480] sm:$0xff]
        %v1312 = vld [vmem:[#allocation8 + $0x488] sm:$0xff]
        %v1313 = vld [vmem:[#allocation8 + $0x490] sm:$0xff]
        %v1314 = vld [vmem:[#allocation8 + $0x498] sm:$0xff]
        %v1315 = vld [vmem:[#allocation8 + $0x4a0] sm:$0xff]
        %v1316 = vld [vmem:[#allocation8 + $0x4a8] sm:$0xff]
        %v1317 = vld [vmem:[#allocation8 + $0x4b0] sm:$0xff]
        %v1318 = vld [vmem:[#allocation8 + $0x4b8] sm:$0xff]
        %v1319 = vld [vmem:[#allocation8 + $0x4c0] sm:$0xff]
        %v1320 = vld [vmem:[#allocation8 + $0x4c8] sm:$0xff]
        %v1321 = vld [vmem:[#allocation8 + $0x4d0] sm:$0xff]
        %v1322 = vld [vmem:[#allocation8 + $0x4d8] sm:$0xff]
        %v1323 = vld [vmem:[#allocation8 + $0x4e0] sm:$0xff]
        %v1324 = vld [vmem:[#allocation8 + $0x4e8] sm:$0xff]
        %v1325 = vld [vmem:[#allocation8 + $0x4f0] sm:$0xff]
        %v1326 = vld [vmem:[#allocation8 + $0x4f8] sm:$0xff]
        %v1327 = vld [vmem:[#allocation8 + $0x500] sm:$0xff]
        %v1328 = vld [vmem:[#allocation8 + $0x508] sm:$0xff]
        %v1329 = vld [vmem:[#allocation8 + $0x510] sm:$0xff]
        %v1330 = vld [vmem:[#allocation8 + $0x518] sm:$0xff]
        %v1331 = vld [vmem:[#allocation8 + $0x520] sm:$0xff]
        %v1332 = vld [vmem:[#allocation8 + $0x528] sm:$0xff]
        %v1333 = vld [vmem:[#allocation8 + $0x530] sm:$0xff]
        %v1334 = vld [vmem:[#allocation8 + $0x538] sm:$0xff]
        %v1335 = vld [vmem:[#allocation8 + $0x540] sm:$0xff]
        %v1336 = vld [vmem:[#allocation8 + $0x548] sm:$0xff]
        %v1337 = vld [vmem:[#allocation8 + $0x550] sm:$0xff]
        %v1338 = vld [vmem:[#allocation8 + $0x558] sm:$0xff]
        %v1339 = vld [vmem:[#allocation8 + $0x560] sm:$0xff]
        %v1340 = vld [vmem:[#allocation8 + $0x568] sm:$0xff]
        %v1341 = vld [vmem:[#allocation8 + $0x570] sm:$0xff]
        %v1342 = vld [vmem:[#allocation8 + $0x578] sm:$0xff]
        %v1343 = vld [vmem:[#allocation8 + $0x580] sm:$0xff]
        %v1344 = vld [vmem:[#allocation8 + $0x588] sm:$0xff]
        %v1345 = vld [vmem:[#allocation8 + $0x590] sm:$0xff]
        %v1346 = vld [vmem:[#allocation8 + $0x598] sm:$0xff]
        %v1347 = vld [vmem:[#allocation8 + $0x5a0] sm:$0xff]
        %v1348 = vld [vmem:[#allocation8 + $0x5a8] sm:$0xff]
        %v1349 = vld [vmem:[#allocation8 + $0x5b0] sm:$0xff]
        %v1350 = vld [vmem:[#allocation8 + $0x5b8] sm:$0xff]
        %v1351 = vld [vmem:[#allocation8 + $0x5c0] sm:$0xff]
        %v1352 = vld [vmem:[#allocation8 + $0x5c8] sm:$0xff]
        %v1353 = vld [vmem:[#allocation8 + $0x5d0] sm:$0xff]
        %v1354 = vld [vmem:[#allocation8 + $0x5d8] sm:$0xff]
        %v1355 = vld [vmem:[#allocation8 + $0x5e0] sm:$0xff]
        %v1356 = vld [vmem:[#allocation8 + $0x5e8] sm:$0xff]
        %v1357 = vld [vmem:[#allocation8 + $0x5f0] sm:$0xff]
        %v1358 = vld [vmem:[#allocation8 + $0x5f8] sm:$0xff]
        %v1359 = vld [vmem:[#allocation8 + $0x600] sm:$0xff]
        %v1360 = vld [vmem:[#allocation8 + $0x608] sm:$0xff]
        %v1361 = vld [vmem:[#allocation8 + $0x610] sm:$0xff]
        %v1362 = vld [vmem:[#allocation8 + $0x618] sm:$0xff]
        %v1363 = vld [vmem:[#allocation8 + $0x620] sm:$0xff]
        %v1364 = vld [vmem:[#allocation8 + $0x628] sm:$0xff]
        %v1365 = vld [vmem:[#allocation8 + $0x630] sm:$0xff]
        %v1366 = vld [vmem:[#allocation8 + $0x638] sm:$0xff]
        %v1367 = vld [vmem:[#allocation8 + $0x640] sm:$0xff]
        %v1368 = vld [vmem:[#allocation8 + $0x648] sm:$0xff]
        %v1369 = vld [vmem:[#allocation8 + $0x650] sm:$0xff]
        %v1370 = vld [vmem:[#allocation8 + $0x658] sm:$0xff]
        %v1371 = vld [vmem:[#allocation8 + $0x660] sm:$0xff]
        %v1372 = vld [vmem:[#allocation8 + $0x668] sm:$0xff]
        %v1373 = vld [vmem:[#allocation8 + $0x670] sm:$0xff]
        %v1374 = vld [vmem:[#allocation8 + $0x678] sm:$0xff]
        %v1375 = vld [vmem:[#allocation8 + $0x680] sm:$0xff]
        %v1376 = vld [vmem:[#allocation8 + $0x688] sm:$0xff]
        %v1377 = vld [vmem:[#allocation8 + $0x690] sm:$0xff]
        %v1378 = vld [vmem:[#allocation8 + $0x698] sm:$0xff]
        %v1379 = vld [vmem:[#allocation8 + $0x6a0] sm:$0xff]
        %v1380 = vld [vmem:[#allocation8 + $0x6a8] sm:$0xff]
        %v1381 = vld [vmem:[#allocation8 + $0x6b0] sm:$0xff]
        %v1382 = vld [vmem:[#allocation8 + $0x6b8] sm:$0xff]
        %v1383 = vld [vmem:[#allocation8 + $0x6c0] sm:$0xff]
        %v1384 = vld [vmem:[#allocation8 + $0x6c8] sm:$0xff]
        %v1385 = vld [vmem:[#allocation8 + $0x6d0] sm:$0xff]
        %v1386 = vld [vmem:[#allocation8 + $0x6d8] sm:$0xff]
        %v1387 = vld [vmem:[#allocation8 + $0x6e0] sm:$0xff]
        %v1388 = vld [vmem:[#allocation8 + $0x6e8] sm:$0xff]
        %v1389 = vld [vmem:[#allocation8 + $0x6f0] sm:$0xff]
        %v1390 = vld [vmem:[#allocation8 + $0x6f8] sm:$0xff]
        %v1391 = vld [vmem:[#allocation8 + $0x700] sm:$0xff]
        %v1392 = vld [vmem:[#allocation8 + $0x708] sm:$0xff]
        %v1393 = vld [vmem:[#allocation8 + $0x710] sm:$0xff]
        %v1394 = vld [vmem:[#allocation8 + $0x718] sm:$0xff]
        %v1395 = vld [vmem:[#allocation8 + $0x720] sm:$0xff]
        %v1396 = vld [vmem:[#allocation8 + $0x728] sm:$0xff]
        %v1397 = vld [vmem:[#allocation8 + $0x730] sm:$0xff]
        %v1398 = vld [vmem:[#allocation8 + $0x738] sm:$0xff]
        %v1399 = vld [vmem:[#allocation8 + $0x740] sm:$0xff]
        %v1400 = vld [vmem:[#allocation8 + $0x748] sm:$0xff]
        %v1401 = vld [vmem:[#allocation8 + $0x750] sm:$0xff]
        %v1402 = vld [vmem:[#allocation8 + $0x758] sm:$0xff]
        %v1403 = vld [vmem:[#allocation8 + $0x760] sm:$0xff]
        %v1404 = vld [vmem:[#allocation8 + $0x768] sm:$0xff]
        %v1405 = vld [vmem:[#allocation8 + $0x770] sm:$0xff]
        %v1406 = vld [vmem:[#allocation8 + $0x778] sm:$0xff]
        %1407 = vmatprep.subr.mxu0 %v1243
        %1408 = vmatpush1.msra.mxu0 %v1242
        %1409 = vmatprep.subr.mxu0 %v1238
        %1410 = vmatpush1.msra.mxu0 %v1237
        %1411 = vmatprep.subr.mxu0 %v1233
        %1412 = vmatpush1.msra.mxu0 %v1232
        %1413 = vmatprep.subr.mxu0 %v1228
        %1414 = vmatpush1.msra.mxu0 %v1227
        %1415 = vmatprep.subr.mxu0 %v1223
        %1416 = vmatpush1.msra.mxu0 %v1222
        %1417 = vmatprep.subr.mxu0 %v1218
        %1418 = vmatpush1.msra.mxu0 %v1217
        %1419 = vmatprep.subr.mxu0 %v1213
        %1420 = vmatpush1.msra.mxu0 %v1212
        %1421 = vmatprep.subr.mxu0 %v1208
        %1422 = vmatpush1.msra.mxu0 %v1207
        %1423 = vmatprep.subr.mxu0 %v1203
        %1424 = vmatpush1.msra.mxu0 %v1202
        %1425 = vmatprep.subr.mxu0 %v1198
        %1426 = vmatpush1.msra.mxu0 %v1197
        %1427 = vmatprep.subr.mxu0 %v1193
        %1428 = vmatpush1.msra.mxu0 %v1192
        %1429 = vmatprep.subr.mxu0 %v1188
        %1430 = vmatpush1.msra.mxu0 %v1187
        %1431 = vmatprep.subr.mxu0 %v1183
        %1432 = vmatpush1.msra.mxu0 %v1182
        %1433 = vmatprep.subr.mxu0 %v1178
        %1434 = vmatpush1.msra.mxu0 %v1177
        %1435 = vmatprep.subr.mxu0 %v1173
        %1436 = vmatpush1.msra.mxu0 %v1172
        %1437 = vmatprep.subr.mxu0 %v1168
        %1438 = vmatpush1.msra.mxu0 %v1167
        %1439 = vmatprep.subr.mxu0 %v1323
        %1440 = vmatpush2.msra.mxu0 %v1322
        %1441 = vmatprep.subr.mxu0 %v1318
        %1442 = vmatpush2.msra.mxu0 %v1317
        %1443 = vmatprep.subr.mxu0 %v1313
        %1444 = vmatpush2.msra.mxu0 %v1312
        %1445 = vmatprep.subr.mxu0 %v1308
        %1446 = vmatpush2.msra.mxu0 %v1307
        %1447 = vmatprep.subr.mxu0 %v1303
        %1448 = vmatpush2.msra.mxu0 %v1302
        %1449 = vmatprep.subr.mxu0 %v1298
        %1450 = vmatpush2.msra.mxu0 %v1297
        %1451 = vmatprep.subr.mxu0 %v1293
        %1452 = vmatpush2.msra.mxu0 %v1292
        %1453 = vmatprep.subr.mxu0 %v1288
        %1454 = vmatpush2.msra.mxu0 %v1287
        %1455 = vmatprep.subr.mxu0 %v1283
        %1456 = vmatpush2.msra.mxu0 %v1282
        %1457 = vmatprep.subr.mxu0 %v1278
        %1458 = vmatpush2.msra.mxu0 %v1277
        %1459 = vmatprep.subr.mxu0 %v1273
        %1460 = vmatpush2.msra.mxu0 %v1272
        %1461 = vmatprep.subr.mxu0 %v1268
        %1462 = vmatpush2.msra.mxu0 %v1267
        %1463 = vmatprep.subr.mxu0 %v1263
        %1464 = vmatpush2.msra.mxu0 %v1262
        %1465 = vmatprep.subr.mxu0 %v1258
        %1466 = vmatpush2.msra.mxu0 %v1257
        %1467 = vmatprep.subr.mxu0 %v1253
        %1468 = vmatpush2.msra.mxu0 %v1252
        %1469 = vmatprep.subr.mxu0 %v1248
        %1470 = vmatpush2.msra.mxu0 %v1247
        %1471 = vmatprep.mubr.f32.mxu0 %v455
        %1472 = vmatmul.mubr.f32.gmra.mxu0 %v454
        %v1473 = vpop.f32.mrf.mxu0
        %v1474 = vadd.f32 0.0, %v1473
        %v1475 = vpop.f32.mrf.mxu0
        %v1476 = vadd.f32 0.0, %v1475
        %1477 = vmatprep.mubr.f32.mxu0 %v458
        %1478 = vmatmul.mubr.f32.gmra.mxu0 %v457
        %v1479 = vpop.f32.mrf.mxu0
        %v1480 = vadd.f32 0.0, %v1479
        %v1481 = vpop.f32.mrf.mxu0
        %v1482 = vadd.f32 0.0, %v1481
        %1483 = vmatprep.mubr.f32.mxu0 %v461
        %1484 = vmatmul.mubr.f32.gmra.mxu0 %v460
        %v1485 = vpop.f32.mrf.mxu0
        %v1486 = vadd.f32 0.0, %v1485
        %v1487 = vpop.f32.mrf.mxu0
        %v1488 = vadd.f32 0.0, %v1487
        %1489 = vmatprep.mubr.f32.mxu0 %v464
        %1490 = vmatmul.mubr.f32.gmra.mxu0 %v463
        %v1491 = vpop.f32.mrf.mxu0
        %v1492 = vadd.f32 0.0, %v1491
        %v1493 = vpop.f32.mrf.mxu0
        %v1494 = vadd.f32 0.0, %v1493
        %1495 = vmatprep.mubr.f32.mxu0 %v467
        %1496 = vmatmul.mubr.f32.gmra.mxu0 %v466
        %v1497 = vpop.f32.mrf.mxu0
        %v1498 = vadd.f32 0.0, %v1497
        %v1499 = vpop.f32.mrf.mxu0
        %v1500 = vadd.f32 0.0, %v1499
        %1501 = vmatprep.mubr.f32.mxu0 %v470
        %1502 = vmatmul.mubr.f32.gmra.mxu0 %v469
        %v1503 = vpop.f32.mrf.mxu0
        %v1504 = vadd.f32 0.0, %v1503
        %v1505 = vpop.f32.mrf.mxu0
        %v1506 = vadd.f32 0.0, %v1505
        %1507 = vmatprep.mubr.f32.mxu0 %v473
        %1508 = vmatmul.mubr.f32.gmra.mxu0 %v472
        %v1509 = vpop.f32.mrf.mxu0
        %v1510 = vadd.f32 0.0, %v1509
        %v1511 = vpop.f32.mrf.mxu0
        %v1512 = vadd.f32 0.0, %v1511
        %1513 = vmatprep.mubr.f32.mxu0 %v476
        %1514 = vmatmul.mubr.f32.gmra.mxu0 %v475
        %v1515 = vpop.f32.mrf.mxu0
        %v1516 = vadd.f32 0.0, %v1515
        %v1517 = vpop.f32.mrf.mxu0
        %v1518 = vadd.f32 0.0, %v1517
        %1519 = vmatprep.mubr.f32.mxu0 %v479
        %1520 = vmatmul.mubr.f32.gmra.mxu0 %v478
        %v1521 = vpop.f32.mrf.mxu0
        %v1522 = vadd.f32 0.0, %v1521
        %v1523 = vpop.f32.mrf.mxu0
        %v1524 = vadd.f32 0.0, %v1523
        %1525 = vmatprep.mubr.f32.mxu0 %v482
        %1526 = vmatmul.mubr.f32.gmra.mxu0 %v481
        %v1527 = vpop.f32.mrf.mxu0
        %v1528 = vadd.f32 0.0, %v1527
        %v1529 = vpop.f32.mrf.mxu0
        %v1530 = vadd.f32 0.0, %v1529
        %1531 = vmatprep.mubr.f32.mxu0 %v485
        %1532 = vmatmul.mubr.f32.gmra.mxu0 %v484
        %v1533 = vpop.f32.mrf.mxu0
        %v1534 = vadd.f32 0.0, %v1533
        %v1535 = vpop.f32.mrf.mxu0
        %v1536 = vadd.f32 0.0, %v1535
        %1537 = vmatprep.mubr.f32.mxu0 %v488
        %1538 = vmatmul.mubr.f32.gmra.mxu0 %v487
        %v1539 = vpop.f32.mrf.mxu0
        %v1540 = vadd.f32 0.0, %v1539
        %v1541 = vpop.f32.mrf.mxu0
        %v1542 = vadd.f32 0.0, %v1541
        %1543 = vmatprep.mubr.f32.mxu0 %v491
        %1544 = vmatmul.mubr.f32.gmra.mxu0 %v490
        %v1545 = vpop.f32.mrf.mxu0
        %v1546 = vadd.f32 0.0, %v1545
        %v1547 = vpop.f32.mrf.mxu0
        %v1548 = vadd.f32 0.0, %v1547
        %1549 = vmatprep.mubr.f32.mxu0 %v494
        %1550 = vmatmul.mubr.f32.gmra.mxu0 %v493
        %v1551 = vpop.f32.mrf.mxu0
        %v1552 = vadd.f32 0.0, %v1551
        %v1553 = vpop.f32.mrf.mxu0
        %v1554 = vadd.f32 0.0, %v1553
        %1555 = vmatprep.mubr.f32.mxu0 %v497
        %1556 = vmatmul.mubr.f32.gmra.mxu0 %v496
        %v1557 = vpop.f32.mrf.mxu0
        %v1558 = vadd.f32 0.0, %v1557
        %v1559 = vpop.f32.mrf.mxu0
        %v1560 = vadd.f32 0.0, %v1559
        %1561 = vmatprep.mubr.f32.mxu0 %v500
        %1562 = vmatmul.mubr.f32.gmra.mxu0 %v499
        %v1563 = vpop.f32.mrf.mxu0
        %v1564 = vadd.f32 0.0, %v1563
        %v1565 = vpop.f32.mrf.mxu0
        %v1566 = vadd.f32 0.0, %v1565
        %1567 = vmatprep.mubr.f32.mxu0 %v503
        %1568 = vmatmul.mubr.f32.gmra.mxu0 %v502
        %v1569 = vpop.f32.mrf.mxu0
        %v1570 = vadd.f32 0.0, %v1569
        %v1571 = vpop.f32.mrf.mxu0
        %v1572 = vadd.f32 0.0, %v1571
        %1573 = vmatprep.mubr.f32.mxu0 %v506
        %1574 = vmatmul.mubr.f32.gmra.mxu0 %v505
        %v1575 = vpop.f32.mrf.mxu0
        %v1576 = vadd.f32 0.0, %v1575
        %v1577 = vpop.f32.mrf.mxu0
        %v1578 = vadd.f32 0.0, %v1577
        %1579 = vmatprep.mubr.f32.mxu0 %v509
        %1580 = vmatmul.mubr.f32.gmra.mxu0 %v508
        %v1581 = vpop.f32.mrf.mxu0
        %v1582 = vadd.f32 0.0, %v1581
        %v1583 = vpop.f32.mrf.mxu0
        %v1584 = vadd.f32 0.0, %v1583
        %1585 = vmatprep.mubr.f32.mxu0 %v512
        %1586 = vmatmul.mubr.f32.gmra.mxu0 %v511
        %v1587 = vpop.f32.mrf.mxu0
        %v1588 = vadd.f32 0.0, %v1587
        %v1589 = vpop.f32.mrf.mxu0
        %v1590 = vadd.f32 0.0, %v1589
        %1591 = vmatprep.mubr.f32.mxu0 %v515
        %1592 = vmatmul.mubr.f32.gmra.mxu0 %v514
        %v1593 = vpop.f32.mrf.mxu0
        %v1594 = vadd.f32 0.0, %v1593
        %v1595 = vpop.f32.mrf.mxu0
        %v1596 = vadd.f32 0.0, %v1595
        %1597 = vmatprep.mubr.f32.mxu0 %v518
        %1598 = vmatmul.mubr.f32.gmra.mxu0 %v517
        %v1599 = vpop.f32.mrf.mxu0
        %v1600 = vadd.f32 0.0, %v1599
        %v1601 = vpop.f32.mrf.mxu0
        %v1602 = vadd.f32 0.0, %v1601
        %1603 = vmatprep.mubr.f32.mxu0 %v521
        %1604 = vmatmul.mubr.f32.gmra.mxu0 %v520
        %v1605 = vpop.f32.mrf.mxu0
        %v1606 = vadd.f32 0.0, %v1605
        %v1607 = vpop.f32.mrf.mxu0
        %v1608 = vadd.f32 0.0, %v1607
        %1609 = vmatprep.mubr.f32.mxu0 %v524
        %1610 = vmatmul.mubr.f32.gmra.mxu0 %v523
        %v1611 = vpop.f32.mrf.mxu0
        %v1612 = vadd.f32 0.0, %v1611
        %v1613 = vpop.f32.mrf.mxu0
        %v1614 = vadd.f32 0.0, %v1613
        %1615 = vmatprep.mubr.f32.mxu0 %v527
        %1616 = vmatmul.mubr.f32.gmra.mxu0 %v526
        %v1617 = vpop.f32.mrf.mxu0
        %v1618 = vadd.f32 0.0, %v1617
        %v1619 = vpop.f32.mrf.mxu0
        %v1620 = vadd.f32 0.0, %v1619
        %1621 = vmatprep.mubr.f32.mxu0 %v530
        %1622 = vmatmul.mubr.f32.gmra.mxu0 %v529
        %v1623 = vpop.f32.mrf.mxu0
        %v1624 = vadd.f32 0.0, %v1623
        %v1625 = vpop.f32.mrf.mxu0
        %v1626 = vadd.f32 0.0, %v1625
        %1627 = vmatprep.mubr.f32.mxu0 %v533
        %1628 = vmatmul.mubr.f32.gmra.mxu0 %v532
        %v1629 = vpop.f32.mrf.mxu0
        %v1630 = vadd.f32 0.0, %v1629
        %v1631 = vpop.f32.mrf.mxu0
        %v1632 = vadd.f32 0.0, %v1631
        %1633 = vmatprep.mubr.f32.mxu0 %v536
        %1634 = vmatmul.mubr.f32.gmra.mxu0 %v535
        %v1635 = vpop.f32.mrf.mxu0
        %v1636 = vadd.f32 0.0, %v1635
        %v1637 = vpop.f32.mrf.mxu0
        %v1638 = vadd.f32 0.0, %v1637
        %1639 = vmatprep.mubr.f32.mxu0 %v539
        %1640 = vmatmul.mubr.f32.gmra.mxu0 %v538
        %v1641 = vpop.f32.mrf.mxu0
        %v1642 = vadd.f32 0.0, %v1641
        %v1643 = vpop.f32.mrf.mxu0
        %v1644 = vadd.f32 0.0, %v1643
        %1645 = vmatprep.mubr.f32.mxu0 %v542
        %1646 = vmatmul.mubr.f32.gmra.mxu0 %v541
        %v1647 = vpop.f32.mrf.mxu0
        %v1648 = vadd.f32 0.0, %v1647
        %v1649 = vpop.f32.mrf.mxu0
        %v1650 = vadd.f32 0.0, %v1649
        %1651 = vmatprep.mubr.f32.mxu0 %v545
        %1652 = vmatmul.mubr.f32.gmra.mxu0 %v544
        %v1653 = vpop.f32.mrf.mxu0
        %v1654 = vadd.f32 0.0, %v1653
        %v1655 = vpop.f32.mrf.mxu0
        %v1656 = vadd.f32 0.0, %v1655
        %1657 = vmatprep.mubr.f32.mxu0 %v548
        %1658 = vmatmul.mubr.f32.gmra.mxu0 %v547
        %v1659 = vpop.f32.mrf.mxu0
        %v1660 = vadd.f32 0.0, %v1659
        %v1661 = vpop.f32.mrf.mxu0
        %v1662 = vadd.f32 0.0, %v1661
        %1663 = vdwg.mxu0
        %1664 = vmatprep.subr.mxu0 %v1403
        %1665 = vmatpush1.msra.mxu0 %v1402
        %1666 = vmatprep.subr.mxu0 %v1398
        %1667 = vmatpush1.msra.mxu0 %v1397
        %1668 = vmatprep.subr.mxu0 %v1393
        %1669 = vmatpush1.msra.mxu0 %v1392
        %1670 = vmatprep.subr.mxu0 %v1388
        %1671 = vmatpush1.msra.mxu0 %v1387
        %1672 = vmatprep.subr.mxu0 %v1383
        %1673 = vmatpush1.msra.mxu0 %v1382
        %1674 = vmatprep.subr.mxu0 %v1378
        %1675 = vmatpush1.msra.mxu0 %v1377
        %1676 = vmatprep.subr.mxu0 %v1373
        %1677 = vmatpush1.msra.mxu0 %v1372
        %1678 = vmatprep.subr.mxu0 %v1368
        %1679 = vmatpush1.msra.mxu0 %v1367
        %1680 = vmatprep.subr.mxu0 %v1363
        %1681 = vmatpush1.msra.mxu0 %v1362
        %1682 = vmatprep.subr.mxu0 %v1358
        %1683 = vmatpush1.msra.mxu0 %v1357
        %1684 = vmatprep.subr.mxu0 %v1353
        %1685 = vmatpush1.msra.mxu0 %v1352
        %1686 = vmatprep.subr.mxu0 %v1348
        %1687 = vmatpush1.msra.mxu0 %v1347
        %1688 = vmatprep.subr.mxu0 %v1343
        %1689 = vmatpush1.msra.mxu0 %v1342
        %1690 = vmatprep.subr.mxu0 %v1338
        %1691 = vmatpush1.msra.mxu0 %v1337
        %1692 = vmatprep.subr.mxu0 %v1333
        %1693 = vmatpush1.msra.mxu0 %v1332
        %1694 = vmatprep.subr.mxu0 %v1328
        %1695 = vmatpush1.msra.mxu0 %v1327
        %1696 = vmatprep.subr.mxu0 0.0
        %1697 = vmatpush2.msra.mxu0 0.0
        %1698 = vmatprep.subr.mxu0 0.0
        %1699 = vmatpush2.msra.mxu0 0.0
        %1700 = vmatprep.subr.mxu0 0.0
        %1701 = vmatpush2.msra.mxu0 0.0
        %1702 = vmatprep.subr.mxu0 0.0
        %1703 = vmatpush2.msra.mxu0 0.0
        %1704 = vmatprep.subr.mxu0 0.0
        %1705 = vmatpush2.msra.mxu0 0.0
        %1706 = vmatprep.subr.mxu0 0.0
        %1707 = vmatpush2.msra.mxu0 0.0
        %1708 = vmatprep.subr.mxu0 0.0
        %1709 = vmatpush2.msra.mxu0 0.0
        %1710 = vmatprep.subr.mxu0 0.0
        %1711 = vmatpush2.msra.mxu0 0.0
        %1712 = vmatprep.subr.mxu0 0.0
        %1713 = vmatpush2.msra.mxu0 0.0
        %1714 = vmatprep.subr.mxu0 0.0
        %1715 = vmatpush2.msra.mxu0 0.0
        %1716 = vmatprep.subr.mxu0 0.0
        %1717 = vmatpush2.msra.mxu0 0.0
        %1718 = vmatprep.subr.mxu0 0.0
        %1719 = vmatpush2.msra.mxu0 0.0
        %1720 = vmatprep.subr.mxu0 0.0
        %1721 = vmatpush2.msra.mxu0 0.0
        %1722 = vmatprep.subr.mxu0 0.0
        %1723 = vmatpush2.msra.mxu0 0.0
        %1724 = vmatprep.subr.mxu0 0.0
        %1725 = vmatpush2.msra.mxu0 0.0
        %1726 = vmatprep.subr.mxu0 0.0
        %1727 = vmatpush2.msra.mxu0 0.0
        %1728 = vmatprep.mubr.f32.mxu0 0.0
        %1729 = vmatmul.mubr.f32.gmra.mxu0 %v456
        %v1730 = vpop.f32.mrf.mxu0
        %v1731 = vadd.f32 %v1474, %v1730
        %v1732 = vpop.f32.mrf.mxu0
        %v1733 = vadd.f32 %v1476, %v1732
        %1734 = vmatprep.mubr.f32.mxu0 0.0
        %1735 = vmatmul.mubr.f32.gmra.mxu0 %v459
        %v1736 = vpop.f32.mrf.mxu0
        %v1737 = vadd.f32 %v1480, %v1736
        %v1738 = vpop.f32.mrf.mxu0
        %v1739 = vadd.f32 %v1482, %v1738
        %1740 = vmatprep.mubr.f32.mxu0 0.0
        %1741 = vmatmul.mubr.f32.gmra.mxu0 %v462
        %v1742 = vpop.f32.mrf.mxu0
        %v1743 = vadd.f32 %v1486, %v1742
        %v1744 = vpop.f32.mrf.mxu0
        %v1745 = vadd.f32 %v1488, %v1744
        %1746 = vmatprep.mubr.f32.mxu0 0.0
        %1747 = vmatmul.mubr.f32.gmra.mxu0 %v465
        %v1748 = vpop.f32.mrf.mxu0
        %v1749 = vadd.f32 %v1492, %v1748
        %v1750 = vpop.f32.mrf.mxu0
        %v1751 = vadd.f32 %v1494, %v1750
        %1752 = vmatprep.mubr.f32.mxu0 0.0
        %1753 = vmatmul.mubr.f32.gmra.mxu0 %v468
        %v1754 = vpop.f32.mrf.mxu0
        %v1755 = vadd.f32 %v1498, %v1754
        %v1756 = vpop.f32.mrf.mxu0
        %v1757 = vadd.f32 %v1500, %v1756
        %1758 = vmatprep.mubr.f32.mxu0 0.0
        %1759 = vmatmul.mubr.f32.gmra.mxu0 %v471
        %v1760 = vpop.f32.mrf.mxu0
        %v1761 = vadd.f32 %v1504, %v1760
        %v1762 = vpop.f32.mrf.mxu0
        %v1763 = vadd.f32 %v1506, %v1762
        %1764 = vmatprep.mubr.f32.mxu0 0.0
        %1765 = vmatmul.mubr.f32.gmra.mxu0 %v474
        %v1766 = vpop.f32.mrf.mxu0
        %v1767 = vadd.f32 %v1510, %v1766
        %v1768 = vpop.f32.mrf.mxu0
        %v1769 = vadd.f32 %v1512, %v1768
        %1770 = vmatprep.mubr.f32.mxu0 0.0
        %1771 = vmatmul.mubr.f32.gmra.mxu0 %v477
        %v1772 = vpop.f32.mrf.mxu0
        %v1773 = vadd.f32 %v1516, %v1772
        %v1774 = vpop.f32.mrf.mxu0
        %v1775 = vadd.f32 %v1518, %v1774
        %1776 = vmatprep.mubr.f32.mxu0 0.0
        %1777 = vmatmul.mubr.f32.gmra.mxu0 %v480
        %v1778 = vpop.f32.mrf.mxu0
        %v1779 = vadd.f32 %v1522, %v1778
        %v1780 = vpop.f32.mrf.mxu0
        %v1781 = vadd.f32 %v1524, %v1780
        %1782 = vmatprep.mubr.f32.mxu0 0.0
        %1783 = vmatmul.mubr.f32.gmra.mxu0 %v483
        %v1784 = vpop.f32.mrf.mxu0
        %v1785 = vadd.f32 %v1528, %v1784
        %v1786 = vpop.f32.mrf.mxu0
        %v1787 = vadd.f32 %v1530, %v1786
        %1788 = vmatprep.mubr.f32.mxu0 0.0
        %1789 = vmatmul.mubr.f32.gmra.mxu0 %v486
        %v1790 = vpop.f32.mrf.mxu0
        %v1791 = vadd.f32 %v1534, %v1790
        %v1792 = vpop.f32.mrf.mxu0
        %v1793 = vadd.f32 %v1536, %v1792
        %1794 = vmatprep.mubr.f32.mxu0 0.0
        %1795 = vmatmul.mubr.f32.gmra.mxu0 %v489
        %v1796 = vpop.f32.mrf.mxu0
        %v1797 = vadd.f32 %v1540, %v1796
        %v1798 = vpop.f32.mrf.mxu0
        %v1799 = vadd.f32 %v1542, %v1798
        %1800 = vmatprep.mubr.f32.mxu0 0.0
        %1801 = vmatmul.mubr.f32.gmra.mxu0 %v492
        %v1802 = vpop.f32.mrf.mxu0
        %v1803 = vadd.f32 %v1546, %v1802
        %v1804 = vpop.f32.mrf.mxu0
        %v1805 = vadd.f32 %v1548, %v1804
        %1806 = vmatprep.mubr.f32.mxu0 0.0
        %1807 = vmatmul.mubr.f32.gmra.mxu0 %v495
        %v1808 = vpop.f32.mrf.mxu0
        %v1809 = vadd.f32 %v1552, %v1808
        %v1810 = vpop.f32.mrf.mxu0
        %v1811 = vadd.f32 %v1554, %v1810
        %1812 = vmatprep.mubr.f32.mxu0 0.0
        %1813 = vmatmul.mubr.f32.gmra.mxu0 %v498
        %v1814 = vpop.f32.mrf.mxu0
        %v1815 = vadd.f32 %v1558, %v1814
        %v1816 = vpop.f32.mrf.mxu0
        %v1817 = vadd.f32 %v1560, %v1816
        %1818 = vmatprep.mubr.f32.mxu0 0.0
        %1819 = vmatmul.mubr.f32.gmra.mxu0 %v501
        %v1820 = vpop.f32.mrf.mxu0
        %v1821 = vadd.f32 %v1564, %v1820
        %v1822 = vpop.f32.mrf.mxu0
        %v1823 = vadd.f32 %v1566, %v1822
        %1824 = vmatprep.mubr.f32.mxu0 0.0
        %1825 = vmatmul.mubr.f32.gmra.mxu0 %v504
        %v1826 = vpop.f32.mrf.mxu0
        %v1827 = vadd.f32 %v1570, %v1826
        %v1828 = vpop.f32.mrf.mxu0
        %v1829 = vadd.f32 %v1572, %v1828
        %1830 = vmatprep.mubr.f32.mxu0 0.0
        %1831 = vmatmul.mubr.f32.gmra.mxu0 %v507
        %v1832 = vpop.f32.mrf.mxu0
        %v1833 = vadd.f32 %v1576, %v1832
        %v1834 = vpop.f32.mrf.mxu0
        %v1835 = vadd.f32 %v1578, %v1834
        %1836 = vmatprep.mubr.f32.mxu0 0.0
        %1837 = vmatmul.mubr.f32.gmra.mxu0 %v510
        %v1838 = vpop.f32.mrf.mxu0
        %v1839 = vadd.f32 %v1582, %v1838
        %v1840 = vpop.f32.mrf.mxu0
        %v1841 = vadd.f32 %v1584, %v1840
        %1842 = vmatprep.mubr.f32.mxu0 0.0
        %1843 = vmatmul.mubr.f32.gmra.mxu0 %v513
        %v1844 = vpop.f32.mrf.mxu0
        %v1845 = vadd.f32 %v1588, %v1844
        %v1846 = vpop.f32.mrf.mxu0
        %v1847 = vadd.f32 %v1590, %v1846
        %1848 = vmatprep.mubr.f32.mxu0 0.0
        %1849 = vmatmul.mubr.f32.gmra.mxu0 %v516
        %v1850 = vpop.f32.mrf.mxu0
        %v1851 = vadd.f32 %v1594, %v1850
        %v1852 = vpop.f32.mrf.mxu0
        %v1853 = vadd.f32 %v1596, %v1852
        %1854 = vmatprep.mubr.f32.mxu0 0.0
        %1855 = vmatmul.mubr.f32.gmra.mxu0 %v519
        %v1856 = vpop.f32.mrf.mxu0
        %v1857 = vadd.f32 %v1600, %v1856
        %v1858 = vpop.f32.mrf.mxu0
        %v1859 = vadd.f32 %v1602, %v1858
        %1860 = vmatprep.mubr.f32.mxu0 0.0
        %1861 = vmatmul.mubr.f32.gmra.mxu0 %v522
        %v1862 = vpop.f32.mrf.mxu0
        %v1863 = vadd.f32 %v1606, %v1862
        %v1864 = vpop.f32.mrf.mxu0
        %v1865 = vadd.f32 %v1608, %v1864
        %1866 = vmatprep.mubr.f32.mxu0 0.0
        %1867 = vmatmul.mubr.f32.gmra.mxu0 %v525
        %v1868 = vpop.f32.mrf.mxu0
        %v1869 = vadd.f32 %v1612, %v1868
        %v1870 = vpop.f32.mrf.mxu0
        %v1871 = vadd.f32 %v1614, %v1870
        %1872 = vmatprep.mubr.f32.mxu0 0.0
        %1873 = vmatmul.mubr.f32.gmra.mxu0 %v528
        %v1874 = vpop.f32.mrf.mxu0
        %v1875 = vadd.f32 %v1618, %v1874
        %v1876 = vpop.f32.mrf.mxu0
        %v1877 = vadd.f32 %v1620, %v1876
        %1878 = vmatprep.mubr.f32.mxu0 0.0
        %1879 = vmatmul.mubr.f32.gmra.mxu0 %v531
        %v1880 = vpop.f32.mrf.mxu0
        %v1881 = vadd.f32 %v1624, %v1880
        %v1882 = vpop.f32.mrf.mxu0
        %v1883 = vadd.f32 %v1626, %v1882
        %1884 = vmatprep.mubr.f32.mxu0 0.0
        %1885 = vmatmul.mubr.f32.gmra.mxu0 %v534
        %v1886 = vpop.f32.mrf.mxu0
        %v1887 = vadd.f32 %v1630, %v1886
        %v1888 = vpop.f32.mrf.mxu0
        %v1889 = vadd.f32 %v1632, %v1888
        %1890 = vmatprep.mubr.f32.mxu0 0.0
        %1891 = vmatmul.mubr.f32.gmra.mxu0 %v537
        %v1892 = vpop.f32.mrf.mxu0
        %v1893 = vadd.f32 %v1636, %v1892
        %v1894 = vpop.f32.mrf.mxu0
        %v1895 = vadd.f32 %v1638, %v1894
        %1896 = vmatprep.mubr.f32.mxu0 0.0
        %1897 = vmatmul.mubr.f32.gmra.mxu0 %v540
        %v1898 = vpop.f32.mrf.mxu0
        %v1899 = vadd.f32 %v1642, %v1898
        %v1900 = vpop.f32.mrf.mxu0
        %v1901 = vadd.f32 %v1644, %v1900
        %1902 = vmatprep.mubr.f32.mxu0 0.0
        %1903 = vmatmul.mubr.f32.gmra.mxu0 %v543
        %v1904 = vpop.f32.mrf.mxu0
        %v1905 = vadd.f32 %v1648, %v1904
        %v1906 = vpop.f32.mrf.mxu0
        %v1907 = vadd.f32 %v1650, %v1906
        %1908 = vmatprep.mubr.f32.mxu0 0.0
        %1909 = vmatmul.mubr.f32.gmra.mxu0 %v546
        %v1910 = vpop.f32.mrf.mxu0
        %v1911 = vadd.f32 %v1654, %v1910
        %v1912 = vpop.f32.mrf.mxu0
        %v1913 = vadd.f32 %v1656, %v1912
        %1914 = vmatprep.mubr.f32.mxu0 0.0
        %1915 = vmatmul.mubr.f32.gmra.mxu0 %v549
        %v1916 = vpop.f32.mrf.mxu0
        %v1917 = vadd.f32 %v1660, %v1916
        %v1918 = vpop.f32.mrf.mxu0
        %v1919 = vadd.f32 %v1662, %v1918
        %1920 = vdwg.mxu0
        %1921 = vmatprep.subr.mxu0 %v1245
        %1922 = vmatpush1.msra.mxu0 %v1244
        %1923 = vmatprep.subr.mxu0 %v1240
        %1924 = vmatpush1.msra.mxu0 %v1239
        %1925 = vmatprep.subr.mxu0 %v1235
        %1926 = vmatpush1.msra.mxu0 %v1234
        %1927 = vmatprep.subr.mxu0 %v1230
        %1928 = vmatpush1.msra.mxu0 %v1229
        %1929 = vmatprep.subr.mxu0 %v1225
        %1930 = vmatpush1.msra.mxu0 %v1224
        %1931 = vmatprep.subr.mxu0 %v1220
        %1932 = vmatpush1.msra.mxu0 %v1219
        %1933 = vmatprep.subr.mxu0 %v1215
        %1934 = vmatpush1.msra.mxu0 %v1214
        %1935 = vmatprep.subr.mxu0 %v1210
        %1936 = vmatpush1.msra.mxu0 %v1209
        %1937 = vmatprep.subr.mxu0 %v1205
        %1938 = vmatpush1.msra.mxu0 %v1204
        %1939 = vmatprep.subr.mxu0 %v1200
        %1940 = vmatpush1.msra.mxu0 %v1199
        %1941 = vmatprep.subr.mxu0 %v1195
        %1942 = vmatpush1.msra.mxu0 %v1194
        %1943 = vmatprep.subr.mxu0 %v1190
        %1944 = vmatpush1.msra.mxu0 %v1189
        %1945 = vmatprep.subr.mxu0 %v1185
        %1946 = vmatpush1.msra.mxu0 %v1184
        %1947 = vmatprep.subr.mxu0 %v1180
        %1948 = vmatpush1.msra.mxu0 %v1179
        %1949 = vmatprep.subr.mxu0 %v1175
        %1950 = vmatpush1.msra.mxu0 %v1174
        %1951 = vmatprep.subr.mxu0 %v1170
        %1952 = vmatpush1.msra.mxu0 %v1169
        %1953 = vmatprep.subr.mxu0 %v1325
        %1954 = vmatpush2.msra.mxu0 %v1324
        %1955 = vmatprep.subr.mxu0 %v1320
        %1956 = vmatpush2.msra.mxu0 %v1319
        %1957 = vmatprep.subr.mxu0 %v1315
        %1958 = vmatpush2.msra.mxu0 %v1314
        %1959 = vmatprep.subr.mxu0 %v1310
        %1960 = vmatpush2.msra.mxu0 %v1309
        %1961 = vmatprep.subr.mxu0 %v1305
        %1962 = vmatpush2.msra.mxu0 %v1304
        %1963 = vmatprep.subr.mxu0 %v1300
        %1964 = vmatpush2.msra.mxu0 %v1299
        %1965 = vmatprep.subr.mxu0 %v1295
        %1966 = vmatpush2.msra.mxu0 %v1294
        %1967 = vmatprep.subr.mxu0 %v1290
        %1968 = vmatpush2.msra.mxu0 %v1289
        %1969 = vmatprep.subr.mxu0 %v1285
        %1970 = vmatpush2.msra.mxu0 %v1284
        %1971 = vmatprep.subr.mxu0 %v1280
        %1972 = vmatpush2.msra.mxu0 %v1279
        %1973 = vmatprep.subr.mxu0 %v1275
        %1974 = vmatpush2.msra.mxu0 %v1274
        %1975 = vmatprep.subr.mxu0 %v1270
        %1976 = vmatpush2.msra.mxu0 %v1269
        %1977 = vmatprep.subr.mxu0 %v1265
        %1978 = vmatpush2.msra.mxu0 %v1264
        %1979 = vmatprep.subr.mxu0 %v1260
        %1980 = vmatpush2.msra.mxu0 %v1259
        %1981 = vmatprep.subr.mxu0 %v1255
        %1982 = vmatpush2.msra.mxu0 %v1254
        %1983 = vmatprep.subr.mxu0 %v1250
        %1984 = vmatpush2.msra.mxu0 %v1249
        %1985 = vmatprep.mubr.f32.mxu0 %v455
        %1986 = vmatmul.mubr.f32.gmra.mxu0 %v454
        %v1987 = vpop.f32.mrf.mxu0
        %v1988 = vadd.f32 0.0, %v1987
        %v1989 = vpop.f32.mrf.mxu0
        %v1990 = vadd.f32 0.0, %v1989
        %1991 = vmatprep.mubr.f32.mxu0 %v458
        %1992 = vmatmul.mubr.f32.gmra.mxu0 %v457
        %v1993 = vpop.f32.mrf.mxu0
        %v1994 = vadd.f32 0.0, %v1993
        %v1995 = vpop.f32.mrf.mxu0
        %v1996 = vadd.f32 0.0, %v1995
        %1997 = vmatprep.mubr.f32.mxu0 %v461
        %1998 = vmatmul.mubr.f32.gmra.mxu0 %v460
        %v1999 = vpop.f32.mrf.mxu0
        %v2000 = vadd.f32 0.0, %v1999
        %v2001 = vpop.f32.mrf.mxu0
        %v2002 = vadd.f32 0.0, %v2001
        %2003 = vmatprep.mubr.f32.mxu0 %v464
        %2004 = vmatmul.mubr.f32.gmra.mxu0 %v463
        %v2005 = vpop.f32.mrf.mxu0
        %v2006 = vadd.f32 0.0, %v2005
        %v2007 = vpop.f32.mrf.mxu0
        %v2008 = vadd.f32 0.0, %v2007
        %2009 = vmatprep.mubr.f32.mxu0 %v467
        %2010 = vmatmul.mubr.f32.gmra.mxu0 %v466
        %v2011 = vpop.f32.mrf.mxu0
        %v2012 = vadd.f32 0.0, %v2011
        %v2013 = vpop.f32.mrf.mxu0
        %v2014 = vadd.f32 0.0, %v2013
        %2015 = vmatprep.mubr.f32.mxu0 %v470
        %2016 = vmatmul.mubr.f32.gmra.mxu0 %v469
        %v2017 = vpop.f32.mrf.mxu0
        %v2018 = vadd.f32 0.0, %v2017
        %v2019 = vpop.f32.mrf.mxu0
        %v2020 = vadd.f32 0.0, %v2019
        %2021 = vmatprep.mubr.f32.mxu0 %v473
        %2022 = vmatmul.mubr.f32.gmra.mxu0 %v472
        %v2023 = vpop.f32.mrf.mxu0
        %v2024 = vadd.f32 0.0, %v2023
        %v2025 = vpop.f32.mrf.mxu0
        %v2026 = vadd.f32 0.0, %v2025
        %2027 = vmatprep.mubr.f32.mxu0 %v476
        %2028 = vmatmul.mubr.f32.gmra.mxu0 %v475
        %v2029 = vpop.f32.mrf.mxu0
        %v2030 = vadd.f32 0.0, %v2029
        %v2031 = vpop.f32.mrf.mxu0
        %v2032 = vadd.f32 0.0, %v2031
        %2033 = vmatprep.mubr.f32.mxu0 %v479
        %2034 = vmatmul.mubr.f32.gmra.mxu0 %v478
        %v2035 = vpop.f32.mrf.mxu0
        %v2036 = vadd.f32 0.0, %v2035
        %v2037 = vpop.f32.mrf.mxu0
        %v2038 = vadd.f32 0.0, %v2037
        %2039 = vmatprep.mubr.f32.mxu0 %v482
        %2040 = vmatmul.mubr.f32.gmra.mxu0 %v481
        %v2041 = vpop.f32.mrf.mxu0
        %v2042 = vadd.f32 0.0, %v2041
        %v2043 = vpop.f32.mrf.mxu0
        %v2044 = vadd.f32 0.0, %v2043
        %2045 = vmatprep.mubr.f32.mxu0 %v485
        %2046 = vmatmul.mubr.f32.gmra.mxu0 %v484
        %v2047 = vpop.f32.mrf.mxu0
        %v2048 = vadd.f32 0.0, %v2047
        %v2049 = vpop.f32.mrf.mxu0
        %v2050 = vadd.f32 0.0, %v2049
        %2051 = vmatprep.mubr.f32.mxu0 %v488
        %2052 = vmatmul.mubr.f32.gmra.mxu0 %v487
        %v2053 = vpop.f32.mrf.mxu0
        %v2054 = vadd.f32 0.0, %v2053
        %v2055 = vpop.f32.mrf.mxu0
        %v2056 = vadd.f32 0.0, %v2055
        %2057 = vmatprep.mubr.f32.mxu0 %v491
        %2058 = vmatmul.mubr.f32.gmra.mxu0 %v490
        %v2059 = vpop.f32.mrf.mxu0
        %v2060 = vadd.f32 0.0, %v2059
        %v2061 = vpop.f32.mrf.mxu0
        %v2062 = vadd.f32 0.0, %v2061
        %2063 = vmatprep.mubr.f32.mxu0 %v494
        %2064 = vmatmul.mubr.f32.gmra.mxu0 %v493
        %v2065 = vpop.f32.mrf.mxu0
        %v2066 = vadd.f32 0.0, %v2065
        %v2067 = vpop.f32.mrf.mxu0
        %v2068 = vadd.f32 0.0, %v2067
        %2069 = vmatprep.mubr.f32.mxu0 %v497
        %2070 = vmatmul.mubr.f32.gmra.mxu0 %v496
        %v2071 = vpop.f32.mrf.mxu0
        %v2072 = vadd.f32 0.0, %v2071
        %v2073 = vpop.f32.mrf.mxu0
        %v2074 = vadd.f32 0.0, %v2073
        %2075 = vmatprep.mubr.f32.mxu0 %v500
        %2076 = vmatmul.mubr.f32.gmra.mxu0 %v499
        %v2077 = vpop.f32.mrf.mxu0
        %v2078 = vadd.f32 0.0, %v2077
        %v2079 = vpop.f32.mrf.mxu0
        %v2080 = vadd.f32 0.0, %v2079
        %2081 = vmatprep.mubr.f32.mxu0 %v503
        %2082 = vmatmul.mubr.f32.gmra.mxu0 %v502
        %v2083 = vpop.f32.mrf.mxu0
        %v2084 = vadd.f32 0.0, %v2083
        %v2085 = vpop.f32.mrf.mxu0
        %v2086 = vadd.f32 0.0, %v2085
        %2087 = vmatprep.mubr.f32.mxu0 %v506
        %2088 = vmatmul.mubr.f32.gmra.mxu0 %v505
        %v2089 = vpop.f32.mrf.mxu0
        %v2090 = vadd.f32 0.0, %v2089
        %v2091 = vpop.f32.mrf.mxu0
        %v2092 = vadd.f32 0.0, %v2091
        %2093 = vmatprep.mubr.f32.mxu0 %v509
        %2094 = vmatmul.mubr.f32.gmra.mxu0 %v508
        %v2095 = vpop.f32.mrf.mxu0
        %v2096 = vadd.f32 0.0, %v2095
        %v2097 = vpop.f32.mrf.mxu0
        %v2098 = vadd.f32 0.0, %v2097
        %2099 = vmatprep.mubr.f32.mxu0 %v512
        %2100 = vmatmul.mubr.f32.gmra.mxu0 %v511
        %v2101 = vpop.f32.mrf.mxu0
        %v2102 = vadd.f32 0.0, %v2101
        %v2103 = vpop.f32.mrf.mxu0
        %v2104 = vadd.f32 0.0, %v2103
        %2105 = vmatprep.mubr.f32.mxu0 %v515
        %2106 = vmatmul.mubr.f32.gmra.mxu0 %v514
        %v2107 = vpop.f32.mrf.mxu0
        %v2108 = vadd.f32 0.0, %v2107
        %v2109 = vpop.f32.mrf.mxu0
        %v2110 = vadd.f32 0.0, %v2109
        %2111 = vmatprep.mubr.f32.mxu0 %v518
        %2112 = vmatmul.mubr.f32.gmra.mxu0 %v517
        %v2113 = vpop.f32.mrf.mxu0
        %v2114 = vadd.f32 0.0, %v2113
        %v2115 = vpop.f32.mrf.mxu0
        %v2116 = vadd.f32 0.0, %v2115
        %2117 = vmatprep.mubr.f32.mxu0 %v521
        %2118 = vmatmul.mubr.f32.gmra.mxu0 %v520
        %v2119 = vpop.f32.mrf.mxu0
        %v2120 = vadd.f32 0.0, %v2119
        %v2121 = vpop.f32.mrf.mxu0
        %v2122 = vadd.f32 0.0, %v2121
        %2123 = vmatprep.mubr.f32.mxu0 %v524
        %2124 = vmatmul.mubr.f32.gmra.mxu0 %v523
        %v2125 = vpop.f32.mrf.mxu0
        %v2126 = vadd.f32 0.0, %v2125
        %v2127 = vpop.f32.mrf.mxu0
        %v2128 = vadd.f32 0.0, %v2127
        %2129 = vmatprep.mubr.f32.mxu0 %v527
        %2130 = vmatmul.mubr.f32.gmra.mxu0 %v526
        %v2131 = vpop.f32.mrf.mxu0
        %v2132 = vadd.f32 0.0, %v2131
        %v2133 = vpop.f32.mrf.mxu0
        %v2134 = vadd.f32 0.0, %v2133
        %2135 = vmatprep.mubr.f32.mxu0 %v530
        %2136 = vmatmul.mubr.f32.gmra.mxu0 %v529
        %v2137 = vpop.f32.mrf.mxu0
        %v2138 = vadd.f32 0.0, %v2137
        %v2139 = vpop.f32.mrf.mxu0
        %v2140 = vadd.f32 0.0, %v2139
        %2141 = vmatprep.mubr.f32.mxu0 %v533
        %2142 = vmatmul.mubr.f32.gmra.mxu0 %v532
        %v2143 = vpop.f32.mrf.mxu0
        %v2144 = vadd.f32 0.0, %v2143
        %v2145 = vpop.f32.mrf.mxu0
        %v2146 = vadd.f32 0.0, %v2145
        %2147 = vmatprep.mubr.f32.mxu0 %v536
        %2148 = vmatmul.mubr.f32.gmra.mxu0 %v535
        %v2149 = vpop.f32.mrf.mxu0
        %v2150 = vadd.f32 0.0, %v2149
        %v2151 = vpop.f32.mrf.mxu0
        %v2152 = vadd.f32 0.0, %v2151
        %2153 = vmatprep.mubr.f32.mxu0 %v539
        %2154 = vmatmul.mubr.f32.gmra.mxu0 %v538
        %v2155 = vpop.f32.mrf.mxu0
        %v2156 = vadd.f32 0.0, %v2155
        %v2157 = vpop.f32.mrf.mxu0
        %v2158 = vadd.f32 0.0, %v2157
        %2159 = vmatprep.mubr.f32.mxu0 %v542
        %2160 = vmatmul.mubr.f32.gmra.mxu0 %v541
        %v2161 = vpop.f32.mrf.mxu0
        %v2162 = vadd.f32 0.0, %v2161
        %v2163 = vpop.f32.mrf.mxu0
        %v2164 = vadd.f32 0.0, %v2163
        %2165 = vmatprep.mubr.f32.mxu0 %v545
        %2166 = vmatmul.mubr.f32.gmra.mxu0 %v544
        %v2167 = vpop.f32.mrf.mxu0
        %v2168 = vadd.f32 0.0, %v2167
        %v2169 = vpop.f32.mrf.mxu0
        %v2170 = vadd.f32 0.0, %v2169
        %2171 = vmatprep.mubr.f32.mxu0 %v548
        %2172 = vmatmul.mubr.f32.gmra.mxu0 %v547
        %v2173 = vpop.f32.mrf.mxu0
        %v2174 = vadd.f32 0.0, %v2173
        %v2175 = vpop.f32.mrf.mxu0
        %v2176 = vadd.f32 0.0, %v2175
        %2177 = vdwg.mxu0
        %2178 = vmatprep.subr.mxu0 %v1405
        %2179 = vmatpush1.msra.mxu0 %v1404
        %2180 = vmatprep.subr.mxu0 %v1400
        %2181 = vmatpush1.msra.mxu0 %v1399
        %2182 = vmatprep.subr.mxu0 %v1395
        %2183 = vmatpush1.msra.mxu0 %v1394
        %2184 = vmatprep.subr.mxu0 %v1390
        %2185 = vmatpush1.msra.mxu0 %v1389
        %2186 = vmatprep.subr.mxu0 %v1385
        %2187 = vmatpush1.msra.mxu0 %v1384
        %2188 = vmatprep.subr.mxu0 %v1380
        %2189 = vmatpush1.msra.mxu0 %v1379
        %2190 = vmatprep.subr.mxu0 %v1375
        %2191 = vmatpush1.msra.mxu0 %v1374
        %2192 = vmatprep.subr.mxu0 %v1370
        %2193 = vmatpush1.msra.mxu0 %v1369
        %2194 = vmatprep.subr.mxu0 %v1365
        %2195 = vmatpush1.msra.mxu0 %v1364
        %2196 = vmatprep.subr.mxu0 %v1360
        %2197 = vmatpush1.msra.mxu0 %v1359
        %2198 = vmatprep.subr.mxu0 %v1355
        %2199 = vmatpush1.msra.mxu0 %v1354
        %2200 = vmatprep.subr.mxu0 %v1350
        %2201 = vmatpush1.msra.mxu0 %v1349
        %2202 = vmatprep.subr.mxu0 %v1345
        %2203 = vmatpush1.msra.mxu0 %v1344
        %2204 = vmatprep.subr.mxu0 %v1340
        %2205 = vmatpush1.msra.mxu0 %v1339
        %2206 = vmatprep.subr.mxu0 %v1335
        %2207 = vmatpush1.msra.mxu0 %v1334
        %2208 = vmatprep.subr.mxu0 %v1330
        %2209 = vmatpush1.msra.mxu0 %v1329
        %2210 = vmatprep.subr.mxu0 0.0
        %2211 = vmatpush2.msra.mxu0 0.0
        %2212 = vmatprep.subr.mxu0 0.0
        %2213 = vmatpush2.msra.mxu0 0.0
        %2214 = vmatprep.subr.mxu0 0.0
        %2215 = vmatpush2.msra.mxu0 0.0
        %2216 = vmatprep.subr.mxu0 0.0
        %2217 = vmatpush2.msra.mxu0 0.0
        %2218 = vmatprep.subr.mxu0 0.0
        %2219 = vmatpush2.msra.mxu0 0.0
        %2220 = vmatprep.subr.mxu0 0.0
        %2221 = vmatpush2.msra.mxu0 0.0
        %2222 = vmatprep.subr.mxu0 0.0
        %2223 = vmatpush2.msra.mxu0 0.0
        %2224 = vmatprep.subr.mxu0 0.0
        %2225 = vmatpush2.msra.mxu0 0.0
        %2226 = vmatprep.subr.mxu0 0.0
        %2227 = vmatpush2.msra.mxu0 0.0
        %2228 = vmatprep.subr.mxu0 0.0
        %2229 = vmatpush2.msra.mxu0 0.0
        %2230 = vmatprep.subr.mxu0 0.0
        %2231 = vmatpush2.msra.mxu0 0.0
        %2232 = vmatprep.subr.mxu0 0.0
        %2233 = vmatpush2.msra.mxu0 0.0
        %2234 = vmatprep.subr.mxu0 0.0
        %2235 = vmatpush2.msra.mxu0 0.0
        %2236 = vmatprep.subr.mxu0 0.0
        %2237 = vmatpush2.msra.mxu0 0.0
        %2238 = vmatprep.subr.mxu0 0.0
        %2239 = vmatpush2.msra.mxu0 0.0
        %2240 = vmatprep.subr.mxu0 0.0
        %2241 = vmatpush2.msra.mxu0 0.0
        %2242 = vmatprep.mubr.f32.mxu0 0.0
        %2243 = vmatmul.mubr.f32.gmra.mxu0 %v456
        %v2244 = vpop.f32.mrf.mxu0
        %v2245 = vadd.f32 %v1988, %v2244
        %v2246 = vpop.f32.mrf.mxu0
        %v2247 = vadd.f32 %v1990, %v2246
        %2248 = vmatprep.mubr.f32.mxu0 0.0
        %2249 = vmatmul.mubr.f32.gmra.mxu0 %v459
        %v2250 = vpop.f32.mrf.mxu0
        %v2251 = vadd.f32 %v1994, %v2250
        %v2252 = vpop.f32.mrf.mxu0
        %v2253 = vadd.f32 %v1996, %v2252
        %2254 = vmatprep.mubr.f32.mxu0 0.0
        %2255 = vmatmul.mubr.f32.gmra.mxu0 %v462
        %v2256 = vpop.f32.mrf.mxu0
        %v2257 = vadd.f32 %v2000, %v2256
        %v2258 = vpop.f32.mrf.mxu0
        %v2259 = vadd.f32 %v2002, %v2258
        %2260 = vmatprep.mubr.f32.mxu0 0.0
        %2261 = vmatmul.mubr.f32.gmra.mxu0 %v465
        %v2262 = vpop.f32.mrf.mxu0
        %v2263 = vadd.f32 %v2006, %v2262
        %v2264 = vpop.f32.mrf.mxu0
        %v2265 = vadd.f32 %v2008, %v2264
        %2266 = vmatprep.mubr.f32.mxu0 0.0
        %2267 = vmatmul.mubr.f32.gmra.mxu0 %v468
        %v2268 = vpop.f32.mrf.mxu0
        %v2269 = vadd.f32 %v2012, %v2268
        %v2270 = vpop.f32.mrf.mxu0
        %v2271 = vadd.f32 %v2014, %v2270
        %2272 = vmatprep.mubr.f32.mxu0 0.0
        %2273 = vmatmul.mubr.f32.gmra.mxu0 %v471
        %v2274 = vpop.f32.mrf.mxu0
        %v2275 = vadd.f32 %v2018, %v2274
        %v2276 = vpop.f32.mrf.mxu0
        %v2277 = vadd.f32 %v2020, %v2276
        %2278 = vmatprep.mubr.f32.mxu0 0.0
        %2279 = vmatmul.mubr.f32.gmra.mxu0 %v474
        %v2280 = vpop.f32.mrf.mxu0
        %v2281 = vadd.f32 %v2024, %v2280
        %v2282 = vpop.f32.mrf.mxu0
        %v2283 = vadd.f32 %v2026, %v2282
        %2284 = vmatprep.mubr.f32.mxu0 0.0
        %2285 = vmatmul.mubr.f32.gmra.mxu0 %v477
        %v2286 = vpop.f32.mrf.mxu0
        %v2287 = vadd.f32 %v2030, %v2286
        %v2288 = vpop.f32.mrf.mxu0
        %v2289 = vadd.f32 %v2032, %v2288
        %2290 = vmatprep.mubr.f32.mxu0 0.0
        %2291 = vmatmul.mubr.f32.gmra.mxu0 %v480
        %v2292 = vpop.f32.mrf.mxu0
        %v2293 = vadd.f32 %v2036, %v2292
        %v2294 = vpop.f32.mrf.mxu0
        %v2295 = vadd.f32 %v2038, %v2294
        %2296 = vmatprep.mubr.f32.mxu0 0.0
        %2297 = vmatmul.mubr.f32.gmra.mxu0 %v483
        %v2298 = vpop.f32.mrf.mxu0
        %v2299 = vadd.f32 %v2042, %v2298
        %v2300 = vpop.f32.mrf.mxu0
        %v2301 = vadd.f32 %v2044, %v2300
        %2302 = vmatprep.mubr.f32.mxu0 0.0
        %2303 = vmatmul.mubr.f32.gmra.mxu0 %v486
        %v2304 = vpop.f32.mrf.mxu0
        %v2305 = vadd.f32 %v2048, %v2304
        %v2306 = vpop.f32.mrf.mxu0
        %v2307 = vadd.f32 %v2050, %v2306
        %2308 = vmatprep.mubr.f32.mxu0 0.0
        %2309 = vmatmul.mubr.f32.gmra.mxu0 %v489
        %v2310 = vpop.f32.mrf.mxu0
        %v2311 = vadd.f32 %v2054, %v2310
        %v2312 = vpop.f32.mrf.mxu0
        %v2313 = vadd.f32 %v2056, %v2312
        %2314 = vmatprep.mubr.f32.mxu0 0.0
        %2315 = vmatmul.mubr.f32.gmra.mxu0 %v492
        %v2316 = vpop.f32.mrf.mxu0
        %v2317 = vadd.f32 %v2060, %v2316
        %v2318 = vpop.f32.mrf.mxu0
        %v2319 = vadd.f32 %v2062, %v2318
        %2320 = vmatprep.mubr.f32.mxu0 0.0
        %2321 = vmatmul.mubr.f32.gmra.mxu0 %v495
        %v2322 = vpop.f32.mrf.mxu0
        %v2323 = vadd.f32 %v2066, %v2322
        %v2324 = vpop.f32.mrf.mxu0
        %v2325 = vadd.f32 %v2068, %v2324
        %2326 = vmatprep.mubr.f32.mxu0 0.0
        %2327 = vmatmul.mubr.f32.gmra.mxu0 %v498
        %v2328 = vpop.f32.mrf.mxu0
        %v2329 = vadd.f32 %v2072, %v2328
        %v2330 = vpop.f32.mrf.mxu0
        %v2331 = vadd.f32 %v2074, %v2330
        %2332 = vmatprep.mubr.f32.mxu0 0.0
        %2333 = vmatmul.mubr.f32.gmra.mxu0 %v501
        %v2334 = vpop.f32.mrf.mxu0
        %v2335 = vadd.f32 %v2078, %v2334
        %v2336 = vpop.f32.mrf.mxu0
        %v2337 = vadd.f32 %v2080, %v2336
        %2338 = vmatprep.mubr.f32.mxu0 0.0
        %2339 = vmatmul.mubr.f32.gmra.mxu0 %v504
        %v2340 = vpop.f32.mrf.mxu0
        %v2341 = vadd.f32 %v2084, %v2340
        %v2342 = vpop.f32.mrf.mxu0
        %v2343 = vadd.f32 %v2086, %v2342
        %2344 = vmatprep.mubr.f32.mxu0 0.0
        %2345 = vmatmul.mubr.f32.gmra.mxu0 %v507
        %v2346 = vpop.f32.mrf.mxu0
        %v2347 = vadd.f32 %v2090, %v2346
        %v2348 = vpop.f32.mrf.mxu0
        %v2349 = vadd.f32 %v2092, %v2348
        %2350 = vmatprep.mubr.f32.mxu0 0.0
        %2351 = vmatmul.mubr.f32.gmra.mxu0 %v510
        %v2352 = vpop.f32.mrf.mxu0
        %v2353 = vadd.f32 %v2096, %v2352
        %v2354 = vpop.f32.mrf.mxu0
        %v2355 = vadd.f32 %v2098, %v2354
        %2356 = vmatprep.mubr.f32.mxu0 0.0
        %2357 = vmatmul.mubr.f32.gmra.mxu0 %v513
        %v2358 = vpop.f32.mrf.mxu0
        %v2359 = vadd.f32 %v2102, %v2358
        %v2360 = vpop.f32.mrf.mxu0
        %v2361 = vadd.f32 %v2104, %v2360
        %2362 = vmatprep.mubr.f32.mxu0 0.0
        %2363 = vmatmul.mubr.f32.gmra.mxu0 %v516
        %v2364 = vpop.f32.mrf.mxu0
        %v2365 = vadd.f32 %v2108, %v2364
        %v2366 = vpop.f32.mrf.mxu0
        %v2367 = vadd.f32 %v2110, %v2366
        %2368 = vmatprep.mubr.f32.mxu0 0.0
        %2369 = vmatmul.mubr.f32.gmra.mxu0 %v519
        %v2370 = vpop.f32.mrf.mxu0
        %v2371 = vadd.f32 %v2114, %v2370
        %v2372 = vpop.f32.mrf.mxu0
        %v2373 = vadd.f32 %v2116, %v2372
        %2374 = vmatprep.mubr.f32.mxu0 0.0
        %2375 = vmatmul.mubr.f32.gmra.mxu0 %v522
        %v2376 = vpop.f32.mrf.mxu0
        %v2377 = vadd.f32 %v2120, %v2376
        %v2378 = vpop.f32.mrf.mxu0
        %v2379 = vadd.f32 %v2122, %v2378
        %2380 = vmatprep.mubr.f32.mxu0 0.0
        %2381 = vmatmul.mubr.f32.gmra.mxu0 %v525
        %v2382 = vpop.f32.mrf.mxu0
        %v2383 = vadd.f32 %v2126, %v2382
        %v2384 = vpop.f32.mrf.mxu0
        %v2385 = vadd.f32 %v2128, %v2384
        %2386 = vmatprep.mubr.f32.mxu0 0.0
        %2387 = vmatmul.mubr.f32.gmra.mxu0 %v528
        %v2388 = vpop.f32.mrf.mxu0
        %v2389 = vadd.f32 %v2132, %v2388
        %v2390 = vpop.f32.mrf.mxu0
        %v2391 = vadd.f32 %v2134, %v2390
        %2392 = vmatprep.mubr.f32.mxu0 0.0
        %2393 = vmatmul.mubr.f32.gmra.mxu0 %v531
        %v2394 = vpop.f32.mrf.mxu0
        %v2395 = vadd.f32 %v2138, %v2394
        %v2396 = vpop.f32.mrf.mxu0
        %v2397 = vadd.f32 %v2140, %v2396
        %2398 = vmatprep.mubr.f32.mxu0 0.0
        %2399 = vmatmul.mubr.f32.gmra.mxu0 %v534
        %v2400 = vpop.f32.mrf.mxu0
        %v2401 = vadd.f32 %v2144, %v2400
        %v2402 = vpop.f32.mrf.mxu0
        %v2403 = vadd.f32 %v2146, %v2402
        %2404 = vmatprep.mubr.f32.mxu0 0.0
        %2405 = vmatmul.mubr.f32.gmra.mxu0 %v537
        %v2406 = vpop.f32.mrf.mxu0
        %v2407 = vadd.f32 %v2150, %v2406
        %v2408 = vpop.f32.mrf.mxu0
        %v2409 = vadd.f32 %v2152, %v2408
        %2410 = vmatprep.mubr.f32.mxu0 0.0
        %2411 = vmatmul.mubr.f32.gmra.mxu0 %v540
        %v2412 = vpop.f32.mrf.mxu0
        %v2413 = vadd.f32 %v2156, %v2412
        %v2414 = vpop.f32.mrf.mxu0
        %v2415 = vadd.f32 %v2158, %v2414
        %2416 = vmatprep.mubr.f32.mxu0 0.0
        %2417 = vmatmul.mubr.f32.gmra.mxu0 %v543
        %v2418 = vpop.f32.mrf.mxu0
        %v2419 = vadd.f32 %v2162, %v2418
        %v2420 = vpop.f32.mrf.mxu0
        %v2421 = vadd.f32 %v2164, %v2420
        %2422 = vmatprep.mubr.f32.mxu0 0.0
        %2423 = vmatmul.mubr.f32.gmra.mxu0 %v546
        %v2424 = vpop.f32.mrf.mxu0
        %v2425 = vadd.f32 %v2168, %v2424
        %v2426 = vpop.f32.mrf.mxu0
        %v2427 = vadd.f32 %v2170, %v2426
        %2428 = vmatprep.mubr.f32.mxu0 0.0
        %2429 = vmatmul.mubr.f32.gmra.mxu0 %v549
        %v2430 = vpop.f32.mrf.mxu0
        %v2431 = vadd.f32 %v2174, %v2430
        %v2432 = vpop.f32.mrf.mxu0
        %v2433 = vadd.f32 %v2176, %v2432
        %2434 = vdwg.mxu0
        %2435 = vmatprep.subr.mxu0 0.0
        %2436 = vmatpush1.msra.mxu0 %v1246
        %2437 = vmatprep.subr.mxu0 0.0
        %2438 = vmatpush1.msra.mxu0 %v1241
        %2439 = vmatprep.subr.mxu0 0.0
        %2440 = vmatpush1.msra.mxu0 %v1236
        %2441 = vmatprep.subr.mxu0 0.0
        %2442 = vmatpush1.msra.mxu0 %v1231
        %2443 = vmatprep.subr.mxu0 0.0
        %2444 = vmatpush1.msra.mxu0 %v1226
        %2445 = vmatprep.subr.mxu0 0.0
        %2446 = vmatpush1.msra.mxu0 %v1221
        %2447 = vmatprep.subr.mxu0 0.0
        %2448 = vmatpush1.msra.mxu0 %v1216
        %2449 = vmatprep.subr.mxu0 0.0
        %2450 = vmatpush1.msra.mxu0 %v1211
        %2451 = vmatprep.subr.mxu0 0.0
        %2452 = vmatpush1.msra.mxu0 %v1206
        %2453 = vmatprep.subr.mxu0 0.0
        %2454 = vmatpush1.msra.mxu0 %v1201
        %2455 = vmatprep.subr.mxu0 0.0
        %2456 = vmatpush1.msra.mxu0 %v1196
        %2457 = vmatprep.subr.mxu0 0.0
        %2458 = vmatpush1.msra.mxu0 %v1191
        %2459 = vmatprep.subr.mxu0 0.0
        %2460 = vmatpush1.msra.mxu0 %v1186
        %2461 = vmatprep.subr.mxu0 0.0
        %2462 = vmatpush1.msra.mxu0 %v1181
        %2463 = vmatprep.subr.mxu0 0.0
        %2464 = vmatpush1.msra.mxu0 %v1176
        %2465 = vmatprep.subr.mxu0 0.0
        %2466 = vmatpush1.msra.mxu0 %v1171
        %2467 = vmatprep.subr.mxu0 0.0
        %2468 = vmatpush2.msra.mxu0 %v1326
        %2469 = vmatprep.subr.mxu0 0.0
        %2470 = vmatpush2.msra.mxu0 %v1321
        %2471 = vmatprep.subr.mxu0 0.0
        %2472 = vmatpush2.msra.mxu0 %v1316
        %2473 = vmatprep.subr.mxu0 0.0
        %2474 = vmatpush2.msra.mxu0 %v1311
        %2475 = vmatprep.subr.mxu0 0.0
        %2476 = vmatpush2.msra.mxu0 %v1306
        %2477 = vmatprep.subr.mxu0 0.0
        %2478 = vmatpush2.msra.mxu0 %v1301
        %2479 = vmatprep.subr.mxu0 0.0
        %2480 = vmatpush2.msra.mxu0 %v1296
        %2481 = vmatprep.subr.mxu0 0.0
        %2482 = vmatpush2.msra.mxu0 %v1291
        %2483 = vmatprep.subr.mxu0 0.0
        %2484 = vmatpush2.msra.mxu0 %v1286
        %2485 = vmatprep.subr.mxu0 0.0
        %2486 = vmatpush2.msra.mxu0 %v1281
        %2487 = vmatprep.subr.mxu0 0.0
        %2488 = vmatpush2.msra.mxu0 %v1276
        %2489 = vmatprep.subr.mxu0 0.0
        %2490 = vmatpush2.msra.mxu0 %v1271
        %2491 = vmatprep.subr.mxu0 0.0
        %2492 = vmatpush2.msra.mxu0 %v1266
        %2493 = vmatprep.subr.mxu0 0.0
        %2494 = vmatpush2.msra.mxu0 %v1261
        %2495 = vmatprep.subr.mxu0 0.0
        %2496 = vmatpush2.msra.mxu0 %v1256
        %2497 = vmatprep.subr.mxu0 0.0
        %2498 = vmatpush2.msra.mxu0 %v1251
        %2499 = vmatprep.mubr.f32.mxu0 %v455
        %2500 = vmatmul.mubr.f32.gmra.mxu0 %v454
        %v2501 = vpop.f32.mrf.mxu0
        %v2502 = vadd.f32 0.0, %v2501
        %v2503 = vpop.f32.mrf.mxu0
        %2504 = vmatprep.mubr.f32.mxu0 %v458
        %2505 = vmatmul.mubr.f32.gmra.mxu0 %v457
        %v2506 = vpop.f32.mrf.mxu0
        %v2507 = vadd.f32 0.0, %v2506
        %v2508 = vpop.f32.mrf.mxu0
        %2509 = vmatprep.mubr.f32.mxu0 %v461
        %2510 = vmatmul.mubr.f32.gmra.mxu0 %v460
        %v2511 = vpop.f32.mrf.mxu0
        %v2512 = vadd.f32 0.0, %v2511
        %v2513 = vpop.f32.mrf.mxu0
        %2514 = vmatprep.mubr.f32.mxu0 %v464
        %2515 = vmatmul.mubr.f32.gmra.mxu0 %v463
        %v2516 = vpop.f32.mrf.mxu0
        %v2517 = vadd.f32 0.0, %v2516
        %v2518 = vpop.f32.mrf.mxu0
        %2519 = vmatprep.mubr.f32.mxu0 %v467
        %2520 = vmatmul.mubr.f32.gmra.mxu0 %v466
        %v2521 = vpop.f32.mrf.mxu0
        %v2522 = vadd.f32 0.0, %v2521
        %v2523 = vpop.f32.mrf.mxu0
        %2524 = vmatprep.mubr.f32.mxu0 %v470
        %2525 = vmatmul.mubr.f32.gmra.mxu0 %v469
        %v2526 = vpop.f32.mrf.mxu0
        %v2527 = vadd.f32 0.0, %v2526
        %v2528 = vpop.f32.mrf.mxu0
        %2529 = vmatprep.mubr.f32.mxu0 %v473
        %2530 = vmatmul.mubr.f32.gmra.mxu0 %v472
        %v2531 = vpop.f32.mrf.mxu0
        %v2532 = vadd.f32 0.0, %v2531
        %v2533 = vpop.f32.mrf.mxu0
        %2534 = vmatprep.mubr.f32.mxu0 %v476
        %2535 = vmatmul.mubr.f32.gmra.mxu0 %v475
        %v2536 = vpop.f32.mrf.mxu0
        %v2537 = vadd.f32 0.0, %v2536
        %v2538 = vpop.f32.mrf.mxu0
        %2539 = vmatprep.mubr.f32.mxu0 %v479
        %2540 = vmatmul.mubr.f32.gmra.mxu0 %v478
        %v2541 = vpop.f32.mrf.mxu0
        %v2542 = vadd.f32 0.0, %v2541
        %v2543 = vpop.f32.mrf.mxu0
        %2544 = vmatprep.mubr.f32.mxu0 %v482
        %2545 = vmatmul.mubr.f32.gmra.mxu0 %v481
        %v2546 = vpop.f32.mrf.mxu0
        %v2547 = vadd.f32 0.0, %v2546
        %v2548 = vpop.f32.mrf.mxu0
        %2549 = vmatprep.mubr.f32.mxu0 %v485
        %2550 = vmatmul.mubr.f32.gmra.mxu0 %v484
        %v2551 = vpop.f32.mrf.mxu0
        %v2552 = vadd.f32 0.0, %v2551
        %v2553 = vpop.f32.mrf.mxu0
        %2554 = vmatprep.mubr.f32.mxu0 %v488
        %2555 = vmatmul.mubr.f32.gmra.mxu0 %v487
        %v2556 = vpop.f32.mrf.mxu0
        %v2557 = vadd.f32 0.0, %v2556
        %v2558 = vpop.f32.mrf.mxu0
        %2559 = vmatprep.mubr.f32.mxu0 %v491
        %2560 = vmatmul.mubr.f32.gmra.mxu0 %v490
        %v2561 = vpop.f32.mrf.mxu0
        %v2562 = vadd.f32 0.0, %v2561
        %v2563 = vpop.f32.mrf.mxu0
        %2564 = vmatprep.mubr.f32.mxu0 %v494
        %2565 = vmatmul.mubr.f32.gmra.mxu0 %v493
        %v2566 = vpop.f32.mrf.mxu0
        %v2567 = vadd.f32 0.0, %v2566
        %v2568 = vpop.f32.mrf.mxu0
        %2569 = vmatprep.mubr.f32.mxu0 %v497
        %2570 = vmatmul.mubr.f32.gmra.mxu0 %v496
        %v2571 = vpop.f32.mrf.mxu0
        %v2572 = vadd.f32 0.0, %v2571
        %v2573 = vpop.f32.mrf.mxu0
        %2574 = vmatprep.mubr.f32.mxu0 %v500
        %2575 = vmatmul.mubr.f32.gmra.mxu0 %v499
        %v2576 = vpop.f32.mrf.mxu0
        %v2577 = vadd.f32 0.0, %v2576
        %v2578 = vpop.f32.mrf.mxu0
        %2579 = vmatprep.mubr.f32.mxu0 %v503
        %2580 = vmatmul.mubr.f32.gmra.mxu0 %v502
        %v2581 = vpop.f32.mrf.mxu0
        %v2582 = vadd.f32 0.0, %v2581
        %v2583 = vpop.f32.mrf.mxu0
        %2584 = vmatprep.mubr.f32.mxu0 %v506
        %2585 = vmatmul.mubr.f32.gmra.mxu0 %v505
        %v2586 = vpop.f32.mrf.mxu0
        %v2587 = vadd.f32 0.0, %v2586
        %v2588 = vpop.f32.mrf.mxu0
        %2589 = vmatprep.mubr.f32.mxu0 %v509
        %2590 = vmatmul.mubr.f32.gmra.mxu0 %v508
        %v2591 = vpop.f32.mrf.mxu0
        %v2592 = vadd.f32 0.0, %v2591
        %v2593 = vpop.f32.mrf.mxu0
        %2594 = vmatprep.mubr.f32.mxu0 %v512
        %2595 = vmatmul.mubr.f32.gmra.mxu0 %v511
        %v2596 = vpop.f32.mrf.mxu0
        %v2597 = vadd.f32 0.0, %v2596
        %v2598 = vpop.f32.mrf.mxu0
        %2599 = vmatprep.mubr.f32.mxu0 %v515
        %2600 = vmatmul.mubr.f32.gmra.mxu0 %v514
        %v2601 = vpop.f32.mrf.mxu0
        %v2602 = vadd.f32 0.0, %v2601
        %v2603 = vpop.f32.mrf.mxu0
        %2604 = vmatprep.mubr.f32.mxu0 %v518
        %2605 = vmatmul.mubr.f32.gmra.mxu0 %v517
        %v2606 = vpop.f32.mrf.mxu0
        %v2607 = vadd.f32 0.0, %v2606
        %v2608 = vpop.f32.mrf.mxu0
        %2609 = vmatprep.mubr.f32.mxu0 %v521
        %2610 = vmatmul.mubr.f32.gmra.mxu0 %v520
        %v2611 = vpop.f32.mrf.mxu0
        %v2612 = vadd.f32 0.0, %v2611
        %v2613 = vpop.f32.mrf.mxu0
        %2614 = vmatprep.mubr.f32.mxu0 %v524
        %2615 = vmatmul.mubr.f32.gmra.mxu0 %v523
        %v2616 = vpop.f32.mrf.mxu0
        %v2617 = vadd.f32 0.0, %v2616
        %v2618 = vpop.f32.mrf.mxu0
        %2619 = vmatprep.mubr.f32.mxu0 %v527
        %2620 = vmatmul.mubr.f32.gmra.mxu0 %v526
        %v2621 = vpop.f32.mrf.mxu0
        %v2622 = vadd.f32 0.0, %v2621
        %v2623 = vpop.f32.mrf.mxu0
        %2624 = vmatprep.mubr.f32.mxu0 %v530
        %2625 = vmatmul.mubr.f32.gmra.mxu0 %v529
        %v2626 = vpop.f32.mrf.mxu0
        %v2627 = vadd.f32 0.0, %v2626
        %v2628 = vpop.f32.mrf.mxu0
        %2629 = vmatprep.mubr.f32.mxu0 %v533
        %2630 = vmatmul.mubr.f32.gmra.mxu0 %v532
        %v2631 = vpop.f32.mrf.mxu0
        %v2632 = vadd.f32 0.0, %v2631
        %v2633 = vpop.f32.mrf.mxu0
        %2634 = vmatprep.mubr.f32.mxu0 %v536
        %2635 = vmatmul.mubr.f32.gmra.mxu0 %v535
        %v2636 = vpop.f32.mrf.mxu0
        %v2637 = vadd.f32 0.0, %v2636
        %v2638 = vpop.f32.mrf.mxu0
        %2639 = vmatprep.mubr.f32.mxu0 %v539
        %2640 = vmatmul.mubr.f32.gmra.mxu0 %v538
        %v2641 = vpop.f32.mrf.mxu0
        %v2642 = vadd.f32 0.0, %v2641
        %v2643 = vpop.f32.mrf.mxu0
        %2644 = vmatprep.mubr.f32.mxu0 %v542
        %2645 = vmatmul.mubr.f32.gmra.mxu0 %v541
        %v2646 = vpop.f32.mrf.mxu0
        %v2647 = vadd.f32 0.0, %v2646
        %v2648 = vpop.f32.mrf.mxu0
        %2649 = vmatprep.mubr.f32.mxu0 %v545
        %2650 = vmatmul.mubr.f32.gmra.mxu0 %v544
        %v2651 = vpop.f32.mrf.mxu0
        %v2652 = vadd.f32 0.0, %v2651
        %v2653 = vpop.f32.mrf.mxu0
        %2654 = vmatprep.mubr.f32.mxu0 %v548
        %2655 = vmatmul.mubr.f32.gmra.mxu0 %v547
        %v2656 = vpop.f32.mrf.mxu0
        %v2657 = vadd.f32 0.0, %v2656
        %v2658 = vpop.f32.mrf.mxu0
        %2659 = vdwg.mxu0
        %2660 = vmatprep.subr.mxu0 0.0
        %2661 = vmatpush1.msra.mxu0 %v1406
        %2662 = vmatprep.subr.mxu0 0.0
        %2663 = vmatpush1.msra.mxu0 %v1401
        %2664 = vmatprep.subr.mxu0 0.0
        %2665 = vmatpush1.msra.mxu0 %v1396
        %2666 = vmatprep.subr.mxu0 0.0
        %2667 = vmatpush1.msra.mxu0 %v1391
        %2668 = vmatprep.subr.mxu0 0.0
        %2669 = vmatpush1.msra.mxu0 %v1386
        %2670 = vmatprep.subr.mxu0 0.0
        %2671 = vmatpush1.msra.mxu0 %v1381
        %2672 = vmatprep.subr.mxu0 0.0
        %2673 = vmatpush1.msra.mxu0 %v1376
        %2674 = vmatprep.subr.mxu0 0.0
        %2675 = vmatpush1.msra.mxu0 %v1371
        %2676 = vmatprep.subr.mxu0 0.0
        %2677 = vmatpush1.msra.mxu0 %v1366
        %2678 = vmatprep.subr.mxu0 0.0
        %2679 = vmatpush1.msra.mxu0 %v1361
        %2680 = vmatprep.subr.mxu0 0.0
        %2681 = vmatpush1.msra.mxu0 %v1356
        %2682 = vmatprep.subr.mxu0 0.0
        %2683 = vmatpush1.msra.mxu0 %v1351
        %2684 = vmatprep.subr.mxu0 0.0
        %2685 = vmatpush1.msra.mxu0 %v1346
        %2686 = vmatprep.subr.mxu0 0.0
        %2687 = vmatpush1.msra.mxu0 %v1341
        %2688 = vmatprep.subr.mxu0 0.0
        %2689 = vmatpush1.msra.mxu0 %v1336
        %2690 = vmatprep.subr.mxu0 0.0
        %2691 = vmatpush1.msra.mxu0 %v1331
        %2692 = vmatprep.subr.mxu0 0.0
        %2693 = vmatpush2.msra.mxu0 0.0
        %2694 = vmatprep.subr.mxu0 0.0
        %2695 = vmatpush2.msra.mxu0 0.0
        %2696 = vmatprep.subr.mxu0 0.0
        %2697 = vmatpush2.msra.mxu0 0.0
        %2698 = vmatprep.subr.mxu0 0.0
        %2699 = vmatpush2.msra.mxu0 0.0
        %2700 = vmatprep.subr.mxu0 0.0
        %2701 = vmatpush2.msra.mxu0 0.0
        %2702 = vmatprep.subr.mxu0 0.0
        %2703 = vmatpush2.msra.mxu0 0.0
        %2704 = vmatprep.subr.mxu0 0.0
        %2705 = vmatpush2.msra.mxu0 0.0
        %2706 = vmatprep.subr.mxu0 0.0
        %2707 = vmatpush2.msra.mxu0 0.0
        %2708 = vmatprep.subr.mxu0 0.0
        %2709 = vmatpush2.msra.mxu0 0.0
        %2710 = vmatprep.subr.mxu0 0.0
        %2711 = vmatpush2.msra.mxu0 0.0
        %2712 = vmatprep.subr.mxu0 0.0
        %2713 = vmatpush2.msra.mxu0 0.0
        %2714 = vmatprep.subr.mxu0 0.0
        %2715 = vmatpush2.msra.mxu0 0.0
        %2716 = vmatprep.subr.mxu0 0.0
        %2717 = vmatpush2.msra.mxu0 0.0
        %2718 = vmatprep.subr.mxu0 0.0
        %2719 = vmatpush2.msra.mxu0 0.0
        %2720 = vmatprep.subr.mxu0 0.0
        %2721 = vmatpush2.msra.mxu0 0.0
        %2722 = vmatprep.subr.mxu0 0.0
        %2723 = vmatpush2.msra.mxu0 0.0
        %2724 = vmatprep.mubr.f32.mxu0 0.0
        %2725 = vmatmul.mubr.f32.gmra.mxu0 %v456
        %v2726 = vpop.f32.mrf.mxu0
        %v2727 = vadd.f32 %v2502, %v2726
        %v2728 = vpop.f32.mrf.mxu0
        %2729 = vmatprep.mubr.f32.mxu0 0.0
        %2730 = vmatmul.mubr.f32.gmra.mxu0 %v459
        %v2731 = vpop.f32.mrf.mxu0
        %v2732 = vadd.f32 %v2507, %v2731
        %v2733 = vpop.f32.mrf.mxu0
        %2734 = vmatprep.mubr.f32.mxu0 0.0
        %2735 = vmatmul.mubr.f32.gmra.mxu0 %v462
        %v2736 = vpop.f32.mrf.mxu0
        %v2737 = vadd.f32 %v2512, %v2736
        %v2738 = vpop.f32.mrf.mxu0
        %2739 = vmatprep.mubr.f32.mxu0 0.0
        %2740 = vmatmul.mubr.f32.gmra.mxu0 %v465
        %v2741 = vpop.f32.mrf.mxu0
        %v2742 = vadd.f32 %v2517, %v2741
        %v2743 = vpop.f32.mrf.mxu0
        %2744 = vmatprep.mubr.f32.mxu0 0.0
        %2745 = vmatmul.mubr.f32.gmra.mxu0 %v468
        %v2746 = vpop.f32.mrf.mxu0
        %v2747 = vadd.f32 %v2522, %v2746
        %v2748 = vpop.f32.mrf.mxu0
        %2749 = vmatprep.mubr.f32.mxu0 0.0
        %2750 = vmatmul.mubr.f32.gmra.mxu0 %v471
        %v2751 = vpop.f32.mrf.mxu0
        %v2752 = vadd.f32 %v2527, %v2751
        %v2753 = vpop.f32.mrf.mxu0
        %2754 = vmatprep.mubr.f32.mxu0 0.0
        %2755 = vmatmul.mubr.f32.gmra.mxu0 %v474
        %v2756 = vpop.f32.mrf.mxu0
        %v2757 = vadd.f32 %v2532, %v2756
        %v2758 = vpop.f32.mrf.mxu0
        %2759 = vmatprep.mubr.f32.mxu0 0.0
        %2760 = vmatmul.mubr.f32.gmra.mxu0 %v477
        %v2761 = vpop.f32.mrf.mxu0
        %v2762 = vadd.f32 %v2537, %v2761
        %v2763 = vpop.f32.mrf.mxu0
        %2764 = vmatprep.mubr.f32.mxu0 0.0
        %2765 = vmatmul.mubr.f32.gmra.mxu0 %v480
        %v2766 = vpop.f32.mrf.mxu0
        %v2767 = vadd.f32 %v2542, %v2766
        %v2768 = vpop.f32.mrf.mxu0
        %2769 = vmatprep.mubr.f32.mxu0 0.0
        %2770 = vmatmul.mubr.f32.gmra.mxu0 %v483
        %v2771 = vpop.f32.mrf.mxu0
        %v2772 = vadd.f32 %v2547, %v2771
        %v2773 = vpop.f32.mrf.mxu0
        %2774 = vmatprep.mubr.f32.mxu0 0.0
        %2775 = vmatmul.mubr.f32.gmra.mxu0 %v486
        %v2776 = vpop.f32.mrf.mxu0
        %v2777 = vadd.f32 %v2552, %v2776
        %v2778 = vpop.f32.mrf.mxu0
        %2779 = vmatprep.mubr.f32.mxu0 0.0
        %2780 = vmatmul.mubr.f32.gmra.mxu0 %v489
        %v2781 = vpop.f32.mrf.mxu0
        %v2782 = vadd.f32 %v2557, %v2781
        %v2783 = vpop.f32.mrf.mxu0
        %2784 = vmatprep.mubr.f32.mxu0 0.0
        %2785 = vmatmul.mubr.f32.gmra.mxu0 %v492
        %v2786 = vpop.f32.mrf.mxu0
        %v2787 = vadd.f32 %v2562, %v2786
        %v2788 = vpop.f32.mrf.mxu0
        %2789 = vmatprep.mubr.f32.mxu0 0.0
        %2790 = vmatmul.mubr.f32.gmra.mxu0 %v495
        %v2791 = vpop.f32.mrf.mxu0
        %v2792 = vadd.f32 %v2567, %v2791
        %v2793 = vpop.f32.mrf.mxu0
        %2794 = vmatprep.mubr.f32.mxu0 0.0
        %2795 = vmatmul.mubr.f32.gmra.mxu0 %v498
        %v2796 = vpop.f32.mrf.mxu0
        %v2797 = vadd.f32 %v2572, %v2796
        %v2798 = vpop.f32.mrf.mxu0
        %2799 = vmatprep.mubr.f32.mxu0 0.0
        %2800 = vmatmul.mubr.f32.gmra.mxu0 %v501
        %v2801 = vpop.f32.mrf.mxu0
        %v2802 = vadd.f32 %v2577, %v2801
        %v2803 = vpop.f32.mrf.mxu0
        %2804 = vmatprep.mubr.f32.mxu0 0.0
        %2805 = vmatmul.mubr.f32.gmra.mxu0 %v504
        %v2806 = vpop.f32.mrf.mxu0
        %v2807 = vadd.f32 %v2582, %v2806
        %v2808 = vpop.f32.mrf.mxu0
        %2809 = vmatprep.mubr.f32.mxu0 0.0
        %2810 = vmatmul.mubr.f32.gmra.mxu0 %v507
        %v2811 = vpop.f32.mrf.mxu0
        %v2812 = vadd.f32 %v2587, %v2811
        %v2813 = vpop.f32.mrf.mxu0
        %2814 = vmatprep.mubr.f32.mxu0 0.0
        %2815 = vmatmul.mubr.f32.gmra.mxu0 %v510
        %v2816 = vpop.f32.mrf.mxu0
        %v2817 = vadd.f32 %v2592, %v2816
        %v2818 = vpop.f32.mrf.mxu0
        %2819 = vmatprep.mubr.f32.mxu0 0.0
        %2820 = vmatmul.mubr.f32.gmra.mxu0 %v513
        %v2821 = vpop.f32.mrf.mxu0
        %v2822 = vadd.f32 %v2597, %v2821
        %v2823 = vpop.f32.mrf.mxu0
        %2824 = vmatprep.mubr.f32.mxu0 0.0
        %2825 = vmatmul.mubr.f32.gmra.mxu0 %v516
        %v2826 = vpop.f32.mrf.mxu0
        %v2827 = vadd.f32 %v2602, %v2826
        %v2828 = vpop.f32.mrf.mxu0
        %2829 = vmatprep.mubr.f32.mxu0 0.0
        %2830 = vmatmul.mubr.f32.gmra.mxu0 %v519
        %v2831 = vpop.f32.mrf.mxu0
        %v2832 = vadd.f32 %v2607, %v2831
        %v2833 = vpop.f32.mrf.mxu0
        %2834 = vmatprep.mubr.f32.mxu0 0.0
        %2835 = vmatmul.mubr.f32.gmra.mxu0 %v522
        %v2836 = vpop.f32.mrf.mxu0
        %v2837 = vadd.f32 %v2612, %v2836
        %v2838 = vpop.f32.mrf.mxu0
        %2839 = vmatprep.mubr.f32.mxu0 0.0
        %2840 = vmatmul.mubr.f32.gmra.mxu0 %v525
        %v2841 = vpop.f32.mrf.mxu0
        %v2842 = vadd.f32 %v2617, %v2841
        %v2843 = vpop.f32.mrf.mxu0
        %2844 = vmatprep.mubr.f32.mxu0 0.0
        %2845 = vmatmul.mubr.f32.gmra.mxu0 %v528
        %v2846 = vpop.f32.mrf.mxu0
        %v2847 = vadd.f32 %v2622, %v2846
        %v2848 = vpop.f32.mrf.mxu0
        %2849 = vmatprep.mubr.f32.mxu0 0.0
        %2850 = vmatmul.mubr.f32.gmra.mxu0 %v531
        %v2851 = vpop.f32.mrf.mxu0
        %v2852 = vadd.f32 %v2627, %v2851
        %v2853 = vpop.f32.mrf.mxu0
        %2854 = vmatprep.mubr.f32.mxu0 0.0
        %2855 = vmatmul.mubr.f32.gmra.mxu0 %v534
        %v2856 = vpop.f32.mrf.mxu0
        %v2857 = vadd.f32 %v2632, %v2856
        %v2858 = vpop.f32.mrf.mxu0
        %2859 = vmatprep.mubr.f32.mxu0 0.0
        %2860 = vmatmul.mubr.f32.gmra.mxu0 %v537
        %v2861 = vpop.f32.mrf.mxu0
        %v2862 = vadd.f32 %v2637, %v2861
        %v2863 = vpop.f32.mrf.mxu0
        %2864 = vmatprep.mubr.f32.mxu0 0.0
        %2865 = vmatmul.mubr.f32.gmra.mxu0 %v540
        %v2866 = vpop.f32.mrf.mxu0
        %v2867 = vadd.f32 %v2642, %v2866
        %v2868 = vpop.f32.mrf.mxu0
        %2869 = vmatprep.mubr.f32.mxu0 0.0
        %2870 = vmatmul.mubr.f32.gmra.mxu0 %v543
        %v2871 = vpop.f32.mrf.mxu0
        %v2872 = vadd.f32 %v2647, %v2871
        %v2873 = vpop.f32.mrf.mxu0
        %2874 = vmatprep.mubr.f32.mxu0 0.0
        %2875 = vmatmul.mubr.f32.gmra.mxu0 %v546
        %v2876 = vpop.f32.mrf.mxu0
        %v2877 = vadd.f32 %v2652, %v2876
        %v2878 = vpop.f32.mrf.mxu0
        %2879 = vmatprep.mubr.f32.mxu0 0.0
        %2880 = vmatmul.mubr.f32.gmra.mxu0 %v549
        %v2881 = vpop.f32.mrf.mxu0
        %v2882 = vadd.f32 %v2657, %v2881
        %v2883 = vpop.f32.mrf.mxu0
        %2884 = vdwg.mxu0
        %2885 = vmatprep.subr.mxu0 %v1163
        %2886 = vmatpush1.msra.mxu0 %v1162
        %2887 = vmatprep.subr.mxu0 %v1158
        %2888 = vmatpush1.msra.mxu0 %v1157
        %2889 = vmatprep.subr.mxu0 %v1153
        %2890 = vmatpush1.msra.mxu0 %v1152
        %2891 = vmatprep.subr.mxu0 %v1148
        %2892 = vmatpush1.msra.mxu0 %v1147
        %2893 = vmatprep.subr.mxu0 %v1143
        %2894 = vmatpush1.msra.mxu0 %v1142
        %2895 = vmatprep.subr.mxu0 %v1138
        %2896 = vmatpush1.msra.mxu0 %v1137
        %2897 = vmatprep.subr.mxu0 %v1133
        %2898 = vmatpush1.msra.mxu0 %v1132
        %2899 = vmatprep.subr.mxu0 %v1128
        %2900 = vmatpush1.msra.mxu0 %v1127
        %2901 = vmatprep.subr.mxu0 %v1123
        %2902 = vmatpush1.msra.mxu0 %v1122
        %2903 = vmatprep.subr.mxu0 %v1118
        %2904 = vmatpush1.msra.mxu0 %v1117
        %2905 = vmatprep.subr.mxu0 %v1113
        %2906 = vmatpush1.msra.mxu0 %v1112
        %2907 = vmatprep.subr.mxu0 %v1108
        %2908 = vmatpush1.msra.mxu0 %v1107
        %2909 = vmatprep.subr.mxu0 %v1103
        %2910 = vmatpush1.msra.mxu0 %v1102
        %2911 = vmatprep.subr.mxu0 %v1098
        %2912 = vmatpush1.msra.mxu0 %v1097
        %2913 = vmatprep.subr.mxu0 %v1093
        %2914 = vmatpush1.msra.mxu0 %v1092
        %2915 = vmatprep.subr.mxu0 %v1088
        %2916 = vmatpush1.msra.mxu0 %v1087
        %2917 = vmatprep.subr.mxu0 0.0
        %2918 = vmatpush2.msra.mxu0 0.0
        %2919 = vmatprep.subr.mxu0 0.0
        %2920 = vmatpush2.msra.mxu0 0.0
        %2921 = vmatprep.subr.mxu0 0.0
        %2922 = vmatpush2.msra.mxu0 0.0
        %2923 = vmatprep.subr.mxu0 0.0
        %2924 = vmatpush2.msra.mxu0 0.0
        %2925 = vmatprep.subr.mxu0 0.0
        %2926 = vmatpush2.msra.mxu0 0.0
        %2927 = vmatprep.subr.mxu0 0.0
        %2928 = vmatpush2.msra.mxu0 0.0
        %2929 = vmatprep.subr.mxu0 0.0
        %2930 = vmatpush2.msra.mxu0 0.0
        %2931 = vmatprep.subr.mxu0 0.0
        %2932 = vmatpush2.msra.mxu0 0.0
        %2933 = vmatprep.subr.mxu0 0.0
        %2934 = vmatpush2.msra.mxu0 0.0
        %2935 = vmatprep.subr.mxu0 0.0
        %2936 = vmatpush2.msra.mxu0 0.0
        %2937 = vmatprep.subr.mxu0 0.0
        %2938 = vmatpush2.msra.mxu0 0.0
        %2939 = vmatprep.subr.mxu0 0.0
        %2940 = vmatpush2.msra.mxu0 0.0
        %2941 = vmatprep.subr.mxu0 0.0
        %2942 = vmatpush2.msra.mxu0 0.0
        %2943 = vmatprep.subr.mxu0 0.0
        %2944 = vmatpush2.msra.mxu0 0.0
        %2945 = vmatprep.subr.mxu0 0.0
        %2946 = vmatpush2.msra.mxu0 0.0
        %2947 = vmatprep.subr.mxu0 0.0
        %2948 = vmatpush2.msra.mxu0 0.0
        %2949 = vmatprep.mubr.f32.mxu0 0.0
        %2950 = vmatmul.mubr.f32.gmra.mxu0 %v1055
        %v2951 = vpop.f32.mrf.mxu0
        %v2952 = vadd.f32 %v1731, %v2951
        %v2953 = vpop.f32.mrf.mxu0
        %v2954 = vadd.f32 %v1733, %v2953
        %2955 = vmatprep.mubr.f32.mxu0 0.0
        %2956 = vmatmul.mubr.f32.gmra.mxu0 %v1056
        %v2957 = vpop.f32.mrf.mxu0
        %v2958 = vadd.f32 %v1737, %v2957
        %v2959 = vpop.f32.mrf.mxu0
        %v2960 = vadd.f32 %v1739, %v2959
        %2961 = vmatprep.mubr.f32.mxu0 0.0
        %2962 = vmatmul.mubr.f32.gmra.mxu0 %v1057
        %v2963 = vpop.f32.mrf.mxu0
        %v2964 = vadd.f32 %v1743, %v2963
        %v2965 = vpop.f32.mrf.mxu0
        %v2966 = vadd.f32 %v1745, %v2965
        %2967 = vmatprep.mubr.f32.mxu0 0.0
        %2968 = vmatmul.mubr.f32.gmra.mxu0 %v1058
        %v2969 = vpop.f32.mrf.mxu0
        %v2970 = vadd.f32 %v1749, %v2969
        %v2971 = vpop.f32.mrf.mxu0
        %v2972 = vadd.f32 %v1751, %v2971
        %2973 = vmatprep.mubr.f32.mxu0 0.0
        %2974 = vmatmul.mubr.f32.gmra.mxu0 %v1059
        %v2975 = vpop.f32.mrf.mxu0
        %v2976 = vadd.f32 %v1755, %v2975
        %v2977 = vpop.f32.mrf.mxu0
        %v2978 = vadd.f32 %v1757, %v2977
        %2979 = vmatprep.mubr.f32.mxu0 0.0
        %2980 = vmatmul.mubr.f32.gmra.mxu0 %v1060
        %v2981 = vpop.f32.mrf.mxu0
        %v2982 = vadd.f32 %v1761, %v2981
        %v2983 = vpop.f32.mrf.mxu0
        %v2984 = vadd.f32 %v1763, %v2983
        %2985 = vmatprep.mubr.f32.mxu0 0.0
        %2986 = vmatmul.mubr.f32.gmra.mxu0 %v1061
        %v2987 = vpop.f32.mrf.mxu0
        %v2988 = vadd.f32 %v1767, %v2987
        %v2989 = vpop.f32.mrf.mxu0
        %v2990 = vadd.f32 %v1769, %v2989
        %2991 = vmatprep.mubr.f32.mxu0 0.0
        %2992 = vmatmul.mubr.f32.gmra.mxu0 %v1062
        %v2993 = vpop.f32.mrf.mxu0
        %v2994 = vadd.f32 %v1773, %v2993
        %v2995 = vpop.f32.mrf.mxu0
        %v2996 = vadd.f32 %v1775, %v2995
        %2997 = vmatprep.mubr.f32.mxu0 0.0
        %2998 = vmatmul.mubr.f32.gmra.mxu0 %v1063
        %v2999 = vpop.f32.mrf.mxu0
        %v3000 = vadd.f32 %v1779, %v2999
        %v3001 = vpop.f32.mrf.mxu0
        %v3002 = vadd.f32 %v1781, %v3001
        %3003 = vmatprep.mubr.f32.mxu0 0.0
        %3004 = vmatmul.mubr.f32.gmra.mxu0 %v1064
        %v3005 = vpop.f32.mrf.mxu0
        %v3006 = vadd.f32 %v1785, %v3005
        %v3007 = vpop.f32.mrf.mxu0
        %v3008 = vadd.f32 %v1787, %v3007
        %3009 = vmatprep.mubr.f32.mxu0 0.0
        %3010 = vmatmul.mubr.f32.gmra.mxu0 %v1065
        %v3011 = vpop.f32.mrf.mxu0
        %v3012 = vadd.f32 %v1791, %v3011
        %v3013 = vpop.f32.mrf.mxu0
        %v3014 = vadd.f32 %v1793, %v3013
        %3015 = vmatprep.mubr.f32.mxu0 0.0
        %3016 = vmatmul.mubr.f32.gmra.mxu0 %v1066
        %v3017 = vpop.f32.mrf.mxu0
        %v3018 = vadd.f32 %v1797, %v3017
        %v3019 = vpop.f32.mrf.mxu0
        %v3020 = vadd.f32 %v1799, %v3019
        %3021 = vmatprep.mubr.f32.mxu0 0.0
        %3022 = vmatmul.mubr.f32.gmra.mxu0 %v1067
        %v3023 = vpop.f32.mrf.mxu0
        %v3024 = vadd.f32 %v1803, %v3023
        %v3025 = vpop.f32.mrf.mxu0
        %v3026 = vadd.f32 %v1805, %v3025
        %3027 = vmatprep.mubr.f32.mxu0 0.0
        %3028 = vmatmul.mubr.f32.gmra.mxu0 %v1068
        %v3029 = vpop.f32.mrf.mxu0
        %v3030 = vadd.f32 %v1809, %v3029
        %v3031 = vpop.f32.mrf.mxu0
        %v3032 = vadd.f32 %v1811, %v3031
        %3033 = vmatprep.mubr.f32.mxu0 0.0
        %3034 = vmatmul.mubr.f32.gmra.mxu0 %v1069
        %v3035 = vpop.f32.mrf.mxu0
        %v3036 = vadd.f32 %v1815, %v3035
        %v3037 = vpop.f32.mrf.mxu0
        %v3038 = vadd.f32 %v1817, %v3037
        %3039 = vmatprep.mubr.f32.mxu0 0.0
        %3040 = vmatmul.mubr.f32.gmra.mxu0 %v1070
        %v3041 = vpop.f32.mrf.mxu0
        %v3042 = vadd.f32 %v1821, %v3041
        %v3043 = vpop.f32.mrf.mxu0
        %v3044 = vadd.f32 %v1823, %v3043
        %3045 = vmatprep.mubr.f32.mxu0 0.0
        %3046 = vmatmul.mubr.f32.gmra.mxu0 %v1071
        %v3047 = vpop.f32.mrf.mxu0
        %v3048 = vadd.f32 %v1827, %v3047
        %v3049 = vpop.f32.mrf.mxu0
        %v3050 = vadd.f32 %v1829, %v3049
        %3051 = vmatprep.mubr.f32.mxu0 0.0
        %3052 = vmatmul.mubr.f32.gmra.mxu0 %v1072
        %v3053 = vpop.f32.mrf.mxu0
        %v3054 = vadd.f32 %v1833, %v3053
        %v3055 = vpop.f32.mrf.mxu0
        %v3056 = vadd.f32 %v1835, %v3055
        %3057 = vmatprep.mubr.f32.mxu0 0.0
        %3058 = vmatmul.mubr.f32.gmra.mxu0 %v1073
        %v3059 = vpop.f32.mrf.mxu0
        %v3060 = vadd.f32 %v1839, %v3059
        %v3061 = vpop.f32.mrf.mxu0
        %v3062 = vadd.f32 %v1841, %v3061
        %3063 = vmatprep.mubr.f32.mxu0 0.0
        %3064 = vmatmul.mubr.f32.gmra.mxu0 %v1074
        %v3065 = vpop.f32.mrf.mxu0
        %v3066 = vadd.f32 %v1845, %v3065
        %v3067 = vpop.f32.mrf.mxu0
        %v3068 = vadd.f32 %v1847, %v3067
        %3069 = vmatprep.mubr.f32.mxu0 0.0
        %3070 = vmatmul.mubr.f32.gmra.mxu0 %v1075
        %v3071 = vpop.f32.mrf.mxu0
        %v3072 = vadd.f32 %v1851, %v3071
        %v3073 = vpop.f32.mrf.mxu0
        %v3074 = vadd.f32 %v1853, %v3073
        %3075 = vmatprep.mubr.f32.mxu0 0.0
        %3076 = vmatmul.mubr.f32.gmra.mxu0 %v1076
        %v3077 = vpop.f32.mrf.mxu0
        %v3078 = vadd.f32 %v1857, %v3077
        %v3079 = vpop.f32.mrf.mxu0
        %v3080 = vadd.f32 %v1859, %v3079
        %3081 = vmatprep.mubr.f32.mxu0 0.0
        %3082 = vmatmul.mubr.f32.gmra.mxu0 %v1077
        %v3083 = vpop.f32.mrf.mxu0
        %v3084 = vadd.f32 %v1863, %v3083
        %v3085 = vpop.f32.mrf.mxu0
        %v3086 = vadd.f32 %v1865, %v3085
        %3087 = vmatprep.mubr.f32.mxu0 0.0
        %3088 = vmatmul.mubr.f32.gmra.mxu0 %v1078
        %v3089 = vpop.f32.mrf.mxu0
        %v3090 = vadd.f32 %v1869, %v3089
        %v3091 = vpop.f32.mrf.mxu0
        %v3092 = vadd.f32 %v1871, %v3091
        %3093 = vmatprep.mubr.f32.mxu0 0.0
        %3094 = vmatmul.mubr.f32.gmra.mxu0 %v1079
        %v3095 = vpop.f32.mrf.mxu0
        %v3096 = vadd.f32 %v1875, %v3095
        %v3097 = vpop.f32.mrf.mxu0
        %v3098 = vadd.f32 %v1877, %v3097
        %3099 = vmatprep.mubr.f32.mxu0 0.0
        %3100 = vmatmul.mubr.f32.gmra.mxu0 %v1080
        %v3101 = vpop.f32.mrf.mxu0
        %v3102 = vadd.f32 %v1881, %v3101
        %v3103 = vpop.f32.mrf.mxu0
        %v3104 = vadd.f32 %v1883, %v3103
        %3105 = vmatprep.mubr.f32.mxu0 0.0
        %3106 = vmatmul.mubr.f32.gmra.mxu0 %v1081
        %v3107 = vpop.f32.mrf.mxu0
        %v3108 = vadd.f32 %v1887, %v3107
        %v3109 = vpop.f32.mrf.mxu0
        %v3110 = vadd.f32 %v1889, %v3109
        %3111 = vmatprep.mubr.f32.mxu0 0.0
        %3112 = vmatmul.mubr.f32.gmra.mxu0 %v1082
        %v3113 = vpop.f32.mrf.mxu0
        %v3114 = vadd.f32 %v1893, %v3113
        %v3115 = vpop.f32.mrf.mxu0
        %v3116 = vadd.f32 %v1895, %v3115
        %3117 = vmatprep.mubr.f32.mxu0 0.0
        %3118 = vmatmul.mubr.f32.gmra.mxu0 %v1083
        %v3119 = vpop.f32.mrf.mxu0
        %v3120 = vadd.f32 %v1899, %v3119
        %v3121 = vpop.f32.mrf.mxu0
        %v3122 = vadd.f32 %v1901, %v3121
        %3123 = vmatprep.mubr.f32.mxu0 0.0
        %3124 = vmatmul.mubr.f32.gmra.mxu0 %v1084
        %v3125 = vpop.f32.mrf.mxu0
        %v3126 = vadd.f32 %v1905, %v3125
        %v3127 = vpop.f32.mrf.mxu0
        %v3128 = vadd.f32 %v1907, %v3127
        %3129 = vmatprep.mubr.f32.mxu0 0.0
        %3130 = vmatmul.mubr.f32.gmra.mxu0 %v1085
        %v3131 = vpop.f32.mrf.mxu0
        %v3132 = vadd.f32 %v1911, %v3131
        %v3133 = vpop.f32.mrf.mxu0
        %v3134 = vadd.f32 %v1913, %v3133
        %3135 = vmatprep.mubr.f32.mxu0 0.0
        %3136 = vmatmul.mubr.f32.gmra.mxu0 %v1086
        %v3137 = vpop.f32.mrf.mxu0
        %v3138 = vadd.f32 %v1917, %v3137
        %v3139 = vpop.f32.mrf.mxu0
        %v3140 = vadd.f32 %v1919, %v3139
        %3141 = vdwg.mxu0
        %3142 = vmatprep.subr.mxu0 %v1165
        %3143 = vmatpush1.msra.mxu0 %v1164
        %3144 = vmatprep.subr.mxu0 %v1160
        %3145 = vmatpush1.msra.mxu0 %v1159
        %3146 = vmatprep.subr.mxu0 %v1155
        %3147 = vmatpush1.msra.mxu0 %v1154
        %3148 = vmatprep.subr.mxu0 %v1150
        %3149 = vmatpush1.msra.mxu0 %v1149
        %3150 = vmatprep.subr.mxu0 %v1145
        %3151 = vmatpush1.msra.mxu0 %v1144
        %3152 = vmatprep.subr.mxu0 %v1140
        %3153 = vmatpush1.msra.mxu0 %v1139
        %3154 = vmatprep.subr.mxu0 %v1135
        %3155 = vmatpush1.msra.mxu0 %v1134
        %3156 = vmatprep.subr.mxu0 %v1130
        %3157 = vmatpush1.msra.mxu0 %v1129
        %3158 = vmatprep.subr.mxu0 %v1125
        %3159 = vmatpush1.msra.mxu0 %v1124
        %3160 = vmatprep.subr.mxu0 %v1120
        %3161 = vmatpush1.msra.mxu0 %v1119
        %3162 = vmatprep.subr.mxu0 %v1115
        %3163 = vmatpush1.msra.mxu0 %v1114
        %3164 = vmatprep.subr.mxu0 %v1110
        %3165 = vmatpush1.msra.mxu0 %v1109
        %3166 = vmatprep.subr.mxu0 %v1105
        %3167 = vmatpush1.msra.mxu0 %v1104
        %3168 = vmatprep.subr.mxu0 %v1100
        %3169 = vmatpush1.msra.mxu0 %v1099
        %3170 = vmatprep.subr.mxu0 %v1095
        %3171 = vmatpush1.msra.mxu0 %v1094
        %3172 = vmatprep.subr.mxu0 %v1090
        %3173 = vmatpush1.msra.mxu0 %v1089
        %3174 = vmatprep.subr.mxu0 0.0
        %3175 = vmatpush2.msra.mxu0 0.0
        %3176 = vmatprep.subr.mxu0 0.0
        %3177 = vmatpush2.msra.mxu0 0.0
        %3178 = vmatprep.subr.mxu0 0.0
        %3179 = vmatpush2.msra.mxu0 0.0
        %3180 = vmatprep.subr.mxu0 0.0
        %3181 = vmatpush2.msra.mxu0 0.0
        %3182 = vmatprep.subr.mxu0 0.0
        %3183 = vmatpush2.msra.mxu0 0.0
        %3184 = vmatprep.subr.mxu0 0.0
        %3185 = vmatpush2.msra.mxu0 0.0
        %3186 = vmatprep.subr.mxu0 0.0
        %3187 = vmatpush2.msra.mxu0 0.0
        %3188 = vmatprep.subr.mxu0 0.0
        %3189 = vmatpush2.msra.mxu0 0.0
        %3190 = vmatprep.subr.mxu0 0.0
        %3191 = vmatpush2.msra.mxu0 0.0
        %3192 = vmatprep.subr.mxu0 0.0
        %3193 = vmatpush2.msra.mxu0 0.0
        %3194 = vmatprep.subr.mxu0 0.0
        %3195 = vmatpush2.msra.mxu0 0.0
        %3196 = vmatprep.subr.mxu0 0.0
        %3197 = vmatpush2.msra.mxu0 0.0
        %3198 = vmatprep.subr.mxu0 0.0
        %3199 = vmatpush2.msra.mxu0 0.0
        %3200 = vmatprep.subr.mxu0 0.0
        %3201 = vmatpush2.msra.mxu0 0.0
        %3202 = vmatprep.subr.mxu0 0.0
        %3203 = vmatpush2.msra.mxu0 0.0
        %3204 = vmatprep.subr.mxu0 0.0
        %3205 = vmatpush2.msra.mxu0 0.0
        %3206 = vmatprep.mubr.f32.mxu0 0.0
        %3207 = vmatmul.mubr.f32.gmra.mxu0 %v1055
        %v3208 = vpop.f32.mrf.mxu0
        %v3209 = vadd.f32 %v2245, %v3208
        %v3210 = vpop.f32.mrf.mxu0
        %v3211 = vadd.f32 %v2247, %v3210
        %3212 = vmatprep.mubr.f32.mxu0 0.0
        %3213 = vmatmul.mubr.f32.gmra.mxu0 %v1056
        %v3214 = vpop.f32.mrf.mxu0
        %v3215 = vadd.f32 %v2251, %v3214
        %v3216 = vpop.f32.mrf.mxu0
        %v3217 = vadd.f32 %v2253, %v3216
        %3218 = vmatprep.mubr.f32.mxu0 0.0
        %3219 = vmatmul.mubr.f32.gmra.mxu0 %v1057
        %v3220 = vpop.f32.mrf.mxu0
        %v3221 = vadd.f32 %v2257, %v3220
        %v3222 = vpop.f32.mrf.mxu0
        %v3223 = vadd.f32 %v2259, %v3222
        %3224 = vmatprep.mubr.f32.mxu0 0.0
        %3225 = vmatmul.mubr.f32.gmra.mxu0 %v1058
        %v3226 = vpop.f32.mrf.mxu0
        %v3227 = vadd.f32 %v2263, %v3226
        %v3228 = vpop.f32.mrf.mxu0
        %v3229 = vadd.f32 %v2265, %v3228
        %3230 = vmatprep.mubr.f32.mxu0 0.0
        %3231 = vmatmul.mubr.f32.gmra.mxu0 %v1059
        %v3232 = vpop.f32.mrf.mxu0
        %v3233 = vadd.f32 %v2269, %v3232
        %v3234 = vpop.f32.mrf.mxu0
        %v3235 = vadd.f32 %v2271, %v3234
        %3236 = vmatprep.mubr.f32.mxu0 0.0
        %3237 = vmatmul.mubr.f32.gmra.mxu0 %v1060
        %v3238 = vpop.f32.mrf.mxu0
        %v3239 = vadd.f32 %v2275, %v3238
        %v3240 = vpop.f32.mrf.mxu0
        %v3241 = vadd.f32 %v2277, %v3240
        %3242 = vmatprep.mubr.f32.mxu0 0.0
        %3243 = vmatmul.mubr.f32.gmra.mxu0 %v1061
        %v3244 = vpop.f32.mrf.mxu0
        %v3245 = vadd.f32 %v2281, %v3244
        %v3246 = vpop.f32.mrf.mxu0
        %v3247 = vadd.f32 %v2283, %v3246
        %3248 = vmatprep.mubr.f32.mxu0 0.0
        %3249 = vmatmul.mubr.f32.gmra.mxu0 %v1062
        %v3250 = vpop.f32.mrf.mxu0
        %v3251 = vadd.f32 %v2287, %v3250
        %v3252 = vpop.f32.mrf.mxu0
        %v3253 = vadd.f32 %v2289, %v3252
        %3254 = vmatprep.mubr.f32.mxu0 0.0
        %3255 = vmatmul.mubr.f32.gmra.mxu0 %v1063
        %v3256 = vpop.f32.mrf.mxu0
        %v3257 = vadd.f32 %v2293, %v3256
        %v3258 = vpop.f32.mrf.mxu0
        %v3259 = vadd.f32 %v2295, %v3258
        %3260 = vmatprep.mubr.f32.mxu0 0.0
        %3261 = vmatmul.mubr.f32.gmra.mxu0 %v1064
        %v3262 = vpop.f32.mrf.mxu0
        %v3263 = vadd.f32 %v2299, %v3262
        %v3264 = vpop.f32.mrf.mxu0
        %v3265 = vadd.f32 %v2301, %v3264
        %3266 = vmatprep.mubr.f32.mxu0 0.0
        %3267 = vmatmul.mubr.f32.gmra.mxu0 %v1065
        %v3268 = vpop.f32.mrf.mxu0
        %v3269 = vadd.f32 %v2305, %v3268
        %v3270 = vpop.f32.mrf.mxu0
        %v3271 = vadd.f32 %v2307, %v3270
        %3272 = vmatprep.mubr.f32.mxu0 0.0
        %3273 = vmatmul.mubr.f32.gmra.mxu0 %v1066
        %v3274 = vpop.f32.mrf.mxu0
        %v3275 = vadd.f32 %v2311, %v3274
        %v3276 = vpop.f32.mrf.mxu0
        %v3277 = vadd.f32 %v2313, %v3276
        %3278 = vmatprep.mubr.f32.mxu0 0.0
        %3279 = vmatmul.mubr.f32.gmra.mxu0 %v1067
        %v3280 = vpop.f32.mrf.mxu0
        %v3281 = vadd.f32 %v2317, %v3280
        %v3282 = vpop.f32.mrf.mxu0
        %v3283 = vadd.f32 %v2319, %v3282
        %3284 = vmatprep.mubr.f32.mxu0 0.0
        %3285 = vmatmul.mubr.f32.gmra.mxu0 %v1068
        %v3286 = vpop.f32.mrf.mxu0
        %v3287 = vadd.f32 %v2323, %v3286
        %v3288 = vpop.f32.mrf.mxu0
        %v3289 = vadd.f32 %v2325, %v3288
        %3290 = vmatprep.mubr.f32.mxu0 0.0
        %3291 = vmatmul.mubr.f32.gmra.mxu0 %v1069
        %v3292 = vpop.f32.mrf.mxu0
        %v3293 = vadd.f32 %v2329, %v3292
        %v3294 = vpop.f32.mrf.mxu0
        %v3295 = vadd.f32 %v2331, %v3294
        %3296 = vmatprep.mubr.f32.mxu0 0.0
        %3297 = vmatmul.mubr.f32.gmra.mxu0 %v1070
        %v3298 = vpop.f32.mrf.mxu0
        %v3299 = vadd.f32 %v2335, %v3298
        %v3300 = vpop.f32.mrf.mxu0
        %v3301 = vadd.f32 %v2337, %v3300
        %3302 = vmatprep.mubr.f32.mxu0 0.0
        %3303 = vmatmul.mubr.f32.gmra.mxu0 %v1071
        %v3304 = vpop.f32.mrf.mxu0
        %v3305 = vadd.f32 %v2341, %v3304
        %v3306 = vpop.f32.mrf.mxu0
        %v3307 = vadd.f32 %v2343, %v3306
        %3308 = vmatprep.mubr.f32.mxu0 0.0
        %3309 = vmatmul.mubr.f32.gmra.mxu0 %v1072
        %v3310 = vpop.f32.mrf.mxu0
        %v3311 = vadd.f32 %v2347, %v3310
        %v3312 = vpop.f32.mrf.mxu0
        %v3313 = vadd.f32 %v2349, %v3312
        %3314 = vmatprep.mubr.f32.mxu0 0.0
        %3315 = vmatmul.mubr.f32.gmra.mxu0 %v1073
        %v3316 = vpop.f32.mrf.mxu0
        %v3317 = vadd.f32 %v2353, %v3316
        %v3318 = vpop.f32.mrf.mxu0
        %v3319 = vadd.f32 %v2355, %v3318
        %3320 = vmatprep.mubr.f32.mxu0 0.0
        %3321 = vmatmul.mubr.f32.gmra.mxu0 %v1074
        %v3322 = vpop.f32.mrf.mxu0
        %v3323 = vadd.f32 %v2359, %v3322
        %v3324 = vpop.f32.mrf.mxu0
        %v3325 = vadd.f32 %v2361, %v3324
        %3326 = vmatprep.mubr.f32.mxu0 0.0
        %3327 = vmatmul.mubr.f32.gmra.mxu0 %v1075
        %v3328 = vpop.f32.mrf.mxu0
        %v3329 = vadd.f32 %v2365, %v3328
        %v3330 = vpop.f32.mrf.mxu0
        %v3331 = vadd.f32 %v2367, %v3330
        %3332 = vmatprep.mubr.f32.mxu0 0.0
        %3333 = vmatmul.mubr.f32.gmra.mxu0 %v1076
        %v3334 = vpop.f32.mrf.mxu0
        %v3335 = vadd.f32 %v2371, %v3334
        %v3336 = vpop.f32.mrf.mxu0
        %v3337 = vadd.f32 %v2373, %v3336
        %3338 = vmatprep.mubr.f32.mxu0 0.0
        %3339 = vmatmul.mubr.f32.gmra.mxu0 %v1077
        %v3340 = vpop.f32.mrf.mxu0
        %v3341 = vadd.f32 %v2377, %v3340
        %v3342 = vpop.f32.mrf.mxu0
        %v3343 = vadd.f32 %v2379, %v3342
        %3344 = vmatprep.mubr.f32.mxu0 0.0
        %3345 = vmatmul.mubr.f32.gmra.mxu0 %v1078
        %v3346 = vpop.f32.mrf.mxu0
        %v3347 = vadd.f32 %v2383, %v3346
        %v3348 = vpop.f32.mrf.mxu0
        %v3349 = vadd.f32 %v2385, %v3348
        %3350 = vmatprep.mubr.f32.mxu0 0.0
        %3351 = vmatmul.mubr.f32.gmra.mxu0 %v1079
        %v3352 = vpop.f32.mrf.mxu0
        %v3353 = vadd.f32 %v2389, %v3352
        %v3354 = vpop.f32.mrf.mxu0
        %v3355 = vadd.f32 %v2391, %v3354
        %3356 = vmatprep.mubr.f32.mxu0 0.0
        %3357 = vmatmul.mubr.f32.gmra.mxu0 %v1080
        %v3358 = vpop.f32.mrf.mxu0
        %v3359 = vadd.f32 %v2395, %v3358
        %v3360 = vpop.f32.mrf.mxu0
        %v3361 = vadd.f32 %v2397, %v3360
        %3362 = vmatprep.mubr.f32.mxu0 0.0
        %3363 = vmatmul.mubr.f32.gmra.mxu0 %v1081
        %v3364 = vpop.f32.mrf.mxu0
        %v3365 = vadd.f32 %v2401, %v3364
        %v3366 = vpop.f32.mrf.mxu0
        %v3367 = vadd.f32 %v2403, %v3366
        %3368 = vmatprep.mubr.f32.mxu0 0.0
        %3369 = vmatmul.mubr.f32.gmra.mxu0 %v1082
        %v3370 = vpop.f32.mrf.mxu0
        %v3371 = vadd.f32 %v2407, %v3370
        %v3372 = vpop.f32.mrf.mxu0
        %v3373 = vadd.f32 %v2409, %v3372
        %3374 = vmatprep.mubr.f32.mxu0 0.0
        %3375 = vmatmul.mubr.f32.gmra.mxu0 %v1083
        %v3376 = vpop.f32.mrf.mxu0
        %v3377 = vadd.f32 %v2413, %v3376
        %v3378 = vpop.f32.mrf.mxu0
        %v3379 = vadd.f32 %v2415, %v3378
        %3380 = vmatprep.mubr.f32.mxu0 0.0
        %3381 = vmatmul.mubr.f32.gmra.mxu0 %v1084
        %v3382 = vpop.f32.mrf.mxu0
        %v3383 = vadd.f32 %v2419, %v3382
        %v3384 = vpop.f32.mrf.mxu0
        %v3385 = vadd.f32 %v2421, %v3384
        %3386 = vmatprep.mubr.f32.mxu0 0.0
        %3387 = vmatmul.mubr.f32.gmra.mxu0 %v1085
        %v3388 = vpop.f32.mrf.mxu0
        %v3389 = vadd.f32 %v2425, %v3388
        %v3390 = vpop.f32.mrf.mxu0
        %v3391 = vadd.f32 %v2427, %v3390
        %3392 = vmatprep.mubr.f32.mxu0 0.0
        %3393 = vmatmul.mubr.f32.gmra.mxu0 %v1086
        %v3394 = vpop.f32.mrf.mxu0
        %v3395 = vadd.f32 %v2431, %v3394
        %v3396 = vpop.f32.mrf.mxu0
        %v3397 = vadd.f32 %v2433, %v3396
        %3398 = vdwg.mxu0
        %3399 = vmatprep.subr.mxu0 0.0
        %3400 = vmatpush1.msra.mxu0 %v1166
        %3401 = vmatprep.subr.mxu0 0.0
        %3402 = vmatpush1.msra.mxu0 %v1161
        %3403 = vmatprep.subr.mxu0 0.0
        %3404 = vmatpush1.msra.mxu0 %v1156
        %3405 = vmatprep.subr.mxu0 0.0
        %3406 = vmatpush1.msra.mxu0 %v1151
        %3407 = vmatprep.subr.mxu0 0.0
        %3408 = vmatpush1.msra.mxu0 %v1146
        %3409 = vmatprep.subr.mxu0 0.0
        %3410 = vmatpush1.msra.mxu0 %v1141
        %3411 = vmatprep.subr.mxu0 0.0
        %3412 = vmatpush1.msra.mxu0 %v1136
        %3413 = vmatprep.subr.mxu0 0.0
        %3414 = vmatpush1.msra.mxu0 %v1131
        %3415 = vmatprep.subr.mxu0 0.0
        %3416 = vmatpush1.msra.mxu0 %v1126
        %3417 = vmatprep.subr.mxu0 0.0
        %3418 = vmatpush1.msra.mxu0 %v1121
        %3419 = vmatprep.subr.mxu0 0.0
        %3420 = vmatpush1.msra.mxu0 %v1116
        %3421 = vmatprep.subr.mxu0 0.0
        %3422 = vmatpush1.msra.mxu0 %v1111
        %3423 = vmatprep.subr.mxu0 0.0
        %3424 = vmatpush1.msra.mxu0 %v1106
        %3425 = vmatprep.subr.mxu0 0.0
        %3426 = vmatpush1.msra.mxu0 %v1101
        %3427 = vmatprep.subr.mxu0 0.0
        %3428 = vmatpush1.msra.mxu0 %v1096
        %3429 = vmatprep.subr.mxu0 0.0
        %3430 = vmatpush1.msra.mxu0 %v1091
        %3431 = vmatprep.subr.mxu0 0.0
        %3432 = vmatpush2.msra.mxu0 0.0
        %3433 = vmatprep.subr.mxu0 0.0
        %3434 = vmatpush2.msra.mxu0 0.0
        %3435 = vmatprep.subr.mxu0 0.0
        %3436 = vmatpush2.msra.mxu0 0.0
        %3437 = vmatprep.subr.mxu0 0.0
        %3438 = vmatpush2.msra.mxu0 0.0
        %3439 = vmatprep.subr.mxu0 0.0
        %3440 = vmatpush2.msra.mxu0 0.0
        %3441 = vmatprep.subr.mxu0 0.0
        %3442 = vmatpush2.msra.mxu0 0.0
        %3443 = vmatprep.subr.mxu0 0.0
        %3444 = vmatpush2.msra.mxu0 0.0
        %3445 = vmatprep.subr.mxu0 0.0
        %3446 = vmatpush2.msra.mxu0 0.0
        %3447 = vmatprep.subr.mxu0 0.0
        %3448 = vmatpush2.msra.mxu0 0.0
        %3449 = vmatprep.subr.mxu0 0.0
        %3450 = vmatpush2.msra.mxu0 0.0
        %3451 = vmatprep.subr.mxu0 0.0
        %3452 = vmatpush2.msra.mxu0 0.0
        %3453 = vmatprep.subr.mxu0 0.0
        %3454 = vmatpush2.msra.mxu0 0.0
        %3455 = vmatprep.subr.mxu0 0.0
        %3456 = vmatpush2.msra.mxu0 0.0
        %3457 = vmatprep.subr.mxu0 0.0
        %3458 = vmatpush2.msra.mxu0 0.0
        %3459 = vmatprep.subr.mxu0 0.0
        %3460 = vmatpush2.msra.mxu0 0.0
        %3461 = vmatprep.subr.mxu0 0.0
        %3462 = vmatpush2.msra.mxu0 0.0
        %3463 = vmatprep.mubr.f32.mxu0 0.0
        %3464 = vmatmul.mubr.f32.gmra.mxu0 %v1055
        %v3465 = vpop.f32.mrf.mxu0
        %v3466 = vadd.f32 %v2727, %v3465
        %v3467 = vpop.f32.mrf.mxu0
        %3468 = vmatprep.mubr.f32.mxu0 0.0
        %3469 = vmatmul.mubr.f32.gmra.mxu0 %v1056
        %v3470 = vpop.f32.mrf.mxu0
        %v3471 = vadd.f32 %v2732, %v3470
        %v3472 = vpop.f32.mrf.mxu0
        %3473 = vmatprep.mubr.f32.mxu0 0.0
        %3474 = vmatmul.mubr.f32.gmra.mxu0 %v1057
        %v3475 = vpop.f32.mrf.mxu0
        %v3476 = vadd.f32 %v2737, %v3475
        %v3477 = vpop.f32.mrf.mxu0
        %3478 = vmatprep.mubr.f32.mxu0 0.0
        %3479 = vmatmul.mubr.f32.gmra.mxu0 %v1058
        %v3480 = vpop.f32.mrf.mxu0
        %v3481 = vadd.f32 %v2742, %v3480
        %v3482 = vpop.f32.mrf.mxu0
        %3483 = vmatprep.mubr.f32.mxu0 0.0
        %3484 = vmatmul.mubr.f32.gmra.mxu0 %v1059
        %v3485 = vpop.f32.mrf.mxu0
        %v3486 = vadd.f32 %v2747, %v3485
        %v3487 = vpop.f32.mrf.mxu0
        %3488 = vmatprep.mubr.f32.mxu0 0.0
        %3489 = vmatmul.mubr.f32.gmra.mxu0 %v1060
        %v3490 = vpop.f32.mrf.mxu0
        %v3491 = vadd.f32 %v2752, %v3490
        %v3492 = vpop.f32.mrf.mxu0
        %3493 = vmatprep.mubr.f32.mxu0 0.0
        %3494 = vmatmul.mubr.f32.gmra.mxu0 %v1061
        %v3495 = vpop.f32.mrf.mxu0
        %v3496 = vadd.f32 %v2757, %v3495
        %v3497 = vpop.f32.mrf.mxu0
        %3498 = vmatprep.mubr.f32.mxu0 0.0
        %3499 = vmatmul.mubr.f32.gmra.mxu0 %v1062
        %v3500 = vpop.f32.mrf.mxu0
        %v3501 = vadd.f32 %v2762, %v3500
        %v3502 = vpop.f32.mrf.mxu0
        %3503 = vmatprep.mubr.f32.mxu0 0.0
        %3504 = vmatmul.mubr.f32.gmra.mxu0 %v1063
        %v3505 = vpop.f32.mrf.mxu0
        %v3506 = vadd.f32 %v2767, %v3505
        %v3507 = vpop.f32.mrf.mxu0
        %3508 = vmatprep.mubr.f32.mxu0 0.0
        %3509 = vmatmul.mubr.f32.gmra.mxu0 %v1064
        %v3510 = vpop.f32.mrf.mxu0
        %v3511 = vadd.f32 %v2772, %v3510
        %v3512 = vpop.f32.mrf.mxu0
        %3513 = vmatprep.mubr.f32.mxu0 0.0
        %3514 = vmatmul.mubr.f32.gmra.mxu0 %v1065
        %v3515 = vpop.f32.mrf.mxu0
        %v3516 = vadd.f32 %v2777, %v3515
        %v3517 = vpop.f32.mrf.mxu0
        %3518 = vmatprep.mubr.f32.mxu0 0.0
        %3519 = vmatmul.mubr.f32.gmra.mxu0 %v1066
        %v3520 = vpop.f32.mrf.mxu0
        %v3521 = vadd.f32 %v2782, %v3520
        %v3522 = vpop.f32.mrf.mxu0
        %3523 = vmatprep.mubr.f32.mxu0 0.0
        %3524 = vmatmul.mubr.f32.gmra.mxu0 %v1067
        %v3525 = vpop.f32.mrf.mxu0
        %v3526 = vadd.f32 %v2787, %v3525
        %v3527 = vpop.f32.mrf.mxu0
        %3528 = vmatprep.mubr.f32.mxu0 0.0
        %3529 = vmatmul.mubr.f32.gmra.mxu0 %v1068
        %v3530 = vpop.f32.mrf.mxu0
        %v3531 = vadd.f32 %v2792, %v3530
        %v3532 = vpop.f32.mrf.mxu0
        %3533 = vmatprep.mubr.f32.mxu0 0.0
        %3534 = vmatmul.mubr.f32.gmra.mxu0 %v1069
        %v3535 = vpop.f32.mrf.mxu0
        %v3536 = vadd.f32 %v2797, %v3535
        %v3537 = vpop.f32.mrf.mxu0
        %3538 = vmatprep.mubr.f32.mxu0 0.0
        %3539 = vmatmul.mubr.f32.gmra.mxu0 %v1070
        %v3540 = vpop.f32.mrf.mxu0
        %v3541 = vadd.f32 %v2802, %v3540
        %v3542 = vpop.f32.mrf.mxu0
        %3543 = vmatprep.mubr.f32.mxu0 0.0
        %3544 = vmatmul.mubr.f32.gmra.mxu0 %v1071
        %v3545 = vpop.f32.mrf.mxu0
        %v3546 = vadd.f32 %v2807, %v3545
        %v3547 = vpop.f32.mrf.mxu0
        %3548 = vmatprep.mubr.f32.mxu0 0.0
        %3549 = vmatmul.mubr.f32.gmra.mxu0 %v1072
        %v3550 = vpop.f32.mrf.mxu0
        %v3551 = vadd.f32 %v2812, %v3550
        %v3552 = vpop.f32.mrf.mxu0
        %3553 = vmatprep.mubr.f32.mxu0 0.0
        %3554 = vmatmul.mubr.f32.gmra.mxu0 %v1073
        %v3555 = vpop.f32.mrf.mxu0
        %v3556 = vadd.f32 %v2817, %v3555
        %v3557 = vpop.f32.mrf.mxu0
        %3558 = vmatprep.mubr.f32.mxu0 0.0
        %3559 = vmatmul.mubr.f32.gmra.mxu0 %v1074
        %v3560 = vpop.f32.mrf.mxu0
        %v3561 = vadd.f32 %v2822, %v3560
        %v3562 = vpop.f32.mrf.mxu0
        %3563 = vmatprep.mubr.f32.mxu0 0.0
        %3564 = vmatmul.mubr.f32.gmra.mxu0 %v1075
        %v3565 = vpop.f32.mrf.mxu0
        %v3566 = vadd.f32 %v2827, %v3565
        %v3567 = vpop.f32.mrf.mxu0
        %3568 = vmatprep.mubr.f32.mxu0 0.0
        %3569 = vmatmul.mubr.f32.gmra.mxu0 %v1076
        %v3570 = vpop.f32.mrf.mxu0
        %v3571 = vadd.f32 %v2832, %v3570
        %v3572 = vpop.f32.mrf.mxu0
        %3573 = vmatprep.mubr.f32.mxu0 0.0
        %3574 = vmatmul.mubr.f32.gmra.mxu0 %v1077
        %v3575 = vpop.f32.mrf.mxu0
        %v3576 = vadd.f32 %v2837, %v3575
        %v3577 = vpop.f32.mrf.mxu0
        %3578 = vmatprep.mubr.f32.mxu0 0.0
        %3579 = vmatmul.mubr.f32.gmra.mxu0 %v1078
        %v3580 = vpop.f32.mrf.mxu0
        %v3581 = vadd.f32 %v2842, %v3580
        %v3582 = vpop.f32.mrf.mxu0
        %3583 = vmatprep.mubr.f32.mxu0 0.0
        %3584 = vmatmul.mubr.f32.gmra.mxu0 %v1079
        %v3585 = vpop.f32.mrf.mxu0
        %v3586 = vadd.f32 %v2847, %v3585
        %v3587 = vpop.f32.mrf.mxu0
        %3588 = vmatprep.mubr.f32.mxu0 0.0
        %3589 = vmatmul.mubr.f32.gmra.mxu0 %v1080
        %v3590 = vpop.f32.mrf.mxu0
        %v3591 = vadd.f32 %v2852, %v3590
        %v3592 = vpop.f32.mrf.mxu0
        %3593 = vmatprep.mubr.f32.mxu0 0.0
        %3594 = vmatmul.mubr.f32.gmra.mxu0 %v1081
        %v3595 = vpop.f32.mrf.mxu0
        %v3596 = vadd.f32 %v2857, %v3595
        %v3597 = vpop.f32.mrf.mxu0
        %3598 = vmatprep.mubr.f32.mxu0 0.0
        %3599 = vmatmul.mubr.f32.gmra.mxu0 %v1082
        %v3600 = vpop.f32.mrf.mxu0
        %v3601 = vadd.f32 %v2862, %v3600
        %v3602 = vpop.f32.mrf.mxu0
        %3603 = vmatprep.mubr.f32.mxu0 0.0
        %3604 = vmatmul.mubr.f32.gmra.mxu0 %v1083
        %v3605 = vpop.f32.mrf.mxu0
        %v3606 = vadd.f32 %v2867, %v3605
        %v3607 = vpop.f32.mrf.mxu0
        %3608 = vmatprep.mubr.f32.mxu0 0.0
        %3609 = vmatmul.mubr.f32.gmra.mxu0 %v1084
        %v3610 = vpop.f32.mrf.mxu0
        %v3611 = vadd.f32 %v2872, %v3610
        %v3612 = vpop.f32.mrf.mxu0
        %3613 = vmatprep.mubr.f32.mxu0 0.0
        %3614 = vmatmul.mubr.f32.gmra.mxu0 %v1085
        %v3615 = vpop.f32.mrf.mxu0
        %v3616 = vadd.f32 %v2877, %v3615
        %v3617 = vpop.f32.mrf.mxu0
        %3618 = vmatprep.mubr.f32.mxu0 0.0
        %3619 = vmatmul.mubr.f32.gmra.mxu0 %v1086
        %v3620 = vpop.f32.mrf.mxu0
        %v3621 = vadd.f32 %v2882, %v3620
        %v3622 = vpop.f32.mrf.mxu0
        %3623 = vdwg.mxu0
        %v3624 = vld [vmem:[%s5] sm:$0x1f]
        %v3626 = vlaneseq
        %v3627 = vshrl.u32 %v3626, 7
        %v3628 = vsub.s32 0, %v3627
        %v3629 = vrot.slane %v3624, %v3628
        %v3630 = vlaneseq
        %v3631 = vshrl.u32 %v3630, 7
        %v3632 = vsub.s32 1, %v3631
        %v3633 = vrot.slane %v3624, %v3632
        %v3634 = vlaneseq
        %v3635 = vshrl.u32 %v3634, 7
        %v3636 = vsub.s32 2, %v3635
        %v3637 = vrot.slane %v3624, %v3636
        %v3638 = vlaneseq
        %v3639 = vshrl.u32 %v3638, 7
        %v3640 = vsub.s32 3, %v3639
        %v3641 = vrot.slane %v3624, %v3640
        %v3642 = vlaneseq
        %v3643 = vshrl.u32 %v3642, 7
        %v3644 = vsub.s32 4, %v3643
        %v3645 = vrot.slane %v3624, %v3644
        %v3651 = vadd.f32 %v2952, %v3629
        %v3652 = vadd.f32 %v2954, %v3633
        %v3653 = vadd.f32 %v3209, %v3637
        %v3654 = vadd.f32 %v3211, %v3641
        %v3655 = vadd.f32 %v3466, %v3645
        %v3656 = vadd.f32 %v2958, %v3629
        %v3657 = vadd.f32 %v2960, %v3633
        %v3658 = vadd.f32 %v3215, %v3637
        %v3659 = vadd.f32 %v3217, %v3641
        %v3660 = vadd.f32 %v3471, %v3645
        %v3661 = vadd.f32 %v2964, %v3629
        %v3662 = vadd.f32 %v2966, %v3633
        %v3663 = vadd.f32 %v3221, %v3637
        %v3664 = vadd.f32 %v3223, %v3641
        %v3665 = vadd.f32 %v3476, %v3645
        %v3666 = vadd.f32 %v2970, %v3629
        %v3667 = vadd.f32 %v2972, %v3633
        %v3668 = vadd.f32 %v3227, %v3637
        %v3669 = vadd.f32 %v3229, %v3641
        %v3670 = vadd.f32 %v3481, %v3645
        %v3671 = vadd.f32 %v2976, %v3629
        %v3672 = vadd.f32 %v2978, %v3633
        %v3673 = vadd.f32 %v3233, %v3637
        %v3674 = vadd.f32 %v3235, %v3641
        %v3675 = vadd.f32 %v3486, %v3645
        %v3676 = vadd.f32 %v2982, %v3629
        %v3677 = vadd.f32 %v2984, %v3633
        %v3678 = vadd.f32 %v3239, %v3637
        %v3679 = vadd.f32 %v3241, %v3641
        %v3680 = vadd.f32 %v3491, %v3645
        %v3681 = vadd.f32 %v2988, %v3629
        %v3682 = vadd.f32 %v2990, %v3633
        %v3683 = vadd.f32 %v3245, %v3637
        %v3684 = vadd.f32 %v3247, %v3641
        %v3685 = vadd.f32 %v3496, %v3645
        %v3686 = vadd.f32 %v2994, %v3629
        %v3687 = vadd.f32 %v2996, %v3633
        %v3688 = vadd.f32 %v3251, %v3637
        %v3689 = vadd.f32 %v3253, %v3641
        %v3690 = vadd.f32 %v3501, %v3645
        %v3691 = vadd.f32 %v3000, %v3629
        %v3692 = vadd.f32 %v3002, %v3633
        %v3693 = vadd.f32 %v3257, %v3637
        %v3694 = vadd.f32 %v3259, %v3641
        %v3695 = vadd.f32 %v3506, %v3645
        %v3696 = vadd.f32 %v3006, %v3629
        %v3697 = vadd.f32 %v3008, %v3633
        %v3698 = vadd.f32 %v3263, %v3637
        %v3699 = vadd.f32 %v3265, %v3641
        %v3700 = vadd.f32 %v3511, %v3645
        %v3701 = vadd.f32 %v3012, %v3629
        %v3702 = vadd.f32 %v3014, %v3633
        %v3703 = vadd.f32 %v3269, %v3637
        %v3704 = vadd.f32 %v3271, %v3641
        %v3705 = vadd.f32 %v3516, %v3645
        %v3706 = vadd.f32 %v3018, %v3629
        %v3707 = vadd.f32 %v3020, %v3633
        %v3708 = vadd.f32 %v3275, %v3637
        %v3709 = vadd.f32 %v3277, %v3641
        %v3710 = vadd.f32 %v3521, %v3645
        %v3711 = vadd.f32 %v3024, %v3629
        %v3712 = vadd.f32 %v3026, %v3633
        %v3713 = vadd.f32 %v3281, %v3637
        %v3714 = vadd.f32 %v3283, %v3641
        %v3715 = vadd.f32 %v3526, %v3645
        %v3716 = vadd.f32 %v3030, %v3629
        %v3717 = vadd.f32 %v3032, %v3633
        %v3718 = vadd.f32 %v3287, %v3637
        %v3719 = vadd.f32 %v3289, %v3641
        %v3720 = vadd.f32 %v3531, %v3645
        %v3721 = vadd.f32 %v3036, %v3629
        %v3722 = vadd.f32 %v3038, %v3633
        %v3723 = vadd.f32 %v3293, %v3637
        %v3724 = vadd.f32 %v3295, %v3641
        %v3725 = vadd.f32 %v3536, %v3645
        %v3726 = vadd.f32 %v3042, %v3629
        %v3727 = vadd.f32 %v3044, %v3633
        %v3728 = vadd.f32 %v3299, %v3637
        %v3729 = vadd.f32 %v3301, %v3641
        %v3730 = vadd.f32 %v3541, %v3645
        %v3731 = vadd.f32 %v3048, %v3629
        %v3732 = vadd.f32 %v3050, %v3633
        %v3733 = vadd.f32 %v3305, %v3637
        %v3734 = vadd.f32 %v3307, %v3641
        %v3735 = vadd.f32 %v3546, %v3645
        %v3736 = vadd.f32 %v3054, %v3629
        %v3737 = vadd.f32 %v3056, %v3633
        %v3738 = vadd.f32 %v3311, %v3637
        %v3739 = vadd.f32 %v3313, %v3641
        %v3740 = vadd.f32 %v3551, %v3645
        %v3741 = vadd.f32 %v3060, %v3629
        %v3742 = vadd.f32 %v3062, %v3633
        %v3743 = vadd.f32 %v3317, %v3637
        %v3744 = vadd.f32 %v3319, %v3641
        %v3745 = vadd.f32 %v3556, %v3645
        %v3746 = vadd.f32 %v3066, %v3629
        %v3747 = vadd.f32 %v3068, %v3633
        %v3748 = vadd.f32 %v3323, %v3637
        %v3749 = vadd.f32 %v3325, %v3641
        %v3750 = vadd.f32 %v3561, %v3645
        %v3751 = vadd.f32 %v3072, %v3629
        %v3752 = vadd.f32 %v3074, %v3633
        %v3753 = vadd.f32 %v3329, %v3637
        %v3754 = vadd.f32 %v3331, %v3641
        %v3755 = vadd.f32 %v3566, %v3645
        %v3756 = vadd.f32 %v3078, %v3629
        %v3757 = vadd.f32 %v3080, %v3633
        %v3758 = vadd.f32 %v3335, %v3637
        %v3759 = vadd.f32 %v3337, %v3641
        %v3760 = vadd.f32 %v3571, %v3645
        %v3761 = vadd.f32 %v3084, %v3629
        %v3762 = vadd.f32 %v3086, %v3633
        %v3763 = vadd.f32 %v3341, %v3637
        %v3764 = vadd.f32 %v3343, %v3641
        %v3765 = vadd.f32 %v3576, %v3645
        %v3766 = vadd.f32 %v3090, %v3629
        %v3767 = vadd.f32 %v3092, %v3633
        %v3768 = vadd.f32 %v3347, %v3637
        %v3769 = vadd.f32 %v3349, %v3641
        %v3770 = vadd.f32 %v3581, %v3645
        %v3771 = vadd.f32 %v3096, %v3629
        %v3772 = vadd.f32 %v3098, %v3633
        %v3773 = vadd.f32 %v3353, %v3637
        %v3774 = vadd.f32 %v3355, %v3641
        %v3775 = vadd.f32 %v3586, %v3645
        %v3776 = vadd.f32 %v3102, %v3629
        %v3777 = vadd.f32 %v3104, %v3633
        %v3778 = vadd.f32 %v3359, %v3637
        %v3779 = vadd.f32 %v3361, %v3641
        %v3780 = vadd.f32 %v3591, %v3645
        %v3781 = vadd.f32 %v3108, %v3629
        %v3782 = vadd.f32 %v3110, %v3633
        %v3783 = vadd.f32 %v3365, %v3637
        %v3784 = vadd.f32 %v3367, %v3641
        %v3785 = vadd.f32 %v3596, %v3645
        %v3786 = vadd.f32 %v3114, %v3629
        %v3787 = vadd.f32 %v3116, %v3633
        %v3788 = vadd.f32 %v3371, %v3637
        %v3789 = vadd.f32 %v3373, %v3641
        %v3790 = vadd.f32 %v3601, %v3645
        %v3791 = vadd.f32 %v3120, %v3629
        %v3792 = vadd.f32 %v3122, %v3633
        %v3793 = vadd.f32 %v3377, %v3637
        %v3794 = vadd.f32 %v3379, %v3641
        %v3795 = vadd.f32 %v3606, %v3645
        %v3796 = vadd.f32 %v3126, %v3629
        %v3797 = vadd.f32 %v3128, %v3633
        %v3798 = vadd.f32 %v3383, %v3637
        %v3799 = vadd.f32 %v3385, %v3641
        %v3800 = vadd.f32 %v3611, %v3645
        %v3801 = vadd.f32 %v3132, %v3629
        %v3802 = vadd.f32 %v3134, %v3633
        %v3803 = vadd.f32 %v3389, %v3637
        %v3804 = vadd.f32 %v3391, %v3641
        %v3805 = vadd.f32 %v3616, %v3645
        %v3806 = vadd.f32 %v3138, %v3629
        %v3807 = vadd.f32 %v3140, %v3633
        %v3808 = vadd.f32 %v3395, %v3637
        %v3809 = vadd.f32 %v3397, %v3641
        %v3810 = vadd.f32 %v3621, %v3645
        %v3811 = vmax.f32 %v3651, 0.0
        %v3812 = vmax.f32 %v3652, 0.0
        %v3813 = vmax.f32 %v3653, 0.0
        %v3814 = vmax.f32 %v3654, 0.0
        %v3815 = vmax.f32 %v3655, 0.0
        %v3816 = vmax.f32 %v3656, 0.0
        %v3817 = vmax.f32 %v3657, 0.0
        %v3818 = vmax.f32 %v3658, 0.0
        %v3819 = vmax.f32 %v3659, 0.0
        %v3820 = vmax.f32 %v3660, 0.0
        %v3821 = vmax.f32 %v3661, 0.0
        %v3822 = vmax.f32 %v3662, 0.0
        %v3823 = vmax.f32 %v3663, 0.0
        %v3824 = vmax.f32 %v3664, 0.0
        %v3825 = vmax.f32 %v3665, 0.0
        %v3826 = vmax.f32 %v3666, 0.0
        %v3827 = vmax.f32 %v3667, 0.0
        %v3828 = vmax.f32 %v3668, 0.0
        %v3829 = vmax.f32 %v3669, 0.0
        %v3830 = vmax.f32 %v3670, 0.0
        %v3831 = vmax.f32 %v3671, 0.0
        %v3832 = vmax.f32 %v3672, 0.0
        %v3833 = vmax.f32 %v3673, 0.0
        %v3834 = vmax.f32 %v3674, 0.0
        %v3835 = vmax.f32 %v3675, 0.0
        %v3836 = vmax.f32 %v3676, 0.0
        %v3837 = vmax.f32 %v3677, 0.0
        %v3838 = vmax.f32 %v3678, 0.0
        %v3839 = vmax.f32 %v3679, 0.0
        %v3840 = vmax.f32 %v3680, 0.0
        %v3841 = vmax.f32 %v3681, 0.0
        %v3842 = vmax.f32 %v3682, 0.0
        %v3843 = vmax.f32 %v3683, 0.0
        %v3844 = vmax.f32 %v3684, 0.0
        %v3845 = vmax.f32 %v3685, 0.0
        %v3846 = vmax.f32 %v3686, 0.0
        %v3847 = vmax.f32 %v3687, 0.0
        %v3848 = vmax.f32 %v3688, 0.0
        %v3849 = vmax.f32 %v3689, 0.0
        %v3850 = vmax.f32 %v3690, 0.0
        %v3851 = vmax.f32 %v3691, 0.0
        %v3852 = vmax.f32 %v3692, 0.0
        %v3853 = vmax.f32 %v3693, 0.0
        %v3854 = vmax.f32 %v3694, 0.0
        %v3855 = vmax.f32 %v3695, 0.0
        %v3856 = vmax.f32 %v3696, 0.0
        %v3857 = vmax.f32 %v3697, 0.0
        %v3858 = vmax.f32 %v3698, 0.0
        %v3859 = vmax.f32 %v3699, 0.0
        %v3860 = vmax.f32 %v3700, 0.0
        %v3861 = vmax.f32 %v3701, 0.0
        %v3862 = vmax.f32 %v3702, 0.0
        %v3863 = vmax.f32 %v3703, 0.0
        %v3864 = vmax.f32 %v3704, 0.0
        %v3865 = vmax.f32 %v3705, 0.0
        %v3866 = vmax.f32 %v3706, 0.0
        %v3867 = vmax.f32 %v3707, 0.0
        %v3868 = vmax.f32 %v3708, 0.0
        %v3869 = vmax.f32 %v3709, 0.0
        %v3870 = vmax.f32 %v3710, 0.0
        %v3871 = vmax.f32 %v3711, 0.0
        %v3872 = vmax.f32 %v3712, 0.0
        %v3873 = vmax.f32 %v3713, 0.0
        %v3874 = vmax.f32 %v3714, 0.0
        %v3875 = vmax.f32 %v3715, 0.0
        %v3876 = vmax.f32 %v3716, 0.0
        %v3877 = vmax.f32 %v3717, 0.0
        %v3878 = vmax.f32 %v3718, 0.0
        %v3879 = vmax.f32 %v3719, 0.0
        %v3880 = vmax.f32 %v3720, 0.0
        %v3881 = vmax.f32 %v3721, 0.0
        %v3882 = vmax.f32 %v3722, 0.0
        %v3883 = vmax.f32 %v3723, 0.0
        %v3884 = vmax.f32 %v3724, 0.0
        %v3885 = vmax.f32 %v3725, 0.0
        %v3886 = vmax.f32 %v3726, 0.0
        %v3887 = vmax.f32 %v3727, 0.0
        %v3888 = vmax.f32 %v3728, 0.0
        %v3889 = vmax.f32 %v3729, 0.0
        %v3890 = vmax.f32 %v3730, 0.0
        %v3891 = vmax.f32 %v3731, 0.0
        %v3892 = vmax.f32 %v3732, 0.0
        %v3893 = vmax.f32 %v3733, 0.0
        %v3894 = vmax.f32 %v3734, 0.0
        %v3895 = vmax.f32 %v3735, 0.0
        %v3896 = vmax.f32 %v3736, 0.0
        %v3897 = vmax.f32 %v3737, 0.0
        %v3898 = vmax.f32 %v3738, 0.0
        %v3899 = vmax.f32 %v3739, 0.0
        %v3900 = vmax.f32 %v3740, 0.0
        %v3901 = vmax.f32 %v3741, 0.0
        %v3902 = vmax.f32 %v3742, 0.0
        %v3903 = vmax.f32 %v3743, 0.0
        %v3904 = vmax.f32 %v3744, 0.0
        %v3905 = vmax.f32 %v3745, 0.0
        %v3906 = vmax.f32 %v3746, 0.0
        %v3907 = vmax.f32 %v3747, 0.0
        %v3908 = vmax.f32 %v3748, 0.0
        %v3909 = vmax.f32 %v3749, 0.0
        %v3910 = vmax.f32 %v3750, 0.0
        %v3911 = vmax.f32 %v3751, 0.0
        %v3912 = vmax.f32 %v3752, 0.0
        %v3913 = vmax.f32 %v3753, 0.0
        %v3914 = vmax.f32 %v3754, 0.0
        %v3915 = vmax.f32 %v3755, 0.0
        %v3916 = vmax.f32 %v3756, 0.0
        %v3917 = vmax.f32 %v3757, 0.0
        %v3918 = vmax.f32 %v3758, 0.0
        %v3919 = vmax.f32 %v3759, 0.0
        %v3920 = vmax.f32 %v3760, 0.0
        %v3921 = vmax.f32 %v3761, 0.0
        %v3922 = vmax.f32 %v3762, 0.0
        %v3923 = vmax.f32 %v3763, 0.0
        %v3924 = vmax.f32 %v3764, 0.0
        %v3925 = vmax.f32 %v3765, 0.0
        %v3926 = vmax.f32 %v3766, 0.0
        %v3927 = vmax.f32 %v3767, 0.0
        %v3928 = vmax.f32 %v3768, 0.0
        %v3929 = vmax.f32 %v3769, 0.0
        %v3930 = vmax.f32 %v3770, 0.0
        %v3931 = vmax.f32 %v3771, 0.0
        %v3932 = vmax.f32 %v3772, 0.0
        %v3933 = vmax.f32 %v3773, 0.0
        %v3934 = vmax.f32 %v3774, 0.0
        %v3935 = vmax.f32 %v3775, 0.0
        %v3936 = vmax.f32 %v3776, 0.0
        %v3937 = vmax.f32 %v3777, 0.0
        %v3938 = vmax.f32 %v3778, 0.0
        %v3939 = vmax.f32 %v3779, 0.0
        %v3940 = vmax.f32 %v3780, 0.0
        %v3941 = vmax.f32 %v3781, 0.0
        %v3942 = vmax.f32 %v3782, 0.0
        %v3943 = vmax.f32 %v3783, 0.0
        %v3944 = vmax.f32 %v3784, 0.0
        %v3945 = vmax.f32 %v3785, 0.0
        %v3946 = vmax.f32 %v3786, 0.0
        %v3947 = vmax.f32 %v3787, 0.0
        %v3948 = vmax.f32 %v3788, 0.0
        %v3949 = vmax.f32 %v3789, 0.0
        %v3950 = vmax.f32 %v3790, 0.0
        %v3951 = vmax.f32 %v3791, 0.0
        %v3952 = vmax.f32 %v3792, 0.0
        %v3953 = vmax.f32 %v3793, 0.0
        %v3954 = vmax.f32 %v3794, 0.0
        %v3955 = vmax.f32 %v3795, 0.0
        %v3956 = vmax.f32 %v3796, 0.0
        %v3957 = vmax.f32 %v3797, 0.0
        %v3958 = vmax.f32 %v3798, 0.0
        %v3959 = vmax.f32 %v3799, 0.0
        %v3960 = vmax.f32 %v3800, 0.0
        %v3961 = vmax.f32 %v3801, 0.0
        %v3962 = vmax.f32 %v3802, 0.0
        %v3963 = vmax.f32 %v3803, 0.0
        %v3964 = vmax.f32 %v3804, 0.0
        %v3965 = vmax.f32 %v3805, 0.0
        %v3966 = vmax.f32 %v3806, 0.0
        %v3967 = vmax.f32 %v3807, 0.0
        %v3968 = vmax.f32 %v3808, 0.0
        %v3969 = vmax.f32 %v3809, 0.0
        %v3970 = vmax.f32 %v3810, 0.0
        %v3971 = vld [vmem:[#allocation10] sm:$0xff]
        %v3972 = vld [vmem:[#allocation10 + $0x8] sm:$0xff]
        %v3973 = vld [vmem:[#allocation10 + $0x10] sm:$0xff]
        %v3974 = vld [vmem:[#allocation10 + $0x18] sm:$0xff]
        %v3975 = vld [vmem:[#allocation10 + $0x20] sm:$0xff]
        %v3976 = vld [vmem:[#allocation10 + $0x28] sm:$0xff]
        %v3977 = vld [vmem:[#allocation10 + $0x30] sm:$0xff]
        %v3978 = vld [vmem:[#allocation10 + $0x38] sm:$0xff]
        %v3979 = vld [vmem:[#allocation10 + $0x40] sm:$0xff]
        %v3980 = vld [vmem:[#allocation10 + $0x48] sm:$0xff]
        %v3981 = vld [vmem:[#allocation10 + $0x50] sm:$0xff]
        %v3982 = vld [vmem:[#allocation10 + $0x58] sm:$0xff]
        %v3983 = vld [vmem:[#allocation10 + $0x60] sm:$0xff]
        %v3984 = vld [vmem:[#allocation10 + $0x68] sm:$0xff]
        %v3985 = vld [vmem:[#allocation10 + $0x70] sm:$0xff]
        %v3986 = vld [vmem:[#allocation10 + $0x78] sm:$0xff]
        %v3987 = vld [vmem:[#allocation10 + $0x80] sm:$0xff]
        %v3988 = vld [vmem:[#allocation10 + $0x88] sm:$0xff]
        %v3989 = vld [vmem:[#allocation10 + $0x90] sm:$0xff]
        %v3990 = vld [vmem:[#allocation10 + $0x98] sm:$0xff]
        %v3991 = vld [vmem:[#allocation10 + $0xa0] sm:$0xff]
        %v3992 = vld [vmem:[#allocation10 + $0xa8] sm:$0xff]
        %v3993 = vld [vmem:[#allocation10 + $0xb0] sm:$0xff]
        %v3994 = vld [vmem:[#allocation10 + $0xb8] sm:$0xff]
        %v3995 = vld [vmem:[#allocation10 + $0xc0] sm:$0xff]
        %v3996 = vld [vmem:[#allocation10 + $0xc8] sm:$0xff]
        %v3997 = vld [vmem:[#allocation10 + $0xd0] sm:$0xff]
        %v3998 = vld [vmem:[#allocation10 + $0xd8] sm:$0xff]
        %v3999 = vld [vmem:[#allocation10 + $0xe0] sm:$0xff]
        %v4000 = vld [vmem:[#allocation10 + $0xe8] sm:$0xff]
        %v4001 = vld [vmem:[#allocation10 + $0xf0] sm:$0xff]
        %v4002 = vld [vmem:[#allocation10 + $0xf8] sm:$0xff]
        %v4003 = vld [vmem:[#allocation10 + $0x100] sm:$0xff]
        %v4004 = vld [vmem:[#allocation10 + $0x108] sm:$0xff]
        %v4005 = vld [vmem:[#allocation10 + $0x110] sm:$0xff]
        %v4006 = vld [vmem:[#allocation10 + $0x118] sm:$0xff]
        %v4007 = vld [vmem:[#allocation10 + $0x120] sm:$0xff]
        %v4008 = vld [vmem:[#allocation10 + $0x128] sm:$0xff]
        %v4009 = vld [vmem:[#allocation10 + $0x130] sm:$0xff]
        %v4010 = vld [vmem:[#allocation10 + $0x138] sm:$0xff]
        %v4011 = vld [vmem:[#allocation10 + $0x140] sm:$0xff]
        %v4012 = vld [vmem:[#allocation10 + $0x148] sm:$0xff]
        %v4013 = vld [vmem:[#allocation10 + $0x150] sm:$0xff]
        %v4014 = vld [vmem:[#allocation10 + $0x158] sm:$0xff]
        %v4015 = vld [vmem:[#allocation10 + $0x160] sm:$0xff]
        %v4016 = vld [vmem:[#allocation10 + $0x168] sm:$0xff]
        %v4017 = vld [vmem:[#allocation10 + $0x170] sm:$0xff]
        %v4018 = vld [vmem:[#allocation10 + $0x178] sm:$0xff]
        %v4019 = vld [vmem:[#allocation10 + $0x180] sm:$0xff]
        %v4020 = vld [vmem:[#allocation10 + $0x188] sm:$0xff]
        %v4021 = vld [vmem:[#allocation10 + $0x190] sm:$0xff]
        %v4022 = vld [vmem:[#allocation10 + $0x198] sm:$0xff]
        %v4023 = vld [vmem:[#allocation10 + $0x1a0] sm:$0xff]
        %v4024 = vld [vmem:[#allocation10 + $0x1a8] sm:$0xff]
        %v4025 = vld [vmem:[#allocation10 + $0x1b0] sm:$0xff]
        %v4026 = vld [vmem:[#allocation10 + $0x1b8] sm:$0xff]
        %v4027 = vld [vmem:[#allocation10 + $0x1c0] sm:$0xff]
        %v4028 = vld [vmem:[#allocation10 + $0x1c8] sm:$0xff]
        %v4029 = vld [vmem:[#allocation10 + $0x1d0] sm:$0xff]
        %v4030 = vld [vmem:[#allocation10 + $0x1d8] sm:$0xff]
        %v4031 = vld [vmem:[#allocation10 + $0x1e0] sm:$0xff]
        %v4032 = vld [vmem:[#allocation10 + $0x1e8] sm:$0xff]
        %v4033 = vld [vmem:[#allocation10 + $0x1f0] sm:$0xff]
        %v4034 = vld [vmem:[#allocation10 + $0x1f8] sm:$0xff]
        %v4035 = vld [vmem:[#allocation10 + $0x200] sm:$0xff]
        %v4036 = vld [vmem:[#allocation10 + $0x208] sm:$0xff]
        %v4037 = vld [vmem:[#allocation10 + $0x210] sm:$0xff]
        %v4038 = vld [vmem:[#allocation10 + $0x218] sm:$0xff]
        %v4039 = vld [vmem:[#allocation10 + $0x220] sm:$0xff]
        %v4040 = vld [vmem:[#allocation10 + $0x228] sm:$0xff]
        %v4041 = vld [vmem:[#allocation10 + $0x230] sm:$0xff]
        %v4042 = vld [vmem:[#allocation10 + $0x238] sm:$0xff]
        %v4043 = vld [vmem:[#allocation10 + $0x240] sm:$0xff]
        %v4044 = vld [vmem:[#allocation10 + $0x248] sm:$0xff]
        %v4045 = vld [vmem:[#allocation10 + $0x250] sm:$0xff]
        %v4046 = vld [vmem:[#allocation10 + $0x258] sm:$0xff]
        %v4047 = vld [vmem:[#allocation10 + $0x260] sm:$0xff]
        %v4048 = vld [vmem:[#allocation10 + $0x268] sm:$0xff]
        %v4049 = vld [vmem:[#allocation10 + $0x270] sm:$0xff]
        %v4050 = vld [vmem:[#allocation10 + $0x278] sm:$0xff]
        %v4051 = vld [vmem:[#allocation10 + $0x280] sm:$0xff]
        %v4052 = vld [vmem:[#allocation10 + $0x288] sm:$0xff]
        %v4053 = vld [vmem:[#allocation10 + $0x290] sm:$0xff]
        %v4054 = vld [vmem:[#allocation10 + $0x298] sm:$0xff]
        %v4055 = vld [vmem:[#allocation10 + $0x2a0] sm:$0xff]
        %v4056 = vld [vmem:[#allocation10 + $0x2a8] sm:$0xff]
        %v4057 = vld [vmem:[#allocation10 + $0x2b0] sm:$0xff]
        %v4058 = vld [vmem:[#allocation10 + $0x2b8] sm:$0xff]
        %v4059 = vld [vmem:[#allocation10 + $0x2c0] sm:$0xff]
        %v4060 = vld [vmem:[#allocation10 + $0x2c8] sm:$0xff]
        %v4061 = vld [vmem:[#allocation10 + $0x2d0] sm:$0xff]
        %v4062 = vld [vmem:[#allocation10 + $0x2d8] sm:$0xff]
        %v4063 = vld [vmem:[#allocation10 + $0x2e0] sm:$0xff]
        %v4064 = vld [vmem:[#allocation10 + $0x2e8] sm:$0xff]
        %v4065 = vld [vmem:[#allocation10 + $0x2f0] sm:$0xff]
        %v4066 = vld [vmem:[#allocation10 + $0x2f8] sm:$0xff]
        %v4067 = vld [vmem:[#allocation10 + $0x300] sm:$0xff]
        %v4068 = vld [vmem:[#allocation10 + $0x308] sm:$0xff]
        %v4069 = vld [vmem:[#allocation10 + $0x310] sm:$0xff]
        %v4070 = vld [vmem:[#allocation10 + $0x318] sm:$0xff]
        %v4071 = vld [vmem:[#allocation10 + $0x320] sm:$0xff]
        %v4072 = vld [vmem:[#allocation10 + $0x328] sm:$0xff]
        %v4073 = vld [vmem:[#allocation10 + $0x330] sm:$0xff]
        %v4074 = vld [vmem:[#allocation10 + $0x338] sm:$0xff]
        %v4075 = vld [vmem:[#allocation10 + $0x340] sm:$0xff]
        %v4076 = vld [vmem:[#allocation10 + $0x348] sm:$0xff]
        %v4077 = vld [vmem:[#allocation10 + $0x350] sm:$0xff]
        %v4078 = vld [vmem:[#allocation10 + $0x358] sm:$0xff]
        %v4079 = vld [vmem:[#allocation10 + $0x360] sm:$0xff]
        %v4080 = vld [vmem:[#allocation10 + $0x368] sm:$0xff]
        %v4081 = vld [vmem:[#allocation10 + $0x370] sm:$0xff]
        %v4082 = vld [vmem:[#allocation10 + $0x378] sm:$0xff]
        %v4083 = vld [vmem:[#allocation10 + $0x380] sm:$0xff]
        %v4084 = vld [vmem:[#allocation10 + $0x388] sm:$0xff]
        %v4085 = vld [vmem:[#allocation10 + $0x390] sm:$0xff]
        %v4086 = vld [vmem:[#allocation10 + $0x398] sm:$0xff]
        %v4087 = vld [vmem:[#allocation10 + $0x3a0] sm:$0xff]
        %v4088 = vld [vmem:[#allocation10 + $0x3a8] sm:$0xff]
        %v4089 = vld [vmem:[#allocation10 + $0x3b0] sm:$0xff]
        %v4090 = vld [vmem:[#allocation10 + $0x3b8] sm:$0xff]
        %v4091 = vld [vmem:[#allocation10 + $0x3c0] sm:$0xff]
        %v4092 = vld [vmem:[#allocation10 + $0x3c8] sm:$0xff]
        %v4093 = vld [vmem:[#allocation10 + $0x3d0] sm:$0xff]
        %v4094 = vld [vmem:[#allocation10 + $0x3d8] sm:$0xff]
        %v4095 = vld [vmem:[#allocation10 + $0x3e0] sm:$0xff]
        %v4096 = vld [vmem:[#allocation10 + $0x3e8] sm:$0xff]
        %v4097 = vld [vmem:[#allocation10 + $0x3f0] sm:$0xff]
        %v4098 = vld [vmem:[#allocation10 + $0x3f8] sm:$0xff]
        %v4099 = vld [vmem:[#allocation10 + $0x400] sm:$0xff]
        %v4100 = vld [vmem:[#allocation10 + $0x408] sm:$0xff]
        %v4101 = vld [vmem:[#allocation10 + $0x410] sm:$0xff]
        %v4102 = vld [vmem:[#allocation10 + $0x418] sm:$0xff]
        %v4103 = vld [vmem:[#allocation10 + $0x420] sm:$0xff]
        %v4104 = vld [vmem:[#allocation10 + $0x428] sm:$0xff]
        %v4105 = vld [vmem:[#allocation10 + $0x430] sm:$0xff]
        %v4106 = vld [vmem:[#allocation10 + $0x438] sm:$0xff]
        %v4107 = vld [vmem:[#allocation10 + $0x440] sm:$0xff]
        %v4108 = vld [vmem:[#allocation10 + $0x448] sm:$0xff]
        %v4109 = vld [vmem:[#allocation10 + $0x450] sm:$0xff]
        %v4110 = vld [vmem:[#allocation10 + $0x458] sm:$0xff]
        %v4111 = vld [vmem:[#allocation10 + $0x460] sm:$0xff]
        %v4112 = vld [vmem:[#allocation10 + $0x468] sm:$0xff]
        %v4113 = vld [vmem:[#allocation10 + $0x470] sm:$0xff]
        %v4114 = vld [vmem:[#allocation10 + $0x478] sm:$0xff]
        %v4115 = vld [vmem:[#allocation10 + $0x480] sm:$0xff]
        %v4116 = vld [vmem:[#allocation10 + $0x488] sm:$0xff]
        %v4117 = vld [vmem:[#allocation10 + $0x490] sm:$0xff]
        %v4118 = vld [vmem:[#allocation10 + $0x498] sm:$0xff]
        %v4119 = vld [vmem:[#allocation10 + $0x4a0] sm:$0xff]
        %v4120 = vld [vmem:[#allocation10 + $0x4a8] sm:$0xff]
        %v4121 = vld [vmem:[#allocation10 + $0x4b0] sm:$0xff]
        %v4122 = vld [vmem:[#allocation10 + $0x4b8] sm:$0xff]
        %v4123 = vld [vmem:[#allocation10 + $0x4c0] sm:$0xff]
        %v4124 = vld [vmem:[#allocation10 + $0x4c8] sm:$0xff]
        %v4125 = vld [vmem:[#allocation10 + $0x4d0] sm:$0xff]
        %v4126 = vld [vmem:[#allocation10 + $0x4d8] sm:$0xff]
        %v4127 = vld [vmem:[#allocation10 + $0x4e0] sm:$0xff]
        %v4128 = vld [vmem:[#allocation10 + $0x4e8] sm:$0xff]
        %v4129 = vld [vmem:[#allocation10 + $0x4f0] sm:$0xff]
        %v4130 = vld [vmem:[#allocation10 + $0x4f8] sm:$0xff]
        %v4131 = vld [vmem:[#allocation10 + $0x500] sm:$0xff]
        %v4132 = vld [vmem:[#allocation10 + $0x508] sm:$0xff]
        %v4133 = vld [vmem:[#allocation10 + $0x510] sm:$0xff]
        %v4134 = vld [vmem:[#allocation10 + $0x518] sm:$0xff]
        %v4135 = vld [vmem:[#allocation10 + $0x520] sm:$0xff]
        %v4136 = vld [vmem:[#allocation10 + $0x528] sm:$0xff]
        %v4137 = vld [vmem:[#allocation10 + $0x530] sm:$0xff]
        %v4138 = vld [vmem:[#allocation10 + $0x538] sm:$0xff]
        %v4139 = vld [vmem:[#allocation10 + $0x540] sm:$0xff]
        %v4140 = vld [vmem:[#allocation10 + $0x548] sm:$0xff]
        %v4141 = vld [vmem:[#allocation10 + $0x550] sm:$0xff]
        %v4142 = vld [vmem:[#allocation10 + $0x558] sm:$0xff]
        %v4143 = vld [vmem:[#allocation10 + $0x560] sm:$0xff]
        %v4144 = vld [vmem:[#allocation10 + $0x568] sm:$0xff]
        %v4145 = vld [vmem:[#allocation10 + $0x570] sm:$0xff]
        %v4146 = vld [vmem:[#allocation10 + $0x578] sm:$0xff]
        %v4147 = vld [vmem:[#allocation10 + $0x580] sm:$0xff]
        %v4148 = vld [vmem:[#allocation10 + $0x588] sm:$0xff]
        %v4149 = vld [vmem:[#allocation10 + $0x590] sm:$0xff]
        %v4150 = vld [vmem:[#allocation10 + $0x598] sm:$0xff]
        %v4151 = vld [vmem:[#allocation10 + $0x5a0] sm:$0xff]
        %v4152 = vld [vmem:[#allocation10 + $0x5a8] sm:$0xff]
        %v4153 = vld [vmem:[#allocation10 + $0x5b0] sm:$0xff]
        %v4154 = vld [vmem:[#allocation10 + $0x5b8] sm:$0xff]
        %v4155 = vld [vmem:[#allocation10 + $0x5c0] sm:$0xff]
        %v4156 = vld [vmem:[#allocation10 + $0x5c8] sm:$0xff]
        %v4157 = vld [vmem:[#allocation10 + $0x5d0] sm:$0xff]
        %v4158 = vld [vmem:[#allocation10 + $0x5d8] sm:$0xff]
        %v4159 = vld [vmem:[#allocation10 + $0x5e0] sm:$0xff]
        %v4160 = vld [vmem:[#allocation10 + $0x5e8] sm:$0xff]
        %v4161 = vld [vmem:[#allocation10 + $0x5f0] sm:$0xff]
        %v4162 = vld [vmem:[#allocation10 + $0x5f8] sm:$0xff]
        %v4163 = vld [vmem:[#allocation10 + $0x600] sm:$0xff]
        %v4164 = vld [vmem:[#allocation10 + $0x608] sm:$0xff]
        %v4165 = vld [vmem:[#allocation10 + $0x610] sm:$0xff]
        %v4166 = vld [vmem:[#allocation10 + $0x618] sm:$0xff]
        %v4167 = vld [vmem:[#allocation10 + $0x620] sm:$0xff]
        %v4168 = vld [vmem:[#allocation10 + $0x628] sm:$0xff]
        %v4169 = vld [vmem:[#allocation10 + $0x630] sm:$0xff]
        %v4170 = vld [vmem:[#allocation10 + $0x638] sm:$0xff]
        %v4171 = vld [vmem:[#allocation10 + $0x640] sm:$0xff]
        %v4172 = vld [vmem:[#allocation10 + $0x648] sm:$0xff]
        %v4173 = vld [vmem:[#allocation10 + $0x650] sm:$0xff]
        %v4174 = vld [vmem:[#allocation10 + $0x658] sm:$0xff]
        %v4175 = vld [vmem:[#allocation10 + $0x660] sm:$0xff]
        %v4176 = vld [vmem:[#allocation10 + $0x668] sm:$0xff]
        %v4177 = vld [vmem:[#allocation10 + $0x670] sm:$0xff]
        %v4178 = vld [vmem:[#allocation10 + $0x678] sm:$0xff]
        %v4179 = vld [vmem:[#allocation10 + $0x680] sm:$0xff]
        %v4180 = vld [vmem:[#allocation10 + $0x688] sm:$0xff]
        %v4181 = vld [vmem:[#allocation10 + $0x690] sm:$0xff]
        %v4182 = vld [vmem:[#allocation10 + $0x698] sm:$0xff]
        %v4183 = vld [vmem:[#allocation10 + $0x6a0] sm:$0xff]
        %v4184 = vld [vmem:[#allocation10 + $0x6a8] sm:$0xff]
        %v4185 = vld [vmem:[#allocation10 + $0x6b0] sm:$0xff]
        %v4186 = vld [vmem:[#allocation10 + $0x6b8] sm:$0xff]
        %v4187 = vld [vmem:[#allocation10 + $0x6c0] sm:$0xff]
        %v4188 = vld [vmem:[#allocation10 + $0x6c8] sm:$0xff]
        %v4189 = vld [vmem:[#allocation10 + $0x6d0] sm:$0xff]
        %v4190 = vld [vmem:[#allocation10 + $0x6d8] sm:$0xff]
        %v4191 = vld [vmem:[#allocation10 + $0x6e0] sm:$0xff]
        %v4192 = vld [vmem:[#allocation10 + $0x6e8] sm:$0xff]
        %v4193 = vld [vmem:[#allocation10 + $0x6f0] sm:$0xff]
        %v4194 = vld [vmem:[#allocation10 + $0x6f8] sm:$0xff]
        %v4195 = vld [vmem:[#allocation10 + $0x700] sm:$0xff]
        %v4196 = vld [vmem:[#allocation10 + $0x708] sm:$0xff]
        %v4197 = vld [vmem:[#allocation10 + $0x710] sm:$0xff]
        %v4198 = vld [vmem:[#allocation10 + $0x718] sm:$0xff]
        %v4199 = vld [vmem:[#allocation10 + $0x720] sm:$0xff]
        %v4200 = vld [vmem:[#allocation10 + $0x728] sm:$0xff]
        %v4201 = vld [vmem:[#allocation10 + $0x730] sm:$0xff]
        %v4202 = vld [vmem:[#allocation10 + $0x738] sm:$0xff]
        %v4203 = vld [vmem:[#allocation10 + $0x740] sm:$0xff]
        %v4204 = vld [vmem:[#allocation10 + $0x748] sm:$0xff]
        %v4205 = vld [vmem:[#allocation10 + $0x750] sm:$0xff]
        %v4206 = vld [vmem:[#allocation10 + $0x758] sm:$0xff]
        %v4207 = vld [vmem:[#allocation10 + $0x760] sm:$0xff]
        %v4208 = vld [vmem:[#allocation10 + $0x768] sm:$0xff]
        %v4209 = vld [vmem:[#allocation10 + $0x770] sm:$0xff]
        %v4210 = vld [vmem:[#allocation10 + $0x778] sm:$0xff]
        %v4211 = vld [vmem:[%s7] sm:$0x7]
        %v4213 = vlaneseq
        %v4214 = vshrl.u32 %v4213, 7
        %v4215 = vsub.s32 0, %v4214
        %v4216 = vrot.slane %v4211, %v4215
        %v4217 = vlaneseq
        %v4218 = vshrl.u32 %v4217, 7
        %v4219 = vsub.s32 1, %v4218
        %v4220 = vrot.slane %v4211, %v4219
        %v4221 = vlaneseq
        %v4222 = vshrl.u32 %v4221, 7
        %v4223 = vsub.s32 2, %v4222
        %v4224 = vrot.slane %v4211, %v4223
        %4228 = vmatprep.subr.mxu0 %v4017
        %4229 = vmatpush1.msra.mxu0 %v4016
        %4230 = vmatprep.subr.mxu0 %v4014
        %4231 = vmatpush1.msra.mxu0 %v4013
        %4232 = vmatprep.subr.mxu0 %v4011
        %4233 = vmatpush1.msra.mxu0 %v4010
        %4234 = vmatprep.subr.mxu0 %v4008
        %4235 = vmatpush1.msra.mxu0 %v4007
        %4236 = vmatprep.subr.mxu0 %v4005
        %4237 = vmatpush1.msra.mxu0 %v4004
        %4238 = vmatprep.subr.mxu0 %v4002
        %4239 = vmatpush1.msra.mxu0 %v4001
        %4240 = vmatprep.subr.mxu0 %v3999
        %4241 = vmatpush1.msra.mxu0 %v3998
        %4242 = vmatprep.subr.mxu0 %v3996
        %4243 = vmatpush1.msra.mxu0 %v3995
        %4244 = vmatprep.subr.mxu0 %v3993
        %4245 = vmatpush1.msra.mxu0 %v3992
        %4246 = vmatprep.subr.mxu0 %v3990
        %4247 = vmatpush1.msra.mxu0 %v3989
        %4248 = vmatprep.subr.mxu0 %v3987
        %4249 = vmatpush1.msra.mxu0 %v3986
        %4250 = vmatprep.subr.mxu0 %v3984
        %4251 = vmatpush1.msra.mxu0 %v3983
        %4252 = vmatprep.subr.mxu0 %v3981
        %4253 = vmatpush1.msra.mxu0 %v3980
        %4254 = vmatprep.subr.mxu0 %v3978
        %4255 = vmatpush1.msra.mxu0 %v3977
        %4256 = vmatprep.subr.mxu0 %v3975
        %4257 = vmatpush1.msra.mxu0 %v3974
        %4258 = vmatprep.subr.mxu0 %v3972
        %4259 = vmatpush1.msra.mxu0 %v3971
        %4260 = vmatprep.subr.mxu0 %v4065
        %4261 = vmatpush2.msra.mxu0 %v4064
        %4262 = vmatprep.subr.mxu0 %v4062
        %4263 = vmatpush2.msra.mxu0 %v4061
        %4264 = vmatprep.subr.mxu0 %v4059
        %4265 = vmatpush2.msra.mxu0 %v4058
        %4266 = vmatprep.subr.mxu0 %v4056
        %4267 = vmatpush2.msra.mxu0 %v4055
        %4268 = vmatprep.subr.mxu0 %v4053
        %4269 = vmatpush2.msra.mxu0 %v4052
        %4270 = vmatprep.subr.mxu0 %v4050
        %4271 = vmatpush2.msra.mxu0 %v4049
        %4272 = vmatprep.subr.mxu0 %v4047
        %4273 = vmatpush2.msra.mxu0 %v4046
        %4274 = vmatprep.subr.mxu0 %v4044
        %4275 = vmatpush2.msra.mxu0 %v4043
        %4276 = vmatprep.subr.mxu0 %v4041
        %4277 = vmatpush2.msra.mxu0 %v4040
        %4278 = vmatprep.subr.mxu0 %v4038
        %4279 = vmatpush2.msra.mxu0 %v4037
        %4280 = vmatprep.subr.mxu0 %v4035
        %4281 = vmatpush2.msra.mxu0 %v4034
        %4282 = vmatprep.subr.mxu0 %v4032
        %4283 = vmatpush2.msra.mxu0 %v4031
        %4284 = vmatprep.subr.mxu0 %v4029
        %4285 = vmatpush2.msra.mxu0 %v4028
        %4286 = vmatprep.subr.mxu0 %v4026
        %4287 = vmatpush2.msra.mxu0 %v4025
        %4288 = vmatprep.subr.mxu0 %v4023
        %4289 = vmatpush2.msra.mxu0 %v4022
        %4290 = vmatprep.subr.mxu0 %v4020
        %4291 = vmatpush2.msra.mxu0 %v4019
        %4292 = vmatprep.mubr.f32.mxu0 %v3812
        %4293 = vmatmul.mubr.f32.gmra.mxu0 %v3811
        %v4294 = vpop.f32.mrf.mxu0
        %v4295 = vadd.f32 %v4216, %v4294
        %v4296 = vpop.f32.mrf.mxu0
        %v4297 = vadd.f32 %v4220, %v4296
        %4298 = vmatprep.mubr.f32.mxu0 %v3817
        %4299 = vmatmul.mubr.f32.gmra.mxu0 %v3816
        %v4300 = vpop.f32.mrf.mxu0
        %v4301 = vadd.f32 %v4216, %v4300
        %v4302 = vpop.f32.mrf.mxu0
        %v4303 = vadd.f32 %v4220, %v4302
        %4304 = vmatprep.mubr.f32.mxu0 %v3822
        %4305 = vmatmul.mubr.f32.gmra.mxu0 %v3821
        %v4306 = vpop.f32.mrf.mxu0
        %v4307 = vadd.f32 %v4216, %v4306
        %v4308 = vpop.f32.mrf.mxu0
        %v4309 = vadd.f32 %v4220, %v4308
        %4310 = vmatprep.mubr.f32.mxu0 %v3827
        %4311 = vmatmul.mubr.f32.gmra.mxu0 %v3826
        %v4312 = vpop.f32.mrf.mxu0
        %v4313 = vadd.f32 %v4216, %v4312
        %v4314 = vpop.f32.mrf.mxu0
        %v4315 = vadd.f32 %v4220, %v4314
        %4316 = vmatprep.mubr.f32.mxu0 %v3832
        %4317 = vmatmul.mubr.f32.gmra.mxu0 %v3831
        %v4318 = vpop.f32.mrf.mxu0
        %v4319 = vadd.f32 %v4216, %v4318
        %v4320 = vpop.f32.mrf.mxu0
        %v4321 = vadd.f32 %v4220, %v4320
        %4322 = vmatprep.mubr.f32.mxu0 %v3837
        %4323 = vmatmul.mubr.f32.gmra.mxu0 %v3836
        %v4324 = vpop.f32.mrf.mxu0
        %v4325 = vadd.f32 %v4216, %v4324
        %v4326 = vpop.f32.mrf.mxu0
        %v4327 = vadd.f32 %v4220, %v4326
        %4328 = vmatprep.mubr.f32.mxu0 %v3842
        %4329 = vmatmul.mubr.f32.gmra.mxu0 %v3841
        %v4330 = vpop.f32.mrf.mxu0
        %v4331 = vadd.f32 %v4216, %v4330
        %v4332 = vpop.f32.mrf.mxu0
        %v4333 = vadd.f32 %v4220, %v4332
        %4334 = vmatprep.mubr.f32.mxu0 %v3847
        %4335 = vmatmul.mubr.f32.gmra.mxu0 %v3846
        %v4336 = vpop.f32.mrf.mxu0
        %v4337 = vadd.f32 %v4216, %v4336
        %v4338 = vpop.f32.mrf.mxu0
        %v4339 = vadd.f32 %v4220, %v4338
        %4340 = vmatprep.mubr.f32.mxu0 %v3852
        %4341 = vmatmul.mubr.f32.gmra.mxu0 %v3851
        %v4342 = vpop.f32.mrf.mxu0
        %v4343 = vadd.f32 %v4216, %v4342
        %v4344 = vpop.f32.mrf.mxu0
        %v4345 = vadd.f32 %v4220, %v4344
        %4346 = vmatprep.mubr.f32.mxu0 %v3857
        %4347 = vmatmul.mubr.f32.gmra.mxu0 %v3856
        %v4348 = vpop.f32.mrf.mxu0
        %v4349 = vadd.f32 %v4216, %v4348
        %v4350 = vpop.f32.mrf.mxu0
        %v4351 = vadd.f32 %v4220, %v4350
        %4352 = vmatprep.mubr.f32.mxu0 %v3862
        %4353 = vmatmul.mubr.f32.gmra.mxu0 %v3861
        %v4354 = vpop.f32.mrf.mxu0
        %v4355 = vadd.f32 %v4216, %v4354
        %v4356 = vpop.f32.mrf.mxu0
        %v4357 = vadd.f32 %v4220, %v4356
        %4358 = vmatprep.mubr.f32.mxu0 %v3867
        %4359 = vmatmul.mubr.f32.gmra.mxu0 %v3866
        %v4360 = vpop.f32.mrf.mxu0
        %v4361 = vadd.f32 %v4216, %v4360
        %v4362 = vpop.f32.mrf.mxu0
        %v4363 = vadd.f32 %v4220, %v4362
        %4364 = vmatprep.mubr.f32.mxu0 %v3872
        %4365 = vmatmul.mubr.f32.gmra.mxu0 %v3871
        %v4366 = vpop.f32.mrf.mxu0
        %v4367 = vadd.f32 %v4216, %v4366
        %v4368 = vpop.f32.mrf.mxu0
        %v4369 = vadd.f32 %v4220, %v4368
        %4370 = vmatprep.mubr.f32.mxu0 %v3877
        %4371 = vmatmul.mubr.f32.gmra.mxu0 %v3876
        %v4372 = vpop.f32.mrf.mxu0
        %v4373 = vadd.f32 %v4216, %v4372
        %v4374 = vpop.f32.mrf.mxu0
        %v4375 = vadd.f32 %v4220, %v4374
        %4376 = vmatprep.mubr.f32.mxu0 %v3882
        %4377 = vmatmul.mubr.f32.gmra.mxu0 %v3881
        %v4378 = vpop.f32.mrf.mxu0
        %v4379 = vadd.f32 %v4216, %v4378
        %v4380 = vpop.f32.mrf.mxu0
        %v4381 = vadd.f32 %v4220, %v4380
        %4382 = vmatprep.mubr.f32.mxu0 %v3887
        %4383 = vmatmul.mubr.f32.gmra.mxu0 %v3886
        %v4384 = vpop.f32.mrf.mxu0
        %v4385 = vadd.f32 %v4216, %v4384
        %v4386 = vpop.f32.mrf.mxu0
        %v4387 = vadd.f32 %v4220, %v4386
        %4388 = vmatprep.mubr.f32.mxu0 %v3892
        %4389 = vmatmul.mubr.f32.gmra.mxu0 %v3891
        %v4390 = vpop.f32.mrf.mxu0
        %v4391 = vadd.f32 %v4216, %v4390
        %v4392 = vpop.f32.mrf.mxu0
        %v4393 = vadd.f32 %v4220, %v4392
        %4394 = vmatprep.mubr.f32.mxu0 %v3897
        %4395 = vmatmul.mubr.f32.gmra.mxu0 %v3896
        %v4396 = vpop.f32.mrf.mxu0
        %v4397 = vadd.f32 %v4216, %v4396
        %v4398 = vpop.f32.mrf.mxu0
        %v4399 = vadd.f32 %v4220, %v4398
        %4400 = vmatprep.mubr.f32.mxu0 %v3902
        %4401 = vmatmul.mubr.f32.gmra.mxu0 %v3901
        %v4402 = vpop.f32.mrf.mxu0
        %v4403 = vadd.f32 %v4216, %v4402
        %v4404 = vpop.f32.mrf.mxu0
        %v4405 = vadd.f32 %v4220, %v4404
        %4406 = vmatprep.mubr.f32.mxu0 %v3907
        %4407 = vmatmul.mubr.f32.gmra.mxu0 %v3906
        %v4408 = vpop.f32.mrf.mxu0
        %v4409 = vadd.f32 %v4216, %v4408
        %v4410 = vpop.f32.mrf.mxu0
        %v4411 = vadd.f32 %v4220, %v4410
        %4412 = vmatprep.mubr.f32.mxu0 %v3912
        %4413 = vmatmul.mubr.f32.gmra.mxu0 %v3911
        %v4414 = vpop.f32.mrf.mxu0
        %v4415 = vadd.f32 %v4216, %v4414
        %v4416 = vpop.f32.mrf.mxu0
        %v4417 = vadd.f32 %v4220, %v4416
        %4418 = vmatprep.mubr.f32.mxu0 %v3917
        %4419 = vmatmul.mubr.f32.gmra.mxu0 %v3916
        %v4420 = vpop.f32.mrf.mxu0
        %v4421 = vadd.f32 %v4216, %v4420
        %v4422 = vpop.f32.mrf.mxu0
        %v4423 = vadd.f32 %v4220, %v4422
        %4424 = vmatprep.mubr.f32.mxu0 %v3922
        %4425 = vmatmul.mubr.f32.gmra.mxu0 %v3921
        %v4426 = vpop.f32.mrf.mxu0
        %v4427 = vadd.f32 %v4216, %v4426
        %v4428 = vpop.f32.mrf.mxu0
        %v4429 = vadd.f32 %v4220, %v4428
        %4430 = vmatprep.mubr.f32.mxu0 %v3927
        %4431 = vmatmul.mubr.f32.gmra.mxu0 %v3926
        %v4432 = vpop.f32.mrf.mxu0
        %v4433 = vadd.f32 %v4216, %v4432
        %v4434 = vpop.f32.mrf.mxu0
        %v4435 = vadd.f32 %v4220, %v4434
        %4436 = vmatprep.mubr.f32.mxu0 %v3932
        %4437 = vmatmul.mubr.f32.gmra.mxu0 %v3931
        %v4438 = vpop.f32.mrf.mxu0
        %v4439 = vadd.f32 %v4216, %v4438
        %v4440 = vpop.f32.mrf.mxu0
        %v4441 = vadd.f32 %v4220, %v4440
        %4442 = vmatprep.mubr.f32.mxu0 %v3937
        %4443 = vmatmul.mubr.f32.gmra.mxu0 %v3936
        %v4444 = vpop.f32.mrf.mxu0
        %v4445 = vadd.f32 %v4216, %v4444
        %v4446 = vpop.f32.mrf.mxu0
        %v4447 = vadd.f32 %v4220, %v4446
        %4448 = vmatprep.mubr.f32.mxu0 %v3942
        %4449 = vmatmul.mubr.f32.gmra.mxu0 %v3941
        %v4450 = vpop.f32.mrf.mxu0
        %v4451 = vadd.f32 %v4216, %v4450
        %v4452 = vpop.f32.mrf.mxu0
        %v4453 = vadd.f32 %v4220, %v4452
        %4454 = vmatprep.mubr.f32.mxu0 %v3947
        %4455 = vmatmul.mubr.f32.gmra.mxu0 %v3946
        %v4456 = vpop.f32.mrf.mxu0
        %v4457 = vadd.f32 %v4216, %v4456
        %v4458 = vpop.f32.mrf.mxu0
        %v4459 = vadd.f32 %v4220, %v4458
        %4460 = vmatprep.mubr.f32.mxu0 %v3952
        %4461 = vmatmul.mubr.f32.gmra.mxu0 %v3951
        %v4462 = vpop.f32.mrf.mxu0
        %v4463 = vadd.f32 %v4216, %v4462
        %v4464 = vpop.f32.mrf.mxu0
        %v4465 = vadd.f32 %v4220, %v4464
        %4466 = vmatprep.mubr.f32.mxu0 %v3957
        %4467 = vmatmul.mubr.f32.gmra.mxu0 %v3956
        %v4468 = vpop.f32.mrf.mxu0
        %v4469 = vadd.f32 %v4216, %v4468
        %v4470 = vpop.f32.mrf.mxu0
        %v4471 = vadd.f32 %v4220, %v4470
        %4472 = vmatprep.mubr.f32.mxu0 %v3962
        %4473 = vmatmul.mubr.f32.gmra.mxu0 %v3961
        %v4474 = vpop.f32.mrf.mxu0
        %v4475 = vadd.f32 %v4216, %v4474
        %v4476 = vpop.f32.mrf.mxu0
        %v4477 = vadd.f32 %v4220, %v4476
        %4478 = vmatprep.mubr.f32.mxu0 %v3967
        %4479 = vmatmul.mubr.f32.gmra.mxu0 %v3966
        %v4480 = vpop.f32.mrf.mxu0
        %v4481 = vadd.f32 %v4216, %v4480
        %v4482 = vpop.f32.mrf.mxu0
        %v4483 = vadd.f32 %v4220, %v4482
        %4484 = vdwg.mxu0
        %4485 = vmatprep.subr.mxu0 %v4113
        %4486 = vmatpush1.msra.mxu0 %v4112
        %4487 = vmatprep.subr.mxu0 %v4110
        %4488 = vmatpush1.msra.mxu0 %v4109
        %4489 = vmatprep.subr.mxu0 %v4107
        %4490 = vmatpush1.msra.mxu0 %v4106
        %4491 = vmatprep.subr.mxu0 %v4104
        %4492 = vmatpush1.msra.mxu0 %v4103
        %4493 = vmatprep.subr.mxu0 %v4101
        %4494 = vmatpush1.msra.mxu0 %v4100
        %4495 = vmatprep.subr.mxu0 %v4098
        %4496 = vmatpush1.msra.mxu0 %v4097
        %4497 = vmatprep.subr.mxu0 %v4095
        %4498 = vmatpush1.msra.mxu0 %v4094
        %4499 = vmatprep.subr.mxu0 %v4092
        %4500 = vmatpush1.msra.mxu0 %v4091
        %4501 = vmatprep.subr.mxu0 %v4089
        %4502 = vmatpush1.msra.mxu0 %v4088
        %4503 = vmatprep.subr.mxu0 %v4086
        %4504 = vmatpush1.msra.mxu0 %v4085
        %4505 = vmatprep.subr.mxu0 %v4083
        %4506 = vmatpush1.msra.mxu0 %v4082
        %4507 = vmatprep.subr.mxu0 %v4080
        %4508 = vmatpush1.msra.mxu0 %v4079
        %4509 = vmatprep.subr.mxu0 %v4077
        %4510 = vmatpush1.msra.mxu0 %v4076
        %4511 = vmatprep.subr.mxu0 %v4074
        %4512 = vmatpush1.msra.mxu0 %v4073
        %4513 = vmatprep.subr.mxu0 %v4071
        %4514 = vmatpush1.msra.mxu0 %v4070
        %4515 = vmatprep.subr.mxu0 %v4068
        %4516 = vmatpush1.msra.mxu0 %v4067
        %4517 = vmatprep.subr.mxu0 %v4161
        %4518 = vmatpush2.msra.mxu0 %v4160
        %4519 = vmatprep.subr.mxu0 %v4158
        %4520 = vmatpush2.msra.mxu0 %v4157
        %4521 = vmatprep.subr.mxu0 %v4155
        %4522 = vmatpush2.msra.mxu0 %v4154
        %4523 = vmatprep.subr.mxu0 %v4152
        %4524 = vmatpush2.msra.mxu0 %v4151
        %4525 = vmatprep.subr.mxu0 %v4149
        %4526 = vmatpush2.msra.mxu0 %v4148
        %4527 = vmatprep.subr.mxu0 %v4146
        %4528 = vmatpush2.msra.mxu0 %v4145
        %4529 = vmatprep.subr.mxu0 %v4143
        %4530 = vmatpush2.msra.mxu0 %v4142
        %4531 = vmatprep.subr.mxu0 %v4140
        %4532 = vmatpush2.msra.mxu0 %v4139
        %4533 = vmatprep.subr.mxu0 %v4137
        %4534 = vmatpush2.msra.mxu0 %v4136
        %4535 = vmatprep.subr.mxu0 %v4134
        %4536 = vmatpush2.msra.mxu0 %v4133
        %4537 = vmatprep.subr.mxu0 %v4131
        %4538 = vmatpush2.msra.mxu0 %v4130
        %4539 = vmatprep.subr.mxu0 %v4128
        %4540 = vmatpush2.msra.mxu0 %v4127
        %4541 = vmatprep.subr.mxu0 %v4125
        %4542 = vmatpush2.msra.mxu0 %v4124
        %4543 = vmatprep.subr.mxu0 %v4122
        %4544 = vmatpush2.msra.mxu0 %v4121
        %4545 = vmatprep.subr.mxu0 %v4119
        %4546 = vmatpush2.msra.mxu0 %v4118
        %4547 = vmatprep.subr.mxu0 %v4116
        %4548 = vmatpush2.msra.mxu0 %v4115
        %4549 = vmatprep.mubr.f32.mxu0 %v3814
        %4550 = vmatmul.mubr.f32.gmra.mxu0 %v3813
        %v4551 = vpop.f32.mrf.mxu0
        %v4552 = vadd.f32 %v4295, %v4551
        %v4553 = vpop.f32.mrf.mxu0
        %v4554 = vadd.f32 %v4297, %v4553
        %4555 = vmatprep.mubr.f32.mxu0 %v3819
        %4556 = vmatmul.mubr.f32.gmra.mxu0 %v3818
        %v4557 = vpop.f32.mrf.mxu0
        %v4558 = vadd.f32 %v4301, %v4557
        %v4559 = vpop.f32.mrf.mxu0
        %v4560 = vadd.f32 %v4303, %v4559
        %4561 = vmatprep.mubr.f32.mxu0 %v3824
        %4562 = vmatmul.mubr.f32.gmra.mxu0 %v3823
        %v4563 = vpop.f32.mrf.mxu0
        %v4564 = vadd.f32 %v4307, %v4563
        %v4565 = vpop.f32.mrf.mxu0
        %v4566 = vadd.f32 %v4309, %v4565
        %4567 = vmatprep.mubr.f32.mxu0 %v3829
        %4568 = vmatmul.mubr.f32.gmra.mxu0 %v3828
        %v4569 = vpop.f32.mrf.mxu0
        %v4570 = vadd.f32 %v4313, %v4569
        %v4571 = vpop.f32.mrf.mxu0
        %v4572 = vadd.f32 %v4315, %v4571
        %4573 = vmatprep.mubr.f32.mxu0 %v3834
        %4574 = vmatmul.mubr.f32.gmra.mxu0 %v3833
        %v4575 = vpop.f32.mrf.mxu0
        %v4576 = vadd.f32 %v4319, %v4575
        %v4577 = vpop.f32.mrf.mxu0
        %v4578 = vadd.f32 %v4321, %v4577
        %4579 = vmatprep.mubr.f32.mxu0 %v3839
        %4580 = vmatmul.mubr.f32.gmra.mxu0 %v3838
        %v4581 = vpop.f32.mrf.mxu0
        %v4582 = vadd.f32 %v4325, %v4581
        %v4583 = vpop.f32.mrf.mxu0
        %v4584 = vadd.f32 %v4327, %v4583
        %4585 = vmatprep.mubr.f32.mxu0 %v3844
        %4586 = vmatmul.mubr.f32.gmra.mxu0 %v3843
        %v4587 = vpop.f32.mrf.mxu0
        %v4588 = vadd.f32 %v4331, %v4587
        %v4589 = vpop.f32.mrf.mxu0
        %v4590 = vadd.f32 %v4333, %v4589
        %4591 = vmatprep.mubr.f32.mxu0 %v3849
        %4592 = vmatmul.mubr.f32.gmra.mxu0 %v3848
        %v4593 = vpop.f32.mrf.mxu0
        %v4594 = vadd.f32 %v4337, %v4593
        %v4595 = vpop.f32.mrf.mxu0
        %v4596 = vadd.f32 %v4339, %v4595
        %4597 = vmatprep.mubr.f32.mxu0 %v3854
        %4598 = vmatmul.mubr.f32.gmra.mxu0 %v3853
        %v4599 = vpop.f32.mrf.mxu0
        %v4600 = vadd.f32 %v4343, %v4599
        %v4601 = vpop.f32.mrf.mxu0
        %v4602 = vadd.f32 %v4345, %v4601
        %4603 = vmatprep.mubr.f32.mxu0 %v3859
        %4604 = vmatmul.mubr.f32.gmra.mxu0 %v3858
        %v4605 = vpop.f32.mrf.mxu0
        %v4606 = vadd.f32 %v4349, %v4605
        %v4607 = vpop.f32.mrf.mxu0
        %v4608 = vadd.f32 %v4351, %v4607
        %4609 = vmatprep.mubr.f32.mxu0 %v3864
        %4610 = vmatmul.mubr.f32.gmra.mxu0 %v3863
        %v4611 = vpop.f32.mrf.mxu0
        %v4612 = vadd.f32 %v4355, %v4611
        %v4613 = vpop.f32.mrf.mxu0
        %v4614 = vadd.f32 %v4357, %v4613
        %4615 = vmatprep.mubr.f32.mxu0 %v3869
        %4616 = vmatmul.mubr.f32.gmra.mxu0 %v3868
        %v4617 = vpop.f32.mrf.mxu0
        %v4618 = vadd.f32 %v4361, %v4617
        %v4619 = vpop.f32.mrf.mxu0
        %v4620 = vadd.f32 %v4363, %v4619
        %4621 = vmatprep.mubr.f32.mxu0 %v3874
        %4622 = vmatmul.mubr.f32.gmra.mxu0 %v3873
        %v4623 = vpop.f32.mrf.mxu0
        %v4624 = vadd.f32 %v4367, %v4623
        %v4625 = vpop.f32.mrf.mxu0
        %v4626 = vadd.f32 %v4369, %v4625
        %4627 = vmatprep.mubr.f32.mxu0 %v3879
        %4628 = vmatmul.mubr.f32.gmra.mxu0 %v3878
        %v4629 = vpop.f32.mrf.mxu0
        %v4630 = vadd.f32 %v4373, %v4629
        %v4631 = vpop.f32.mrf.mxu0
        %v4632 = vadd.f32 %v4375, %v4631
        %4633 = vmatprep.mubr.f32.mxu0 %v3884
        %4634 = vmatmul.mubr.f32.gmra.mxu0 %v3883
        %v4635 = vpop.f32.mrf.mxu0
        %v4636 = vadd.f32 %v4379, %v4635
        %v4637 = vpop.f32.mrf.mxu0
        %v4638 = vadd.f32 %v4381, %v4637
        %4639 = vmatprep.mubr.f32.mxu0 %v3889
        %4640 = vmatmul.mubr.f32.gmra.mxu0 %v3888
        %v4641 = vpop.f32.mrf.mxu0
        %v4642 = vadd.f32 %v4385, %v4641
        %v4643 = vpop.f32.mrf.mxu0
        %v4644 = vadd.f32 %v4387, %v4643
        %4645 = vmatprep.mubr.f32.mxu0 %v3894
        %4646 = vmatmul.mubr.f32.gmra.mxu0 %v3893
        %v4647 = vpop.f32.mrf.mxu0
        %v4648 = vadd.f32 %v4391, %v4647
        %v4649 = vpop.f32.mrf.mxu0
        %v4650 = vadd.f32 %v4393, %v4649
        %4651 = vmatprep.mubr.f32.mxu0 %v3899
        %4652 = vmatmul.mubr.f32.gmra.mxu0 %v3898
        %v4653 = vpop.f32.mrf.mxu0
        %v4654 = vadd.f32 %v4397, %v4653
        %v4655 = vpop.f32.mrf.mxu0
        %v4656 = vadd.f32 %v4399, %v4655
        %4657 = vmatprep.mubr.f32.mxu0 %v3904
        %4658 = vmatmul.mubr.f32.gmra.mxu0 %v3903
        %v4659 = vpop.f32.mrf.mxu0
        %v4660 = vadd.f32 %v4403, %v4659
        %v4661 = vpop.f32.mrf.mxu0
        %v4662 = vadd.f32 %v4405, %v4661
        %4663 = vmatprep.mubr.f32.mxu0 %v3909
        %4664 = vmatmul.mubr.f32.gmra.mxu0 %v3908
        %v4665 = vpop.f32.mrf.mxu0
        %v4666 = vadd.f32 %v4409, %v4665
        %v4667 = vpop.f32.mrf.mxu0
        %v4668 = vadd.f32 %v4411, %v4667
        %4669 = vmatprep.mubr.f32.mxu0 %v3914
        %4670 = vmatmul.mubr.f32.gmra.mxu0 %v3913
        %v4671 = vpop.f32.mrf.mxu0
        %v4672 = vadd.f32 %v4415, %v4671
        %v4673 = vpop.f32.mrf.mxu0
        %v4674 = vadd.f32 %v4417, %v4673
        %4675 = vmatprep.mubr.f32.mxu0 %v3919
        %4676 = vmatmul.mubr.f32.gmra.mxu0 %v3918
        %v4677 = vpop.f32.mrf.mxu0
        %v4678 = vadd.f32 %v4421, %v4677
        %v4679 = vpop.f32.mrf.mxu0
        %v4680 = vadd.f32 %v4423, %v4679
        %4681 = vmatprep.mubr.f32.mxu0 %v3924
        %4682 = vmatmul.mubr.f32.gmra.mxu0 %v3923
        %v4683 = vpop.f32.mrf.mxu0
        %v4684 = vadd.f32 %v4427, %v4683
        %v4685 = vpop.f32.mrf.mxu0
        %v4686 = vadd.f32 %v4429, %v4685
        %4687 = vmatprep.mubr.f32.mxu0 %v3929
        %4688 = vmatmul.mubr.f32.gmra.mxu0 %v3928
        %v4689 = vpop.f32.mrf.mxu0
        %v4690 = vadd.f32 %v4433, %v4689
        %v4691 = vpop.f32.mrf.mxu0
        %v4692 = vadd.f32 %v4435, %v4691
        %4693 = vmatprep.mubr.f32.mxu0 %v3934
        %4694 = vmatmul.mubr.f32.gmra.mxu0 %v3933
        %v4695 = vpop.f32.mrf.mxu0
        %v4696 = vadd.f32 %v4439, %v4695
        %v4697 = vpop.f32.mrf.mxu0
        %v4698 = vadd.f32 %v4441, %v4697
        %4699 = vmatprep.mubr.f32.mxu0 %v3939
        %4700 = vmatmul.mubr.f32.gmra.mxu0 %v3938
        %v4701 = vpop.f32.mrf.mxu0
        %v4702 = vadd.f32 %v4445, %v4701
        %v4703 = vpop.f32.mrf.mxu0
        %v4704 = vadd.f32 %v4447, %v4703
        %4705 = vmatprep.mubr.f32.mxu0 %v3944
        %4706 = vmatmul.mubr.f32.gmra.mxu0 %v3943
        %v4707 = vpop.f32.mrf.mxu0
        %v4708 = vadd.f32 %v4451, %v4707
        %v4709 = vpop.f32.mrf.mxu0
        %v4710 = vadd.f32 %v4453, %v4709
        %4711 = vmatprep.mubr.f32.mxu0 %v3949
        %4712 = vmatmul.mubr.f32.gmra.mxu0 %v3948
        %v4713 = vpop.f32.mrf.mxu0
        %v4714 = vadd.f32 %v4457, %v4713
        %v4715 = vpop.f32.mrf.mxu0
        %v4716 = vadd.f32 %v4459, %v4715
        %4717 = vmatprep.mubr.f32.mxu0 %v3954
        %4718 = vmatmul.mubr.f32.gmra.mxu0 %v3953
        %v4719 = vpop.f32.mrf.mxu0
        %v4720 = vadd.f32 %v4463, %v4719
        %v4721 = vpop.f32.mrf.mxu0
        %v4722 = vadd.f32 %v4465, %v4721
        %4723 = vmatprep.mubr.f32.mxu0 %v3959
        %4724 = vmatmul.mubr.f32.gmra.mxu0 %v3958
        %v4725 = vpop.f32.mrf.mxu0
        %v4726 = vadd.f32 %v4469, %v4725
        %v4727 = vpop.f32.mrf.mxu0
        %v4728 = vadd.f32 %v4471, %v4727
        %4729 = vmatprep.mubr.f32.mxu0 %v3964
        %4730 = vmatmul.mubr.f32.gmra.mxu0 %v3963
        %v4731 = vpop.f32.mrf.mxu0
        %v4732 = vadd.f32 %v4475, %v4731
        %v4733 = vpop.f32.mrf.mxu0
        %v4734 = vadd.f32 %v4477, %v4733
        %4735 = vmatprep.mubr.f32.mxu0 %v3969
        %4736 = vmatmul.mubr.f32.gmra.mxu0 %v3968
        %v4737 = vpop.f32.mrf.mxu0
        %v4738 = vadd.f32 %v4481, %v4737
        %v4739 = vpop.f32.mrf.mxu0
        %v4740 = vadd.f32 %v4483, %v4739
        %4741 = vdwg.mxu0
        %4742 = vmatprep.subr.mxu0 %v4209
        %4743 = vmatpush1.msra.mxu0 %v4208
        %4744 = vmatprep.subr.mxu0 %v4206
        %4745 = vmatpush1.msra.mxu0 %v4205
        %4746 = vmatprep.subr.mxu0 %v4203
        %4747 = vmatpush1.msra.mxu0 %v4202
        %4748 = vmatprep.subr.mxu0 %v4200
        %4749 = vmatpush1.msra.mxu0 %v4199
        %4750 = vmatprep.subr.mxu0 %v4197
        %4751 = vmatpush1.msra.mxu0 %v4196
        %4752 = vmatprep.subr.mxu0 %v4194
        %4753 = vmatpush1.msra.mxu0 %v4193
        %4754 = vmatprep.subr.mxu0 %v4191
        %4755 = vmatpush1.msra.mxu0 %v4190
        %4756 = vmatprep.subr.mxu0 %v4188
        %4757 = vmatpush1.msra.mxu0 %v4187
        %4758 = vmatprep.subr.mxu0 %v4185
        %4759 = vmatpush1.msra.mxu0 %v4184
        %4760 = vmatprep.subr.mxu0 %v4182
        %4761 = vmatpush1.msra.mxu0 %v4181
        %4762 = vmatprep.subr.mxu0 %v4179
        %4763 = vmatpush1.msra.mxu0 %v4178
        %4764 = vmatprep.subr.mxu0 %v4176
        %4765 = vmatpush1.msra.mxu0 %v4175
        %4766 = vmatprep.subr.mxu0 %v4173
        %4767 = vmatpush1.msra.mxu0 %v4172
        %4768 = vmatprep.subr.mxu0 %v4170
        %4769 = vmatpush1.msra.mxu0 %v4169
        %4770 = vmatprep.subr.mxu0 %v4167
        %4771 = vmatpush1.msra.mxu0 %v4166
        %4772 = vmatprep.subr.mxu0 %v4164
        %4773 = vmatpush1.msra.mxu0 %v4163
        %4774 = vmatprep.subr.mxu0 0.0
        %4775 = vmatpush2.msra.mxu0 0.0
        %4776 = vmatprep.subr.mxu0 0.0
        %4777 = vmatpush2.msra.mxu0 0.0
        %4778 = vmatprep.subr.mxu0 0.0
        %4779 = vmatpush2.msra.mxu0 0.0
        %4780 = vmatprep.subr.mxu0 0.0
        %4781 = vmatpush2.msra.mxu0 0.0
        %4782 = vmatprep.subr.mxu0 0.0
        %4783 = vmatpush2.msra.mxu0 0.0
        %4784 = vmatprep.subr.mxu0 0.0
        %4785 = vmatpush2.msra.mxu0 0.0
        %4786 = vmatprep.subr.mxu0 0.0
        %4787 = vmatpush2.msra.mxu0 0.0
        %4788 = vmatprep.subr.mxu0 0.0
        %4789 = vmatpush2.msra.mxu0 0.0
        %4790 = vmatprep.subr.mxu0 0.0
        %4791 = vmatpush2.msra.mxu0 0.0
        %4792 = vmatprep.subr.mxu0 0.0
        %4793 = vmatpush2.msra.mxu0 0.0
        %4794 = vmatprep.subr.mxu0 0.0
        %4795 = vmatpush2.msra.mxu0 0.0
        %4796 = vmatprep.subr.mxu0 0.0
        %4797 = vmatpush2.msra.mxu0 0.0
        %4798 = vmatprep.subr.mxu0 0.0
        %4799 = vmatpush2.msra.mxu0 0.0
        %4800 = vmatprep.subr.mxu0 0.0
        %4801 = vmatpush2.msra.mxu0 0.0
        %4802 = vmatprep.subr.mxu0 0.0
        %4803 = vmatpush2.msra.mxu0 0.0
        %4804 = vmatprep.subr.mxu0 0.0
        %4805 = vmatpush2.msra.mxu0 0.0
        %4806 = vmatprep.mubr.f32.mxu0 0.0
        %4807 = vmatmul.mubr.f32.gmra.mxu0 %v3815
        %v4808 = vpop.f32.mrf.mxu0
        %v4809 = vadd.f32 %v4552, %v4808
        %v4810 = vpop.f32.mrf.mxu0
        %v4811 = vadd.f32 %v4554, %v4810
        %4812 = vmatprep.mubr.f32.mxu0 0.0
        %4813 = vmatmul.mubr.f32.gmra.mxu0 %v3820
        %v4814 = vpop.f32.mrf.mxu0
        %v4815 = vadd.f32 %v4558, %v4814
        %v4816 = vpop.f32.mrf.mxu0
        %v4817 = vadd.f32 %v4560, %v4816
        %4818 = vmatprep.mubr.f32.mxu0 0.0
        %4819 = vmatmul.mubr.f32.gmra.mxu0 %v3825
        %v4820 = vpop.f32.mrf.mxu0
        %v4821 = vadd.f32 %v4564, %v4820
        %v4822 = vpop.f32.mrf.mxu0
        %v4823 = vadd.f32 %v4566, %v4822
        %4824 = vmatprep.mubr.f32.mxu0 0.0
        %4825 = vmatmul.mubr.f32.gmra.mxu0 %v3830
        %v4826 = vpop.f32.mrf.mxu0
        %v4827 = vadd.f32 %v4570, %v4826
        %v4828 = vpop.f32.mrf.mxu0
        %v4829 = vadd.f32 %v4572, %v4828
        %4830 = vmatprep.mubr.f32.mxu0 0.0
        %4831 = vmatmul.mubr.f32.gmra.mxu0 %v3835
        %v4832 = vpop.f32.mrf.mxu0
        %v4833 = vadd.f32 %v4576, %v4832
        %v4834 = vpop.f32.mrf.mxu0
        %v4835 = vadd.f32 %v4578, %v4834
        %4836 = vmatprep.mubr.f32.mxu0 0.0
        %4837 = vmatmul.mubr.f32.gmra.mxu0 %v3840
        %v4838 = vpop.f32.mrf.mxu0
        %v4839 = vadd.f32 %v4582, %v4838
        %v4840 = vpop.f32.mrf.mxu0
        %v4841 = vadd.f32 %v4584, %v4840
        %4842 = vmatprep.mubr.f32.mxu0 0.0
        %4843 = vmatmul.mubr.f32.gmra.mxu0 %v3845
        %v4844 = vpop.f32.mrf.mxu0
        %v4845 = vadd.f32 %v4588, %v4844
        %v4846 = vpop.f32.mrf.mxu0
        %v4847 = vadd.f32 %v4590, %v4846
        %4848 = vmatprep.mubr.f32.mxu0 0.0
        %4849 = vmatmul.mubr.f32.gmra.mxu0 %v3850
        %v4850 = vpop.f32.mrf.mxu0
        %v4851 = vadd.f32 %v4594, %v4850
        %v4852 = vpop.f32.mrf.mxu0
        %v4853 = vadd.f32 %v4596, %v4852
        %4854 = vmatprep.mubr.f32.mxu0 0.0
        %4855 = vmatmul.mubr.f32.gmra.mxu0 %v3855
        %v4856 = vpop.f32.mrf.mxu0
        %v4857 = vadd.f32 %v4600, %v4856
        %v4858 = vpop.f32.mrf.mxu0
        %v4859 = vadd.f32 %v4602, %v4858
        %4860 = vmatprep.mubr.f32.mxu0 0.0
        %4861 = vmatmul.mubr.f32.gmra.mxu0 %v3860
        %v4862 = vpop.f32.mrf.mxu0
        %v4863 = vadd.f32 %v4606, %v4862
        %v4864 = vpop.f32.mrf.mxu0
        %v4865 = vadd.f32 %v4608, %v4864
        %4866 = vmatprep.mubr.f32.mxu0 0.0
        %4867 = vmatmul.mubr.f32.gmra.mxu0 %v3865
        %v4868 = vpop.f32.mrf.mxu0
        %v4869 = vadd.f32 %v4612, %v4868
        %v4870 = vpop.f32.mrf.mxu0
        %v4871 = vadd.f32 %v4614, %v4870
        %4872 = vmatprep.mubr.f32.mxu0 0.0
        %4873 = vmatmul.mubr.f32.gmra.mxu0 %v3870
        %v4874 = vpop.f32.mrf.mxu0
        %v4875 = vadd.f32 %v4618, %v4874
        %v4876 = vpop.f32.mrf.mxu0
        %v4877 = vadd.f32 %v4620, %v4876
        %4878 = vmatprep.mubr.f32.mxu0 0.0
        %4879 = vmatmul.mubr.f32.gmra.mxu0 %v3875
        %v4880 = vpop.f32.mrf.mxu0
        %v4881 = vadd.f32 %v4624, %v4880
        %v4882 = vpop.f32.mrf.mxu0
        %v4883 = vadd.f32 %v4626, %v4882
        %4884 = vmatprep.mubr.f32.mxu0 0.0
        %4885 = vmatmul.mubr.f32.gmra.mxu0 %v3880
        %v4886 = vpop.f32.mrf.mxu0
        %v4887 = vadd.f32 %v4630, %v4886
        %v4888 = vpop.f32.mrf.mxu0
        %v4889 = vadd.f32 %v4632, %v4888
        %4890 = vmatprep.mubr.f32.mxu0 0.0
        %4891 = vmatmul.mubr.f32.gmra.mxu0 %v3885
        %v4892 = vpop.f32.mrf.mxu0
        %v4893 = vadd.f32 %v4636, %v4892
        %v4894 = vpop.f32.mrf.mxu0
        %v4895 = vadd.f32 %v4638, %v4894
        %4896 = vmatprep.mubr.f32.mxu0 0.0
        %4897 = vmatmul.mubr.f32.gmra.mxu0 %v3890
        %v4898 = vpop.f32.mrf.mxu0
        %v4899 = vadd.f32 %v4642, %v4898
        %v4900 = vpop.f32.mrf.mxu0
        %v4901 = vadd.f32 %v4644, %v4900
        %4902 = vmatprep.mubr.f32.mxu0 0.0
        %4903 = vmatmul.mubr.f32.gmra.mxu0 %v3895
        %v4904 = vpop.f32.mrf.mxu0
        %v4905 = vadd.f32 %v4648, %v4904
        %v4906 = vpop.f32.mrf.mxu0
        %v4907 = vadd.f32 %v4650, %v4906
        %4908 = vmatprep.mubr.f32.mxu0 0.0
        %4909 = vmatmul.mubr.f32.gmra.mxu0 %v3900
        %v4910 = vpop.f32.mrf.mxu0
        %v4911 = vadd.f32 %v4654, %v4910
        %v4912 = vpop.f32.mrf.mxu0
        %v4913 = vadd.f32 %v4656, %v4912
        %4914 = vmatprep.mubr.f32.mxu0 0.0
        %4915 = vmatmul.mubr.f32.gmra.mxu0 %v3905
        %v4916 = vpop.f32.mrf.mxu0
        %v4917 = vadd.f32 %v4660, %v4916
        %v4918 = vpop.f32.mrf.mxu0
        %v4919 = vadd.f32 %v4662, %v4918
        %4920 = vmatprep.mubr.f32.mxu0 0.0
        %4921 = vmatmul.mubr.f32.gmra.mxu0 %v3910
        %v4922 = vpop.f32.mrf.mxu0
        %v4923 = vadd.f32 %v4666, %v4922
        %v4924 = vpop.f32.mrf.mxu0
        %v4925 = vadd.f32 %v4668, %v4924
        %4926 = vmatprep.mubr.f32.mxu0 0.0
        %4927 = vmatmul.mubr.f32.gmra.mxu0 %v3915
        %v4928 = vpop.f32.mrf.mxu0
        %v4929 = vadd.f32 %v4672, %v4928
        %v4930 = vpop.f32.mrf.mxu0
        %v4931 = vadd.f32 %v4674, %v4930
        %4932 = vmatprep.mubr.f32.mxu0 0.0
        %4933 = vmatmul.mubr.f32.gmra.mxu0 %v3920
        %v4934 = vpop.f32.mrf.mxu0
        %v4935 = vadd.f32 %v4678, %v4934
        %v4936 = vpop.f32.mrf.mxu0
        %v4937 = vadd.f32 %v4680, %v4936
        %4938 = vmatprep.mubr.f32.mxu0 0.0
        %4939 = vmatmul.mubr.f32.gmra.mxu0 %v3925
        %v4940 = vpop.f32.mrf.mxu0
        %v4941 = vadd.f32 %v4684, %v4940
        %v4942 = vpop.f32.mrf.mxu0
        %v4943 = vadd.f32 %v4686, %v4942
        %4944 = vmatprep.mubr.f32.mxu0 0.0
        %4945 = vmatmul.mubr.f32.gmra.mxu0 %v3930
        %v4946 = vpop.f32.mrf.mxu0
        %v4947 = vadd.f32 %v4690, %v4946
        %v4948 = vpop.f32.mrf.mxu0
        %v4949 = vadd.f32 %v4692, %v4948
        %4950 = vmatprep.mubr.f32.mxu0 0.0
        %4951 = vmatmul.mubr.f32.gmra.mxu0 %v3935
        %v4952 = vpop.f32.mrf.mxu0
        %v4953 = vadd.f32 %v4696, %v4952
        %v4954 = vpop.f32.mrf.mxu0
        %v4955 = vadd.f32 %v4698, %v4954
        %4956 = vmatprep.mubr.f32.mxu0 0.0
        %4957 = vmatmul.mubr.f32.gmra.mxu0 %v3940
        %v4958 = vpop.f32.mrf.mxu0
        %v4959 = vadd.f32 %v4702, %v4958
        %v4960 = vpop.f32.mrf.mxu0
        %v4961 = vadd.f32 %v4704, %v4960
        %4962 = vmatprep.mubr.f32.mxu0 0.0
        %4963 = vmatmul.mubr.f32.gmra.mxu0 %v3945
        %v4964 = vpop.f32.mrf.mxu0
        %v4965 = vadd.f32 %v4708, %v4964
        %v4966 = vpop.f32.mrf.mxu0
        %v4967 = vadd.f32 %v4710, %v4966
        %4968 = vmatprep.mubr.f32.mxu0 0.0
        %4969 = vmatmul.mubr.f32.gmra.mxu0 %v3950
        %v4970 = vpop.f32.mrf.mxu0
        %v4971 = vadd.f32 %v4714, %v4970
        %v4972 = vpop.f32.mrf.mxu0
        %v4973 = vadd.f32 %v4716, %v4972
        %4974 = vmatprep.mubr.f32.mxu0 0.0
        %4975 = vmatmul.mubr.f32.gmra.mxu0 %v3955
        %v4976 = vpop.f32.mrf.mxu0
        %v4977 = vadd.f32 %v4720, %v4976
        %v4978 = vpop.f32.mrf.mxu0
        %v4979 = vadd.f32 %v4722, %v4978
        %4980 = vmatprep.mubr.f32.mxu0 0.0
        %4981 = vmatmul.mubr.f32.gmra.mxu0 %v3960
        %v4982 = vpop.f32.mrf.mxu0
        %v4983 = vadd.f32 %v4726, %v4982
        %v4984 = vpop.f32.mrf.mxu0
        %v4985 = vadd.f32 %v4728, %v4984
        %4986 = vmatprep.mubr.f32.mxu0 0.0
        %4987 = vmatmul.mubr.f32.gmra.mxu0 %v3965
        %v4988 = vpop.f32.mrf.mxu0
        %v4989 = vadd.f32 %v4732, %v4988
        %v4990 = vpop.f32.mrf.mxu0
        %v4991 = vadd.f32 %v4734, %v4990
        %4992 = vmatprep.mubr.f32.mxu0 0.0
        %4993 = vmatmul.mubr.f32.gmra.mxu0 %v3970
        %v4994 = vpop.f32.mrf.mxu0
        %v4995 = vadd.f32 %v4738, %v4994
        %v4996 = vpop.f32.mrf.mxu0
        %v4997 = vadd.f32 %v4740, %v4996
        %4998 = vdwg.mxu0
        %4999 = vmatprep.subr.mxu0 0.0
        %5000 = vmatpush1.msra.mxu0 %v4018
        %5001 = vmatprep.subr.mxu0 0.0
        %5002 = vmatpush1.msra.mxu0 %v4015
        %5003 = vmatprep.subr.mxu0 0.0
        %5004 = vmatpush1.msra.mxu0 %v4012
        %5005 = vmatprep.subr.mxu0 0.0
        %5006 = vmatpush1.msra.mxu0 %v4009
        %5007 = vmatprep.subr.mxu0 0.0
        %5008 = vmatpush1.msra.mxu0 %v4006
        %5009 = vmatprep.subr.mxu0 0.0
        %5010 = vmatpush1.msra.mxu0 %v4003
        %5011 = vmatprep.subr.mxu0 0.0
        %5012 = vmatpush1.msra.mxu0 %v4000
        %5013 = vmatprep.subr.mxu0 0.0
        %5014 = vmatpush1.msra.mxu0 %v3997
        %5015 = vmatprep.subr.mxu0 0.0
        %5016 = vmatpush1.msra.mxu0 %v3994
        %5017 = vmatprep.subr.mxu0 0.0
        %5018 = vmatpush1.msra.mxu0 %v3991
        %5019 = vmatprep.subr.mxu0 0.0
        %5020 = vmatpush1.msra.mxu0 %v3988
        %5021 = vmatprep.subr.mxu0 0.0
        %5022 = vmatpush1.msra.mxu0 %v3985
        %5023 = vmatprep.subr.mxu0 0.0
        %5024 = vmatpush1.msra.mxu0 %v3982
        %5025 = vmatprep.subr.mxu0 0.0
        %5026 = vmatpush1.msra.mxu0 %v3979
        %5027 = vmatprep.subr.mxu0 0.0
        %5028 = vmatpush1.msra.mxu0 %v3976
        %5029 = vmatprep.subr.mxu0 0.0
        %5030 = vmatpush1.msra.mxu0 %v3973
        %5031 = vmatprep.subr.mxu0 0.0
        %5032 = vmatpush2.msra.mxu0 %v4066
        %5033 = vmatprep.subr.mxu0 0.0
        %5034 = vmatpush2.msra.mxu0 %v4063
        %5035 = vmatprep.subr.mxu0 0.0
        %5036 = vmatpush2.msra.mxu0 %v4060
        %5037 = vmatprep.subr.mxu0 0.0
        %5038 = vmatpush2.msra.mxu0 %v4057
        %5039 = vmatprep.subr.mxu0 0.0
        %5040 = vmatpush2.msra.mxu0 %v4054
        %5041 = vmatprep.subr.mxu0 0.0
        %5042 = vmatpush2.msra.mxu0 %v4051
        %5043 = vmatprep.subr.mxu0 0.0
        %5044 = vmatpush2.msra.mxu0 %v4048
        %5045 = vmatprep.subr.mxu0 0.0
        %5046 = vmatpush2.msra.mxu0 %v4045
        %5047 = vmatprep.subr.mxu0 0.0
        %5048 = vmatpush2.msra.mxu0 %v4042
        %5049 = vmatprep.subr.mxu0 0.0
        %5050 = vmatpush2.msra.mxu0 %v4039
        %5051 = vmatprep.subr.mxu0 0.0
        %5052 = vmatpush2.msra.mxu0 %v4036
        %5053 = vmatprep.subr.mxu0 0.0
        %5054 = vmatpush2.msra.mxu0 %v4033
        %5055 = vmatprep.subr.mxu0 0.0
        %5056 = vmatpush2.msra.mxu0 %v4030
        %5057 = vmatprep.subr.mxu0 0.0
        %5058 = vmatpush2.msra.mxu0 %v4027
        %5059 = vmatprep.subr.mxu0 0.0
        %5060 = vmatpush2.msra.mxu0 %v4024
        %5061 = vmatprep.subr.mxu0 0.0
        %5062 = vmatpush2.msra.mxu0 %v4021
        %5063 = vmatprep.mubr.f32.mxu0 %v3812
        %5064 = vmatmul.mubr.f32.gmra.mxu0 %v3811
        %v5065 = vpop.f32.mrf.mxu0
        %v5066 = vadd.f32 %v4224, %v5065
        %v5067 = vpop.f32.mrf.mxu0
        %5068 = vmatprep.mubr.f32.mxu0 %v3817
        %5069 = vmatmul.mubr.f32.gmra.mxu0 %v3816
        %v5070 = vpop.f32.mrf.mxu0
        %v5071 = vadd.f32 %v4224, %v5070
        %v5072 = vpop.f32.mrf.mxu0
        %5073 = vmatprep.mubr.f32.mxu0 %v3822
        %5074 = vmatmul.mubr.f32.gmra.mxu0 %v3821
        %v5075 = vpop.f32.mrf.mxu0
        %v5076 = vadd.f32 %v4224, %v5075
        %v5077 = vpop.f32.mrf.mxu0
        %5078 = vmatprep.mubr.f32.mxu0 %v3827
        %5079 = vmatmul.mubr.f32.gmra.mxu0 %v3826
        %v5080 = vpop.f32.mrf.mxu0
        %v5081 = vadd.f32 %v4224, %v5080
        %v5082 = vpop.f32.mrf.mxu0
        %5083 = vmatprep.mubr.f32.mxu0 %v3832
        %5084 = vmatmul.mubr.f32.gmra.mxu0 %v3831
        %v5085 = vpop.f32.mrf.mxu0
        %v5086 = vadd.f32 %v4224, %v5085
        %v5087 = vpop.f32.mrf.mxu0
        %5088 = vmatprep.mubr.f32.mxu0 %v3837
        %5089 = vmatmul.mubr.f32.gmra.mxu0 %v3836
        %v5090 = vpop.f32.mrf.mxu0
        %v5091 = vadd.f32 %v4224, %v5090
        %v5092 = vpop.f32.mrf.mxu0
        %5093 = vmatprep.mubr.f32.mxu0 %v3842
        %5094 = vmatmul.mubr.f32.gmra.mxu0 %v3841
        %v5095 = vpop.f32.mrf.mxu0
        %v5096 = vadd.f32 %v4224, %v5095
        %v5097 = vpop.f32.mrf.mxu0
        %5098 = vmatprep.mubr.f32.mxu0 %v3847
        %5099 = vmatmul.mubr.f32.gmra.mxu0 %v3846
        %v5100 = vpop.f32.mrf.mxu0
        %v5101 = vadd.f32 %v4224, %v5100
        %v5102 = vpop.f32.mrf.mxu0
        %5103 = vmatprep.mubr.f32.mxu0 %v3852
        %5104 = vmatmul.mubr.f32.gmra.mxu0 %v3851
        %v5105 = vpop.f32.mrf.mxu0
        %v5106 = vadd.f32 %v4224, %v5105
        %v5107 = vpop.f32.mrf.mxu0
        %5108 = vmatprep.mubr.f32.mxu0 %v3857
        %5109 = vmatmul.mubr.f32.gmra.mxu0 %v3856
        %v5110 = vpop.f32.mrf.mxu0
        %v5111 = vadd.f32 %v4224, %v5110
        %v5112 = vpop.f32.mrf.mxu0
        %5113 = vmatprep.mubr.f32.mxu0 %v3862
        %5114 = vmatmul.mubr.f32.gmra.mxu0 %v3861
        %v5115 = vpop.f32.mrf.mxu0
        %v5116 = vadd.f32 %v4224, %v5115
        %v5117 = vpop.f32.mrf.mxu0
        %5118 = vmatprep.mubr.f32.mxu0 %v3867
        %5119 = vmatmul.mubr.f32.gmra.mxu0 %v3866
        %v5120 = vpop.f32.mrf.mxu0
        %v5121 = vadd.f32 %v4224, %v5120
        %v5122 = vpop.f32.mrf.mxu0
        %5123 = vmatprep.mubr.f32.mxu0 %v3872
        %5124 = vmatmul.mubr.f32.gmra.mxu0 %v3871
        %v5125 = vpop.f32.mrf.mxu0
        %v5126 = vadd.f32 %v4224, %v5125
        %v5127 = vpop.f32.mrf.mxu0
        %5128 = vmatprep.mubr.f32.mxu0 %v3877
        %5129 = vmatmul.mubr.f32.gmra.mxu0 %v3876
        %v5130 = vpop.f32.mrf.mxu0
        %v5131 = vadd.f32 %v4224, %v5130
        %v5132 = vpop.f32.mrf.mxu0
        %5133 = vmatprep.mubr.f32.mxu0 %v3882
        %5134 = vmatmul.mubr.f32.gmra.mxu0 %v3881
        %v5135 = vpop.f32.mrf.mxu0
        %v5136 = vadd.f32 %v4224, %v5135
        %v5137 = vpop.f32.mrf.mxu0
        %5138 = vmatprep.mubr.f32.mxu0 %v3887
        %5139 = vmatmul.mubr.f32.gmra.mxu0 %v3886
        %v5140 = vpop.f32.mrf.mxu0
        %v5141 = vadd.f32 %v4224, %v5140
        %v5142 = vpop.f32.mrf.mxu0
        %5143 = vmatprep.mubr.f32.mxu0 %v3892
        %5144 = vmatmul.mubr.f32.gmra.mxu0 %v3891
        %v5145 = vpop.f32.mrf.mxu0
        %v5146 = vadd.f32 %v4224, %v5145
        %v5147 = vpop.f32.mrf.mxu0
        %5148 = vmatprep.mubr.f32.mxu0 %v3897
        %5149 = vmatmul.mubr.f32.gmra.mxu0 %v3896
        %v5150 = vpop.f32.mrf.mxu0
        %v5151 = vadd.f32 %v4224, %v5150
        %v5152 = vpop.f32.mrf.mxu0
        %5153 = vmatprep.mubr.f32.mxu0 %v3902
        %5154 = vmatmul.mubr.f32.gmra.mxu0 %v3901
        %v5155 = vpop.f32.mrf.mxu0
        %v5156 = vadd.f32 %v4224, %v5155
        %v5157 = vpop.f32.mrf.mxu0
        %5158 = vmatprep.mubr.f32.mxu0 %v3907
        %5159 = vmatmul.mubr.f32.gmra.mxu0 %v3906
        %v5160 = vpop.f32.mrf.mxu0
        %v5161 = vadd.f32 %v4224, %v5160
        %v5162 = vpop.f32.mrf.mxu0
        %5163 = vmatprep.mubr.f32.mxu0 %v3912
        %5164 = vmatmul.mubr.f32.gmra.mxu0 %v3911
        %v5165 = vpop.f32.mrf.mxu0
        %v5166 = vadd.f32 %v4224, %v5165
        %v5167 = vpop.f32.mrf.mxu0
        %5168 = vmatprep.mubr.f32.mxu0 %v3917
        %5169 = vmatmul.mubr.f32.gmra.mxu0 %v3916
        %v5170 = vpop.f32.mrf.mxu0
        %v5171 = vadd.f32 %v4224, %v5170
        %v5172 = vpop.f32.mrf.mxu0
        %5173 = vmatprep.mubr.f32.mxu0 %v3922
        %5174 = vmatmul.mubr.f32.gmra.mxu0 %v3921
        %v5175 = vpop.f32.mrf.mxu0
        %v5176 = vadd.f32 %v4224, %v5175
        %v5177 = vpop.f32.mrf.mxu0
        %5178 = vmatprep.mubr.f32.mxu0 %v3927
        %5179 = vmatmul.mubr.f32.gmra.mxu0 %v3926
        %v5180 = vpop.f32.mrf.mxu0
        %v5181 = vadd.f32 %v4224, %v5180
        %v5182 = vpop.f32.mrf.mxu0
        %5183 = vmatprep.mubr.f32.mxu0 %v3932
        %5184 = vmatmul.mubr.f32.gmra.mxu0 %v3931
        %v5185 = vpop.f32.mrf.mxu0
        %v5186 = vadd.f32 %v4224, %v5185
        %v5187 = vpop.f32.mrf.mxu0
        %5188 = vmatprep.mubr.f32.mxu0 %v3937
        %5189 = vmatmul.mubr.f32.gmra.mxu0 %v3936
        %v5190 = vpop.f32.mrf.mxu0
        %v5191 = vadd.f32 %v4224, %v5190
        %v5192 = vpop.f32.mrf.mxu0
        %5193 = vmatprep.mubr.f32.mxu0 %v3942
        %5194 = vmatmul.mubr.f32.gmra.mxu0 %v3941
        %v5195 = vpop.f32.mrf.mxu0
        %v5196 = vadd.f32 %v4224, %v5195
        %v5197 = vpop.f32.mrf.mxu0
        %5198 = vmatprep.mubr.f32.mxu0 %v3947
        %5199 = vmatmul.mubr.f32.gmra.mxu0 %v3946
        %v5200 = vpop.f32.mrf.mxu0
        %v5201 = vadd.f32 %v4224, %v5200
        %v5202 = vpop.f32.mrf.mxu0
        %5203 = vmatprep.mubr.f32.mxu0 %v3952
        %5204 = vmatmul.mubr.f32.gmra.mxu0 %v3951
        %v5205 = vpop.f32.mrf.mxu0
        %v5206 = vadd.f32 %v4224, %v5205
        %v5207 = vpop.f32.mrf.mxu0
        %5208 = vmatprep.mubr.f32.mxu0 %v3957
        %5209 = vmatmul.mubr.f32.gmra.mxu0 %v3956
        %v5210 = vpop.f32.mrf.mxu0
        %v5211 = vadd.f32 %v4224, %v5210
        %v5212 = vpop.f32.mrf.mxu0
        %5213 = vmatprep.mubr.f32.mxu0 %v3962
        %5214 = vmatmul.mubr.f32.gmra.mxu0 %v3961
        %v5215 = vpop.f32.mrf.mxu0
        %v5216 = vadd.f32 %v4224, %v5215
        %v5217 = vpop.f32.mrf.mxu0
        %5218 = vmatprep.mubr.f32.mxu0 %v3967
        %5219 = vmatmul.mubr.f32.gmra.mxu0 %v3966
        %v5220 = vpop.f32.mrf.mxu0
        %v5221 = vadd.f32 %v4224, %v5220
        %v5222 = vpop.f32.mrf.mxu0
        %5223 = vdwg.mxu0
        %5224 = vmatprep.subr.mxu0 0.0
        %5225 = vmatpush1.msra.mxu0 %v4114
        %5226 = vmatprep.subr.mxu0 0.0
        %5227 = vmatpush1.msra.mxu0 %v4111
        %5228 = vmatprep.subr.mxu0 0.0
        %5229 = vmatpush1.msra.mxu0 %v4108
        %5230 = vmatprep.subr.mxu0 0.0
        %5231 = vmatpush1.msra.mxu0 %v4105
        %5232 = vmatprep.subr.mxu0 0.0
        %5233 = vmatpush1.msra.mxu0 %v4102
        %5234 = vmatprep.subr.mxu0 0.0
        %5235 = vmatpush1.msra.mxu0 %v4099
        %5236 = vmatprep.subr.mxu0 0.0
        %5237 = vmatpush1.msra.mxu0 %v4096
        %5238 = vmatprep.subr.mxu0 0.0
        %5239 = vmatpush1.msra.mxu0 %v4093
        %5240 = vmatprep.subr.mxu0 0.0
        %5241 = vmatpush1.msra.mxu0 %v4090
        %5242 = vmatprep.subr.mxu0 0.0
        %5243 = vmatpush1.msra.mxu0 %v4087
        %5244 = vmatprep.subr.mxu0 0.0
        %5245 = vmatpush1.msra.mxu0 %v4084
        %5246 = vmatprep.subr.mxu0 0.0
        %5247 = vmatpush1.msra.mxu0 %v4081
        %5248 = vmatprep.subr.mxu0 0.0
        %5249 = vmatpush1.msra.mxu0 %v4078
        %5250 = vmatprep.subr.mxu0 0.0
        %5251 = vmatpush1.msra.mxu0 %v4075
        %5252 = vmatprep.subr.mxu0 0.0
        %5253 = vmatpush1.msra.mxu0 %v4072
        %5254 = vmatprep.subr.mxu0 0.0
        %5255 = vmatpush1.msra.mxu0 %v4069
        %5256 = vmatprep.subr.mxu0 0.0
        %5257 = vmatpush2.msra.mxu0 %v4162
        %5258 = vmatprep.subr.mxu0 0.0
        %5259 = vmatpush2.msra.mxu0 %v4159
        %5260 = vmatprep.subr.mxu0 0.0
        %5261 = vmatpush2.msra.mxu0 %v4156
        %5262 = vmatprep.subr.mxu0 0.0
        %5263 = vmatpush2.msra.mxu0 %v4153
        %5264 = vmatprep.subr.mxu0 0.0
        %5265 = vmatpush2.msra.mxu0 %v4150
        %5266 = vmatprep.subr.mxu0 0.0
        %5267 = vmatpush2.msra.mxu0 %v4147
        %5268 = vmatprep.subr.mxu0 0.0
        %5269 = vmatpush2.msra.mxu0 %v4144
        %5270 = vmatprep.subr.mxu0 0.0
        %5271 = vmatpush2.msra.mxu0 %v4141
        %5272 = vmatprep.subr.mxu0 0.0
        %5273 = vmatpush2.msra.mxu0 %v4138
        %5274 = vmatprep.subr.mxu0 0.0
        %5275 = vmatpush2.msra.mxu0 %v4135
        %5276 = vmatprep.subr.mxu0 0.0
        %5277 = vmatpush2.msra.mxu0 %v4132
        %5278 = vmatprep.subr.mxu0 0.0
        %5279 = vmatpush2.msra.mxu0 %v4129
        %5280 = vmatprep.subr.mxu0 0.0
        %5281 = vmatpush2.msra.mxu0 %v4126
        %5282 = vmatprep.subr.mxu0 0.0
        %5283 = vmatpush2.msra.mxu0 %v4123
        %5284 = vmatprep.subr.mxu0 0.0
        %5285 = vmatpush2.msra.mxu0 %v4120
        %5286 = vmatprep.subr.mxu0 0.0
        %5287 = vmatpush2.msra.mxu0 %v4117
        %5288 = vmatprep.mubr.f32.mxu0 %v3814
        %5289 = vmatmul.mubr.f32.gmra.mxu0 %v3813
        %v5290 = vpop.f32.mrf.mxu0
        %v5291 = vadd.f32 %v5066, %v5290
        %v5292 = vpop.f32.mrf.mxu0
        %5293 = vmatprep.mubr.f32.mxu0 %v3819
        %5294 = vmatmul.mubr.f32.gmra.mxu0 %v3818
        %v5295 = vpop.f32.mrf.mxu0
        %v5296 = vadd.f32 %v5071, %v5295
        %v5297 = vpop.f32.mrf.mxu0
        %5298 = vmatprep.mubr.f32.mxu0 %v3824
        %5299 = vmatmul.mubr.f32.gmra.mxu0 %v3823
        %v5300 = vpop.f32.mrf.mxu0
        %v5301 = vadd.f32 %v5076, %v5300
        %v5302 = vpop.f32.mrf.mxu0
        %5303 = vmatprep.mubr.f32.mxu0 %v3829
        %5304 = vmatmul.mubr.f32.gmra.mxu0 %v3828
        %v5305 = vpop.f32.mrf.mxu0
        %v5306 = vadd.f32 %v5081, %v5305
        %v5307 = vpop.f32.mrf.mxu0
        %5308 = vmatprep.mubr.f32.mxu0 %v3834
        %5309 = vmatmul.mubr.f32.gmra.mxu0 %v3833
        %v5310 = vpop.f32.mrf.mxu0
        %v5311 = vadd.f32 %v5086, %v5310
        %v5312 = vpop.f32.mrf.mxu0
        %5313 = vmatprep.mubr.f32.mxu0 %v3839
        %5314 = vmatmul.mubr.f32.gmra.mxu0 %v3838
        %v5315 = vpop.f32.mrf.mxu0
        %v5316 = vadd.f32 %v5091, %v5315
        %v5317 = vpop.f32.mrf.mxu0
        %5318 = vmatprep.mubr.f32.mxu0 %v3844
        %5319 = vmatmul.mubr.f32.gmra.mxu0 %v3843
        %v5320 = vpop.f32.mrf.mxu0
        %v5321 = vadd.f32 %v5096, %v5320
        %v5322 = vpop.f32.mrf.mxu0
        %5323 = vmatprep.mubr.f32.mxu0 %v3849
        %5324 = vmatmul.mubr.f32.gmra.mxu0 %v3848
        %v5325 = vpop.f32.mrf.mxu0
        %v5326 = vadd.f32 %v5101, %v5325
        %v5327 = vpop.f32.mrf.mxu0
        %5328 = vmatprep.mubr.f32.mxu0 %v3854
        %5329 = vmatmul.mubr.f32.gmra.mxu0 %v3853
        %v5330 = vpop.f32.mrf.mxu0
        %v5331 = vadd.f32 %v5106, %v5330
        %v5332 = vpop.f32.mrf.mxu0
        %5333 = vmatprep.mubr.f32.mxu0 %v3859
        %5334 = vmatmul.mubr.f32.gmra.mxu0 %v3858
        %v5335 = vpop.f32.mrf.mxu0
        %v5336 = vadd.f32 %v5111, %v5335
        %v5337 = vpop.f32.mrf.mxu0
        %5338 = vmatprep.mubr.f32.mxu0 %v3864
        %5339 = vmatmul.mubr.f32.gmra.mxu0 %v3863
        %v5340 = vpop.f32.mrf.mxu0
        %v5341 = vadd.f32 %v5116, %v5340
        %v5342 = vpop.f32.mrf.mxu0
        %5343 = vmatprep.mubr.f32.mxu0 %v3869
        %5344 = vmatmul.mubr.f32.gmra.mxu0 %v3868
        %v5345 = vpop.f32.mrf.mxu0
        %v5346 = vadd.f32 %v5121, %v5345
        %v5347 = vpop.f32.mrf.mxu0
        %5348 = vmatprep.mubr.f32.mxu0 %v3874
        %5349 = vmatmul.mubr.f32.gmra.mxu0 %v3873
        %v5350 = vpop.f32.mrf.mxu0
        %v5351 = vadd.f32 %v5126, %v5350
        %v5352 = vpop.f32.mrf.mxu0
        %5353 = vmatprep.mubr.f32.mxu0 %v3879
        %5354 = vmatmul.mubr.f32.gmra.mxu0 %v3878
        %v5355 = vpop.f32.mrf.mxu0
        %v5356 = vadd.f32 %v5131, %v5355
        %v5357 = vpop.f32.mrf.mxu0
        %5358 = vmatprep.mubr.f32.mxu0 %v3884
        %5359 = vmatmul.mubr.f32.gmra.mxu0 %v3883
        %v5360 = vpop.f32.mrf.mxu0
        %v5361 = vadd.f32 %v5136, %v5360
        %v5362 = vpop.f32.mrf.mxu0
        %5363 = vmatprep.mubr.f32.mxu0 %v3889
        %5364 = vmatmul.mubr.f32.gmra.mxu0 %v3888
        %v5365 = vpop.f32.mrf.mxu0
        %v5366 = vadd.f32 %v5141, %v5365
        %v5367 = vpop.f32.mrf.mxu0
        %5368 = vmatprep.mubr.f32.mxu0 %v3894
        %5369 = vmatmul.mubr.f32.gmra.mxu0 %v3893
        %v5370 = vpop.f32.mrf.mxu0
        %v5371 = vadd.f32 %v5146, %v5370
        %v5372 = vpop.f32.mrf.mxu0
        %5373 = vmatprep.mubr.f32.mxu0 %v3899
        %5374 = vmatmul.mubr.f32.gmra.mxu0 %v3898
        %v5375 = vpop.f32.mrf.mxu0
        %v5376 = vadd.f32 %v5151, %v5375
        %v5377 = vpop.f32.mrf.mxu0
        %5378 = vmatprep.mubr.f32.mxu0 %v3904
        %5379 = vmatmul.mubr.f32.gmra.mxu0 %v3903
        %v5380 = vpop.f32.mrf.mxu0
        %v5381 = vadd.f32 %v5156, %v5380
        %v5382 = vpop.f32.mrf.mxu0
        %5383 = vmatprep.mubr.f32.mxu0 %v3909
        %5384 = vmatmul.mubr.f32.gmra.mxu0 %v3908
        %v5385 = vpop.f32.mrf.mxu0
        %v5386 = vadd.f32 %v5161, %v5385
        %v5387 = vpop.f32.mrf.mxu0
        %5388 = vmatprep.mubr.f32.mxu0 %v3914
        %5389 = vmatmul.mubr.f32.gmra.mxu0 %v3913
        %v5390 = vpop.f32.mrf.mxu0
        %v5391 = vadd.f32 %v5166, %v5390
        %v5392 = vpop.f32.mrf.mxu0
        %5393 = vmatprep.mubr.f32.mxu0 %v3919
        %5394 = vmatmul.mubr.f32.gmra.mxu0 %v3918
        %v5395 = vpop.f32.mrf.mxu0
        %v5396 = vadd.f32 %v5171, %v5395
        %v5397 = vpop.f32.mrf.mxu0
        %5398 = vmatprep.mubr.f32.mxu0 %v3924
        %5399 = vmatmul.mubr.f32.gmra.mxu0 %v3923
        %v5400 = vpop.f32.mrf.mxu0
        %v5401 = vadd.f32 %v5176, %v5400
        %v5402 = vpop.f32.mrf.mxu0
        %5403 = vmatprep.mubr.f32.mxu0 %v3929
        %5404 = vmatmul.mubr.f32.gmra.mxu0 %v3928
        %v5405 = vpop.f32.mrf.mxu0
        %v5406 = vadd.f32 %v5181, %v5405
        %v5407 = vpop.f32.mrf.mxu0
        %5408 = vmatprep.mubr.f32.mxu0 %v3934
        %5409 = vmatmul.mubr.f32.gmra.mxu0 %v3933
        %v5410 = vpop.f32.mrf.mxu0
        %v5411 = vadd.f32 %v5186, %v5410
        %v5412 = vpop.f32.mrf.mxu0
        %5413 = vmatprep.mubr.f32.mxu0 %v3939
        %5414 = vmatmul.mubr.f32.gmra.mxu0 %v3938
        %v5415 = vpop.f32.mrf.mxu0
        %v5416 = vadd.f32 %v5191, %v5415
        %v5417 = vpop.f32.mrf.mxu0
        %5418 = vmatprep.mubr.f32.mxu0 %v3944
        %5419 = vmatmul.mubr.f32.gmra.mxu0 %v3943
        %v5420 = vpop.f32.mrf.mxu0
        %v5421 = vadd.f32 %v5196, %v5420
        %v5422 = vpop.f32.mrf.mxu0
        %5423 = vmatprep.mubr.f32.mxu0 %v3949
        %5424 = vmatmul.mubr.f32.gmra.mxu0 %v3948
        %v5425 = vpop.f32.mrf.mxu0
        %v5426 = vadd.f32 %v5201, %v5425
        %v5427 = vpop.f32.mrf.mxu0
        %5428 = vmatprep.mubr.f32.mxu0 %v3954
        %5429 = vmatmul.mubr.f32.gmra.mxu0 %v3953
        %v5430 = vpop.f32.mrf.mxu0
        %v5431 = vadd.f32 %v5206, %v5430
        %v5432 = vpop.f32.mrf.mxu0
        %5433 = vmatprep.mubr.f32.mxu0 %v3959
        %5434 = vmatmul.mubr.f32.gmra.mxu0 %v3958
        %v5435 = vpop.f32.mrf.mxu0
        %v5436 = vadd.f32 %v5211, %v5435
        %v5437 = vpop.f32.mrf.mxu0
        %5438 = vmatprep.mubr.f32.mxu0 %v3964
        %5439 = vmatmul.mubr.f32.gmra.mxu0 %v3963
        %v5440 = vpop.f32.mrf.mxu0
        %v5441 = vadd.f32 %v5216, %v5440
        %v5442 = vpop.f32.mrf.mxu0
        %5443 = vmatprep.mubr.f32.mxu0 %v3969
        %5444 = vmatmul.mubr.f32.gmra.mxu0 %v3968
        %v5445 = vpop.f32.mrf.mxu0
        %v5446 = vadd.f32 %v5221, %v5445
        %v5447 = vpop.f32.mrf.mxu0
        %5448 = vdwg.mxu0
        %5449 = vmatprep.subr.mxu0 0.0
        %5450 = vmatpush1.msra.mxu0 %v4210
        %5451 = vmatprep.subr.mxu0 0.0
        %5452 = vmatpush1.msra.mxu0 %v4207
        %5453 = vmatprep.subr.mxu0 0.0
        %5454 = vmatpush1.msra.mxu0 %v4204
        %5455 = vmatprep.subr.mxu0 0.0
        %5456 = vmatpush1.msra.mxu0 %v4201
        %5457 = vmatprep.subr.mxu0 0.0
        %5458 = vmatpush1.msra.mxu0 %v4198
        %5459 = vmatprep.subr.mxu0 0.0
        %5460 = vmatpush1.msra.mxu0 %v4195
        %5461 = vmatprep.subr.mxu0 0.0
        %5462 = vmatpush1.msra.mxu0 %v4192
        %5463 = vmatprep.subr.mxu0 0.0
        %5464 = vmatpush1.msra.mxu0 %v4189
        %5465 = vmatprep.subr.mxu0 0.0
        %5466 = vmatpush1.msra.mxu0 %v4186
        %5467 = vmatprep.subr.mxu0 0.0
        %5468 = vmatpush1.msra.mxu0 %v4183
        %5469 = vmatprep.subr.mxu0 0.0
        %5470 = vmatpush1.msra.mxu0 %v4180
        %5471 = vmatprep.subr.mxu0 0.0
        %5472 = vmatpush1.msra.mxu0 %v4177
        %5473 = vmatprep.subr.mxu0 0.0
        %5474 = vmatpush1.msra.mxu0 %v4174
        %5475 = vmatprep.subr.mxu0 0.0
        %5476 = vmatpush1.msra.mxu0 %v4171
        %5477 = vmatprep.subr.mxu0 0.0
        %5478 = vmatpush1.msra.mxu0 %v4168
        %5479 = vmatprep.subr.mxu0 0.0
        %5480 = vmatpush1.msra.mxu0 %v4165
        %5481 = vmatprep.subr.mxu0 0.0
        %5482 = vmatpush2.msra.mxu0 0.0
        %5483 = vmatprep.subr.mxu0 0.0
        %5484 = vmatpush2.msra.mxu0 0.0
        %5485 = vmatprep.subr.mxu0 0.0
        %5486 = vmatpush2.msra.mxu0 0.0
        %5487 = vmatprep.subr.mxu0 0.0
        %5488 = vmatpush2.msra.mxu0 0.0
        %5489 = vmatprep.subr.mxu0 0.0
        %5490 = vmatpush2.msra.mxu0 0.0
        %5491 = vmatprep.subr.mxu0 0.0
        %5492 = vmatpush2.msra.mxu0 0.0
        %5493 = vmatprep.subr.mxu0 0.0
        %5494 = vmatpush2.msra.mxu0 0.0
        %5495 = vmatprep.subr.mxu0 0.0
        %5496 = vmatpush2.msra.mxu0 0.0
        %5497 = vmatprep.subr.mxu0 0.0
        %5498 = vmatpush2.msra.mxu0 0.0
        %5499 = vmatprep.subr.mxu0 0.0
        %5500 = vmatpush2.msra.mxu0 0.0
        %5501 = vmatprep.subr.mxu0 0.0
        %5502 = vmatpush2.msra.mxu0 0.0
        %5503 = vmatprep.subr.mxu0 0.0
        %5504 = vmatpush2.msra.mxu0 0.0
        %5505 = vmatprep.subr.mxu0 0.0
        %5506 = vmatpush2.msra.mxu0 0.0
        %5507 = vmatprep.subr.mxu0 0.0
        %5508 = vmatpush2.msra.mxu0 0.0
        %5509 = vmatprep.subr.mxu0 0.0
        %5510 = vmatpush2.msra.mxu0 0.0
        %5511 = vmatprep.subr.mxu0 0.0
        %5512 = vmatpush2.msra.mxu0 0.0
        %5513 = vmatprep.mubr.f32.mxu0 0.0
        %5514 = vmatmul.mubr.f32.gmra.mxu0 %v3815
        %v5515 = vpop.f32.mrf.mxu0
        %v5516 = vadd.f32 %v5291, %v5515
        %v5517 = vpop.f32.mrf.mxu0
        %5518 = vmatprep.mubr.f32.mxu0 0.0
        %5519 = vmatmul.mubr.f32.gmra.mxu0 %v3820
        %v5520 = vpop.f32.mrf.mxu0
        %v5521 = vadd.f32 %v5296, %v5520
        %v5522 = vpop.f32.mrf.mxu0
        %5523 = vmatprep.mubr.f32.mxu0 0.0
        %5524 = vmatmul.mubr.f32.gmra.mxu0 %v3825
        %v5525 = vpop.f32.mrf.mxu0
        %v5526 = vadd.f32 %v5301, %v5525
        %v5527 = vpop.f32.mrf.mxu0
        %5528 = vmatprep.mubr.f32.mxu0 0.0
        %5529 = vmatmul.mubr.f32.gmra.mxu0 %v3830
        %v5530 = vpop.f32.mrf.mxu0
        %v5531 = vadd.f32 %v5306, %v5530
        %v5532 = vpop.f32.mrf.mxu0
        %5533 = vmatprep.mubr.f32.mxu0 0.0
        %5534 = vmatmul.mubr.f32.gmra.mxu0 %v3835
        %v5535 = vpop.f32.mrf.mxu0
        %v5536 = vadd.f32 %v5311, %v5535
        %v5537 = vpop.f32.mrf.mxu0
        %5538 = vmatprep.mubr.f32.mxu0 0.0
        %5539 = vmatmul.mubr.f32.gmra.mxu0 %v3840
        %v5540 = vpop.f32.mrf.mxu0
        %v5541 = vadd.f32 %v5316, %v5540
        %v5542 = vpop.f32.mrf.mxu0
        %5543 = vmatprep.mubr.f32.mxu0 0.0
        %5544 = vmatmul.mubr.f32.gmra.mxu0 %v3845
        %v5545 = vpop.f32.mrf.mxu0
        %v5546 = vadd.f32 %v5321, %v5545
        %v5547 = vpop.f32.mrf.mxu0
        %5548 = vmatprep.mubr.f32.mxu0 0.0
        %5549 = vmatmul.mubr.f32.gmra.mxu0 %v3850
        %v5550 = vpop.f32.mrf.mxu0
        %v5551 = vadd.f32 %v5326, %v5550
        %v5552 = vpop.f32.mrf.mxu0
        %5553 = vmatprep.mubr.f32.mxu0 0.0
        %5554 = vmatmul.mubr.f32.gmra.mxu0 %v3855
        %v5555 = vpop.f32.mrf.mxu0
        %v5556 = vadd.f32 %v5331, %v5555
        %v5557 = vpop.f32.mrf.mxu0
        %5558 = vmatprep.mubr.f32.mxu0 0.0
        %5559 = vmatmul.mubr.f32.gmra.mxu0 %v3860
        %v5560 = vpop.f32.mrf.mxu0
        %v5561 = vadd.f32 %v5336, %v5560
        %v5562 = vpop.f32.mrf.mxu0
        %5563 = vmatprep.mubr.f32.mxu0 0.0
        %5564 = vmatmul.mubr.f32.gmra.mxu0 %v3865
        %v5565 = vpop.f32.mrf.mxu0
        %v5566 = vadd.f32 %v5341, %v5565
        %v5567 = vpop.f32.mrf.mxu0
        %5568 = vmatprep.mubr.f32.mxu0 0.0
        %5569 = vmatmul.mubr.f32.gmra.mxu0 %v3870
        %v5570 = vpop.f32.mrf.mxu0
        %v5571 = vadd.f32 %v5346, %v5570
        %v5572 = vpop.f32.mrf.mxu0
        %5573 = vmatprep.mubr.f32.mxu0 0.0
        %5574 = vmatmul.mubr.f32.gmra.mxu0 %v3875
        %v5575 = vpop.f32.mrf.mxu0
        %v5576 = vadd.f32 %v5351, %v5575
        %v5577 = vpop.f32.mrf.mxu0
        %5578 = vmatprep.mubr.f32.mxu0 0.0
        %5579 = vmatmul.mubr.f32.gmra.mxu0 %v3880
        %v5580 = vpop.f32.mrf.mxu0
        %v5581 = vadd.f32 %v5356, %v5580
        %v5582 = vpop.f32.mrf.mxu0
        %5583 = vmatprep.mubr.f32.mxu0 0.0
        %5584 = vmatmul.mubr.f32.gmra.mxu0 %v3885
        %v5585 = vpop.f32.mrf.mxu0
        %v5586 = vadd.f32 %v5361, %v5585
        %v5587 = vpop.f32.mrf.mxu0
        %5588 = vmatprep.mubr.f32.mxu0 0.0
        %5589 = vmatmul.mubr.f32.gmra.mxu0 %v3890
        %v5590 = vpop.f32.mrf.mxu0
        %v5591 = vadd.f32 %v5366, %v5590
        %v5592 = vpop.f32.mrf.mxu0
        %5593 = vmatprep.mubr.f32.mxu0 0.0
        %5594 = vmatmul.mubr.f32.gmra.mxu0 %v3895
        %v5595 = vpop.f32.mrf.mxu0
        %v5596 = vadd.f32 %v5371, %v5595
        %v5597 = vpop.f32.mrf.mxu0
        %5598 = vmatprep.mubr.f32.mxu0 0.0
        %5599 = vmatmul.mubr.f32.gmra.mxu0 %v3900
        %v5600 = vpop.f32.mrf.mxu0
        %v5601 = vadd.f32 %v5376, %v5600
        %v5602 = vpop.f32.mrf.mxu0
        %5603 = vmatprep.mubr.f32.mxu0 0.0
        %5604 = vmatmul.mubr.f32.gmra.mxu0 %v3905
        %v5605 = vpop.f32.mrf.mxu0
        %v5606 = vadd.f32 %v5381, %v5605
        %v5607 = vpop.f32.mrf.mxu0
        %5608 = vmatprep.mubr.f32.mxu0 0.0
        %5609 = vmatmul.mubr.f32.gmra.mxu0 %v3910
        %v5610 = vpop.f32.mrf.mxu0
        %v5611 = vadd.f32 %v5386, %v5610
        %v5612 = vpop.f32.mrf.mxu0
        %5613 = vmatprep.mubr.f32.mxu0 0.0
        %5614 = vmatmul.mubr.f32.gmra.mxu0 %v3915
        %v5615 = vpop.f32.mrf.mxu0
        %v5616 = vadd.f32 %v5391, %v5615
        %v5617 = vpop.f32.mrf.mxu0
        %5618 = vmatprep.mubr.f32.mxu0 0.0
        %5619 = vmatmul.mubr.f32.gmra.mxu0 %v3920
        %v5620 = vpop.f32.mrf.mxu0
        %v5621 = vadd.f32 %v5396, %v5620
        %v5622 = vpop.f32.mrf.mxu0
        %5623 = vmatprep.mubr.f32.mxu0 0.0
        %5624 = vmatmul.mubr.f32.gmra.mxu0 %v3925
        %v5625 = vpop.f32.mrf.mxu0
        %v5626 = vadd.f32 %v5401, %v5625
        %v5627 = vpop.f32.mrf.mxu0
        %5628 = vmatprep.mubr.f32.mxu0 0.0
        %5629 = vmatmul.mubr.f32.gmra.mxu0 %v3930
        %v5630 = vpop.f32.mrf.mxu0
        %v5631 = vadd.f32 %v5406, %v5630
        %v5632 = vpop.f32.mrf.mxu0
        %5633 = vmatprep.mubr.f32.mxu0 0.0
        %5634 = vmatmul.mubr.f32.gmra.mxu0 %v3935
        %v5635 = vpop.f32.mrf.mxu0
        %v5636 = vadd.f32 %v5411, %v5635
        %v5637 = vpop.f32.mrf.mxu0
        %5638 = vmatprep.mubr.f32.mxu0 0.0
        %5639 = vmatmul.mubr.f32.gmra.mxu0 %v3940
        %v5640 = vpop.f32.mrf.mxu0
        %v5641 = vadd.f32 %v5416, %v5640
        %v5642 = vpop.f32.mrf.mxu0
        %5643 = vmatprep.mubr.f32.mxu0 0.0
        %5644 = vmatmul.mubr.f32.gmra.mxu0 %v3945
        %v5645 = vpop.f32.mrf.mxu0
        %v5646 = vadd.f32 %v5421, %v5645
        %v5647 = vpop.f32.mrf.mxu0
        %5648 = vmatprep.mubr.f32.mxu0 0.0
        %5649 = vmatmul.mubr.f32.gmra.mxu0 %v3950
        %v5650 = vpop.f32.mrf.mxu0
        %v5651 = vadd.f32 %v5426, %v5650
        %v5652 = vpop.f32.mrf.mxu0
        %5653 = vmatprep.mubr.f32.mxu0 0.0
        %5654 = vmatmul.mubr.f32.gmra.mxu0 %v3955
        %v5655 = vpop.f32.mrf.mxu0
        %v5656 = vadd.f32 %v5431, %v5655
        %v5657 = vpop.f32.mrf.mxu0
        %5658 = vmatprep.mubr.f32.mxu0 0.0
        %5659 = vmatmul.mubr.f32.gmra.mxu0 %v3960
        %v5660 = vpop.f32.mrf.mxu0
        %v5661 = vadd.f32 %v5436, %v5660
        %v5662 = vpop.f32.mrf.mxu0
        %5663 = vmatprep.mubr.f32.mxu0 0.0
        %5664 = vmatmul.mubr.f32.gmra.mxu0 %v3965
        %v5665 = vpop.f32.mrf.mxu0
        %v5666 = vadd.f32 %v5441, %v5665
        %v5667 = vpop.f32.mrf.mxu0
        %5668 = vmatprep.mubr.f32.mxu0 0.0
        %5669 = vmatmul.mubr.f32.gmra.mxu0 %v3970
        %v5670 = vpop.f32.mrf.mxu0
        %v5671 = vadd.f32 %v5446, %v5670
        %v5672 = vpop.f32.mrf.mxu0
        %5673 = vdwg.mxu0
        %v5674 = vmax.f32 %v4809, 0.0
        %v5675 = vmax.f32 %v4811, 0.0
        %v5676 = vmax.f32 %v5516, 0.0
        %v5677 = vmax.f32 %v4815, 0.0
        %v5678 = vmax.f32 %v4817, 0.0
        %v5679 = vmax.f32 %v5521, 0.0
        %v5680 = vmax.f32 %v4821, 0.0
        %v5681 = vmax.f32 %v4823, 0.0
        %v5682 = vmax.f32 %v5526, 0.0
        %v5683 = vmax.f32 %v4827, 0.0
        %v5684 = vmax.f32 %v4829, 0.0
        %v5685 = vmax.f32 %v5531, 0.0
        %v5686 = vmax.f32 %v4833, 0.0
        %v5687 = vmax.f32 %v4835, 0.0
        %v5688 = vmax.f32 %v5536, 0.0
        %v5689 = vmax.f32 %v4839, 0.0
        %v5690 = vmax.f32 %v4841, 0.0
        %v5691 = vmax.f32 %v5541, 0.0
        %v5692 = vmax.f32 %v4845, 0.0
        %v5693 = vmax.f32 %v4847, 0.0
        %v5694 = vmax.f32 %v5546, 0.0
        %v5695 = vmax.f32 %v4851, 0.0
        %v5696 = vmax.f32 %v4853, 0.0
        %v5697 = vmax.f32 %v5551, 0.0
        %v5698 = vmax.f32 %v4857, 0.0
        %v5699 = vmax.f32 %v4859, 0.0
        %v5700 = vmax.f32 %v5556, 0.0
        %v5701 = vmax.f32 %v4863, 0.0
        %v5702 = vmax.f32 %v4865, 0.0
        %v5703 = vmax.f32 %v5561, 0.0
        %v5704 = vmax.f32 %v4869, 0.0
        %v5705 = vmax.f32 %v4871, 0.0
        %v5706 = vmax.f32 %v5566, 0.0
        %v5707 = vmax.f32 %v4875, 0.0
        %v5708 = vmax.f32 %v4877, 0.0
        %v5709 = vmax.f32 %v5571, 0.0
        %v5710 = vmax.f32 %v4881, 0.0
        %v5711 = vmax.f32 %v4883, 0.0
        %v5712 = vmax.f32 %v5576, 0.0
        %v5713 = vmax.f32 %v4887, 0.0
        %v5714 = vmax.f32 %v4889, 0.0
        %v5715 = vmax.f32 %v5581, 0.0
        %v5716 = vmax.f32 %v4893, 0.0
        %v5717 = vmax.f32 %v4895, 0.0
        %v5718 = vmax.f32 %v5586, 0.0
        %v5719 = vmax.f32 %v4899, 0.0
        %v5720 = vmax.f32 %v4901, 0.0
        %v5721 = vmax.f32 %v5591, 0.0
        %v5722 = vmax.f32 %v4905, 0.0
        %v5723 = vmax.f32 %v4907, 0.0
        %v5724 = vmax.f32 %v5596, 0.0
        %v5725 = vmax.f32 %v4911, 0.0
        %v5726 = vmax.f32 %v4913, 0.0
        %v5727 = vmax.f32 %v5601, 0.0
        %v5728 = vmax.f32 %v4917, 0.0
        %v5729 = vmax.f32 %v4919, 0.0
        %v5730 = vmax.f32 %v5606, 0.0
        %v5731 = vmax.f32 %v4923, 0.0
        %v5732 = vmax.f32 %v4925, 0.0
        %v5733 = vmax.f32 %v5611, 0.0
        %v5734 = vmax.f32 %v4929, 0.0
        %v5735 = vmax.f32 %v4931, 0.0
        %v5736 = vmax.f32 %v5616, 0.0
        %v5737 = vmax.f32 %v4935, 0.0
        %v5738 = vmax.f32 %v4937, 0.0
        %v5739 = vmax.f32 %v5621, 0.0
        %v5740 = vmax.f32 %v4941, 0.0
        %v5741 = vmax.f32 %v4943, 0.0
        %v5742 = vmax.f32 %v5626, 0.0
        %v5743 = vmax.f32 %v4947, 0.0
        %v5744 = vmax.f32 %v4949, 0.0
        %v5745 = vmax.f32 %v5631, 0.0
        %v5746 = vmax.f32 %v4953, 0.0
        %v5747 = vmax.f32 %v4955, 0.0
        %v5748 = vmax.f32 %v5636, 0.0
        %v5749 = vmax.f32 %v4959, 0.0
        %v5750 = vmax.f32 %v4961, 0.0
        %v5751 = vmax.f32 %v5641, 0.0
        %v5752 = vmax.f32 %v4965, 0.0
        %v5753 = vmax.f32 %v4967, 0.0
        %v5754 = vmax.f32 %v5646, 0.0
        %v5755 = vmax.f32 %v4971, 0.0
        %v5756 = vmax.f32 %v4973, 0.0
        %v5757 = vmax.f32 %v5651, 0.0
        %v5758 = vmax.f32 %v4977, 0.0
        %v5759 = vmax.f32 %v4979, 0.0
        %v5760 = vmax.f32 %v5656, 0.0
        %v5761 = vmax.f32 %v4983, 0.0
        %v5762 = vmax.f32 %v4985, 0.0
        %v5763 = vmax.f32 %v5661, 0.0
        %v5764 = vmax.f32 %v4989, 0.0
        %v5765 = vmax.f32 %v4991, 0.0
        %v5766 = vmax.f32 %v5666, 0.0
        %v5767 = vmax.f32 %v4995, 0.0
        %v5768 = vmax.f32 %v4997, 0.0
        %v5769 = vmax.f32 %v5671, 0.0
        %v5770 = vld [vmem:[#allocation11] sm:$0xff]
        %v5771 = vld [vmem:[#allocation11 + $0x8] sm:$0xff]
        %v5772 = vld [vmem:[#allocation11 + $0x10] sm:$0xff]
        %v5773 = vld [vmem:[#allocation11 + $0x18] sm:$0xff]
        %v5774 = vld [vmem:[#allocation11 + $0x20] sm:$0xff]
        %v5775 = vld [vmem:[#allocation11 + $0x28] sm:$0xff]
        %v5776 = vld [vmem:[#allocation11 + $0x30] sm:$0xff]
        %v5777 = vld [vmem:[#allocation11 + $0x38] sm:$0xff]
        %v5778 = vld [vmem:[#allocation11 + $0x40] sm:$0xff]
        %v5779 = vld [vmem:[#allocation11 + $0x48] sm:$0xff]
        %v5780 = vld [vmem:[#allocation11 + $0x50] sm:$0xff]
        %v5781 = vld [vmem:[#allocation11 + $0x58] sm:$0xff]
        %v5782 = vld [vmem:[#allocation11 + $0x60] sm:$0xff]
        %v5783 = vld [vmem:[#allocation11 + $0x68] sm:$0xff]
        %v5784 = vld [vmem:[#allocation11 + $0x70] sm:$0xff]
        %v5785 = vld [vmem:[#allocation11 + $0x78] sm:$0xff]
        %v5786 = vld [vmem:[#allocation11 + $0x80] sm:$0xff]
        %v5787 = vld [vmem:[#allocation11 + $0x88] sm:$0xff]
        %v5788 = vld [vmem:[#allocation11 + $0x90] sm:$0xff]
        %v5789 = vld [vmem:[#allocation11 + $0x98] sm:$0xff]
        %v5790 = vld [vmem:[#allocation11 + $0xa0] sm:$0xff]
        %v5791 = vld [vmem:[#allocation11 + $0xa8] sm:$0xff]
        %v5792 = vld [vmem:[#allocation11 + $0xb0] sm:$0xff]
        %v5793 = vld [vmem:[#allocation11 + $0xb8] sm:$0xff]
        %v5794 = vld [vmem:[#allocation11 + $0xc0] sm:$0xff]
        %v5795 = vld [vmem:[#allocation11 + $0xc8] sm:$0xff]
        %v5796 = vld [vmem:[#allocation11 + $0xd0] sm:$0xff]
        %v5797 = vld [vmem:[#allocation11 + $0xd8] sm:$0xff]
        %v5798 = vld [vmem:[#allocation11 + $0xe0] sm:$0xff]
        %v5799 = vld [vmem:[#allocation11 + $0xe8] sm:$0xff]
        %v5800 = vld [vmem:[#allocation11 + $0xf0] sm:$0xff]
        %v5801 = vld [vmem:[#allocation11 + $0xf8] sm:$0xff]
        %v5802 = vld [vmem:[#allocation11 + $0x100] sm:$0xff]
        %v5803 = vld [vmem:[#allocation11 + $0x108] sm:$0xff]
        %v5804 = vld [vmem:[#allocation11 + $0x110] sm:$0xff]
        %v5805 = vld [vmem:[#allocation11 + $0x118] sm:$0xff]
        %v5806 = vld [vmem:[#allocation11 + $0x120] sm:$0xff]
        %v5807 = vld [vmem:[#allocation11 + $0x128] sm:$0xff]
        %v5808 = vld [vmem:[#allocation11 + $0x130] sm:$0xff]
        %v5809 = vld [vmem:[#allocation11 + $0x138] sm:$0xff]
        %v5810 = vld [vmem:[#allocation11 + $0x140] sm:$0xff]
        %v5811 = vld [vmem:[#allocation11 + $0x148] sm:$0xff]
        %v5812 = vld [vmem:[#allocation11 + $0x150] sm:$0xff]
        %v5813 = vld [vmem:[#allocation11 + $0x158] sm:$0xff]
        %v5814 = vld [vmem:[#allocation11 + $0x160] sm:$0xff]
        %v5815 = vld [vmem:[#allocation11 + $0x168] sm:$0xff]
        %v5816 = vld [vmem:[#allocation11 + $0x170] sm:$0xff]
        %v5817 = vld [vmem:[#allocation11 + $0x178] sm:$0xff]
        %v5818 = vld [vmem:[%s9] sm:$0x1]
        %v5820 = vlaneseq
        %v5821 = vshrl.u32 %v5820, 7
        %v5822 = vsub.s32 0, %v5821
        %v5823 = vrot.slane %v5818, %v5822
        %5825 = vmatprep.subr.mxu0 0.0
        %5826 = vmatpush1.msra.mxu0 %v5785
        %5827 = vmatprep.subr.mxu0 0.0
        %5828 = vmatpush1.msra.mxu0 %v5784
        %5829 = vmatprep.subr.mxu0 0.0
        %5830 = vmatpush1.msra.mxu0 %v5783
        %5831 = vmatprep.subr.mxu0 0.0
        %5832 = vmatpush1.msra.mxu0 %v5782
        %5833 = vmatprep.subr.mxu0 0.0
        %5834 = vmatpush1.msra.mxu0 %v5781
        %5835 = vmatprep.subr.mxu0 0.0
        %5836 = vmatpush1.msra.mxu0 %v5780
        %5837 = vmatprep.subr.mxu0 0.0
        %5838 = vmatpush1.msra.mxu0 %v5779
        %5839 = vmatprep.subr.mxu0 0.0
        %5840 = vmatpush1.msra.mxu0 %v5778
        %5841 = vmatprep.subr.mxu0 0.0
        %5842 = vmatpush1.msra.mxu0 %v5777
        %5843 = vmatprep.subr.mxu0 0.0
        %5844 = vmatpush1.msra.mxu0 %v5776
        %5845 = vmatprep.subr.mxu0 0.0
        %5846 = vmatpush1.msra.mxu0 %v5775
        %5847 = vmatprep.subr.mxu0 0.0
        %5848 = vmatpush1.msra.mxu0 %v5774
        %5849 = vmatprep.subr.mxu0 0.0
        %5850 = vmatpush1.msra.mxu0 %v5773
        %5851 = vmatprep.subr.mxu0 0.0
        %5852 = vmatpush1.msra.mxu0 %v5772
        %5853 = vmatprep.subr.mxu0 0.0
        %5854 = vmatpush1.msra.mxu0 %v5771
        %5855 = vmatprep.subr.mxu0 0.0
        %5856 = vmatpush1.msra.mxu0 %v5770
        %5857 = vmatprep.subr.mxu0 0.0
        %5858 = vmatpush2.msra.mxu0 %v5801
        %5859 = vmatprep.subr.mxu0 0.0
        %5860 = vmatpush2.msra.mxu0 %v5800
        %5861 = vmatprep.subr.mxu0 0.0
        %5862 = vmatpush2.msra.mxu0 %v5799
        %5863 = vmatprep.subr.mxu0 0.0
        %5864 = vmatpush2.msra.mxu0 %v5798
        %5865 = vmatprep.subr.mxu0 0.0
        %5866 = vmatpush2.msra.mxu0 %v5797
        %5867 = vmatprep.subr.mxu0 0.0
        %5868 = vmatpush2.msra.mxu0 %v5796
        %5869 = vmatprep.subr.mxu0 0.0
        %5870 = vmatpush2.msra.mxu0 %v5795
        %5871 = vmatprep.subr.mxu0 0.0
        %5872 = vmatpush2.msra.mxu0 %v5794
        %5873 = vmatprep.subr.mxu0 0.0
        %5874 = vmatpush2.msra.mxu0 %v5793
        %5875 = vmatprep.subr.mxu0 0.0
        %5876 = vmatpush2.msra.mxu0 %v5792
        %5877 = vmatprep.subr.mxu0 0.0
        %5878 = vmatpush2.msra.mxu0 %v5791
        %5879 = vmatprep.subr.mxu0 0.0
        %5880 = vmatpush2.msra.mxu0 %v5790
        %5881 = vmatprep.subr.mxu0 0.0
        %5882 = vmatpush2.msra.mxu0 %v5789
        %5883 = vmatprep.subr.mxu0 0.0
        %5884 = vmatpush2.msra.mxu0 %v5788
        %5885 = vmatprep.subr.mxu0 0.0
        %5886 = vmatpush2.msra.mxu0 %v5787
        %5887 = vmatprep.subr.mxu0 0.0
        %5888 = vmatpush2.msra.mxu0 %v5786
        %5889 = vmatprep.mubr.f32.mxu0 %v5675
        %5890 = vmatmul.mubr.f32.gmra.mxu0 %v5674
        %v5891 = vpop.f32.mrf.mxu0
        %v5892 = vadd.f32 %v5823, %v5891
        %v5893 = vpop.f32.mrf.mxu0
        %5894 = vmatprep.mubr.f32.mxu0 %v5678
        %5895 = vmatmul.mubr.f32.gmra.mxu0 %v5677
        %v5896 = vpop.f32.mrf.mxu0
        %v5897 = vadd.f32 %v5823, %v5896
        %v5898 = vpop.f32.mrf.mxu0
        %5899 = vmatprep.mubr.f32.mxu0 %v5681
        %5900 = vmatmul.mubr.f32.gmra.mxu0 %v5680
        %v5901 = vpop.f32.mrf.mxu0
        %v5902 = vadd.f32 %v5823, %v5901
        %v5903 = vpop.f32.mrf.mxu0
        %5904 = vmatprep.mubr.f32.mxu0 %v5684
        %5905 = vmatmul.mubr.f32.gmra.mxu0 %v5683
        %v5906 = vpop.f32.mrf.mxu0
        %v5907 = vadd.f32 %v5823, %v5906
        %v5908 = vpop.f32.mrf.mxu0
        %5909 = vmatprep.mubr.f32.mxu0 %v5687
        %5910 = vmatmul.mubr.f32.gmra.mxu0 %v5686
        %v5911 = vpop.f32.mrf.mxu0
        %v5912 = vadd.f32 %v5823, %v5911
        %v5913 = vpop.f32.mrf.mxu0
        %5914 = vmatprep.mubr.f32.mxu0 %v5690
        %5915 = vmatmul.mubr.f32.gmra.mxu0 %v5689
        %v5916 = vpop.f32.mrf.mxu0
        %v5917 = vadd.f32 %v5823, %v5916
        %v5918 = vpop.f32.mrf.mxu0
        %5919 = vmatprep.mubr.f32.mxu0 %v5693
        %5920 = vmatmul.mubr.f32.gmra.mxu0 %v5692
        %v5921 = vpop.f32.mrf.mxu0
        %v5922 = vadd.f32 %v5823, %v5921
        %v5923 = vpop.f32.mrf.mxu0
        %5924 = vmatprep.mubr.f32.mxu0 %v5696
        %5925 = vmatmul.mubr.f32.gmra.mxu0 %v5695
        %v5926 = vpop.f32.mrf.mxu0
        %v5927 = vadd.f32 %v5823, %v5926
        %v5928 = vpop.f32.mrf.mxu0
        %5929 = vmatprep.mubr.f32.mxu0 %v5699
        %5930 = vmatmul.mubr.f32.gmra.mxu0 %v5698
        %v5931 = vpop.f32.mrf.mxu0
        %v5932 = vadd.f32 %v5823, %v5931
        %v5933 = vpop.f32.mrf.mxu0
        %5934 = vmatprep.mubr.f32.mxu0 %v5702
        %5935 = vmatmul.mubr.f32.gmra.mxu0 %v5701
        %v5936 = vpop.f32.mrf.mxu0
        %v5937 = vadd.f32 %v5823, %v5936
        %v5938 = vpop.f32.mrf.mxu0
        %5939 = vmatprep.mubr.f32.mxu0 %v5705
        %5940 = vmatmul.mubr.f32.gmra.mxu0 %v5704
        %v5941 = vpop.f32.mrf.mxu0
        %v5942 = vadd.f32 %v5823, %v5941
        %v5943 = vpop.f32.mrf.mxu0
        %5944 = vmatprep.mubr.f32.mxu0 %v5708
        %5945 = vmatmul.mubr.f32.gmra.mxu0 %v5707
        %v5946 = vpop.f32.mrf.mxu0
        %v5947 = vadd.f32 %v5823, %v5946
        %v5948 = vpop.f32.mrf.mxu0
        %5949 = vmatprep.mubr.f32.mxu0 %v5711
        %5950 = vmatmul.mubr.f32.gmra.mxu0 %v5710
        %v5951 = vpop.f32.mrf.mxu0
        %v5952 = vadd.f32 %v5823, %v5951
        %v5953 = vpop.f32.mrf.mxu0
        %5954 = vmatprep.mubr.f32.mxu0 %v5714
        %5955 = vmatmul.mubr.f32.gmra.mxu0 %v5713
        %v5956 = vpop.f32.mrf.mxu0
        %v5957 = vadd.f32 %v5823, %v5956
        %v5958 = vpop.f32.mrf.mxu0
        %5959 = vmatprep.mubr.f32.mxu0 %v5717
        %5960 = vmatmul.mubr.f32.gmra.mxu0 %v5716
        %v5961 = vpop.f32.mrf.mxu0
        %v5962 = vadd.f32 %v5823, %v5961
        %v5963 = vpop.f32.mrf.mxu0
        %5964 = vmatprep.mubr.f32.mxu0 %v5720
        %5965 = vmatmul.mubr.f32.gmra.mxu0 %v5719
        %v5966 = vpop.f32.mrf.mxu0
        %v5967 = vadd.f32 %v5823, %v5966
        %v5968 = vpop.f32.mrf.mxu0
        %5969 = vmatprep.mubr.f32.mxu0 %v5723
        %5970 = vmatmul.mubr.f32.gmra.mxu0 %v5722
        %v5971 = vpop.f32.mrf.mxu0
        %v5972 = vadd.f32 %v5823, %v5971
        %v5973 = vpop.f32.mrf.mxu0
        %5974 = vmatprep.mubr.f32.mxu0 %v5726
        %5975 = vmatmul.mubr.f32.gmra.mxu0 %v5725
        %v5976 = vpop.f32.mrf.mxu0
        %v5977 = vadd.f32 %v5823, %v5976
        %v5978 = vpop.f32.mrf.mxu0
        %5979 = vmatprep.mubr.f32.mxu0 %v5729
        %5980 = vmatmul.mubr.f32.gmra.mxu0 %v5728
        %v5981 = vpop.f32.mrf.mxu0
        %v5982 = vadd.f32 %v5823, %v5981
        %v5983 = vpop.f32.mrf.mxu0
        %5984 = vmatprep.mubr.f32.mxu0 %v5732
        %5985 = vmatmul.mubr.f32.gmra.mxu0 %v5731
        %v5986 = vpop.f32.mrf.mxu0
        %v5987 = vadd.f32 %v5823, %v5986
        %v5988 = vpop.f32.mrf.mxu0
        %5989 = vmatprep.mubr.f32.mxu0 %v5735
        %5990 = vmatmul.mubr.f32.gmra.mxu0 %v5734
        %v5991 = vpop.f32.mrf.mxu0
        %v5992 = vadd.f32 %v5823, %v5991
        %v5993 = vpop.f32.mrf.mxu0
        %5994 = vmatprep.mubr.f32.mxu0 %v5738
        %5995 = vmatmul.mubr.f32.gmra.mxu0 %v5737
        %v5996 = vpop.f32.mrf.mxu0
        %v5997 = vadd.f32 %v5823, %v5996
        %v5998 = vpop.f32.mrf.mxu0
        %5999 = vmatprep.mubr.f32.mxu0 %v5741
        %6000 = vmatmul.mubr.f32.gmra.mxu0 %v5740
        %v6001 = vpop.f32.mrf.mxu0
        %v6002 = vadd.f32 %v5823, %v6001
        %v6003 = vpop.f32.mrf.mxu0
        %6004 = vmatprep.mubr.f32.mxu0 %v5744
        %6005 = vmatmul.mubr.f32.gmra.mxu0 %v5743
        %v6006 = vpop.f32.mrf.mxu0
        %v6007 = vadd.f32 %v5823, %v6006
        %v6008 = vpop.f32.mrf.mxu0
        %6009 = vmatprep.mubr.f32.mxu0 %v5747
        %6010 = vmatmul.mubr.f32.gmra.mxu0 %v5746
        %v6011 = vpop.f32.mrf.mxu0
        %v6012 = vadd.f32 %v5823, %v6011
        %v6013 = vpop.f32.mrf.mxu0
        %6014 = vmatprep.mubr.f32.mxu0 %v5750
        %6015 = vmatmul.mubr.f32.gmra.mxu0 %v5749
        %v6016 = vpop.f32.mrf.mxu0
        %v6017 = vadd.f32 %v5823, %v6016
        %v6018 = vpop.f32.mrf.mxu0
        %6019 = vmatprep.mubr.f32.mxu0 %v5753
        %6020 = vmatmul.mubr.f32.gmra.mxu0 %v5752
        %v6021 = vpop.f32.mrf.mxu0
        %v6022 = vadd.f32 %v5823, %v6021
        %v6023 = vpop.f32.mrf.mxu0
        %6024 = vmatprep.mubr.f32.mxu0 %v5756
        %6025 = vmatmul.mubr.f32.gmra.mxu0 %v5755
        %v6026 = vpop.f32.mrf.mxu0
        %v6027 = vadd.f32 %v5823, %v6026
        %v6028 = vpop.f32.mrf.mxu0
        %6029 = vmatprep.mubr.f32.mxu0 %v5759
        %6030 = vmatmul.mubr.f32.gmra.mxu0 %v5758
        %v6031 = vpop.f32.mrf.mxu0
        %v6032 = vadd.f32 %v5823, %v6031
        %v6033 = vpop.f32.mrf.mxu0
        %6034 = vmatprep.mubr.f32.mxu0 %v5762
        %6035 = vmatmul.mubr.f32.gmra.mxu0 %v5761
        %v6036 = vpop.f32.mrf.mxu0
        %v6037 = vadd.f32 %v5823, %v6036
        %v6038 = vpop.f32.mrf.mxu0
        %6039 = vmatprep.mubr.f32.mxu0 %v5765
        %6040 = vmatmul.mubr.f32.gmra.mxu0 %v5764
        %v6041 = vpop.f32.mrf.mxu0
        %v6042 = vadd.f32 %v5823, %v6041
        %v6043 = vpop.f32.mrf.mxu0
        %6044 = vmatprep.mubr.f32.mxu0 %v5768
        %6045 = vmatmul.mubr.f32.gmra.mxu0 %v5767
        %v6046 = vpop.f32.mrf.mxu0
        %v6047 = vadd.f32 %v5823, %v6046
        %v6048 = vpop.f32.mrf.mxu0
        %6049 = vdwg.mxu0
        %6050 = vmatprep.subr.mxu0 0.0
        %6051 = vmatpush1.msra.mxu0 %v5817
        %6052 = vmatprep.subr.mxu0 0.0
        %6053 = vmatpush1.msra.mxu0 %v5816
        %6054 = vmatprep.subr.mxu0 0.0
        %6055 = vmatpush1.msra.mxu0 %v5815
        %6056 = vmatprep.subr.mxu0 0.0
        %6057 = vmatpush1.msra.mxu0 %v5814
        %6058 = vmatprep.subr.mxu0 0.0
        %6059 = vmatpush1.msra.mxu0 %v5813
        %6060 = vmatprep.subr.mxu0 0.0
        %6061 = vmatpush1.msra.mxu0 %v5812
        %6062 = vmatprep.subr.mxu0 0.0
        %6063 = vmatpush1.msra.mxu0 %v5811
        %6064 = vmatprep.subr.mxu0 0.0
        %6065 = vmatpush1.msra.mxu0 %v5810
        %6066 = vmatprep.subr.mxu0 0.0
        %6067 = vmatpush1.msra.mxu0 %v5809
        %6068 = vmatprep.subr.mxu0 0.0
        %6069 = vmatpush1.msra.mxu0 %v5808
        %6070 = vmatprep.subr.mxu0 0.0
        %6071 = vmatpush1.msra.mxu0 %v5807
        %6072 = vmatprep.subr.mxu0 0.0
        %6073 = vmatpush1.msra.mxu0 %v5806
        %6074 = vmatprep.subr.mxu0 0.0
        %6075 = vmatpush1.msra.mxu0 %v5805
        %6076 = vmatprep.subr.mxu0 0.0
        %6077 = vmatpush1.msra.mxu0 %v5804
        %6078 = vmatprep.subr.mxu0 0.0
        %6079 = vmatpush1.msra.mxu0 %v5803
        %6080 = vmatprep.subr.mxu0 0.0
        %6081 = vmatpush1.msra.mxu0 %v5802
        %6082 = vmatprep.subr.mxu0 0.0
        %6083 = vmatpush2.msra.mxu0 0.0
        %6084 = vmatprep.subr.mxu0 0.0
        %6085 = vmatpush2.msra.mxu0 0.0
        %6086 = vmatprep.subr.mxu0 0.0
        %6087 = vmatpush2.msra.mxu0 0.0
        %6088 = vmatprep.subr.mxu0 0.0
        %6089 = vmatpush2.msra.mxu0 0.0
        %6090 = vmatprep.subr.mxu0 0.0
        %6091 = vmatpush2.msra.mxu0 0.0
        %6092 = vmatprep.subr.mxu0 0.0
        %6093 = vmatpush2.msra.mxu0 0.0
        %6094 = vmatprep.subr.mxu0 0.0
        %6095 = vmatpush2.msra.mxu0 0.0
        %6096 = vmatprep.subr.mxu0 0.0
        %6097 = vmatpush2.msra.mxu0 0.0
        %6098 = vmatprep.subr.mxu0 0.0
        %6099 = vmatpush2.msra.mxu0 0.0
        %6100 = vmatprep.subr.mxu0 0.0
        %6101 = vmatpush2.msra.mxu0 0.0
        %6102 = vmatprep.subr.mxu0 0.0
        %6103 = vmatpush2.msra.mxu0 0.0
        %6104 = vmatprep.subr.mxu0 0.0
        %6105 = vmatpush2.msra.mxu0 0.0
        %6106 = vmatprep.subr.mxu0 0.0
        %6107 = vmatpush2.msra.mxu0 0.0
        %6108 = vmatprep.subr.mxu0 0.0
        %6109 = vmatpush2.msra.mxu0 0.0
        %6110 = vmatprep.subr.mxu0 0.0
        %6111 = vmatpush2.msra.mxu0 0.0
        %6112 = vmatprep.subr.mxu0 0.0
        %6113 = vmatpush2.msra.mxu0 0.0
        %6114 = vmatprep.mubr.f32.mxu0 0.0
        %6115 = vmatmul.mubr.f32.gmra.mxu0 %v5676
        %v6116 = vpop.f32.mrf.mxu0
        %v6117 = vadd.f32 %v5892, %v6116
        %v6118 = vpop.f32.mrf.mxu0
        %6119 = vmatprep.mubr.f32.mxu0 0.0
        %6120 = vmatmul.mubr.f32.gmra.mxu0 %v5679
        %v6121 = vpop.f32.mrf.mxu0
        %v6122 = vadd.f32 %v5897, %v6121
        %v6123 = vpop.f32.mrf.mxu0
        %6124 = vmatprep.mubr.f32.mxu0 0.0
        %6125 = vmatmul.mubr.f32.gmra.mxu0 %v5682
        %v6126 = vpop.f32.mrf.mxu0
        %v6127 = vadd.f32 %v5902, %v6126
        %v6128 = vpop.f32.mrf.mxu0
        %6129 = vmatprep.mubr.f32.mxu0 0.0
        %6130 = vmatmul.mubr.f32.gmra.mxu0 %v5685
        %v6131 = vpop.f32.mrf.mxu0
        %v6132 = vadd.f32 %v5907, %v6131
        %v6133 = vpop.f32.mrf.mxu0
        %6134 = vmatprep.mubr.f32.mxu0 0.0
        %6135 = vmatmul.mubr.f32.gmra.mxu0 %v5688
        %v6136 = vpop.f32.mrf.mxu0
        %v6137 = vadd.f32 %v5912, %v6136
        %v6138 = vpop.f32.mrf.mxu0
        %6139 = vmatprep.mubr.f32.mxu0 0.0
        %6140 = vmatmul.mubr.f32.gmra.mxu0 %v5691
        %v6141 = vpop.f32.mrf.mxu0
        %v6142 = vadd.f32 %v5917, %v6141
        %v6143 = vpop.f32.mrf.mxu0
        %6144 = vmatprep.mubr.f32.mxu0 0.0
        %6145 = vmatmul.mubr.f32.gmra.mxu0 %v5694
        %v6146 = vpop.f32.mrf.mxu0
        %v6147 = vadd.f32 %v5922, %v6146
        %v6148 = vpop.f32.mrf.mxu0
        %6149 = vmatprep.mubr.f32.mxu0 0.0
        %6150 = vmatmul.mubr.f32.gmra.mxu0 %v5697
        %v6151 = vpop.f32.mrf.mxu0
        %v6152 = vadd.f32 %v5927, %v6151
        %v6153 = vpop.f32.mrf.mxu0
        %6154 = vmatprep.mubr.f32.mxu0 0.0
        %6155 = vmatmul.mubr.f32.gmra.mxu0 %v5700
        %v6156 = vpop.f32.mrf.mxu0
        %v6157 = vadd.f32 %v5932, %v6156
        %v6158 = vpop.f32.mrf.mxu0
        %6159 = vmatprep.mubr.f32.mxu0 0.0
        %6160 = vmatmul.mubr.f32.gmra.mxu0 %v5703
        %v6161 = vpop.f32.mrf.mxu0
        %v6162 = vadd.f32 %v5937, %v6161
        %v6163 = vpop.f32.mrf.mxu0
        %6164 = vmatprep.mubr.f32.mxu0 0.0
        %6165 = vmatmul.mubr.f32.gmra.mxu0 %v5706
        %v6166 = vpop.f32.mrf.mxu0
        %v6167 = vadd.f32 %v5942, %v6166
        %v6168 = vpop.f32.mrf.mxu0
        %6169 = vmatprep.mubr.f32.mxu0 0.0
        %6170 = vmatmul.mubr.f32.gmra.mxu0 %v5709
        %v6171 = vpop.f32.mrf.mxu0
        %v6172 = vadd.f32 %v5947, %v6171
        %v6173 = vpop.f32.mrf.mxu0
        %6174 = vmatprep.mubr.f32.mxu0 0.0
        %6175 = vmatmul.mubr.f32.gmra.mxu0 %v5712
        %v6176 = vpop.f32.mrf.mxu0
        %v6177 = vadd.f32 %v5952, %v6176
        %v6178 = vpop.f32.mrf.mxu0
        %6179 = vmatprep.mubr.f32.mxu0 0.0
        %6180 = vmatmul.mubr.f32.gmra.mxu0 %v5715
        %v6181 = vpop.f32.mrf.mxu0
        %v6182 = vadd.f32 %v5957, %v6181
        %v6183 = vpop.f32.mrf.mxu0
        %6184 = vmatprep.mubr.f32.mxu0 0.0
        %6185 = vmatmul.mubr.f32.gmra.mxu0 %v5718
        %v6186 = vpop.f32.mrf.mxu0
        %v6187 = vadd.f32 %v5962, %v6186
        %v6188 = vpop.f32.mrf.mxu0
        %6189 = vmatprep.mubr.f32.mxu0 0.0
        %6190 = vmatmul.mubr.f32.gmra.mxu0 %v5721
        %v6191 = vpop.f32.mrf.mxu0
        %v6192 = vadd.f32 %v5967, %v6191
        %v6193 = vpop.f32.mrf.mxu0
        %6194 = vmatprep.mubr.f32.mxu0 0.0
        %6195 = vmatmul.mubr.f32.gmra.mxu0 %v5724
        %v6196 = vpop.f32.mrf.mxu0
        %v6197 = vadd.f32 %v5972, %v6196
        %v6198 = vpop.f32.mrf.mxu0
        %6199 = vmatprep.mubr.f32.mxu0 0.0
        %6200 = vmatmul.mubr.f32.gmra.mxu0 %v5727
        %v6201 = vpop.f32.mrf.mxu0
        %v6202 = vadd.f32 %v5977, %v6201
        %v6203 = vpop.f32.mrf.mxu0
        %6204 = vmatprep.mubr.f32.mxu0 0.0
        %6205 = vmatmul.mubr.f32.gmra.mxu0 %v5730
        %v6206 = vpop.f32.mrf.mxu0
        %v6207 = vadd.f32 %v5982, %v6206
        %v6208 = vpop.f32.mrf.mxu0
        %6209 = vmatprep.mubr.f32.mxu0 0.0
        %6210 = vmatmul.mubr.f32.gmra.mxu0 %v5733
        %v6211 = vpop.f32.mrf.mxu0
        %v6212 = vadd.f32 %v5987, %v6211
        %v6213 = vpop.f32.mrf.mxu0
        %6214 = vmatprep.mubr.f32.mxu0 0.0
        %6215 = vmatmul.mubr.f32.gmra.mxu0 %v5736
        %v6216 = vpop.f32.mrf.mxu0
        %v6217 = vadd.f32 %v5992, %v6216
        %v6218 = vpop.f32.mrf.mxu0
        %6219 = vmatprep.mubr.f32.mxu0 0.0
        %6220 = vmatmul.mubr.f32.gmra.mxu0 %v5739
        %v6221 = vpop.f32.mrf.mxu0
        %v6222 = vadd.f32 %v5997, %v6221
        %v6223 = vpop.f32.mrf.mxu0
        %6224 = vmatprep.mubr.f32.mxu0 0.0
        %6225 = vmatmul.mubr.f32.gmra.mxu0 %v5742
        %v6226 = vpop.f32.mrf.mxu0
        %v6227 = vadd.f32 %v6002, %v6226
        %v6228 = vpop.f32.mrf.mxu0
        %6229 = vmatprep.mubr.f32.mxu0 0.0
        %6230 = vmatmul.mubr.f32.gmra.mxu0 %v5745
        %v6231 = vpop.f32.mrf.mxu0
        %v6232 = vadd.f32 %v6007, %v6231
        %v6233 = vpop.f32.mrf.mxu0
        %6234 = vmatprep.mubr.f32.mxu0 0.0
        %6235 = vmatmul.mubr.f32.gmra.mxu0 %v5748
        %v6236 = vpop.f32.mrf.mxu0
        %v6237 = vadd.f32 %v6012, %v6236
        %v6238 = vpop.f32.mrf.mxu0
        %6239 = vmatprep.mubr.f32.mxu0 0.0
        %6240 = vmatmul.mubr.f32.gmra.mxu0 %v5751
        %v6241 = vpop.f32.mrf.mxu0
        %v6242 = vadd.f32 %v6017, %v6241
        %v6243 = vpop.f32.mrf.mxu0
        %6244 = vmatprep.mubr.f32.mxu0 0.0
        %6245 = vmatmul.mubr.f32.gmra.mxu0 %v5754
        %v6246 = vpop.f32.mrf.mxu0
        %v6247 = vadd.f32 %v6022, %v6246
        %v6248 = vpop.f32.mrf.mxu0
        %6249 = vmatprep.mubr.f32.mxu0 0.0
        %6250 = vmatmul.mubr.f32.gmra.mxu0 %v5757
        %v6251 = vpop.f32.mrf.mxu0
        %v6252 = vadd.f32 %v6027, %v6251
        %v6253 = vpop.f32.mrf.mxu0
        %6254 = vmatprep.mubr.f32.mxu0 0.0
        %6255 = vmatmul.mubr.f32.gmra.mxu0 %v5760
        %v6256 = vpop.f32.mrf.mxu0
        %v6257 = vadd.f32 %v6032, %v6256
        %v6258 = vpop.f32.mrf.mxu0
        %6259 = vmatprep.mubr.f32.mxu0 0.0
        %6260 = vmatmul.mubr.f32.gmra.mxu0 %v5763
        %v6261 = vpop.f32.mrf.mxu0
        %v6262 = vadd.f32 %v6037, %v6261
        %v6263 = vpop.f32.mrf.mxu0
        %6264 = vmatprep.mubr.f32.mxu0 0.0
        %6265 = vmatmul.mubr.f32.gmra.mxu0 %v5766
        %v6266 = vpop.f32.mrf.mxu0
        %v6267 = vadd.f32 %v6042, %v6266
        %v6268 = vpop.f32.mrf.mxu0
        %6269 = vmatprep.mubr.f32.mxu0 0.0
        %6270 = vmatmul.mubr.f32.gmra.mxu0 %v5769
        %v6271 = vpop.f32.mrf.mxu0
        %v6272 = vadd.f32 %v6047, %v6271
        %v6273 = vpop.f32.mrf.mxu0
        %6274 = vdwg.mxu0
        %v6275 = vtanh.pop %v6117
        %v6276 = vtanh.pop %v6122
        %v6277 = vtanh.pop %v6127
        %v6278 = vtanh.pop %v6132
        %v6279 = vtanh.pop %v6137
        %v6280 = vtanh.pop %v6142
        %v6281 = vtanh.pop %v6147
        %v6282 = vtanh.pop %v6152
        %v6283 = vtanh.pop %v6157
        %v6284 = vtanh.pop %v6162
        %v6285 = vtanh.pop %v6167
        %v6286 = vtanh.pop %v6172
        %v6287 = vtanh.pop %v6177
        %v6288 = vtanh.pop %v6182
        %v6289 = vtanh.pop %v6187
        %v6290 = vtanh.pop %v6192
        %v6291 = vtanh.pop %v6197
        %v6292 = vtanh.pop %v6202
        %v6293 = vtanh.pop %v6207
        %v6294 = vtanh.pop %v6212
        %v6295 = vtanh.pop %v6217
        %v6296 = vtanh.pop %v6222
        %v6297 = vtanh.pop %v6227
        %v6298 = vtanh.pop %v6232
        %v6299 = vtanh.pop %v6237
        %v6300 = vtanh.pop %v6242
        %v6301 = vtanh.pop %v6247
        %v6302 = vtanh.pop %v6252
        %v6303 = vtanh.pop %v6257
        %v6304 = vtanh.pop %v6262
        %v6305 = vtanh.pop %v6267
        %v6306 = vtanh.pop %v6272
        %v6307 = vmul.f32 %v6275, 0.1
        %v6308 = vmul.f32 %v6276, 0.1
        %v6309 = vmul.f32 %v6277, 0.1
        %v6310 = vmul.f32 %v6278, 0.1
        %v6311 = vmul.f32 %v6279, 0.1
        %v6312 = vmul.f32 %v6280, 0.1
        %v6313 = vmul.f32 %v6281, 0.1
        %v6314 = vmul.f32 %v6282, 0.1
        %v6315 = vmul.f32 %v6283, 0.1
        %v6316 = vmul.f32 %v6284, 0.1
        %v6317 = vmul.f32 %v6285, 0.1
        %v6318 = vmul.f32 %v6286, 0.1
        %v6319 = vmul.f32 %v6287, 0.1
        %v6320 = vmul.f32 %v6288, 0.1
        %v6321 = vmul.f32 %v6289, 0.1
        %v6322 = vmul.f32 %v6290, 0.1
        %v6323 = vmul.f32 %v6291, 0.1
        %v6324 = vmul.f32 %v6292, 0.1
        %v6325 = vmul.f32 %v6293, 0.1
        %v6326 = vmul.f32 %v6294, 0.1
        %v6327 = vmul.f32 %v6295, 0.1
        %v6328 = vmul.f32 %v6296, 0.1
        %v6329 = vmul.f32 %v6297, 0.1
        %v6330 = vmul.f32 %v6298, 0.1
        %v6331 = vmul.f32 %v6299, 0.1
        %v6332 = vmul.f32 %v6300, 0.1
        %v6333 = vmul.f32 %v6301, 0.1
        %v6334 = vmul.f32 %v6302, 0.1
        %v6335 = vmul.f32 %v6303, 0.1
        %v6336 = vmul.f32 %v6304, 0.1
        %v6337 = vmul.f32 %v6305, 0.1
        %v6338 = vmul.f32 %v6306, 0.1
        %v6339 = vsub.f32 0.0, %v6117
        %v6340 = vsub.f32 0.0, %v6122
        %v6341 = vsub.f32 0.0, %v6127
        %v6342 = vsub.f32 0.0, %v6132
        %v6343 = vsub.f32 0.0, %v6137
        %v6344 = vsub.f32 0.0, %v6142
        %v6345 = vsub.f32 0.0, %v6147
        %v6346 = vsub.f32 0.0, %v6152
        %v6347 = vsub.f32 0.0, %v6157
        %v6348 = vsub.f32 0.0, %v6162
        %v6349 = vsub.f32 0.0, %v6167
        %v6350 = vsub.f32 0.0, %v6172
        %v6351 = vsub.f32 0.0, %v6177
        %v6352 = vsub.f32 0.0, %v6182
        %v6353 = vsub.f32 0.0, %v6187
        %v6354 = vsub.f32 0.0, %v6192
        %v6355 = vsub.f32 0.0, %v6197
        %v6356 = vsub.f32 0.0, %v6202
        %v6357 = vsub.f32 0.0, %v6207
        %v6358 = vsub.f32 0.0, %v6212
        %v6359 = vsub.f32 0.0, %v6217
        %v6360 = vsub.f32 0.0, %v6222
        %v6361 = vsub.f32 0.0, %v6227
        %v6362 = vsub.f32 0.0, %v6232
        %v6363 = vsub.f32 0.0, %v6237
        %v6364 = vsub.f32 0.0, %v6242
        %v6365 = vsub.f32 0.0, %v6247
        %v6366 = vsub.f32 0.0, %v6252
        %v6367 = vsub.f32 0.0, %v6257
        %v6368 = vsub.f32 0.0, %v6262
        %v6369 = vsub.f32 0.0, %v6267
        %v6370 = vsub.f32 0.0, %v6272
        %v6371 = vmul.f32 %v6339, 1.442695
        %v6372 = vpow.pop %v6371
        %v6373 = vmul.f32 %v6340, 1.442695
        %v6374 = vpow.pop %v6373
        %v6375 = vmul.f32 %v6341, 1.442695
        %v6376 = vpow.pop %v6375
        %v6377 = vmul.f32 %v6342, 1.442695
        %v6378 = vpow.pop %v6377
        %v6379 = vmul.f32 %v6343, 1.442695
        %v6380 = vpow.pop %v6379
        %v6381 = vmul.f32 %v6344, 1.442695
        %v6382 = vpow.pop %v6381
        %v6383 = vmul.f32 %v6345, 1.442695
        %v6384 = vpow.pop %v6383
        %v6385 = vmul.f32 %v6346, 1.442695
        %v6386 = vpow.pop %v6385
        %v6387 = vmul.f32 %v6347, 1.442695
        %v6388 = vpow.pop %v6387
        %v6389 = vmul.f32 %v6348, 1.442695
        %v6390 = vpow.pop %v6389
        %v6391 = vmul.f32 %v6349, 1.442695
        %v6392 = vpow.pop %v6391
        %v6393 = vmul.f32 %v6350, 1.442695
        %v6394 = vpow.pop %v6393
        %v6395 = vmul.f32 %v6351, 1.442695
        %v6396 = vpow.pop %v6395
        %v6397 = vmul.f32 %v6352, 1.442695
        %v6398 = vpow.pop %v6397
        %v6399 = vmul.f32 %v6353, 1.442695
        %v6400 = vpow.pop %v6399
        %v6401 = vmul.f32 %v6354, 1.442695
        %v6402 = vpow.pop %v6401
        %v6403 = vmul.f32 %v6355, 1.442695
        %v6404 = vpow.pop %v6403
        %v6405 = vmul.f32 %v6356, 1.442695
        %v6406 = vpow.pop %v6405
        %v6407 = vmul.f32 %v6357, 1.442695
        %v6408 = vpow.pop %v6407
        %v6409 = vmul.f32 %v6358, 1.442695
        %v6410 = vpow.pop %v6409
        %v6411 = vmul.f32 %v6359, 1.442695
        %v6412 = vpow.pop %v6411
        %v6413 = vmul.f32 %v6360, 1.442695
        %v6414 = vpow.pop %v6413
        %v6415 = vmul.f32 %v6361, 1.442695
        %v6416 = vpow.pop %v6415
        %v6417 = vmul.f32 %v6362, 1.442695
        %v6418 = vpow.pop %v6417
        %v6419 = vmul.f32 %v6363, 1.442695
        %v6420 = vpow.pop %v6419
        %v6421 = vmul.f32 %v6364, 1.442695
        %v6422 = vpow.pop %v6421
        %v6423 = vmul.f32 %v6365, 1.442695
        %v6424 = vpow.pop %v6423
        %v6425 = vmul.f32 %v6366, 1.442695
        %v6426 = vpow.pop %v6425
        %v6427 = vmul.f32 %v6367, 1.442695
        %v6428 = vpow.pop %v6427
        %v6429 = vmul.f32 %v6368, 1.442695
        %v6430 = vpow.pop %v6429
        %v6431 = vmul.f32 %v6369, 1.442695
        %v6432 = vpow.pop %v6431
        %v6433 = vmul.f32 %v6370, 1.442695
        %v6434 = vpow.pop %v6433
        %v6435 = vadd.f32 %v6372, 1.0
        %v6436 = vadd.f32 %v6374, 1.0
        %v6437 = vadd.f32 %v6376, 1.0
        %v6438 = vadd.f32 %v6378, 1.0
        %v6439 = vadd.f32 %v6380, 1.0
        %v6440 = vadd.f32 %v6382, 1.0
        %v6441 = vadd.f32 %v6384, 1.0
        %v6442 = vadd.f32 %v6386, 1.0
        %v6443 = vadd.f32 %v6388, 1.0
        %v6444 = vadd.f32 %v6390, 1.0
        %v6445 = vadd.f32 %v6392, 1.0
        %v6446 = vadd.f32 %v6394, 1.0
        %v6447 = vadd.f32 %v6396, 1.0
        %v6448 = vadd.f32 %v6398, 1.0
        %v6449 = vadd.f32 %v6400, 1.0
        %v6450 = vadd.f32 %v6402, 1.0
        %v6451 = vadd.f32 %v6404, 1.0
        %v6452 = vadd.f32 %v6406, 1.0
        %v6453 = vadd.f32 %v6408, 1.0
        %v6454 = vadd.f32 %v6410, 1.0
        %v6455 = vadd.f32 %v6412, 1.0
        %v6456 = vadd.f32 %v6414, 1.0
        %v6457 = vadd.f32 %v6416, 1.0
        %v6458 = vadd.f32 %v6418, 1.0
        %v6459 = vadd.f32 %v6420, 1.0
        %v6460 = vadd.f32 %v6422, 1.0
        %v6461 = vadd.f32 %v6424, 1.0
        %v6462 = vadd.f32 %v6426, 1.0
        %v6463 = vadd.f32 %v6428, 1.0
        %v6464 = vadd.f32 %v6430, 1.0
        %v6465 = vadd.f32 %v6432, 1.0
        %v6466 = vadd.f32 %v6434, 1.0
        %v6467 = vrcp.pop %v6435
        %v6468 = vmul.f32 1.0, %v6467
        %v6469 = vrcp.pop %v6436
        %v6470 = vmul.f32 1.0, %v6469
        %v6471 = vrcp.pop %v6437
        %v6472 = vmul.f32 1.0, %v6471
        %v6473 = vrcp.pop %v6438
        %v6474 = vmul.f32 1.0, %v6473
        %v6475 = vrcp.pop %v6439
        %v6476 = vmul.f32 1.0, %v6475
        %v6477 = vrcp.pop %v6440
        %v6478 = vmul.f32 1.0, %v6477
        %v6479 = vrcp.pop %v6441
        %v6480 = vmul.f32 1.0, %v6479
        %v6481 = vrcp.pop %v6442
        %v6482 = vmul.f32 1.0, %v6481
        %v6483 = vrcp.pop %v6443
        %v6484 = vmul.f32 1.0, %v6483
        %v6485 = vrcp.pop %v6444
        %v6486 = vmul.f32 1.0, %v6485
        %v6487 = vrcp.pop %v6445
        %v6488 = vmul.f32 1.0, %v6487
        %v6489 = vrcp.pop %v6446
        %v6490 = vmul.f32 1.0, %v6489
        %v6491 = vrcp.pop %v6447
        %v6492 = vmul.f32 1.0, %v6491
        %v6493 = vrcp.pop %v6448
        %v6494 = vmul.f32 1.0, %v6493
        %v6495 = vrcp.pop %v6449
        %v6496 = vmul.f32 1.0, %v6495
        %v6497 = vrcp.pop %v6450
        %v6498 = vmul.f32 1.0, %v6497
        %v6499 = vrcp.pop %v6451
        %v6500 = vmul.f32 1.0, %v6499
        %v6501 = vrcp.pop %v6452
        %v6502 = vmul.f32 1.0, %v6501
        %v6503 = vrcp.pop %v6453
        %v6504 = vmul.f32 1.0, %v6503
        %v6505 = vrcp.pop %v6454
        %v6506 = vmul.f32 1.0, %v6505
        %v6507 = vrcp.pop %v6455
        %v6508 = vmul.f32 1.0, %v6507
        %v6509 = vrcp.pop %v6456
        %v6510 = vmul.f32 1.0, %v6509
        %v6511 = vrcp.pop %v6457
        %v6512 = vmul.f32 1.0, %v6511
        %v6513 = vrcp.pop %v6458
        %v6514 = vmul.f32 1.0, %v6513
        %v6515 = vrcp.pop %v6459
        %v6516 = vmul.f32 1.0, %v6515
        %v6517 = vrcp.pop %v6460
        %v6518 = vmul.f32 1.0, %v6517
        %v6519 = vrcp.pop %v6461
        %v6520 = vmul.f32 1.0, %v6519
        %v6521 = vrcp.pop %v6462
        %v6522 = vmul.f32 1.0, %v6521
        %v6523 = vrcp.pop %v6463
        %v6524 = vmul.f32 1.0, %v6523
        %v6525 = vrcp.pop %v6464
        %v6526 = vmul.f32 1.0, %v6525
        %v6527 = vrcp.pop %v6465
        %v6528 = vmul.f32 1.0, %v6527
        %v6529 = vrcp.pop %v6466
        %v6530 = vmul.f32 1.0, %v6529
        %v6531 = vmul.f32 %v6117, %v6117
        %v6532 = vmul.f32 %v6122, %v6122
        %v6533 = vmul.f32 %v6127, %v6127
        %v6534 = vmul.f32 %v6132, %v6132
        %v6535 = vmul.f32 %v6137, %v6137
        %v6536 = vmul.f32 %v6142, %v6142
        %v6537 = vmul.f32 %v6147, %v6147
        %v6538 = vmul.f32 %v6152, %v6152
        %v6539 = vmul.f32 %v6157, %v6157
        %v6540 = vmul.f32 %v6162, %v6162
        %v6541 = vmul.f32 %v6167, %v6167
        %v6542 = vmul.f32 %v6172, %v6172
        %v6543 = vmul.f32 %v6177, %v6177
        %v6544 = vmul.f32 %v6182, %v6182
        %v6545 = vmul.f32 %v6187, %v6187
        %v6546 = vmul.f32 %v6192, %v6192
        %v6547 = vmul.f32 %v6197, %v6197
        %v6548 = vmul.f32 %v6202, %v6202
        %v6549 = vmul.f32 %v6207, %v6207
        %v6550 = vmul.f32 %v6212, %v6212
        %v6551 = vmul.f32 %v6217, %v6217
        %v6552 = vmul.f32 %v6222, %v6222
        %v6553 = vmul.f32 %v6227, %v6227
        %v6554 = vmul.f32 %v6232, %v6232
        %v6555 = vmul.f32 %v6237, %v6237
        %v6556 = vmul.f32 %v6242, %v6242
        %v6557 = vmul.f32 %v6247, %v6247
        %v6558 = vmul.f32 %v6252, %v6252
        %v6559 = vmul.f32 %v6257, %v6257
        %v6560 = vmul.f32 %v6262, %v6262
        %v6561 = vmul.f32 %v6267, %v6267
        %v6562 = vmul.f32 %v6272, %v6272
        %6595 = vrot.lane.b32.xlu0 %v6531, 125
        %v6596 = vpop.permute.xlu0 %6595
        %6597 = vrot.lane.b32.xlu0 %v6532, 125
        %v6598 = vpop.permute.xlu0 %6597
        %6599 = vrot.lane.b32.xlu0 %v6533, 125
        %v6600 = vpop.permute.xlu0 %6599
        %6601 = vrot.lane.b32.xlu0 %v6534, 125
        %v6602 = vpop.permute.xlu0 %6601
        %6603 = vrot.lane.b32.xlu0 %v6535, 125
        %v6604 = vpop.permute.xlu0 %6603
        %6605 = vrot.lane.b32.xlu0 %v6536, 125
        %v6606 = vpop.permute.xlu0 %6605
        %6607 = vrot.lane.b32.xlu0 %v6537, 125
        %v6608 = vpop.permute.xlu0 %6607
        %6609 = vrot.lane.b32.xlu0 %v6538, 125
        %v6610 = vpop.permute.xlu0 %6609
        %6611 = vrot.lane.b32.xlu0 %v6539, 125
        %v6612 = vpop.permute.xlu0 %6611
        %6613 = vrot.lane.b32.xlu0 %v6540, 125
        %v6614 = vpop.permute.xlu0 %6613
        %6615 = vrot.lane.b32.xlu0 %v6541, 125
        %v6616 = vpop.permute.xlu0 %6615
        %6617 = vrot.lane.b32.xlu0 %v6542, 125
        %v6618 = vpop.permute.xlu0 %6617
        %6619 = vrot.lane.b32.xlu0 %v6543, 125
        %v6620 = vpop.permute.xlu0 %6619
        %6621 = vrot.lane.b32.xlu0 %v6544, 125
        %v6622 = vpop.permute.xlu0 %6621
        %6623 = vrot.lane.b32.xlu0 %v6545, 125
        %v6624 = vpop.permute.xlu0 %6623
        %6625 = vrot.lane.b32.xlu0 %v6546, 125
        %v6626 = vpop.permute.xlu0 %6625
        %6627 = vrot.lane.b32.xlu0 %v6547, 125
        %v6628 = vpop.permute.xlu0 %6627
        %6629 = vrot.lane.b32.xlu0 %v6548, 125
        %v6630 = vpop.permute.xlu0 %6629
        %6631 = vrot.lane.b32.xlu0 %v6549, 125
        %v6632 = vpop.permute.xlu0 %6631
        %6633 = vrot.lane.b32.xlu0 %v6550, 125
        %v6634 = vpop.permute.xlu0 %6633
        %6635 = vrot.lane.b32.xlu0 %v6551, 125
        %v6636 = vpop.permute.xlu0 %6635
        %6637 = vrot.lane.b32.xlu0 %v6552, 125
        %v6638 = vpop.permute.xlu0 %6637
        %6639 = vrot.lane.b32.xlu0 %v6553, 125
        %v6640 = vpop.permute.xlu0 %6639
        %6641 = vrot.lane.b32.xlu0 %v6554, 125
        %v6642 = vpop.permute.xlu0 %6641
        %6643 = vrot.lane.b32.xlu0 %v6555, 125
        %v6644 = vpop.permute.xlu0 %6643
        %6645 = vrot.lane.b32.xlu0 %v6556, 125
        %v6646 = vpop.permute.xlu0 %6645
        %6647 = vrot.lane.b32.xlu0 %v6557, 125
        %v6648 = vpop.permute.xlu0 %6647
        %6649 = vrot.lane.b32.xlu0 %v6558, 125
        %v6650 = vpop.permute.xlu0 %6649
        %6651 = vrot.lane.b32.xlu0 %v6559, 125
        %v6652 = vpop.permute.xlu0 %6651
        %6653 = vrot.lane.b32.xlu0 %v6560, 125
        %v6654 = vpop.permute.xlu0 %6653
        %6655 = vrot.lane.b32.xlu0 %v6561, 125
        %v6656 = vpop.permute.xlu0 %6655
        %6657 = vrot.lane.b32.xlu0 %v6562, 125
        %v6658 = vpop.permute.xlu0 %6657
        %vm6691 = vcmask 31744
        %v6692 = vsel %vm6691, %v6596, 0.0
        %6693 = vadd.xlane.f32.xlu0 %v6692
        %v6694 = vpop.xlane.xlu0 %6693
        %v6695 = vsel %vm6691, %v6598, 0.0
        %6696 = vadd.xlane.f32.xlu0 %v6695
        %v6697 = vpop.xlane.xlu0 %6696
        %v6698 = vsel %vm6691, %v6600, 0.0
        %6699 = vadd.xlane.f32.xlu0 %v6698
        %v6700 = vpop.xlane.xlu0 %6699
        %v6701 = vsel %vm6691, %v6602, 0.0
        %6702 = vadd.xlane.f32.xlu0 %v6701
        %v6703 = vpop.xlane.xlu0 %6702
        %v6704 = vsel %vm6691, %v6604, 0.0
        %6705 = vadd.xlane.f32.xlu0 %v6704
        %v6706 = vpop.xlane.xlu0 %6705
        %v6707 = vsel %vm6691, %v6606, 0.0
        %6708 = vadd.xlane.f32.xlu0 %v6707
        %v6709 = vpop.xlane.xlu0 %6708
        %v6710 = vsel %vm6691, %v6608, 0.0
        %6711 = vadd.xlane.f32.xlu0 %v6710
        %v6712 = vpop.xlane.xlu0 %6711
        %v6713 = vsel %vm6691, %v6610, 0.0
        %6714 = vadd.xlane.f32.xlu0 %v6713
        %v6715 = vpop.xlane.xlu0 %6714
        %v6716 = vsel %vm6691, %v6612, 0.0
        %6717 = vadd.xlane.f32.xlu0 %v6716
        %v6718 = vpop.xlane.xlu0 %6717
        %v6719 = vsel %vm6691, %v6614, 0.0
        %6720 = vadd.xlane.f32.xlu0 %v6719
        %v6721 = vpop.xlane.xlu0 %6720
        %v6722 = vsel %vm6691, %v6616, 0.0
        %6723 = vadd.xlane.f32.xlu0 %v6722
        %v6724 = vpop.xlane.xlu0 %6723
        %v6725 = vsel %vm6691, %v6618, 0.0
        %6726 = vadd.xlane.f32.xlu0 %v6725
        %v6727 = vpop.xlane.xlu0 %6726
        %v6728 = vsel %vm6691, %v6620, 0.0
        %6729 = vadd.xlane.f32.xlu0 %v6728
        %v6730 = vpop.xlane.xlu0 %6729
        %v6731 = vsel %vm6691, %v6622, 0.0
        %6732 = vadd.xlane.f32.xlu0 %v6731
        %v6733 = vpop.xlane.xlu0 %6732
        %v6734 = vsel %vm6691, %v6624, 0.0
        %6735 = vadd.xlane.f32.xlu0 %v6734
        %v6736 = vpop.xlane.xlu0 %6735
        %v6737 = vsel %vm6691, %v6626, 0.0
        %6738 = vadd.xlane.f32.xlu0 %v6737
        %v6739 = vpop.xlane.xlu0 %6738
        %v6740 = vsel %vm6691, %v6628, 0.0
        %6741 = vadd.xlane.f32.xlu0 %v6740
        %v6742 = vpop.xlane.xlu0 %6741
        %v6743 = vsel %vm6691, %v6630, 0.0
        %6744 = vadd.xlane.f32.xlu0 %v6743
        %v6745 = vpop.xlane.xlu0 %6744
        %v6746 = vsel %vm6691, %v6632, 0.0
        %6747 = vadd.xlane.f32.xlu0 %v6746
        %v6748 = vpop.xlane.xlu0 %6747
        %v6749 = vsel %vm6691, %v6634, 0.0
        %6750 = vadd.xlane.f32.xlu0 %v6749
        %v6751 = vpop.xlane.xlu0 %6750
        %v6752 = vsel %vm6691, %v6636, 0.0
        %6753 = vadd.xlane.f32.xlu0 %v6752
        %v6754 = vpop.xlane.xlu0 %6753
        %v6755 = vsel %vm6691, %v6638, 0.0
        %6756 = vadd.xlane.f32.xlu0 %v6755
        %v6757 = vpop.xlane.xlu0 %6756
        %v6758 = vsel %vm6691, %v6640, 0.0
        %6759 = vadd.xlane.f32.xlu0 %v6758
        %v6760 = vpop.xlane.xlu0 %6759
        %v6761 = vsel %vm6691, %v6642, 0.0
        %6762 = vadd.xlane.f32.xlu0 %v6761
        %v6763 = vpop.xlane.xlu0 %6762
        %v6764 = vsel %vm6691, %v6644, 0.0
        %6765 = vadd.xlane.f32.xlu0 %v6764
        %v6766 = vpop.xlane.xlu0 %6765
        %v6767 = vsel %vm6691, %v6646, 0.0
        %6768 = vadd.xlane.f32.xlu0 %v6767
        %v6769 = vpop.xlane.xlu0 %6768
        %v6770 = vsel %vm6691, %v6648, 0.0
        %6771 = vadd.xlane.f32.xlu0 %v6770
        %v6772 = vpop.xlane.xlu0 %6771
        %v6773 = vsel %vm6691, %v6650, 0.0
        %6774 = vadd.xlane.f32.xlu0 %v6773
        %v6775 = vpop.xlane.xlu0 %6774
        %v6776 = vsel %vm6691, %v6652, 0.0
        %6777 = vadd.xlane.f32.xlu0 %v6776
        %v6778 = vpop.xlane.xlu0 %6777
        %v6779 = vsel %vm6691, %v6654, 0.0
        %6780 = vadd.xlane.f32.xlu0 %v6779
        %v6781 = vpop.xlane.xlu0 %6780
        %v6782 = vsel %vm6691, %v6656, 0.0
        %6783 = vadd.xlane.f32.xlu0 %v6782
        %v6784 = vpop.xlane.xlu0 %6783
        %v6785 = vsel %vm6691, %v6658, 0.0
        %6786 = vadd.xlane.f32.xlu0 %v6785
        %v6787 = vpop.xlane.xlu0 %6786
        %v6788 = vrsqrt.pop %v6694
        %v6789 = vmul.f32 %v6694, %v6788
        %vm6790 = vcmp.eq.f32.partialorder %v6694, inf
        %v6791 = vsel %vm6790, %v6694, %v6789
        %vm6792 = vcmp.eq.f32.partialorder %v6694, 0.0
        %v6793 = vand.u32 %v6694, 2147483648
        %v6794 = vsel %vm6792, %v6793, %v6791
        %v6795 = vrsqrt.pop %v6697
        %v6796 = vmul.f32 %v6697, %v6795
        %vm6797 = vcmp.eq.f32.partialorder %v6697, inf
        %v6798 = vsel %vm6797, %v6697, %v6796
        %vm6799 = vcmp.eq.f32.partialorder %v6697, 0.0
        %v6800 = vand.u32 %v6697, 2147483648
        %v6801 = vsel %vm6799, %v6800, %v6798
        %v6802 = vrsqrt.pop %v6700
        %v6803 = vmul.f32 %v6700, %v6802
        %vm6804 = vcmp.eq.f32.partialorder %v6700, inf
        %v6805 = vsel %vm6804, %v6700, %v6803
        %vm6806 = vcmp.eq.f32.partialorder %v6700, 0.0
        %v6807 = vand.u32 %v6700, 2147483648
        %v6808 = vsel %vm6806, %v6807, %v6805
        %v6809 = vrsqrt.pop %v6703
        %v6810 = vmul.f32 %v6703, %v6809
        %vm6811 = vcmp.eq.f32.partialorder %v6703, inf
        %v6812 = vsel %vm6811, %v6703, %v6810
        %vm6813 = vcmp.eq.f32.partialorder %v6703, 0.0
        %v6814 = vand.u32 %v6703, 2147483648
        %v6815 = vsel %vm6813, %v6814, %v6812
        %v6816 = vrsqrt.pop %v6706
        %v6817 = vmul.f32 %v6706, %v6816
        %vm6818 = vcmp.eq.f32.partialorder %v6706, inf
        %v6819 = vsel %vm6818, %v6706, %v6817
        %vm6820 = vcmp.eq.f32.partialorder %v6706, 0.0
        %v6821 = vand.u32 %v6706, 2147483648
        %v6822 = vsel %vm6820, %v6821, %v6819
        %v6823 = vrsqrt.pop %v6709
        %v6824 = vmul.f32 %v6709, %v6823
        %vm6825 = vcmp.eq.f32.partialorder %v6709, inf
        %v6826 = vsel %vm6825, %v6709, %v6824
        %vm6827 = vcmp.eq.f32.partialorder %v6709, 0.0
        %v6828 = vand.u32 %v6709, 2147483648
        %v6829 = vsel %vm6827, %v6828, %v6826
        %v6830 = vrsqrt.pop %v6712
        %v6831 = vmul.f32 %v6712, %v6830
        %vm6832 = vcmp.eq.f32.partialorder %v6712, inf
        %v6833 = vsel %vm6832, %v6712, %v6831
        %vm6834 = vcmp.eq.f32.partialorder %v6712, 0.0
        %v6835 = vand.u32 %v6712, 2147483648
        %v6836 = vsel %vm6834, %v6835, %v6833
        %v6837 = vrsqrt.pop %v6715
        %v6838 = vmul.f32 %v6715, %v6837
        %vm6839 = vcmp.eq.f32.partialorder %v6715, inf
        %v6840 = vsel %vm6839, %v6715, %v6838
        %vm6841 = vcmp.eq.f32.partialorder %v6715, 0.0
        %v6842 = vand.u32 %v6715, 2147483648
        %v6843 = vsel %vm6841, %v6842, %v6840
        %v6844 = vrsqrt.pop %v6718
        %v6845 = vmul.f32 %v6718, %v6844
        %vm6846 = vcmp.eq.f32.partialorder %v6718, inf
        %v6847 = vsel %vm6846, %v6718, %v6845
        %vm6848 = vcmp.eq.f32.partialorder %v6718, 0.0
        %v6849 = vand.u32 %v6718, 2147483648
        %v6850 = vsel %vm6848, %v6849, %v6847
        %v6851 = vrsqrt.pop %v6721
        %v6852 = vmul.f32 %v6721, %v6851
        %vm6853 = vcmp.eq.f32.partialorder %v6721, inf
        %v6854 = vsel %vm6853, %v6721, %v6852
        %vm6855 = vcmp.eq.f32.partialorder %v6721, 0.0
        %v6856 = vand.u32 %v6721, 2147483648
        %v6857 = vsel %vm6855, %v6856, %v6854
        %v6858 = vrsqrt.pop %v6724
        %v6859 = vmul.f32 %v6724, %v6858
        %vm6860 = vcmp.eq.f32.partialorder %v6724, inf
        %v6861 = vsel %vm6860, %v6724, %v6859
        %vm6862 = vcmp.eq.f32.partialorder %v6724, 0.0
        %v6863 = vand.u32 %v6724, 2147483648
        %v6864 = vsel %vm6862, %v6863, %v6861
        %v6865 = vrsqrt.pop %v6727
        %v6866 = vmul.f32 %v6727, %v6865
        %vm6867 = vcmp.eq.f32.partialorder %v6727, inf
        %v6868 = vsel %vm6867, %v6727, %v6866
        %vm6869 = vcmp.eq.f32.partialorder %v6727, 0.0
        %v6870 = vand.u32 %v6727, 2147483648
        %v6871 = vsel %vm6869, %v6870, %v6868
        %v6872 = vrsqrt.pop %v6730
        %v6873 = vmul.f32 %v6730, %v6872
        %vm6874 = vcmp.eq.f32.partialorder %v6730, inf
        %v6875 = vsel %vm6874, %v6730, %v6873
        %vm6876 = vcmp.eq.f32.partialorder %v6730, 0.0
        %v6877 = vand.u32 %v6730, 2147483648
        %v6878 = vsel %vm6876, %v6877, %v6875
        %v6879 = vrsqrt.pop %v6733
        %v6880 = vmul.f32 %v6733, %v6879
        %vm6881 = vcmp.eq.f32.partialorder %v6733, inf
        %v6882 = vsel %vm6881, %v6733, %v6880
        %vm6883 = vcmp.eq.f32.partialorder %v6733, 0.0
        %v6884 = vand.u32 %v6733, 2147483648
        %v6885 = vsel %vm6883, %v6884, %v6882
        %v6886 = vrsqrt.pop %v6736
        %v6887 = vmul.f32 %v6736, %v6886
        %vm6888 = vcmp.eq.f32.partialorder %v6736, inf
        %v6889 = vsel %vm6888, %v6736, %v6887
        %vm6890 = vcmp.eq.f32.partialorder %v6736, 0.0
        %v6891 = vand.u32 %v6736, 2147483648
        %v6892 = vsel %vm6890, %v6891, %v6889
        %v6893 = vrsqrt.pop %v6739
        %v6894 = vmul.f32 %v6739, %v6893
        %vm6895 = vcmp.eq.f32.partialorder %v6739, inf
        %v6896 = vsel %vm6895, %v6739, %v6894
        %vm6897 = vcmp.eq.f32.partialorder %v6739, 0.0
        %v6898 = vand.u32 %v6739, 2147483648
        %v6899 = vsel %vm6897, %v6898, %v6896
        %v6900 = vrsqrt.pop %v6742
        %v6901 = vmul.f32 %v6742, %v6900
        %vm6902 = vcmp.eq.f32.partialorder %v6742, inf
        %v6903 = vsel %vm6902, %v6742, %v6901
        %vm6904 = vcmp.eq.f32.partialorder %v6742, 0.0
        %v6905 = vand.u32 %v6742, 2147483648
        %v6906 = vsel %vm6904, %v6905, %v6903
        %v6907 = vrsqrt.pop %v6745
        %v6908 = vmul.f32 %v6745, %v6907
        %vm6909 = vcmp.eq.f32.partialorder %v6745, inf
        %v6910 = vsel %vm6909, %v6745, %v6908
        %vm6911 = vcmp.eq.f32.partialorder %v6745, 0.0
        %v6912 = vand.u32 %v6745, 2147483648
        %v6913 = vsel %vm6911, %v6912, %v6910
        %v6914 = vrsqrt.pop %v6748
        %v6915 = vmul.f32 %v6748, %v6914
        %vm6916 = vcmp.eq.f32.partialorder %v6748, inf
        %v6917 = vsel %vm6916, %v6748, %v6915
        %vm6918 = vcmp.eq.f32.partialorder %v6748, 0.0
        %v6919 = vand.u32 %v6748, 2147483648
        %v6920 = vsel %vm6918, %v6919, %v6917
        %v6921 = vrsqrt.pop %v6751
        %v6922 = vmul.f32 %v6751, %v6921
        %vm6923 = vcmp.eq.f32.partialorder %v6751, inf
        %v6924 = vsel %vm6923, %v6751, %v6922
        %vm6925 = vcmp.eq.f32.partialorder %v6751, 0.0
        %v6926 = vand.u32 %v6751, 2147483648
        %v6927 = vsel %vm6925, %v6926, %v6924
        %v6928 = vrsqrt.pop %v6754
        %v6929 = vmul.f32 %v6754, %v6928
        %vm6930 = vcmp.eq.f32.partialorder %v6754, inf
        %v6931 = vsel %vm6930, %v6754, %v6929
        %vm6932 = vcmp.eq.f32.partialorder %v6754, 0.0
        %v6933 = vand.u32 %v6754, 2147483648
        %v6934 = vsel %vm6932, %v6933, %v6931
        %v6935 = vrsqrt.pop %v6757
        %v6936 = vmul.f32 %v6757, %v6935
        %vm6937 = vcmp.eq.f32.partialorder %v6757, inf
        %v6938 = vsel %vm6937, %v6757, %v6936
        %vm6939 = vcmp.eq.f32.partialorder %v6757, 0.0
        %v6940 = vand.u32 %v6757, 2147483648
        %v6941 = vsel %vm6939, %v6940, %v6938
        %v6942 = vrsqrt.pop %v6760
        %v6943 = vmul.f32 %v6760, %v6942
        %vm6944 = vcmp.eq.f32.partialorder %v6760, inf
        %v6945 = vsel %vm6944, %v6760, %v6943
        %vm6946 = vcmp.eq.f32.partialorder %v6760, 0.0
        %v6947 = vand.u32 %v6760, 2147483648
        %v6948 = vsel %vm6946, %v6947, %v6945
        %v6949 = vrsqrt.pop %v6763
        %v6950 = vmul.f32 %v6763, %v6949
        %vm6951 = vcmp.eq.f32.partialorder %v6763, inf
        %v6952 = vsel %vm6951, %v6763, %v6950
        %vm6953 = vcmp.eq.f32.partialorder %v6763, 0.0
        %v6954 = vand.u32 %v6763, 2147483648
        %v6955 = vsel %vm6953, %v6954, %v6952
        %v6956 = vrsqrt.pop %v6766
        %v6957 = vmul.f32 %v6766, %v6956
        %vm6958 = vcmp.eq.f32.partialorder %v6766, inf
        %v6959 = vsel %vm6958, %v6766, %v6957
        %vm6960 = vcmp.eq.f32.partialorder %v6766, 0.0
        %v6961 = vand.u32 %v6766, 2147483648
        %v6962 = vsel %vm6960, %v6961, %v6959
        %v6963 = vrsqrt.pop %v6769
        %v6964 = vmul.f32 %v6769, %v6963
        %vm6965 = vcmp.eq.f32.partialorder %v6769, inf
        %v6966 = vsel %vm6965, %v6769, %v6964
        %vm6967 = vcmp.eq.f32.partialorder %v6769, 0.0
        %v6968 = vand.u32 %v6769, 2147483648
        %v6969 = vsel %vm6967, %v6968, %v6966
        %v6970 = vrsqrt.pop %v6772
        %v6971 = vmul.f32 %v6772, %v6970
        %vm6972 = vcmp.eq.f32.partialorder %v6772, inf
        %v6973 = vsel %vm6972, %v6772, %v6971
        %vm6974 = vcmp.eq.f32.partialorder %v6772, 0.0
        %v6975 = vand.u32 %v6772, 2147483648
        %v6976 = vsel %vm6974, %v6975, %v6973
        %v6977 = vrsqrt.pop %v6775
        %v6978 = vmul.f32 %v6775, %v6977
        %vm6979 = vcmp.eq.f32.partialorder %v6775, inf
        %v6980 = vsel %vm6979, %v6775, %v6978
        %vm6981 = vcmp.eq.f32.partialorder %v6775, 0.0
        %v6982 = vand.u32 %v6775, 2147483648
        %v6983 = vsel %vm6981, %v6982, %v6980
        %v6984 = vrsqrt.pop %v6778
        %v6985 = vmul.f32 %v6778, %v6984
        %vm6986 = vcmp.eq.f32.partialorder %v6778, inf
        %v6987 = vsel %vm6986, %v6778, %v6985
        %vm6988 = vcmp.eq.f32.partialorder %v6778, 0.0
        %v6989 = vand.u32 %v6778, 2147483648
        %v6990 = vsel %vm6988, %v6989, %v6987
        %v6991 = vrsqrt.pop %v6781
        %v6992 = vmul.f32 %v6781, %v6991
        %vm6993 = vcmp.eq.f32.partialorder %v6781, inf
        %v6994 = vsel %vm6993, %v6781, %v6992
        %vm6995 = vcmp.eq.f32.partialorder %v6781, 0.0
        %v6996 = vand.u32 %v6781, 2147483648
        %v6997 = vsel %vm6995, %v6996, %v6994
        %v6998 = vrsqrt.pop %v6784
        %v6999 = vmul.f32 %v6784, %v6998
        %vm7000 = vcmp.eq.f32.partialorder %v6784, inf
        %v7001 = vsel %vm7000, %v6784, %v6999
        %vm7002 = vcmp.eq.f32.partialorder %v6784, 0.0
        %v7003 = vand.u32 %v6784, 2147483648
        %v7004 = vsel %vm7002, %v7003, %v7001
        %v7005 = vrsqrt.pop %v6787
        %v7006 = vmul.f32 %v6787, %v7005
        %vm7007 = vcmp.eq.f32.partialorder %v6787, inf
        %v7008 = vsel %vm7007, %v6787, %v7006
        %vm7009 = vcmp.eq.f32.partialorder %v6787, 0.0
        %v7010 = vand.u32 %v6787, 2147483648
        %v7011 = vsel %vm7009, %v7010, %v7008
        %v7012 = vadd.f32 %v6794, 1e-08
        %v7013 = vadd.f32 %v6801, 1e-08
        %v7014 = vadd.f32 %v6808, 1e-08
        %v7015 = vadd.f32 %v6815, 1e-08
        %v7016 = vadd.f32 %v6822, 1e-08
        %v7017 = vadd.f32 %v6829, 1e-08
        %v7018 = vadd.f32 %v6836, 1e-08
        %v7019 = vadd.f32 %v6843, 1e-08
        %v7020 = vadd.f32 %v6850, 1e-08
        %v7021 = vadd.f32 %v6857, 1e-08
        %v7022 = vadd.f32 %v6864, 1e-08
        %v7023 = vadd.f32 %v6871, 1e-08
        %v7024 = vadd.f32 %v6878, 1e-08
        %v7025 = vadd.f32 %v6885, 1e-08
        %v7026 = vadd.f32 %v6892, 1e-08
        %v7027 = vadd.f32 %v6899, 1e-08
        %v7028 = vadd.f32 %v6906, 1e-08
        %v7029 = vadd.f32 %v6913, 1e-08
        %v7030 = vadd.f32 %v6920, 1e-08
        %v7031 = vadd.f32 %v6927, 1e-08
        %v7032 = vadd.f32 %v6934, 1e-08
        %v7033 = vadd.f32 %v6941, 1e-08
        %v7034 = vadd.f32 %v6948, 1e-08
        %v7035 = vadd.f32 %v6955, 1e-08
        %v7036 = vadd.f32 %v6962, 1e-08
        %v7037 = vadd.f32 %v6969, 1e-08
        %v7038 = vadd.f32 %v6976, 1e-08
        %v7039 = vadd.f32 %v6983, 1e-08
        %v7040 = vadd.f32 %v6990, 1e-08
        %v7041 = vadd.f32 %v6997, 1e-08
        %v7042 = vadd.f32 %v7004, 1e-08
        %v7043 = vadd.f32 %v7011, 1e-08
        %v7044 = vrcp.pop %v7012
        %v7045 = vmul.f32 %v6117, %v7044
        %v7046 = vrcp.pop %v7013
        %v7047 = vmul.f32 %v6122, %v7046
        %v7048 = vrcp.pop %v7014
        %v7049 = vmul.f32 %v6127, %v7048
        %v7050 = vrcp.pop %v7015
        %v7051 = vmul.f32 %v6132, %v7050
        %v7052 = vrcp.pop %v7016
        %v7053 = vmul.f32 %v6137, %v7052
        %v7054 = vrcp.pop %v7017
        %v7055 = vmul.f32 %v6142, %v7054
        %v7056 = vrcp.pop %v7018
        %v7057 = vmul.f32 %v6147, %v7056
        %v7058 = vrcp.pop %v7019
        %v7059 = vmul.f32 %v6152, %v7058
        %v7060 = vrcp.pop %v7020
        %v7061 = vmul.f32 %v6157, %v7060
        %v7062 = vrcp.pop %v7021
        %v7063 = vmul.f32 %v6162, %v7062
        %v7064 = vrcp.pop %v7022
        %v7065 = vmul.f32 %v6167, %v7064
        %v7066 = vrcp.pop %v7023
        %v7067 = vmul.f32 %v6172, %v7066
        %v7068 = vrcp.pop %v7024
        %v7069 = vmul.f32 %v6177, %v7068
        %v7070 = vrcp.pop %v7025
        %v7071 = vmul.f32 %v6182, %v7070
        %v7072 = vrcp.pop %v7026
        %v7073 = vmul.f32 %v6187, %v7072
        %v7074 = vrcp.pop %v7027
        %v7075 = vmul.f32 %v6192, %v7074
        %v7076 = vrcp.pop %v7028
        %v7077 = vmul.f32 %v6197, %v7076
        %v7078 = vrcp.pop %v7029
        %v7079 = vmul.f32 %v6202, %v7078
        %v7080 = vrcp.pop %v7030
        %v7081 = vmul.f32 %v6207, %v7080
        %v7082 = vrcp.pop %v7031
        %v7083 = vmul.f32 %v6212, %v7082
        %v7084 = vrcp.pop %v7032
        %v7085 = vmul.f32 %v6217, %v7084
        %v7086 = vrcp.pop %v7033
        %v7087 = vmul.f32 %v6222, %v7086
        %v7088 = vrcp.pop %v7034
        %v7089 = vmul.f32 %v6227, %v7088
        %v7090 = vrcp.pop %v7035
        %v7091 = vmul.f32 %v6232, %v7090
        %v7092 = vrcp.pop %v7036
        %v7093 = vmul.f32 %v6237, %v7092
        %v7094 = vrcp.pop %v7037
        %v7095 = vmul.f32 %v6242, %v7094
        %v7096 = vrcp.pop %v7038
        %v7097 = vmul.f32 %v6247, %v7096
        %v7098 = vrcp.pop %v7039
        %v7099 = vmul.f32 %v6252, %v7098
        %v7100 = vrcp.pop %v7040
        %v7101 = vmul.f32 %v6257, %v7100
        %v7102 = vrcp.pop %v7041
        %v7103 = vmul.f32 %v6262, %v7102
        %v7104 = vrcp.pop %v7042
        %v7105 = vmul.f32 %v6267, %v7104
        %v7106 = vrcp.pop %v7043
        %v7107 = vmul.f32 %v6272, %v7106
        %v7108 = vmul.f32 %v454, %v7045
        %v7109 = vmul.f32 %v457, %v7047
        %v7110 = vmul.f32 %v460, %v7049
        %v7111 = vmul.f32 %v463, %v7051
        %v7112 = vmul.f32 %v466, %v7053
        %v7113 = vmul.f32 %v469, %v7055
        %v7114 = vmul.f32 %v472, %v7057
        %v7115 = vmul.f32 %v475, %v7059
        %v7116 = vmul.f32 %v478, %v7061
        %v7117 = vmul.f32 %v481, %v7063
        %v7118 = vmul.f32 %v484, %v7065
        %v7119 = vmul.f32 %v487, %v7067
        %v7120 = vmul.f32 %v490, %v7069
        %v7121 = vmul.f32 %v493, %v7071
        %v7122 = vmul.f32 %v496, %v7073
        %v7123 = vmul.f32 %v499, %v7075
        %v7124 = vmul.f32 %v502, %v7077
        %v7125 = vmul.f32 %v505, %v7079
        %v7126 = vmul.f32 %v508, %v7081
        %v7127 = vmul.f32 %v511, %v7083
        %v7128 = vmul.f32 %v514, %v7085
        %v7129 = vmul.f32 %v517, %v7087
        %v7130 = vmul.f32 %v520, %v7089
        %v7131 = vmul.f32 %v523, %v7091
        %v7132 = vmul.f32 %v526, %v7093
        %v7133 = vmul.f32 %v529, %v7095
        %v7134 = vmul.f32 %v532, %v7097
        %v7135 = vmul.f32 %v535, %v7099
        %v7136 = vmul.f32 %v538, %v7101
        %v7137 = vmul.f32 %v541, %v7103
        %v7138 = vmul.f32 %v544, %v7105
        %v7139 = vmul.f32 %v547, %v7107
        %7172 = vrot.lane.b32.xlu0 %v7108, 127
        %v7173 = vpop.permute.xlu0 %7172
        %7174 = vrot.lane.b32.xlu0 %v7109, 127
        %v7175 = vpop.permute.xlu0 %7174
        %7176 = vrot.lane.b32.xlu0 %v7110, 127
        %v7177 = vpop.permute.xlu0 %7176
        %7178 = vrot.lane.b32.xlu0 %v7111, 127
        %v7179 = vpop.permute.xlu0 %7178
        %7180 = vrot.lane.b32.xlu0 %v7112, 127
        %v7181 = vpop.permute.xlu0 %7180
        %7182 = vrot.lane.b32.xlu0 %v7113, 127
        %v7183 = vpop.permute.xlu0 %7182
        %7184 = vrot.lane.b32.xlu0 %v7114, 127
        %v7185 = vpop.permute.xlu0 %7184
        %7186 = vrot.lane.b32.xlu0 %v7115, 127
        %v7187 = vpop.permute.xlu0 %7186
        %7188 = vrot.lane.b32.xlu0 %v7116, 127
        %v7189 = vpop.permute.xlu0 %7188
        %7190 = vrot.lane.b32.xlu0 %v7117, 127
        %v7191 = vpop.permute.xlu0 %7190
        %7192 = vrot.lane.b32.xlu0 %v7118, 127
        %v7193 = vpop.permute.xlu0 %7192
        %7194 = vrot.lane.b32.xlu0 %v7119, 127
        %v7195 = vpop.permute.xlu0 %7194
        %7196 = vrot.lane.b32.xlu0 %v7120, 127
        %v7197 = vpop.permute.xlu0 %7196
        %7198 = vrot.lane.b32.xlu0 %v7121, 127
        %v7199 = vpop.permute.xlu0 %7198
        %7200 = vrot.lane.b32.xlu0 %v7122, 127
        %v7201 = vpop.permute.xlu0 %7200
        %7202 = vrot.lane.b32.xlu0 %v7123, 127
        %v7203 = vpop.permute.xlu0 %7202
        %7204 = vrot.lane.b32.xlu0 %v7124, 127
        %v7205 = vpop.permute.xlu0 %7204
        %7206 = vrot.lane.b32.xlu0 %v7125, 127
        %v7207 = vpop.permute.xlu0 %7206
        %7208 = vrot.lane.b32.xlu0 %v7126, 127
        %v7209 = vpop.permute.xlu0 %7208
        %7210 = vrot.lane.b32.xlu0 %v7127, 127
        %v7211 = vpop.permute.xlu0 %7210
        %7212 = vrot.lane.b32.xlu0 %v7128, 127
        %v7213 = vpop.permute.xlu0 %7212
        %7214 = vrot.lane.b32.xlu0 %v7129, 127
        %v7215 = vpop.permute.xlu0 %7214
        %7216 = vrot.lane.b32.xlu0 %v7130, 127
        %v7217 = vpop.permute.xlu0 %7216
        %7218 = vrot.lane.b32.xlu0 %v7131, 127
        %v7219 = vpop.permute.xlu0 %7218
        %7220 = vrot.lane.b32.xlu0 %v7132, 127
        %v7221 = vpop.permute.xlu0 %7220
        %7222 = vrot.lane.b32.xlu0 %v7133, 127
        %v7223 = vpop.permute.xlu0 %7222
        %7224 = vrot.lane.b32.xlu0 %v7134, 127
        %v7225 = vpop.permute.xlu0 %7224
        %7226 = vrot.lane.b32.xlu0 %v7135, 127
        %v7227 = vpop.permute.xlu0 %7226
        %7228 = vrot.lane.b32.xlu0 %v7136, 127
        %v7229 = vpop.permute.xlu0 %7228
        %7230 = vrot.lane.b32.xlu0 %v7137, 127
        %v7231 = vpop.permute.xlu0 %7230
        %7232 = vrot.lane.b32.xlu0 %v7138, 127
        %v7233 = vpop.permute.xlu0 %7232
        %7234 = vrot.lane.b32.xlu0 %v7139, 127
        %v7235 = vpop.permute.xlu0 %7234
        %v7268 = vsub.f32 %v7108, %v7173
        %v7269 = vsub.f32 %v7109, %v7175
        %v7270 = vsub.f32 %v7110, %v7177
        %v7271 = vsub.f32 %v7111, %v7179
        %v7272 = vsub.f32 %v7112, %v7181
        %v7273 = vsub.f32 %v7113, %v7183
        %v7274 = vsub.f32 %v7114, %v7185
        %v7275 = vsub.f32 %v7115, %v7187
        %v7276 = vsub.f32 %v7116, %v7189
        %v7277 = vsub.f32 %v7117, %v7191
        %v7278 = vsub.f32 %v7118, %v7193
        %v7279 = vsub.f32 %v7119, %v7195
        %v7280 = vsub.f32 %v7120, %v7197
        %v7281 = vsub.f32 %v7121, %v7199
        %v7282 = vsub.f32 %v7122, %v7201
        %v7283 = vsub.f32 %v7123, %v7203
        %v7284 = vsub.f32 %v7124, %v7205
        %v7285 = vsub.f32 %v7125, %v7207
        %v7286 = vsub.f32 %v7126, %v7209
        %v7287 = vsub.f32 %v7127, %v7211
        %v7288 = vsub.f32 %v7128, %v7213
        %v7289 = vsub.f32 %v7129, %v7215
        %v7290 = vsub.f32 %v7130, %v7217
        %v7291 = vsub.f32 %v7131, %v7219
        %v7292 = vsub.f32 %v7132, %v7221
        %v7293 = vsub.f32 %v7133, %v7223
        %v7294 = vsub.f32 %v7134, %v7225
        %v7295 = vsub.f32 %v7135, %v7227
        %v7296 = vsub.f32 %v7136, %v7229
        %v7297 = vsub.f32 %v7137, %v7231
        %v7298 = vsub.f32 %v7138, %v7233
        %v7299 = vsub.f32 %v7139, %v7235
        %7300 = vrot.lane.b32.xlu0 %v7108, 126
        %v7301 = vpop.permute.xlu0 %7300
        %7302 = vrot.lane.b32.xlu0 %v7109, 126
        %v7303 = vpop.permute.xlu0 %7302
        %7304 = vrot.lane.b32.xlu0 %v7110, 126
        %v7305 = vpop.permute.xlu0 %7304
        %7306 = vrot.lane.b32.xlu0 %v7111, 126
        %v7307 = vpop.permute.xlu0 %7306
        %7308 = vrot.lane.b32.xlu0 %v7112, 126
        %v7309 = vpop.permute.xlu0 %7308
        %7310 = vrot.lane.b32.xlu0 %v7113, 126
        %v7311 = vpop.permute.xlu0 %7310
        %7312 = vrot.lane.b32.xlu0 %v7114, 126
        %v7313 = vpop.permute.xlu0 %7312
        %7314 = vrot.lane.b32.xlu0 %v7115, 126
        %v7315 = vpop.permute.xlu0 %7314
        %7316 = vrot.lane.b32.xlu0 %v7116, 126
        %v7317 = vpop.permute.xlu0 %7316
        %7318 = vrot.lane.b32.xlu0 %v7117, 126
        %v7319 = vpop.permute.xlu0 %7318
        %7320 = vrot.lane.b32.xlu0 %v7118, 126
        %v7321 = vpop.permute.xlu0 %7320
        %7322 = vrot.lane.b32.xlu0 %v7119, 126
        %v7323 = vpop.permute.xlu0 %7322
        %7324 = vrot.lane.b32.xlu0 %v7120, 126
        %v7325 = vpop.permute.xlu0 %7324
        %7326 = vrot.lane.b32.xlu0 %v7121, 126
        %v7327 = vpop.permute.xlu0 %7326
        %7328 = vrot.lane.b32.xlu0 %v7122, 126
        %v7329 = vpop.permute.xlu0 %7328
        %7330 = vrot.lane.b32.xlu0 %v7123, 126
        %v7331 = vpop.permute.xlu0 %7330
        %7332 = vrot.lane.b32.xlu0 %v7124, 126
        %v7333 = vpop.permute.xlu0 %7332
        %7334 = vrot.lane.b32.xlu0 %v7125, 126
        %v7335 = vpop.permute.xlu0 %7334
        %7336 = vrot.lane.b32.xlu0 %v7126, 126
        %v7337 = vpop.permute.xlu0 %7336
        %7338 = vrot.lane.b32.xlu0 %v7127, 126
        %v7339 = vpop.permute.xlu0 %7338
        %7340 = vrot.lane.b32.xlu0 %v7128, 126
        %v7341 = vpop.permute.xlu0 %7340
        %7342 = vrot.lane.b32.xlu0 %v7129, 126
        %v7343 = vpop.permute.xlu0 %7342
        %7344 = vrot.lane.b32.xlu0 %v7130, 126
        %v7345 = vpop.permute.xlu0 %7344
        %7346 = vrot.lane.b32.xlu0 %v7131, 126
        %v7347 = vpop.permute.xlu0 %7346
        %7348 = vrot.lane.b32.xlu0 %v7132, 126
        %v7349 = vpop.permute.xlu0 %7348
        %7350 = vrot.lane.b32.xlu0 %v7133, 126
        %v7351 = vpop.permute.xlu0 %7350
        %7352 = vrot.lane.b32.xlu0 %v7134, 126
        %v7353 = vpop.permute.xlu0 %7352
        %7354 = vrot.lane.b32.xlu0 %v7135, 126
        %v7355 = vpop.permute.xlu0 %7354
        %7356 = vrot.lane.b32.xlu0 %v7136, 126
        %v7357 = vpop.permute.xlu0 %7356
        %7358 = vrot.lane.b32.xlu0 %v7137, 126
        %v7359 = vpop.permute.xlu0 %7358
        %7360 = vrot.lane.b32.xlu0 %v7138, 126
        %v7361 = vpop.permute.xlu0 %7360
        %7362 = vrot.lane.b32.xlu0 %v7139, 126
        %v7363 = vpop.permute.xlu0 %7362
        %v7396 = vsub.f32 %v7268, %v7301
        %v7397 = vsub.f32 %v7269, %v7303
        %v7398 = vsub.f32 %v7270, %v7305
        %v7399 = vsub.f32 %v7271, %v7307
        %v7400 = vsub.f32 %v7272, %v7309
        %v7401 = vsub.f32 %v7273, %v7311
        %v7402 = vsub.f32 %v7274, %v7313
        %v7403 = vsub.f32 %v7275, %v7315
        %v7404 = vsub.f32 %v7276, %v7317
        %v7405 = vsub.f32 %v7277, %v7319
        %v7406 = vsub.f32 %v7278, %v7321
        %v7407 = vsub.f32 %v7279, %v7323
        %v7408 = vsub.f32 %v7280, %v7325
        %v7409 = vsub.f32 %v7281, %v7327
        %v7410 = vsub.f32 %v7282, %v7329
        %v7411 = vsub.f32 %v7283, %v7331
        %v7412 = vsub.f32 %v7284, %v7333
        %v7413 = vsub.f32 %v7285, %v7335
        %v7414 = vsub.f32 %v7286, %v7337
        %v7415 = vsub.f32 %v7287, %v7339
        %v7416 = vsub.f32 %v7288, %v7341
        %v7417 = vsub.f32 %v7289, %v7343
        %v7418 = vsub.f32 %v7290, %v7345
        %v7419 = vsub.f32 %v7291, %v7347
        %v7420 = vsub.f32 %v7292, %v7349
        %v7421 = vsub.f32 %v7293, %v7351
        %v7422 = vsub.f32 %v7294, %v7353
        %v7423 = vsub.f32 %v7295, %v7355
        %v7424 = vsub.f32 %v7296, %v7357
        %v7425 = vsub.f32 %v7297, %v7359
        %v7426 = vsub.f32 %v7298, %v7361
        %v7427 = vsub.f32 %v7299, %v7363
        %7428 = vrot.lane.b32.xlu0 %v7108, 125
        %v7429 = vpop.permute.xlu0 %7428
        %7430 = vrot.lane.b32.xlu0 %v7109, 125
        %v7431 = vpop.permute.xlu0 %7430
        %7432 = vrot.lane.b32.xlu0 %v7110, 125
        %v7433 = vpop.permute.xlu0 %7432
        %7434 = vrot.lane.b32.xlu0 %v7111, 125
        %v7435 = vpop.permute.xlu0 %7434
        %7436 = vrot.lane.b32.xlu0 %v7112, 125
        %v7437 = vpop.permute.xlu0 %7436
        %7438 = vrot.lane.b32.xlu0 %v7113, 125
        %v7439 = vpop.permute.xlu0 %7438
        %7440 = vrot.lane.b32.xlu0 %v7114, 125
        %v7441 = vpop.permute.xlu0 %7440
        %7442 = vrot.lane.b32.xlu0 %v7115, 125
        %v7443 = vpop.permute.xlu0 %7442
        %7444 = vrot.lane.b32.xlu0 %v7116, 125
        %v7445 = vpop.permute.xlu0 %7444
        %7446 = vrot.lane.b32.xlu0 %v7117, 125
        %v7447 = vpop.permute.xlu0 %7446
        %7448 = vrot.lane.b32.xlu0 %v7118, 125
        %v7449 = vpop.permute.xlu0 %7448
        %7450 = vrot.lane.b32.xlu0 %v7119, 125
        %v7451 = vpop.permute.xlu0 %7450
        %7452 = vrot.lane.b32.xlu0 %v7120, 125
        %v7453 = vpop.permute.xlu0 %7452
        %7454 = vrot.lane.b32.xlu0 %v7121, 125
        %v7455 = vpop.permute.xlu0 %7454
        %7456 = vrot.lane.b32.xlu0 %v7122, 125
        %v7457 = vpop.permute.xlu0 %7456
        %7458 = vrot.lane.b32.xlu0 %v7123, 125
        %v7459 = vpop.permute.xlu0 %7458
        %7460 = vrot.lane.b32.xlu0 %v7124, 125
        %v7461 = vpop.permute.xlu0 %7460
        %7462 = vrot.lane.b32.xlu0 %v7125, 125
        %v7463 = vpop.permute.xlu0 %7462
        %7464 = vrot.lane.b32.xlu0 %v7126, 125
        %v7465 = vpop.permute.xlu0 %7464
        %7466 = vrot.lane.b32.xlu0 %v7127, 125
        %v7467 = vpop.permute.xlu0 %7466
        %7468 = vrot.lane.b32.xlu0 %v7128, 125
        %v7469 = vpop.permute.xlu0 %7468
        %7470 = vrot.lane.b32.xlu0 %v7129, 125
        %v7471 = vpop.permute.xlu0 %7470
        %7472 = vrot.lane.b32.xlu0 %v7130, 125
        %v7473 = vpop.permute.xlu0 %7472
        %7474 = vrot.lane.b32.xlu0 %v7131, 125
        %v7475 = vpop.permute.xlu0 %7474
        %7476 = vrot.lane.b32.xlu0 %v7132, 125
        %v7477 = vpop.permute.xlu0 %7476
        %7478 = vrot.lane.b32.xlu0 %v7133, 125
        %v7479 = vpop.permute.xlu0 %7478
        %7480 = vrot.lane.b32.xlu0 %v7134, 125
        %v7481 = vpop.permute.xlu0 %7480
        %7482 = vrot.lane.b32.xlu0 %v7135, 125
        %v7483 = vpop.permute.xlu0 %7482
        %7484 = vrot.lane.b32.xlu0 %v7136, 125
        %v7485 = vpop.permute.xlu0 %7484
        %7486 = vrot.lane.b32.xlu0 %v7137, 125
        %v7487 = vpop.permute.xlu0 %7486
        %7488 = vrot.lane.b32.xlu0 %v7138, 125
        %v7489 = vpop.permute.xlu0 %7488
        %7490 = vrot.lane.b32.xlu0 %v7139, 125
        %v7491 = vpop.permute.xlu0 %7490
        %v7524 = vsub.f32 %v7396, %v7429
        %v7525 = vsub.f32 %v7397, %v7431
        %v7526 = vsub.f32 %v7398, %v7433
        %v7527 = vsub.f32 %v7399, %v7435
        %v7528 = vsub.f32 %v7400, %v7437
        %v7529 = vsub.f32 %v7401, %v7439
        %v7530 = vsub.f32 %v7402, %v7441
        %v7531 = vsub.f32 %v7403, %v7443
        %v7532 = vsub.f32 %v7404, %v7445
        %v7533 = vsub.f32 %v7405, %v7447
        %v7534 = vsub.f32 %v7406, %v7449
        %v7535 = vsub.f32 %v7407, %v7451
        %v7536 = vsub.f32 %v7408, %v7453
        %v7537 = vsub.f32 %v7409, %v7455
        %v7538 = vsub.f32 %v7410, %v7457
        %v7539 = vsub.f32 %v7411, %v7459
        %v7540 = vsub.f32 %v7412, %v7461
        %v7541 = vsub.f32 %v7413, %v7463
        %v7542 = vsub.f32 %v7414, %v7465
        %v7543 = vsub.f32 %v7415, %v7467
        %v7544 = vsub.f32 %v7416, %v7469
        %v7545 = vsub.f32 %v7417, %v7471
        %v7546 = vsub.f32 %v7418, %v7473
        %v7547 = vsub.f32 %v7419, %v7475
        %v7548 = vsub.f32 %v7420, %v7477
        %v7549 = vsub.f32 %v7421, %v7479
        %v7550 = vsub.f32 %v7422, %v7481
        %v7551 = vsub.f32 %v7423, %v7483
        %v7552 = vsub.f32 %v7424, %v7485
        %v7553 = vsub.f32 %v7425, %v7487
        %v7554 = vsub.f32 %v7426, %v7489
        %v7555 = vsub.f32 %v7427, %v7491
        %7588 = vrot.lane.b32.xlu0 %v7045, 127
        %v7589 = vpop.permute.xlu0 %7588
        %7590 = vrot.lane.b32.xlu0 %v7047, 127
        %v7591 = vpop.permute.xlu0 %7590
        %7592 = vrot.lane.b32.xlu0 %v7049, 127
        %v7593 = vpop.permute.xlu0 %7592
        %7594 = vrot.lane.b32.xlu0 %v7051, 127
        %v7595 = vpop.permute.xlu0 %7594
        %7596 = vrot.lane.b32.xlu0 %v7053, 127
        %v7597 = vpop.permute.xlu0 %7596
        %7598 = vrot.lane.b32.xlu0 %v7055, 127
        %v7599 = vpop.permute.xlu0 %7598
        %7600 = vrot.lane.b32.xlu0 %v7057, 127
        %v7601 = vpop.permute.xlu0 %7600
        %7602 = vrot.lane.b32.xlu0 %v7059, 127
        %v7603 = vpop.permute.xlu0 %7602
        %7604 = vrot.lane.b32.xlu0 %v7061, 127
        %v7605 = vpop.permute.xlu0 %7604
        %7606 = vrot.lane.b32.xlu0 %v7063, 127
        %v7607 = vpop.permute.xlu0 %7606
        %7608 = vrot.lane.b32.xlu0 %v7065, 127
        %v7609 = vpop.permute.xlu0 %7608
        %7610 = vrot.lane.b32.xlu0 %v7067, 127
        %v7611 = vpop.permute.xlu0 %7610
        %7612 = vrot.lane.b32.xlu0 %v7069, 127
        %v7613 = vpop.permute.xlu0 %7612
        %7614 = vrot.lane.b32.xlu0 %v7071, 127
        %v7615 = vpop.permute.xlu0 %7614
        %7616 = vrot.lane.b32.xlu0 %v7073, 127
        %v7617 = vpop.permute.xlu0 %7616
        %7618 = vrot.lane.b32.xlu0 %v7075, 127
        %v7619 = vpop.permute.xlu0 %7618
        %7620 = vrot.lane.b32.xlu0 %v7077, 127
        %v7621 = vpop.permute.xlu0 %7620
        %7622 = vrot.lane.b32.xlu0 %v7079, 127
        %v7623 = vpop.permute.xlu0 %7622
        %7624 = vrot.lane.b32.xlu0 %v7081, 127
        %v7625 = vpop.permute.xlu0 %7624
        %7626 = vrot.lane.b32.xlu0 %v7083, 127
        %v7627 = vpop.permute.xlu0 %7626
        %7628 = vrot.lane.b32.xlu0 %v7085, 127
        %v7629 = vpop.permute.xlu0 %7628
        %7630 = vrot.lane.b32.xlu0 %v7087, 127
        %v7631 = vpop.permute.xlu0 %7630
        %7632 = vrot.lane.b32.xlu0 %v7089, 127
        %v7633 = vpop.permute.xlu0 %7632
        %7634 = vrot.lane.b32.xlu0 %v7091, 127
        %v7635 = vpop.permute.xlu0 %7634
        %7636 = vrot.lane.b32.xlu0 %v7093, 127
        %v7637 = vpop.permute.xlu0 %7636
        %7638 = vrot.lane.b32.xlu0 %v7095, 127
        %v7639 = vpop.permute.xlu0 %7638
        %7640 = vrot.lane.b32.xlu0 %v7097, 127
        %v7641 = vpop.permute.xlu0 %7640
        %7642 = vrot.lane.b32.xlu0 %v7099, 127
        %v7643 = vpop.permute.xlu0 %7642
        %7644 = vrot.lane.b32.xlu0 %v7101, 127
        %v7645 = vpop.permute.xlu0 %7644
        %7646 = vrot.lane.b32.xlu0 %v7103, 127
        %v7647 = vpop.permute.xlu0 %7646
        %7648 = vrot.lane.b32.xlu0 %v7105, 127
        %v7649 = vpop.permute.xlu0 %7648
        %7650 = vrot.lane.b32.xlu0 %v7107, 127
        %v7651 = vpop.permute.xlu0 %7650
        %v7684 = vmul.f32 %v454, %v7589
        %v7685 = vmul.f32 %v457, %v7591
        %v7686 = vmul.f32 %v460, %v7593
        %v7687 = vmul.f32 %v463, %v7595
        %v7688 = vmul.f32 %v466, %v7597
        %v7689 = vmul.f32 %v469, %v7599
        %v7690 = vmul.f32 %v472, %v7601
        %v7691 = vmul.f32 %v475, %v7603
        %v7692 = vmul.f32 %v478, %v7605
        %v7693 = vmul.f32 %v481, %v7607
        %v7694 = vmul.f32 %v484, %v7609
        %v7695 = vmul.f32 %v487, %v7611
        %v7696 = vmul.f32 %v490, %v7613
        %v7697 = vmul.f32 %v493, %v7615
        %v7698 = vmul.f32 %v496, %v7617
        %v7699 = vmul.f32 %v499, %v7619
        %v7700 = vmul.f32 %v502, %v7621
        %v7701 = vmul.f32 %v505, %v7623
        %v7702 = vmul.f32 %v508, %v7625
        %v7703 = vmul.f32 %v511, %v7627
        %v7704 = vmul.f32 %v514, %v7629
        %v7705 = vmul.f32 %v517, %v7631
        %v7706 = vmul.f32 %v520, %v7633
        %v7707 = vmul.f32 %v523, %v7635
        %v7708 = vmul.f32 %v526, %v7637
        %v7709 = vmul.f32 %v529, %v7639
        %v7710 = vmul.f32 %v532, %v7641
        %v7711 = vmul.f32 %v535, %v7643
        %v7712 = vmul.f32 %v538, %v7645
        %v7713 = vmul.f32 %v541, %v7647
        %v7714 = vmul.f32 %v544, %v7649
        %v7715 = vmul.f32 %v547, %v7651
        %7716 = vrot.lane.b32.xlu0 %v7045, 1
        %v7717 = vpop.permute.xlu0 %7716
        %7718 = vrot.lane.b32.xlu0 %v7047, 1
        %v7719 = vpop.permute.xlu0 %7718
        %7720 = vrot.lane.b32.xlu0 %v7049, 1
        %v7721 = vpop.permute.xlu0 %7720
        %7722 = vrot.lane.b32.xlu0 %v7051, 1
        %v7723 = vpop.permute.xlu0 %7722
        %7724 = vrot.lane.b32.xlu0 %v7053, 1
        %v7725 = vpop.permute.xlu0 %7724
        %7726 = vrot.lane.b32.xlu0 %v7055, 1
        %v7727 = vpop.permute.xlu0 %7726
        %7728 = vrot.lane.b32.xlu0 %v7057, 1
        %v7729 = vpop.permute.xlu0 %7728
        %7730 = vrot.lane.b32.xlu0 %v7059, 1
        %v7731 = vpop.permute.xlu0 %7730
        %7732 = vrot.lane.b32.xlu0 %v7061, 1
        %v7733 = vpop.permute.xlu0 %7732
        %7734 = vrot.lane.b32.xlu0 %v7063, 1
        %v7735 = vpop.permute.xlu0 %7734
        %7736 = vrot.lane.b32.xlu0 %v7065, 1
        %v7737 = vpop.permute.xlu0 %7736
        %7738 = vrot.lane.b32.xlu0 %v7067, 1
        %v7739 = vpop.permute.xlu0 %7738
        %7740 = vrot.lane.b32.xlu0 %v7069, 1
        %v7741 = vpop.permute.xlu0 %7740
        %7742 = vrot.lane.b32.xlu0 %v7071, 1
        %v7743 = vpop.permute.xlu0 %7742
        %7744 = vrot.lane.b32.xlu0 %v7073, 1
        %v7745 = vpop.permute.xlu0 %7744
        %7746 = vrot.lane.b32.xlu0 %v7075, 1
        %v7747 = vpop.permute.xlu0 %7746
        %7748 = vrot.lane.b32.xlu0 %v7077, 1
        %v7749 = vpop.permute.xlu0 %7748
        %7750 = vrot.lane.b32.xlu0 %v7079, 1
        %v7751 = vpop.permute.xlu0 %7750
        %7752 = vrot.lane.b32.xlu0 %v7081, 1
        %v7753 = vpop.permute.xlu0 %7752
        %7754 = vrot.lane.b32.xlu0 %v7083, 1
        %v7755 = vpop.permute.xlu0 %7754
        %7756 = vrot.lane.b32.xlu0 %v7085, 1
        %v7757 = vpop.permute.xlu0 %7756
        %7758 = vrot.lane.b32.xlu0 %v7087, 1
        %v7759 = vpop.permute.xlu0 %7758
        %7760 = vrot.lane.b32.xlu0 %v7089, 1
        %v7761 = vpop.permute.xlu0 %7760
        %7762 = vrot.lane.b32.xlu0 %v7091, 1
        %v7763 = vpop.permute.xlu0 %7762
        %7764 = vrot.lane.b32.xlu0 %v7093, 1
        %v7765 = vpop.permute.xlu0 %7764
        %7766 = vrot.lane.b32.xlu0 %v7095, 1
        %v7767 = vpop.permute.xlu0 %7766
        %7768 = vrot.lane.b32.xlu0 %v7097, 1
        %v7769 = vpop.permute.xlu0 %7768
        %7770 = vrot.lane.b32.xlu0 %v7099, 1
        %v7771 = vpop.permute.xlu0 %7770
        %7772 = vrot.lane.b32.xlu0 %v7101, 1
        %v7773 = vpop.permute.xlu0 %7772
        %7774 = vrot.lane.b32.xlu0 %v7103, 1
        %v7775 = vpop.permute.xlu0 %7774
        %7776 = vrot.lane.b32.xlu0 %v7105, 1
        %v7777 = vpop.permute.xlu0 %7776
        %7778 = vrot.lane.b32.xlu0 %v7107, 1
        %v7779 = vpop.permute.xlu0 %7778
        %v7812 = vmul.f32 %v454, %v7717
        %v7813 = vmul.f32 %v457, %v7719
        %v7814 = vmul.f32 %v460, %v7721
        %v7815 = vmul.f32 %v463, %v7723
        %v7816 = vmul.f32 %v466, %v7725
        %v7817 = vmul.f32 %v469, %v7727
        %v7818 = vmul.f32 %v472, %v7729
        %v7819 = vmul.f32 %v475, %v7731
        %v7820 = vmul.f32 %v478, %v7733
        %v7821 = vmul.f32 %v481, %v7735
        %v7822 = vmul.f32 %v484, %v7737
        %v7823 = vmul.f32 %v487, %v7739
        %v7824 = vmul.f32 %v490, %v7741
        %v7825 = vmul.f32 %v493, %v7743
        %v7826 = vmul.f32 %v496, %v7745
        %v7827 = vmul.f32 %v499, %v7747
        %v7828 = vmul.f32 %v502, %v7749
        %v7829 = vmul.f32 %v505, %v7751
        %v7830 = vmul.f32 %v508, %v7753
        %v7831 = vmul.f32 %v511, %v7755
        %v7832 = vmul.f32 %v514, %v7757
        %v7833 = vmul.f32 %v517, %v7759
        %v7834 = vmul.f32 %v520, %v7761
        %v7835 = vmul.f32 %v523, %v7763
        %v7836 = vmul.f32 %v526, %v7765
        %v7837 = vmul.f32 %v529, %v7767
        %v7838 = vmul.f32 %v532, %v7769
        %v7839 = vmul.f32 %v535, %v7771
        %v7840 = vmul.f32 %v538, %v7773
        %v7841 = vmul.f32 %v541, %v7775
        %v7842 = vmul.f32 %v544, %v7777
        %v7843 = vmul.f32 %v547, %v7779
        %7876 = vrot.lane.b32.xlu0 %v7812, 127
        %v7877 = vpop.permute.xlu0 %7876
        %7878 = vrot.lane.b32.xlu0 %v7813, 127
        %v7879 = vpop.permute.xlu0 %7878
        %7880 = vrot.lane.b32.xlu0 %v7814, 127
        %v7881 = vpop.permute.xlu0 %7880
        %7882 = vrot.lane.b32.xlu0 %v7815, 127
        %v7883 = vpop.permute.xlu0 %7882
        %7884 = vrot.lane.b32.xlu0 %v7816, 127
        %v7885 = vpop.permute.xlu0 %7884
        %7886 = vrot.lane.b32.xlu0 %v7817, 127
        %v7887 = vpop.permute.xlu0 %7886
        %7888 = vrot.lane.b32.xlu0 %v7818, 127
        %v7889 = vpop.permute.xlu0 %7888
        %7890 = vrot.lane.b32.xlu0 %v7819, 127
        %v7891 = vpop.permute.xlu0 %7890
        %7892 = vrot.lane.b32.xlu0 %v7820, 127
        %v7893 = vpop.permute.xlu0 %7892
        %7894 = vrot.lane.b32.xlu0 %v7821, 127
        %v7895 = vpop.permute.xlu0 %7894
        %7896 = vrot.lane.b32.xlu0 %v7822, 127
        %v7897 = vpop.permute.xlu0 %7896
        %7898 = vrot.lane.b32.xlu0 %v7823, 127
        %v7899 = vpop.permute.xlu0 %7898
        %7900 = vrot.lane.b32.xlu0 %v7824, 127
        %v7901 = vpop.permute.xlu0 %7900
        %7902 = vrot.lane.b32.xlu0 %v7825, 127
        %v7903 = vpop.permute.xlu0 %7902
        %7904 = vrot.lane.b32.xlu0 %v7826, 127
        %v7905 = vpop.permute.xlu0 %7904
        %7906 = vrot.lane.b32.xlu0 %v7827, 127
        %v7907 = vpop.permute.xlu0 %7906
        %7908 = vrot.lane.b32.xlu0 %v7828, 127
        %v7909 = vpop.permute.xlu0 %7908
        %7910 = vrot.lane.b32.xlu0 %v7829, 127
        %v7911 = vpop.permute.xlu0 %7910
        %7912 = vrot.lane.b32.xlu0 %v7830, 127
        %v7913 = vpop.permute.xlu0 %7912
        %7914 = vrot.lane.b32.xlu0 %v7831, 127
        %v7915 = vpop.permute.xlu0 %7914
        %7916 = vrot.lane.b32.xlu0 %v7832, 127
        %v7917 = vpop.permute.xlu0 %7916
        %7918 = vrot.lane.b32.xlu0 %v7833, 127
        %v7919 = vpop.permute.xlu0 %7918
        %7920 = vrot.lane.b32.xlu0 %v7834, 127
        %v7921 = vpop.permute.xlu0 %7920
        %7922 = vrot.lane.b32.xlu0 %v7835, 127
        %v7923 = vpop.permute.xlu0 %7922
        %7924 = vrot.lane.b32.xlu0 %v7836, 127
        %v7925 = vpop.permute.xlu0 %7924
        %7926 = vrot.lane.b32.xlu0 %v7837, 127
        %v7927 = vpop.permute.xlu0 %7926
        %7928 = vrot.lane.b32.xlu0 %v7838, 127
        %v7929 = vpop.permute.xlu0 %7928
        %7930 = vrot.lane.b32.xlu0 %v7839, 127
        %v7931 = vpop.permute.xlu0 %7930
        %7932 = vrot.lane.b32.xlu0 %v7840, 127
        %v7933 = vpop.permute.xlu0 %7932
        %7934 = vrot.lane.b32.xlu0 %v7841, 127
        %v7935 = vpop.permute.xlu0 %7934
        %7936 = vrot.lane.b32.xlu0 %v7842, 127
        %v7937 = vpop.permute.xlu0 %7936
        %7938 = vrot.lane.b32.xlu0 %v7843, 127
        %v7939 = vpop.permute.xlu0 %7938
        %v7972 = vadd.f32 %v7684, %v7877
        %v7973 = vadd.f32 %v7685, %v7879
        %v7974 = vadd.f32 %v7686, %v7881
        %v7975 = vadd.f32 %v7687, %v7883
        %v7976 = vadd.f32 %v7688, %v7885
        %v7977 = vadd.f32 %v7689, %v7887
        %v7978 = vadd.f32 %v7690, %v7889
        %v7979 = vadd.f32 %v7691, %v7891
        %v7980 = vadd.f32 %v7692, %v7893
        %v7981 = vadd.f32 %v7693, %v7895
        %v7982 = vadd.f32 %v7694, %v7897
        %v7983 = vadd.f32 %v7695, %v7899
        %v7984 = vadd.f32 %v7696, %v7901
        %v7985 = vadd.f32 %v7697, %v7903
        %v7986 = vadd.f32 %v7698, %v7905
        %v7987 = vadd.f32 %v7699, %v7907
        %v7988 = vadd.f32 %v7700, %v7909
        %v7989 = vadd.f32 %v7701, %v7911
        %v7990 = vadd.f32 %v7702, %v7913
        %v7991 = vadd.f32 %v7703, %v7915
        %v7992 = vadd.f32 %v7704, %v7917
        %v7993 = vadd.f32 %v7705, %v7919
        %v7994 = vadd.f32 %v7706, %v7921
        %v7995 = vadd.f32 %v7707, %v7923
        %v7996 = vadd.f32 %v7708, %v7925
        %v7997 = vadd.f32 %v7709, %v7927
        %v7998 = vadd.f32 %v7710, %v7929
        %v7999 = vadd.f32 %v7711, %v7931
        %v8000 = vadd.f32 %v7712, %v7933
        %v8001 = vadd.f32 %v7713, %v7935
        %v8002 = vadd.f32 %v7714, %v7937
        %v8003 = vadd.f32 %v7715, %v7939
        %8036 = vrot.lane.b32.xlu0 %v7684, 126
        %v8037 = vpop.permute.xlu0 %8036
        %8038 = vrot.lane.b32.xlu0 %v7685, 126
        %v8039 = vpop.permute.xlu0 %8038
        %8040 = vrot.lane.b32.xlu0 %v7686, 126
        %v8041 = vpop.permute.xlu0 %8040
        %8042 = vrot.lane.b32.xlu0 %v7687, 126
        %v8043 = vpop.permute.xlu0 %8042
        %8044 = vrot.lane.b32.xlu0 %v7688, 126
        %v8045 = vpop.permute.xlu0 %8044
        %8046 = vrot.lane.b32.xlu0 %v7689, 126
        %v8047 = vpop.permute.xlu0 %8046
        %8048 = vrot.lane.b32.xlu0 %v7690, 126
        %v8049 = vpop.permute.xlu0 %8048
        %8050 = vrot.lane.b32.xlu0 %v7691, 126
        %v8051 = vpop.permute.xlu0 %8050
        %8052 = vrot.lane.b32.xlu0 %v7692, 126
        %v8053 = vpop.permute.xlu0 %8052
        %8054 = vrot.lane.b32.xlu0 %v7693, 126
        %v8055 = vpop.permute.xlu0 %8054
        %8056 = vrot.lane.b32.xlu0 %v7694, 126
        %v8057 = vpop.permute.xlu0 %8056
        %8058 = vrot.lane.b32.xlu0 %v7695, 126
        %v8059 = vpop.permute.xlu0 %8058
        %8060 = vrot.lane.b32.xlu0 %v7696, 126
        %v8061 = vpop.permute.xlu0 %8060
        %8062 = vrot.lane.b32.xlu0 %v7697, 126
        %v8063 = vpop.permute.xlu0 %8062
        %8064 = vrot.lane.b32.xlu0 %v7698, 126
        %v8065 = vpop.permute.xlu0 %8064
        %8066 = vrot.lane.b32.xlu0 %v7699, 126
        %v8067 = vpop.permute.xlu0 %8066
        %8068 = vrot.lane.b32.xlu0 %v7700, 126
        %v8069 = vpop.permute.xlu0 %8068
        %8070 = vrot.lane.b32.xlu0 %v7701, 126
        %v8071 = vpop.permute.xlu0 %8070
        %8072 = vrot.lane.b32.xlu0 %v7702, 126
        %v8073 = vpop.permute.xlu0 %8072
        %8074 = vrot.lane.b32.xlu0 %v7703, 126
        %v8075 = vpop.permute.xlu0 %8074
        %8076 = vrot.lane.b32.xlu0 %v7704, 126
        %v8077 = vpop.permute.xlu0 %8076
        %8078 = vrot.lane.b32.xlu0 %v7705, 126
        %v8079 = vpop.permute.xlu0 %8078
        %8080 = vrot.lane.b32.xlu0 %v7706, 126
        %v8081 = vpop.permute.xlu0 %8080
        %8082 = vrot.lane.b32.xlu0 %v7707, 126
        %v8083 = vpop.permute.xlu0 %8082
        %8084 = vrot.lane.b32.xlu0 %v7708, 126
        %v8085 = vpop.permute.xlu0 %8084
        %8086 = vrot.lane.b32.xlu0 %v7709, 126
        %v8087 = vpop.permute.xlu0 %8086
        %8088 = vrot.lane.b32.xlu0 %v7710, 126
        %v8089 = vpop.permute.xlu0 %8088
        %8090 = vrot.lane.b32.xlu0 %v7711, 126
        %v8091 = vpop.permute.xlu0 %8090
        %8092 = vrot.lane.b32.xlu0 %v7712, 126
        %v8093 = vpop.permute.xlu0 %8092
        %8094 = vrot.lane.b32.xlu0 %v7713, 126
        %v8095 = vpop.permute.xlu0 %8094
        %8096 = vrot.lane.b32.xlu0 %v7714, 126
        %v8097 = vpop.permute.xlu0 %8096
        %8098 = vrot.lane.b32.xlu0 %v7715, 126
        %v8099 = vpop.permute.xlu0 %8098
        %v8132 = vadd.f32 %v7972, %v8037
        %v8133 = vadd.f32 %v7973, %v8039
        %v8134 = vadd.f32 %v7974, %v8041
        %v8135 = vadd.f32 %v7975, %v8043
        %v8136 = vadd.f32 %v7976, %v8045
        %v8137 = vadd.f32 %v7977, %v8047
        %v8138 = vadd.f32 %v7978, %v8049
        %v8139 = vadd.f32 %v7979, %v8051
        %v8140 = vadd.f32 %v7980, %v8053
        %v8141 = vadd.f32 %v7981, %v8055
        %v8142 = vadd.f32 %v7982, %v8057
        %v8143 = vadd.f32 %v7983, %v8059
        %v8144 = vadd.f32 %v7984, %v8061
        %v8145 = vadd.f32 %v7985, %v8063
        %v8146 = vadd.f32 %v7986, %v8065
        %v8147 = vadd.f32 %v7987, %v8067
        %v8148 = vadd.f32 %v7988, %v8069
        %v8149 = vadd.f32 %v7989, %v8071
        %v8150 = vadd.f32 %v7990, %v8073
        %v8151 = vadd.f32 %v7991, %v8075
        %v8152 = vadd.f32 %v7992, %v8077
        %v8153 = vadd.f32 %v7993, %v8079
        %v8154 = vadd.f32 %v7994, %v8081
        %v8155 = vadd.f32 %v7995, %v8083
        %v8156 = vadd.f32 %v7996, %v8085
        %v8157 = vadd.f32 %v7997, %v8087
        %v8158 = vadd.f32 %v7998, %v8089
        %v8159 = vadd.f32 %v7999, %v8091
        %v8160 = vadd.f32 %v8000, %v8093
        %v8161 = vadd.f32 %v8001, %v8095
        %v8162 = vadd.f32 %v8002, %v8097
        %v8163 = vadd.f32 %v8003, %v8099
        %8164 = vrot.lane.b32.xlu0 %v7812, 125
        %v8165 = vpop.permute.xlu0 %8164
        %8166 = vrot.lane.b32.xlu0 %v7813, 125
        %v8167 = vpop.permute.xlu0 %8166
        %8168 = vrot.lane.b32.xlu0 %v7814, 125
        %v8169 = vpop.permute.xlu0 %8168
        %8170 = vrot.lane.b32.xlu0 %v7815, 125
        %v8171 = vpop.permute.xlu0 %8170
        %8172 = vrot.lane.b32.xlu0 %v7816, 125
        %v8173 = vpop.permute.xlu0 %8172
        %8174 = vrot.lane.b32.xlu0 %v7817, 125
        %v8175 = vpop.permute.xlu0 %8174
        %8176 = vrot.lane.b32.xlu0 %v7818, 125
        %v8177 = vpop.permute.xlu0 %8176
        %8178 = vrot.lane.b32.xlu0 %v7819, 125
        %v8179 = vpop.permute.xlu0 %8178
        %8180 = vrot.lane.b32.xlu0 %v7820, 125
        %v8181 = vpop.permute.xlu0 %8180
        %8182 = vrot.lane.b32.xlu0 %v7821, 125
        %v8183 = vpop.permute.xlu0 %8182
        %8184 = vrot.lane.b32.xlu0 %v7822, 125
        %v8185 = vpop.permute.xlu0 %8184
        %8186 = vrot.lane.b32.xlu0 %v7823, 125
        %v8187 = vpop.permute.xlu0 %8186
        %8188 = vrot.lane.b32.xlu0 %v7824, 125
        %v8189 = vpop.permute.xlu0 %8188
        %8190 = vrot.lane.b32.xlu0 %v7825, 125
        %v8191 = vpop.permute.xlu0 %8190
        %8192 = vrot.lane.b32.xlu0 %v7826, 125
        %v8193 = vpop.permute.xlu0 %8192
        %8194 = vrot.lane.b32.xlu0 %v7827, 125
        %v8195 = vpop.permute.xlu0 %8194
        %8196 = vrot.lane.b32.xlu0 %v7828, 125
        %v8197 = vpop.permute.xlu0 %8196
        %8198 = vrot.lane.b32.xlu0 %v7829, 125
        %v8199 = vpop.permute.xlu0 %8198
        %8200 = vrot.lane.b32.xlu0 %v7830, 125
        %v8201 = vpop.permute.xlu0 %8200
        %8202 = vrot.lane.b32.xlu0 %v7831, 125
        %v8203 = vpop.permute.xlu0 %8202
        %8204 = vrot.lane.b32.xlu0 %v7832, 125
        %v8205 = vpop.permute.xlu0 %8204
        %8206 = vrot.lane.b32.xlu0 %v7833, 125
        %v8207 = vpop.permute.xlu0 %8206
        %8208 = vrot.lane.b32.xlu0 %v7834, 125
        %v8209 = vpop.permute.xlu0 %8208
        %8210 = vrot.lane.b32.xlu0 %v7835, 125
        %v8211 = vpop.permute.xlu0 %8210
        %8212 = vrot.lane.b32.xlu0 %v7836, 125
        %v8213 = vpop.permute.xlu0 %8212
        %8214 = vrot.lane.b32.xlu0 %v7837, 125
        %v8215 = vpop.permute.xlu0 %8214
        %8216 = vrot.lane.b32.xlu0 %v7838, 125
        %v8217 = vpop.permute.xlu0 %8216
        %8218 = vrot.lane.b32.xlu0 %v7839, 125
        %v8219 = vpop.permute.xlu0 %8218
        %8220 = vrot.lane.b32.xlu0 %v7840, 125
        %v8221 = vpop.permute.xlu0 %8220
        %8222 = vrot.lane.b32.xlu0 %v7841, 125
        %v8223 = vpop.permute.xlu0 %8222
        %8224 = vrot.lane.b32.xlu0 %v7842, 125
        %v8225 = vpop.permute.xlu0 %8224
        %8226 = vrot.lane.b32.xlu0 %v7843, 125
        %v8227 = vpop.permute.xlu0 %8226
        %v8260 = vsub.f32 %v8132, %v8165
        %v8261 = vsub.f32 %v8133, %v8167
        %v8262 = vsub.f32 %v8134, %v8169
        %v8263 = vsub.f32 %v8135, %v8171
        %v8264 = vsub.f32 %v8136, %v8173
        %v8265 = vsub.f32 %v8137, %v8175
        %v8266 = vsub.f32 %v8138, %v8177
        %v8267 = vsub.f32 %v8139, %v8179
        %v8268 = vsub.f32 %v8140, %v8181
        %v8269 = vsub.f32 %v8141, %v8183
        %v8270 = vsub.f32 %v8142, %v8185
        %v8271 = vsub.f32 %v8143, %v8187
        %v8272 = vsub.f32 %v8144, %v8189
        %v8273 = vsub.f32 %v8145, %v8191
        %v8274 = vsub.f32 %v8146, %v8193
        %v8275 = vsub.f32 %v8147, %v8195
        %v8276 = vsub.f32 %v8148, %v8197
        %v8277 = vsub.f32 %v8149, %v8199
        %v8278 = vsub.f32 %v8150, %v8201
        %v8279 = vsub.f32 %v8151, %v8203
        %v8280 = vsub.f32 %v8152, %v8205
        %v8281 = vsub.f32 %v8153, %v8207
        %v8282 = vsub.f32 %v8154, %v8209
        %v8283 = vsub.f32 %v8155, %v8211
        %v8284 = vsub.f32 %v8156, %v8213
        %v8285 = vsub.f32 %v8157, %v8215
        %v8286 = vsub.f32 %v8158, %v8217
        %v8287 = vsub.f32 %v8159, %v8219
        %v8288 = vsub.f32 %v8160, %v8221
        %v8289 = vsub.f32 %v8161, %v8223
        %v8290 = vsub.f32 %v8162, %v8225
        %v8291 = vsub.f32 %v8163, %v8227
        %8292 = vrot.lane.b32.xlu0 %v7045, 126
        %v8293 = vpop.permute.xlu0 %8292
        %8294 = vrot.lane.b32.xlu0 %v7047, 126
        %v8295 = vpop.permute.xlu0 %8294
        %8296 = vrot.lane.b32.xlu0 %v7049, 126
        %v8297 = vpop.permute.xlu0 %8296
        %8298 = vrot.lane.b32.xlu0 %v7051, 126
        %v8299 = vpop.permute.xlu0 %8298
        %8300 = vrot.lane.b32.xlu0 %v7053, 126
        %v8301 = vpop.permute.xlu0 %8300
        %8302 = vrot.lane.b32.xlu0 %v7055, 126
        %v8303 = vpop.permute.xlu0 %8302
        %8304 = vrot.lane.b32.xlu0 %v7057, 126
        %v8305 = vpop.permute.xlu0 %8304
        %8306 = vrot.lane.b32.xlu0 %v7059, 126
        %v8307 = vpop.permute.xlu0 %8306
        %8308 = vrot.lane.b32.xlu0 %v7061, 126
        %v8309 = vpop.permute.xlu0 %8308
        %8310 = vrot.lane.b32.xlu0 %v7063, 126
        %v8311 = vpop.permute.xlu0 %8310
        %8312 = vrot.lane.b32.xlu0 %v7065, 126
        %v8313 = vpop.permute.xlu0 %8312
        %8314 = vrot.lane.b32.xlu0 %v7067, 126
        %v8315 = vpop.permute.xlu0 %8314
        %8316 = vrot.lane.b32.xlu0 %v7069, 126
        %v8317 = vpop.permute.xlu0 %8316
        %8318 = vrot.lane.b32.xlu0 %v7071, 126
        %v8319 = vpop.permute.xlu0 %8318
        %8320 = vrot.lane.b32.xlu0 %v7073, 126
        %v8321 = vpop.permute.xlu0 %8320
        %8322 = vrot.lane.b32.xlu0 %v7075, 126
        %v8323 = vpop.permute.xlu0 %8322
        %8324 = vrot.lane.b32.xlu0 %v7077, 126
        %v8325 = vpop.permute.xlu0 %8324
        %8326 = vrot.lane.b32.xlu0 %v7079, 126
        %v8327 = vpop.permute.xlu0 %8326
        %8328 = vrot.lane.b32.xlu0 %v7081, 126
        %v8329 = vpop.permute.xlu0 %8328
        %8330 = vrot.lane.b32.xlu0 %v7083, 126
        %v8331 = vpop.permute.xlu0 %8330
        %8332 = vrot.lane.b32.xlu0 %v7085, 126
        %v8333 = vpop.permute.xlu0 %8332
        %8334 = vrot.lane.b32.xlu0 %v7087, 126
        %v8335 = vpop.permute.xlu0 %8334
        %8336 = vrot.lane.b32.xlu0 %v7089, 126
        %v8337 = vpop.permute.xlu0 %8336
        %8338 = vrot.lane.b32.xlu0 %v7091, 126
        %v8339 = vpop.permute.xlu0 %8338
        %8340 = vrot.lane.b32.xlu0 %v7093, 126
        %v8341 = vpop.permute.xlu0 %8340
        %8342 = vrot.lane.b32.xlu0 %v7095, 126
        %v8343 = vpop.permute.xlu0 %8342
        %8344 = vrot.lane.b32.xlu0 %v7097, 126
        %v8345 = vpop.permute.xlu0 %8344
        %8346 = vrot.lane.b32.xlu0 %v7099, 126
        %v8347 = vpop.permute.xlu0 %8346
        %8348 = vrot.lane.b32.xlu0 %v7101, 126
        %v8349 = vpop.permute.xlu0 %8348
        %8350 = vrot.lane.b32.xlu0 %v7103, 126
        %v8351 = vpop.permute.xlu0 %8350
        %8352 = vrot.lane.b32.xlu0 %v7105, 126
        %v8353 = vpop.permute.xlu0 %8352
        %8354 = vrot.lane.b32.xlu0 %v7107, 126
        %v8355 = vpop.permute.xlu0 %8354
        %v8388 = vmul.f32 %v454, %v8293
        %v8389 = vmul.f32 %v457, %v8295
        %v8390 = vmul.f32 %v460, %v8297
        %v8391 = vmul.f32 %v463, %v8299
        %v8392 = vmul.f32 %v466, %v8301
        %v8393 = vmul.f32 %v469, %v8303
        %v8394 = vmul.f32 %v472, %v8305
        %v8395 = vmul.f32 %v475, %v8307
        %v8396 = vmul.f32 %v478, %v8309
        %v8397 = vmul.f32 %v481, %v8311
        %v8398 = vmul.f32 %v484, %v8313
        %v8399 = vmul.f32 %v487, %v8315
        %v8400 = vmul.f32 %v490, %v8317
        %v8401 = vmul.f32 %v493, %v8319
        %v8402 = vmul.f32 %v496, %v8321
        %v8403 = vmul.f32 %v499, %v8323
        %v8404 = vmul.f32 %v502, %v8325
        %v8405 = vmul.f32 %v505, %v8327
        %v8406 = vmul.f32 %v508, %v8329
        %v8407 = vmul.f32 %v511, %v8331
        %v8408 = vmul.f32 %v514, %v8333
        %v8409 = vmul.f32 %v517, %v8335
        %v8410 = vmul.f32 %v520, %v8337
        %v8411 = vmul.f32 %v523, %v8339
        %v8412 = vmul.f32 %v526, %v8341
        %v8413 = vmul.f32 %v529, %v8343
        %v8414 = vmul.f32 %v532, %v8345
        %v8415 = vmul.f32 %v535, %v8347
        %v8416 = vmul.f32 %v538, %v8349
        %v8417 = vmul.f32 %v541, %v8351
        %v8418 = vmul.f32 %v544, %v8353
        %v8419 = vmul.f32 %v547, %v8355
        %8452 = vrot.lane.b32.xlu0 %v8388, 127
        %v8453 = vpop.permute.xlu0 %8452
        %8454 = vrot.lane.b32.xlu0 %v8389, 127
        %v8455 = vpop.permute.xlu0 %8454
        %8456 = vrot.lane.b32.xlu0 %v8390, 127
        %v8457 = vpop.permute.xlu0 %8456
        %8458 = vrot.lane.b32.xlu0 %v8391, 127
        %v8459 = vpop.permute.xlu0 %8458
        %8460 = vrot.lane.b32.xlu0 %v8392, 127
        %v8461 = vpop.permute.xlu0 %8460
        %8462 = vrot.lane.b32.xlu0 %v8393, 127
        %v8463 = vpop.permute.xlu0 %8462
        %8464 = vrot.lane.b32.xlu0 %v8394, 127
        %v8465 = vpop.permute.xlu0 %8464
        %8466 = vrot.lane.b32.xlu0 %v8395, 127
        %v8467 = vpop.permute.xlu0 %8466
        %8468 = vrot.lane.b32.xlu0 %v8396, 127
        %v8469 = vpop.permute.xlu0 %8468
        %8470 = vrot.lane.b32.xlu0 %v8397, 127
        %v8471 = vpop.permute.xlu0 %8470
        %8472 = vrot.lane.b32.xlu0 %v8398, 127
        %v8473 = vpop.permute.xlu0 %8472
        %8474 = vrot.lane.b32.xlu0 %v8399, 127
        %v8475 = vpop.permute.xlu0 %8474
        %8476 = vrot.lane.b32.xlu0 %v8400, 127
        %v8477 = vpop.permute.xlu0 %8476
        %8478 = vrot.lane.b32.xlu0 %v8401, 127
        %v8479 = vpop.permute.xlu0 %8478
        %8480 = vrot.lane.b32.xlu0 %v8402, 127
        %v8481 = vpop.permute.xlu0 %8480
        %8482 = vrot.lane.b32.xlu0 %v8403, 127
        %v8483 = vpop.permute.xlu0 %8482
        %8484 = vrot.lane.b32.xlu0 %v8404, 127
        %v8485 = vpop.permute.xlu0 %8484
        %8486 = vrot.lane.b32.xlu0 %v8405, 127
        %v8487 = vpop.permute.xlu0 %8486
        %8488 = vrot.lane.b32.xlu0 %v8406, 127
        %v8489 = vpop.permute.xlu0 %8488
        %8490 = vrot.lane.b32.xlu0 %v8407, 127
        %v8491 = vpop.permute.xlu0 %8490
        %8492 = vrot.lane.b32.xlu0 %v8408, 127
        %v8493 = vpop.permute.xlu0 %8492
        %8494 = vrot.lane.b32.xlu0 %v8409, 127
        %v8495 = vpop.permute.xlu0 %8494
        %8496 = vrot.lane.b32.xlu0 %v8410, 127
        %v8497 = vpop.permute.xlu0 %8496
        %8498 = vrot.lane.b32.xlu0 %v8411, 127
        %v8499 = vpop.permute.xlu0 %8498
        %8500 = vrot.lane.b32.xlu0 %v8412, 127
        %v8501 = vpop.permute.xlu0 %8500
        %8502 = vrot.lane.b32.xlu0 %v8413, 127
        %v8503 = vpop.permute.xlu0 %8502
        %8504 = vrot.lane.b32.xlu0 %v8414, 127
        %v8505 = vpop.permute.xlu0 %8504
        %8506 = vrot.lane.b32.xlu0 %v8415, 127
        %v8507 = vpop.permute.xlu0 %8506
        %8508 = vrot.lane.b32.xlu0 %v8416, 127
        %v8509 = vpop.permute.xlu0 %8508
        %8510 = vrot.lane.b32.xlu0 %v8417, 127
        %v8511 = vpop.permute.xlu0 %8510
        %8512 = vrot.lane.b32.xlu0 %v8418, 127
        %v8513 = vpop.permute.xlu0 %8512
        %8514 = vrot.lane.b32.xlu0 %v8419, 127
        %v8515 = vpop.permute.xlu0 %8514
        %v8548 = vsub.f32 %v8388, %v8453
        %v8549 = vsub.f32 %v8389, %v8455
        %v8550 = vsub.f32 %v8390, %v8457
        %v8551 = vsub.f32 %v8391, %v8459
        %v8552 = vsub.f32 %v8392, %v8461
        %v8553 = vsub.f32 %v8393, %v8463
        %v8554 = vsub.f32 %v8394, %v8465
        %v8555 = vsub.f32 %v8395, %v8467
        %v8556 = vsub.f32 %v8396, %v8469
        %v8557 = vsub.f32 %v8397, %v8471
        %v8558 = vsub.f32 %v8398, %v8473
        %v8559 = vsub.f32 %v8399, %v8475
        %v8560 = vsub.f32 %v8400, %v8477
        %v8561 = vsub.f32 %v8401, %v8479
        %v8562 = vsub.f32 %v8402, %v8481
        %v8563 = vsub.f32 %v8403, %v8483
        %v8564 = vsub.f32 %v8404, %v8485
        %v8565 = vsub.f32 %v8405, %v8487
        %v8566 = vsub.f32 %v8406, %v8489
        %v8567 = vsub.f32 %v8407, %v8491
        %v8568 = vsub.f32 %v8408, %v8493
        %v8569 = vsub.f32 %v8409, %v8495
        %v8570 = vsub.f32 %v8410, %v8497
        %v8571 = vsub.f32 %v8411, %v8499
        %v8572 = vsub.f32 %v8412, %v8501
        %v8573 = vsub.f32 %v8413, %v8503
        %v8574 = vsub.f32 %v8414, %v8505
        %v8575 = vsub.f32 %v8415, %v8507
        %v8576 = vsub.f32 %v8416, %v8509
        %v8577 = vsub.f32 %v8417, %v8511
        %v8578 = vsub.f32 %v8418, %v8513
        %v8579 = vsub.f32 %v8419, %v8515
        %8580 = vrot.lane.b32.xlu0 %v7045, 2
        %v8581 = vpop.permute.xlu0 %8580
        %8582 = vrot.lane.b32.xlu0 %v7047, 2
        %v8583 = vpop.permute.xlu0 %8582
        %8584 = vrot.lane.b32.xlu0 %v7049, 2
        %v8585 = vpop.permute.xlu0 %8584
        %8586 = vrot.lane.b32.xlu0 %v7051, 2
        %v8587 = vpop.permute.xlu0 %8586
        %8588 = vrot.lane.b32.xlu0 %v7053, 2
        %v8589 = vpop.permute.xlu0 %8588
        %8590 = vrot.lane.b32.xlu0 %v7055, 2
        %v8591 = vpop.permute.xlu0 %8590
        %8592 = vrot.lane.b32.xlu0 %v7057, 2
        %v8593 = vpop.permute.xlu0 %8592
        %8594 = vrot.lane.b32.xlu0 %v7059, 2
        %v8595 = vpop.permute.xlu0 %8594
        %8596 = vrot.lane.b32.xlu0 %v7061, 2
        %v8597 = vpop.permute.xlu0 %8596
        %8598 = vrot.lane.b32.xlu0 %v7063, 2
        %v8599 = vpop.permute.xlu0 %8598
        %8600 = vrot.lane.b32.xlu0 %v7065, 2
        %v8601 = vpop.permute.xlu0 %8600
        %8602 = vrot.lane.b32.xlu0 %v7067, 2
        %v8603 = vpop.permute.xlu0 %8602
        %8604 = vrot.lane.b32.xlu0 %v7069, 2
        %v8605 = vpop.permute.xlu0 %8604
        %8606 = vrot.lane.b32.xlu0 %v7071, 2
        %v8607 = vpop.permute.xlu0 %8606
        %8608 = vrot.lane.b32.xlu0 %v7073, 2
        %v8609 = vpop.permute.xlu0 %8608
        %8610 = vrot.lane.b32.xlu0 %v7075, 2
        %v8611 = vpop.permute.xlu0 %8610
        %8612 = vrot.lane.b32.xlu0 %v7077, 2
        %v8613 = vpop.permute.xlu0 %8612
        %8614 = vrot.lane.b32.xlu0 %v7079, 2
        %v8615 = vpop.permute.xlu0 %8614
        %8616 = vrot.lane.b32.xlu0 %v7081, 2
        %v8617 = vpop.permute.xlu0 %8616
        %8618 = vrot.lane.b32.xlu0 %v7083, 2
        %v8619 = vpop.permute.xlu0 %8618
        %8620 = vrot.lane.b32.xlu0 %v7085, 2
        %v8621 = vpop.permute.xlu0 %8620
        %8622 = vrot.lane.b32.xlu0 %v7087, 2
        %v8623 = vpop.permute.xlu0 %8622
        %8624 = vrot.lane.b32.xlu0 %v7089, 2
        %v8625 = vpop.permute.xlu0 %8624
        %8626 = vrot.lane.b32.xlu0 %v7091, 2
        %v8627 = vpop.permute.xlu0 %8626
        %8628 = vrot.lane.b32.xlu0 %v7093, 2
        %v8629 = vpop.permute.xlu0 %8628
        %8630 = vrot.lane.b32.xlu0 %v7095, 2
        %v8631 = vpop.permute.xlu0 %8630
        %8632 = vrot.lane.b32.xlu0 %v7097, 2
        %v8633 = vpop.permute.xlu0 %8632
        %8634 = vrot.lane.b32.xlu0 %v7099, 2
        %v8635 = vpop.permute.xlu0 %8634
        %8636 = vrot.lane.b32.xlu0 %v7101, 2
        %v8637 = vpop.permute.xlu0 %8636
        %8638 = vrot.lane.b32.xlu0 %v7103, 2
        %v8639 = vpop.permute.xlu0 %8638
        %8640 = vrot.lane.b32.xlu0 %v7105, 2
        %v8641 = vpop.permute.xlu0 %8640
        %8642 = vrot.lane.b32.xlu0 %v7107, 2
        %v8643 = vpop.permute.xlu0 %8642
        %v8676 = vmul.f32 %v454, %v8581
        %v8677 = vmul.f32 %v457, %v8583
        %v8678 = vmul.f32 %v460, %v8585
        %v8679 = vmul.f32 %v463, %v8587
        %v8680 = vmul.f32 %v466, %v8589
        %v8681 = vmul.f32 %v469, %v8591
        %v8682 = vmul.f32 %v472, %v8593
        %v8683 = vmul.f32 %v475, %v8595
        %v8684 = vmul.f32 %v478, %v8597
        %v8685 = vmul.f32 %v481, %v8599
        %v8686 = vmul.f32 %v484, %v8601
        %v8687 = vmul.f32 %v487, %v8603
        %v8688 = vmul.f32 %v490, %v8605
        %v8689 = vmul.f32 %v493, %v8607
        %v8690 = vmul.f32 %v496, %v8609
        %v8691 = vmul.f32 %v499, %v8611
        %v8692 = vmul.f32 %v502, %v8613
        %v8693 = vmul.f32 %v505, %v8615
        %v8694 = vmul.f32 %v508, %v8617
        %v8695 = vmul.f32 %v511, %v8619
        %v8696 = vmul.f32 %v514, %v8621
        %v8697 = vmul.f32 %v517, %v8623
        %v8698 = vmul.f32 %v520, %v8625
        %v8699 = vmul.f32 %v523, %v8627
        %v8700 = vmul.f32 %v526, %v8629
        %v8701 = vmul.f32 %v529, %v8631
        %v8702 = vmul.f32 %v532, %v8633
        %v8703 = vmul.f32 %v535, %v8635
        %v8704 = vmul.f32 %v538, %v8637
        %v8705 = vmul.f32 %v541, %v8639
        %v8706 = vmul.f32 %v544, %v8641
        %v8707 = vmul.f32 %v547, %v8643
        %8740 = vrot.lane.b32.xlu0 %v8676, 126
        %v8741 = vpop.permute.xlu0 %8740
        %8742 = vrot.lane.b32.xlu0 %v8677, 126
        %v8743 = vpop.permute.xlu0 %8742
        %8744 = vrot.lane.b32.xlu0 %v8678, 126
        %v8745 = vpop.permute.xlu0 %8744
        %8746 = vrot.lane.b32.xlu0 %v8679, 126
        %v8747 = vpop.permute.xlu0 %8746
        %8748 = vrot.lane.b32.xlu0 %v8680, 126
        %v8749 = vpop.permute.xlu0 %8748
        %8750 = vrot.lane.b32.xlu0 %v8681, 126
        %v8751 = vpop.permute.xlu0 %8750
        %8752 = vrot.lane.b32.xlu0 %v8682, 126
        %v8753 = vpop.permute.xlu0 %8752
        %8754 = vrot.lane.b32.xlu0 %v8683, 126
        %v8755 = vpop.permute.xlu0 %8754
        %8756 = vrot.lane.b32.xlu0 %v8684, 126
        %v8757 = vpop.permute.xlu0 %8756
        %8758 = vrot.lane.b32.xlu0 %v8685, 126
        %v8759 = vpop.permute.xlu0 %8758
        %8760 = vrot.lane.b32.xlu0 %v8686, 126
        %v8761 = vpop.permute.xlu0 %8760
        %8762 = vrot.lane.b32.xlu0 %v8687, 126
        %v8763 = vpop.permute.xlu0 %8762
        %8764 = vrot.lane.b32.xlu0 %v8688, 126
        %v8765 = vpop.permute.xlu0 %8764
        %8766 = vrot.lane.b32.xlu0 %v8689, 126
        %v8767 = vpop.permute.xlu0 %8766
        %8768 = vrot.lane.b32.xlu0 %v8690, 126
        %v8769 = vpop.permute.xlu0 %8768
        %8770 = vrot.lane.b32.xlu0 %v8691, 126
        %v8771 = vpop.permute.xlu0 %8770
        %8772 = vrot.lane.b32.xlu0 %v8692, 126
        %v8773 = vpop.permute.xlu0 %8772
        %8774 = vrot.lane.b32.xlu0 %v8693, 126
        %v8775 = vpop.permute.xlu0 %8774
        %8776 = vrot.lane.b32.xlu0 %v8694, 126
        %v8777 = vpop.permute.xlu0 %8776
        %8778 = vrot.lane.b32.xlu0 %v8695, 126
        %v8779 = vpop.permute.xlu0 %8778
        %8780 = vrot.lane.b32.xlu0 %v8696, 126
        %v8781 = vpop.permute.xlu0 %8780
        %8782 = vrot.lane.b32.xlu0 %v8697, 126
        %v8783 = vpop.permute.xlu0 %8782
        %8784 = vrot.lane.b32.xlu0 %v8698, 126
        %v8785 = vpop.permute.xlu0 %8784
        %8786 = vrot.lane.b32.xlu0 %v8699, 126
        %v8787 = vpop.permute.xlu0 %8786
        %8788 = vrot.lane.b32.xlu0 %v8700, 126
        %v8789 = vpop.permute.xlu0 %8788
        %8790 = vrot.lane.b32.xlu0 %v8701, 126
        %v8791 = vpop.permute.xlu0 %8790
        %8792 = vrot.lane.b32.xlu0 %v8702, 126
        %v8793 = vpop.permute.xlu0 %8792
        %8794 = vrot.lane.b32.xlu0 %v8703, 126
        %v8795 = vpop.permute.xlu0 %8794
        %8796 = vrot.lane.b32.xlu0 %v8704, 126
        %v8797 = vpop.permute.xlu0 %8796
        %8798 = vrot.lane.b32.xlu0 %v8705, 126
        %v8799 = vpop.permute.xlu0 %8798
        %8800 = vrot.lane.b32.xlu0 %v8706, 126
        %v8801 = vpop.permute.xlu0 %8800
        %8802 = vrot.lane.b32.xlu0 %v8707, 126
        %v8803 = vpop.permute.xlu0 %8802
        %v8836 = vadd.f32 %v8548, %v8741
        %v8837 = vadd.f32 %v8549, %v8743
        %v8838 = vadd.f32 %v8550, %v8745
        %v8839 = vadd.f32 %v8551, %v8747
        %v8840 = vadd.f32 %v8552, %v8749
        %v8841 = vadd.f32 %v8553, %v8751
        %v8842 = vadd.f32 %v8554, %v8753
        %v8843 = vadd.f32 %v8555, %v8755
        %v8844 = vadd.f32 %v8556, %v8757
        %v8845 = vadd.f32 %v8557, %v8759
        %v8846 = vadd.f32 %v8558, %v8761
        %v8847 = vadd.f32 %v8559, %v8763
        %v8848 = vadd.f32 %v8560, %v8765
        %v8849 = vadd.f32 %v8561, %v8767
        %v8850 = vadd.f32 %v8562, %v8769
        %v8851 = vadd.f32 %v8563, %v8771
        %v8852 = vadd.f32 %v8564, %v8773
        %v8853 = vadd.f32 %v8565, %v8775
        %v8854 = vadd.f32 %v8566, %v8777
        %v8855 = vadd.f32 %v8567, %v8779
        %v8856 = vadd.f32 %v8568, %v8781
        %v8857 = vadd.f32 %v8569, %v8783
        %v8858 = vadd.f32 %v8570, %v8785
        %v8859 = vadd.f32 %v8571, %v8787
        %v8860 = vadd.f32 %v8572, %v8789
        %v8861 = vadd.f32 %v8573, %v8791
        %v8862 = vadd.f32 %v8574, %v8793
        %v8863 = vadd.f32 %v8575, %v8795
        %v8864 = vadd.f32 %v8576, %v8797
        %v8865 = vadd.f32 %v8577, %v8799
        %v8866 = vadd.f32 %v8578, %v8801
        %v8867 = vadd.f32 %v8579, %v8803
        %8868 = vrot.lane.b32.xlu0 %v8676, 125
        %v8869 = vpop.permute.xlu0 %8868
        %8870 = vrot.lane.b32.xlu0 %v8677, 125
        %v8871 = vpop.permute.xlu0 %8870
        %8872 = vrot.lane.b32.xlu0 %v8678, 125
        %v8873 = vpop.permute.xlu0 %8872
        %8874 = vrot.lane.b32.xlu0 %v8679, 125
        %v8875 = vpop.permute.xlu0 %8874
        %8876 = vrot.lane.b32.xlu0 %v8680, 125
        %v8877 = vpop.permute.xlu0 %8876
        %8878 = vrot.lane.b32.xlu0 %v8681, 125
        %v8879 = vpop.permute.xlu0 %8878
        %8880 = vrot.lane.b32.xlu0 %v8682, 125
        %v8881 = vpop.permute.xlu0 %8880
        %8882 = vrot.lane.b32.xlu0 %v8683, 125
        %v8883 = vpop.permute.xlu0 %8882
        %8884 = vrot.lane.b32.xlu0 %v8684, 125
        %v8885 = vpop.permute.xlu0 %8884
        %8886 = vrot.lane.b32.xlu0 %v8685, 125
        %v8887 = vpop.permute.xlu0 %8886
        %8888 = vrot.lane.b32.xlu0 %v8686, 125
        %v8889 = vpop.permute.xlu0 %8888
        %8890 = vrot.lane.b32.xlu0 %v8687, 125
        %v8891 = vpop.permute.xlu0 %8890
        %8892 = vrot.lane.b32.xlu0 %v8688, 125
        %v8893 = vpop.permute.xlu0 %8892
        %8894 = vrot.lane.b32.xlu0 %v8689, 125
        %v8895 = vpop.permute.xlu0 %8894
        %8896 = vrot.lane.b32.xlu0 %v8690, 125
        %v8897 = vpop.permute.xlu0 %8896
        %8898 = vrot.lane.b32.xlu0 %v8691, 125
        %v8899 = vpop.permute.xlu0 %8898
        %8900 = vrot.lane.b32.xlu0 %v8692, 125
        %v8901 = vpop.permute.xlu0 %8900
        %8902 = vrot.lane.b32.xlu0 %v8693, 125
        %v8903 = vpop.permute.xlu0 %8902
        %8904 = vrot.lane.b32.xlu0 %v8694, 125
        %v8905 = vpop.permute.xlu0 %8904
        %8906 = vrot.lane.b32.xlu0 %v8695, 125
        %v8907 = vpop.permute.xlu0 %8906
        %8908 = vrot.lane.b32.xlu0 %v8696, 125
        %v8909 = vpop.permute.xlu0 %8908
        %8910 = vrot.lane.b32.xlu0 %v8697, 125
        %v8911 = vpop.permute.xlu0 %8910
        %8912 = vrot.lane.b32.xlu0 %v8698, 125
        %v8913 = vpop.permute.xlu0 %8912
        %8914 = vrot.lane.b32.xlu0 %v8699, 125
        %v8915 = vpop.permute.xlu0 %8914
        %8916 = vrot.lane.b32.xlu0 %v8700, 125
        %v8917 = vpop.permute.xlu0 %8916
        %8918 = vrot.lane.b32.xlu0 %v8701, 125
        %v8919 = vpop.permute.xlu0 %8918
        %8920 = vrot.lane.b32.xlu0 %v8702, 125
        %v8921 = vpop.permute.xlu0 %8920
        %8922 = vrot.lane.b32.xlu0 %v8703, 125
        %v8923 = vpop.permute.xlu0 %8922
        %8924 = vrot.lane.b32.xlu0 %v8704, 125
        %v8925 = vpop.permute.xlu0 %8924
        %8926 = vrot.lane.b32.xlu0 %v8705, 125
        %v8927 = vpop.permute.xlu0 %8926
        %8928 = vrot.lane.b32.xlu0 %v8706, 125
        %v8929 = vpop.permute.xlu0 %8928
        %8930 = vrot.lane.b32.xlu0 %v8707, 125
        %v8931 = vpop.permute.xlu0 %8930
        %v8964 = vadd.f32 %v8836, %v8869
        %v8965 = vadd.f32 %v8837, %v8871
        %v8966 = vadd.f32 %v8838, %v8873
        %v8967 = vadd.f32 %v8839, %v8875
        %v8968 = vadd.f32 %v8840, %v8877
        %v8969 = vadd.f32 %v8841, %v8879
        %v8970 = vadd.f32 %v8842, %v8881
        %v8971 = vadd.f32 %v8843, %v8883
        %v8972 = vadd.f32 %v8844, %v8885
        %v8973 = vadd.f32 %v8845, %v8887
        %v8974 = vadd.f32 %v8846, %v8889
        %v8975 = vadd.f32 %v8847, %v8891
        %v8976 = vadd.f32 %v8848, %v8893
        %v8977 = vadd.f32 %v8849, %v8895
        %v8978 = vadd.f32 %v8850, %v8897
        %v8979 = vadd.f32 %v8851, %v8899
        %v8980 = vadd.f32 %v8852, %v8901
        %v8981 = vadd.f32 %v8853, %v8903
        %v8982 = vadd.f32 %v8854, %v8905
        %v8983 = vadd.f32 %v8855, %v8907
        %v8984 = vadd.f32 %v8856, %v8909
        %v8985 = vadd.f32 %v8857, %v8911
        %v8986 = vadd.f32 %v8858, %v8913
        %v8987 = vadd.f32 %v8859, %v8915
        %v8988 = vadd.f32 %v8860, %v8917
        %v8989 = vadd.f32 %v8861, %v8919
        %v8990 = vadd.f32 %v8862, %v8921
        %v8991 = vadd.f32 %v8863, %v8923
        %v8992 = vadd.f32 %v8864, %v8925
        %v8993 = vadd.f32 %v8865, %v8927
        %v8994 = vadd.f32 %v8866, %v8929
        %v8995 = vadd.f32 %v8867, %v8931
        %8996 = vrot.lane.b32.xlu0 %v7045, 125
        %v8997 = vpop.permute.xlu0 %8996
        %8998 = vrot.lane.b32.xlu0 %v7047, 125
        %v8999 = vpop.permute.xlu0 %8998
        %9000 = vrot.lane.b32.xlu0 %v7049, 125
        %v9001 = vpop.permute.xlu0 %9000
        %9002 = vrot.lane.b32.xlu0 %v7051, 125
        %v9003 = vpop.permute.xlu0 %9002
        %9004 = vrot.lane.b32.xlu0 %v7053, 125
        %v9005 = vpop.permute.xlu0 %9004
        %9006 = vrot.lane.b32.xlu0 %v7055, 125
        %v9007 = vpop.permute.xlu0 %9006
        %9008 = vrot.lane.b32.xlu0 %v7057, 125
        %v9009 = vpop.permute.xlu0 %9008
        %9010 = vrot.lane.b32.xlu0 %v7059, 125
        %v9011 = vpop.permute.xlu0 %9010
        %9012 = vrot.lane.b32.xlu0 %v7061, 125
        %v9013 = vpop.permute.xlu0 %9012
        %9014 = vrot.lane.b32.xlu0 %v7063, 125
        %v9015 = vpop.permute.xlu0 %9014
        %9016 = vrot.lane.b32.xlu0 %v7065, 125
        %v9017 = vpop.permute.xlu0 %9016
        %9018 = vrot.lane.b32.xlu0 %v7067, 125
        %v9019 = vpop.permute.xlu0 %9018
        %9020 = vrot.lane.b32.xlu0 %v7069, 125
        %v9021 = vpop.permute.xlu0 %9020
        %9022 = vrot.lane.b32.xlu0 %v7071, 125
        %v9023 = vpop.permute.xlu0 %9022
        %9024 = vrot.lane.b32.xlu0 %v7073, 125
        %v9025 = vpop.permute.xlu0 %9024
        %9026 = vrot.lane.b32.xlu0 %v7075, 125
        %v9027 = vpop.permute.xlu0 %9026
        %9028 = vrot.lane.b32.xlu0 %v7077, 125
        %v9029 = vpop.permute.xlu0 %9028
        %9030 = vrot.lane.b32.xlu0 %v7079, 125
        %v9031 = vpop.permute.xlu0 %9030
        %9032 = vrot.lane.b32.xlu0 %v7081, 125
        %v9033 = vpop.permute.xlu0 %9032
        %9034 = vrot.lane.b32.xlu0 %v7083, 125
        %v9035 = vpop.permute.xlu0 %9034
        %9036 = vrot.lane.b32.xlu0 %v7085, 125
        %v9037 = vpop.permute.xlu0 %9036
        %9038 = vrot.lane.b32.xlu0 %v7087, 125
        %v9039 = vpop.permute.xlu0 %9038
        %9040 = vrot.lane.b32.xlu0 %v7089, 125
        %v9041 = vpop.permute.xlu0 %9040
        %9042 = vrot.lane.b32.xlu0 %v7091, 125
        %v9043 = vpop.permute.xlu0 %9042
        %9044 = vrot.lane.b32.xlu0 %v7093, 125
        %v9045 = vpop.permute.xlu0 %9044
        %9046 = vrot.lane.b32.xlu0 %v7095, 125
        %v9047 = vpop.permute.xlu0 %9046
        %9048 = vrot.lane.b32.xlu0 %v7097, 125
        %v9049 = vpop.permute.xlu0 %9048
        %9050 = vrot.lane.b32.xlu0 %v7099, 125
        %v9051 = vpop.permute.xlu0 %9050
        %9052 = vrot.lane.b32.xlu0 %v7101, 125
        %v9053 = vpop.permute.xlu0 %9052
        %9054 = vrot.lane.b32.xlu0 %v7103, 125
        %v9055 = vpop.permute.xlu0 %9054
        %9056 = vrot.lane.b32.xlu0 %v7105, 125
        %v9057 = vpop.permute.xlu0 %9056
        %9058 = vrot.lane.b32.xlu0 %v7107, 125
        %v9059 = vpop.permute.xlu0 %9058
        %v9092 = vmul.f32 %v454, %v8997
        %v9093 = vmul.f32 %v457, %v8999
        %v9094 = vmul.f32 %v460, %v9001
        %v9095 = vmul.f32 %v463, %v9003
        %v9096 = vmul.f32 %v466, %v9005
        %v9097 = vmul.f32 %v469, %v9007
        %v9098 = vmul.f32 %v472, %v9009
        %v9099 = vmul.f32 %v475, %v9011
        %v9100 = vmul.f32 %v478, %v9013
        %v9101 = vmul.f32 %v481, %v9015
        %v9102 = vmul.f32 %v484, %v9017
        %v9103 = vmul.f32 %v487, %v9019
        %v9104 = vmul.f32 %v490, %v9021
        %v9105 = vmul.f32 %v493, %v9023
        %v9106 = vmul.f32 %v496, %v9025
        %v9107 = vmul.f32 %v499, %v9027
        %v9108 = vmul.f32 %v502, %v9029
        %v9109 = vmul.f32 %v505, %v9031
        %v9110 = vmul.f32 %v508, %v9033
        %v9111 = vmul.f32 %v511, %v9035
        %v9112 = vmul.f32 %v514, %v9037
        %v9113 = vmul.f32 %v517, %v9039
        %v9114 = vmul.f32 %v520, %v9041
        %v9115 = vmul.f32 %v523, %v9043
        %v9116 = vmul.f32 %v526, %v9045
        %v9117 = vmul.f32 %v529, %v9047
        %v9118 = vmul.f32 %v532, %v9049
        %v9119 = vmul.f32 %v535, %v9051
        %v9120 = vmul.f32 %v538, %v9053
        %v9121 = vmul.f32 %v541, %v9055
        %v9122 = vmul.f32 %v544, %v9057
        %v9123 = vmul.f32 %v547, %v9059
        %9124 = vrot.lane.b32.xlu0 %v7684, 127
        %v9125 = vpop.permute.xlu0 %9124
        %9126 = vrot.lane.b32.xlu0 %v7685, 127
        %v9127 = vpop.permute.xlu0 %9126
        %9128 = vrot.lane.b32.xlu0 %v7686, 127
        %v9129 = vpop.permute.xlu0 %9128
        %9130 = vrot.lane.b32.xlu0 %v7687, 127
        %v9131 = vpop.permute.xlu0 %9130
        %9132 = vrot.lane.b32.xlu0 %v7688, 127
        %v9133 = vpop.permute.xlu0 %9132
        %9134 = vrot.lane.b32.xlu0 %v7689, 127
        %v9135 = vpop.permute.xlu0 %9134
        %9136 = vrot.lane.b32.xlu0 %v7690, 127
        %v9137 = vpop.permute.xlu0 %9136
        %9138 = vrot.lane.b32.xlu0 %v7691, 127
        %v9139 = vpop.permute.xlu0 %9138
        %9140 = vrot.lane.b32.xlu0 %v7692, 127
        %v9141 = vpop.permute.xlu0 %9140
        %9142 = vrot.lane.b32.xlu0 %v7693, 127
        %v9143 = vpop.permute.xlu0 %9142
        %9144 = vrot.lane.b32.xlu0 %v7694, 127
        %v9145 = vpop.permute.xlu0 %9144
        %9146 = vrot.lane.b32.xlu0 %v7695, 127
        %v9147 = vpop.permute.xlu0 %9146
        %9148 = vrot.lane.b32.xlu0 %v7696, 127
        %v9149 = vpop.permute.xlu0 %9148
        %9150 = vrot.lane.b32.xlu0 %v7697, 127
        %v9151 = vpop.permute.xlu0 %9150
        %9152 = vrot.lane.b32.xlu0 %v7698, 127
        %v9153 = vpop.permute.xlu0 %9152
        %9154 = vrot.lane.b32.xlu0 %v7699, 127
        %v9155 = vpop.permute.xlu0 %9154
        %9156 = vrot.lane.b32.xlu0 %v7700, 127
        %v9157 = vpop.permute.xlu0 %9156
        %9158 = vrot.lane.b32.xlu0 %v7701, 127
        %v9159 = vpop.permute.xlu0 %9158
        %9160 = vrot.lane.b32.xlu0 %v7702, 127
        %v9161 = vpop.permute.xlu0 %9160
        %9162 = vrot.lane.b32.xlu0 %v7703, 127
        %v9163 = vpop.permute.xlu0 %9162
        %9164 = vrot.lane.b32.xlu0 %v7704, 127
        %v9165 = vpop.permute.xlu0 %9164
        %9166 = vrot.lane.b32.xlu0 %v7705, 127
        %v9167 = vpop.permute.xlu0 %9166
        %9168 = vrot.lane.b32.xlu0 %v7706, 127
        %v9169 = vpop.permute.xlu0 %9168
        %9170 = vrot.lane.b32.xlu0 %v7707, 127
        %v9171 = vpop.permute.xlu0 %9170
        %9172 = vrot.lane.b32.xlu0 %v7708, 127
        %v9173 = vpop.permute.xlu0 %9172
        %9174 = vrot.lane.b32.xlu0 %v7709, 127
        %v9175 = vpop.permute.xlu0 %9174
        %9176 = vrot.lane.b32.xlu0 %v7710, 127
        %v9177 = vpop.permute.xlu0 %9176
        %9178 = vrot.lane.b32.xlu0 %v7711, 127
        %v9179 = vpop.permute.xlu0 %9178
        %9180 = vrot.lane.b32.xlu0 %v7712, 127
        %v9181 = vpop.permute.xlu0 %9180
        %9182 = vrot.lane.b32.xlu0 %v7713, 127
        %v9183 = vpop.permute.xlu0 %9182
        %9184 = vrot.lane.b32.xlu0 %v7714, 127
        %v9185 = vpop.permute.xlu0 %9184
        %9186 = vrot.lane.b32.xlu0 %v7715, 127
        %v9187 = vpop.permute.xlu0 %9186
        %v9220 = vadd.f32 %v9092, %v9125
        %v9221 = vadd.f32 %v9093, %v9127
        %v9222 = vadd.f32 %v9094, %v9129
        %v9223 = vadd.f32 %v9095, %v9131
        %v9224 = vadd.f32 %v9096, %v9133
        %v9225 = vadd.f32 %v9097, %v9135
        %v9226 = vadd.f32 %v9098, %v9137
        %v9227 = vadd.f32 %v9099, %v9139
        %v9228 = vadd.f32 %v9100, %v9141
        %v9229 = vadd.f32 %v9101, %v9143
        %v9230 = vadd.f32 %v9102, %v9145
        %v9231 = vadd.f32 %v9103, %v9147
        %v9232 = vadd.f32 %v9104, %v9149
        %v9233 = vadd.f32 %v9105, %v9151
        %v9234 = vadd.f32 %v9106, %v9153
        %v9235 = vadd.f32 %v9107, %v9155
        %v9236 = vadd.f32 %v9108, %v9157
        %v9237 = vadd.f32 %v9109, %v9159
        %v9238 = vadd.f32 %v9110, %v9161
        %v9239 = vadd.f32 %v9111, %v9163
        %v9240 = vadd.f32 %v9112, %v9165
        %v9241 = vadd.f32 %v9113, %v9167
        %v9242 = vadd.f32 %v9114, %v9169
        %v9243 = vadd.f32 %v9115, %v9171
        %v9244 = vadd.f32 %v9116, %v9173
        %v9245 = vadd.f32 %v9117, %v9175
        %v9246 = vadd.f32 %v9118, %v9177
        %v9247 = vadd.f32 %v9119, %v9179
        %v9248 = vadd.f32 %v9120, %v9181
        %v9249 = vadd.f32 %v9121, %v9183
        %v9250 = vadd.f32 %v9122, %v9185
        %v9251 = vadd.f32 %v9123, %v9187
        %9252 = vrot.lane.b32.xlu0 %v7812, 126
        %v9253 = vpop.permute.xlu0 %9252
        %9254 = vrot.lane.b32.xlu0 %v7813, 126
        %v9255 = vpop.permute.xlu0 %9254
        %9256 = vrot.lane.b32.xlu0 %v7814, 126
        %v9257 = vpop.permute.xlu0 %9256
        %9258 = vrot.lane.b32.xlu0 %v7815, 126
        %v9259 = vpop.permute.xlu0 %9258
        %9260 = vrot.lane.b32.xlu0 %v7816, 126
        %v9261 = vpop.permute.xlu0 %9260
        %9262 = vrot.lane.b32.xlu0 %v7817, 126
        %v9263 = vpop.permute.xlu0 %9262
        %9264 = vrot.lane.b32.xlu0 %v7818, 126
        %v9265 = vpop.permute.xlu0 %9264
        %9266 = vrot.lane.b32.xlu0 %v7819, 126
        %v9267 = vpop.permute.xlu0 %9266
        %9268 = vrot.lane.b32.xlu0 %v7820, 126
        %v9269 = vpop.permute.xlu0 %9268
        %9270 = vrot.lane.b32.xlu0 %v7821, 126
        %v9271 = vpop.permute.xlu0 %9270
        %9272 = vrot.lane.b32.xlu0 %v7822, 126
        %v9273 = vpop.permute.xlu0 %9272
        %9274 = vrot.lane.b32.xlu0 %v7823, 126
        %v9275 = vpop.permute.xlu0 %9274
        %9276 = vrot.lane.b32.xlu0 %v7824, 126
        %v9277 = vpop.permute.xlu0 %9276
        %9278 = vrot.lane.b32.xlu0 %v7825, 126
        %v9279 = vpop.permute.xlu0 %9278
        %9280 = vrot.lane.b32.xlu0 %v7826, 126
        %v9281 = vpop.permute.xlu0 %9280
        %9282 = vrot.lane.b32.xlu0 %v7827, 126
        %v9283 = vpop.permute.xlu0 %9282
        %9284 = vrot.lane.b32.xlu0 %v7828, 126
        %v9285 = vpop.permute.xlu0 %9284
        %9286 = vrot.lane.b32.xlu0 %v7829, 126
        %v9287 = vpop.permute.xlu0 %9286
        %9288 = vrot.lane.b32.xlu0 %v7830, 126
        %v9289 = vpop.permute.xlu0 %9288
        %9290 = vrot.lane.b32.xlu0 %v7831, 126
        %v9291 = vpop.permute.xlu0 %9290
        %9292 = vrot.lane.b32.xlu0 %v7832, 126
        %v9293 = vpop.permute.xlu0 %9292
        %9294 = vrot.lane.b32.xlu0 %v7833, 126
        %v9295 = vpop.permute.xlu0 %9294
        %9296 = vrot.lane.b32.xlu0 %v7834, 126
        %v9297 = vpop.permute.xlu0 %9296
        %9298 = vrot.lane.b32.xlu0 %v7835, 126
        %v9299 = vpop.permute.xlu0 %9298
        %9300 = vrot.lane.b32.xlu0 %v7836, 126
        %v9301 = vpop.permute.xlu0 %9300
        %9302 = vrot.lane.b32.xlu0 %v7837, 126
        %v9303 = vpop.permute.xlu0 %9302
        %9304 = vrot.lane.b32.xlu0 %v7838, 126
        %v9305 = vpop.permute.xlu0 %9304
        %9306 = vrot.lane.b32.xlu0 %v7839, 126
        %v9307 = vpop.permute.xlu0 %9306
        %9308 = vrot.lane.b32.xlu0 %v7840, 126
        %v9309 = vpop.permute.xlu0 %9308
        %9310 = vrot.lane.b32.xlu0 %v7841, 126
        %v9311 = vpop.permute.xlu0 %9310
        %9312 = vrot.lane.b32.xlu0 %v7842, 126
        %v9313 = vpop.permute.xlu0 %9312
        %9314 = vrot.lane.b32.xlu0 %v7843, 126
        %v9315 = vpop.permute.xlu0 %9314
        %v9348 = vsub.f32 %v9220, %v9253
        %v9349 = vsub.f32 %v9221, %v9255
        %v9350 = vsub.f32 %v9222, %v9257
        %v9351 = vsub.f32 %v9223, %v9259
        %v9352 = vsub.f32 %v9224, %v9261
        %v9353 = vsub.f32 %v9225, %v9263
        %v9354 = vsub.f32 %v9226, %v9265
        %v9355 = vsub.f32 %v9227, %v9267
        %v9356 = vsub.f32 %v9228, %v9269
        %v9357 = vsub.f32 %v9229, %v9271
        %v9358 = vsub.f32 %v9230, %v9273
        %v9359 = vsub.f32 %v9231, %v9275
        %v9360 = vsub.f32 %v9232, %v9277
        %v9361 = vsub.f32 %v9233, %v9279
        %v9362 = vsub.f32 %v9234, %v9281
        %v9363 = vsub.f32 %v9235, %v9283
        %v9364 = vsub.f32 %v9236, %v9285
        %v9365 = vsub.f32 %v9237, %v9287
        %v9366 = vsub.f32 %v9238, %v9289
        %v9367 = vsub.f32 %v9239, %v9291
        %v9368 = vsub.f32 %v9240, %v9293
        %v9369 = vsub.f32 %v9241, %v9295
        %v9370 = vsub.f32 %v9242, %v9297
        %v9371 = vsub.f32 %v9243, %v9299
        %v9372 = vsub.f32 %v9244, %v9301
        %v9373 = vsub.f32 %v9245, %v9303
        %v9374 = vsub.f32 %v9246, %v9305
        %v9375 = vsub.f32 %v9247, %v9307
        %v9376 = vsub.f32 %v9248, %v9309
        %v9377 = vsub.f32 %v9249, %v9311
        %v9378 = vsub.f32 %v9250, %v9313
        %v9379 = vsub.f32 %v9251, %v9315
        %9380 = vrot.lane.b32.xlu0 %v7045, 3
        %v9381 = vpop.permute.xlu0 %9380
        %9382 = vrot.lane.b32.xlu0 %v7047, 3
        %v9383 = vpop.permute.xlu0 %9382
        %9384 = vrot.lane.b32.xlu0 %v7049, 3
        %v9385 = vpop.permute.xlu0 %9384
        %9386 = vrot.lane.b32.xlu0 %v7051, 3
        %v9387 = vpop.permute.xlu0 %9386
        %9388 = vrot.lane.b32.xlu0 %v7053, 3
        %v9389 = vpop.permute.xlu0 %9388
        %9390 = vrot.lane.b32.xlu0 %v7055, 3
        %v9391 = vpop.permute.xlu0 %9390
        %9392 = vrot.lane.b32.xlu0 %v7057, 3
        %v9393 = vpop.permute.xlu0 %9392
        %9394 = vrot.lane.b32.xlu0 %v7059, 3
        %v9395 = vpop.permute.xlu0 %9394
        %9396 = vrot.lane.b32.xlu0 %v7061, 3
        %v9397 = vpop.permute.xlu0 %9396
        %9398 = vrot.lane.b32.xlu0 %v7063, 3
        %v9399 = vpop.permute.xlu0 %9398
        %9400 = vrot.lane.b32.xlu0 %v7065, 3
        %v9401 = vpop.permute.xlu0 %9400
        %9402 = vrot.lane.b32.xlu0 %v7067, 3
        %v9403 = vpop.permute.xlu0 %9402
        %9404 = vrot.lane.b32.xlu0 %v7069, 3
        %v9405 = vpop.permute.xlu0 %9404
        %9406 = vrot.lane.b32.xlu0 %v7071, 3
        %v9407 = vpop.permute.xlu0 %9406
        %9408 = vrot.lane.b32.xlu0 %v7073, 3
        %v9409 = vpop.permute.xlu0 %9408
        %9410 = vrot.lane.b32.xlu0 %v7075, 3
        %v9411 = vpop.permute.xlu0 %9410
        %9412 = vrot.lane.b32.xlu0 %v7077, 3
        %v9413 = vpop.permute.xlu0 %9412
        %9414 = vrot.lane.b32.xlu0 %v7079, 3
        %v9415 = vpop.permute.xlu0 %9414
        %9416 = vrot.lane.b32.xlu0 %v7081, 3
        %v9417 = vpop.permute.xlu0 %9416
        %9418 = vrot.lane.b32.xlu0 %v7083, 3
        %v9419 = vpop.permute.xlu0 %9418
        %9420 = vrot.lane.b32.xlu0 %v7085, 3
        %v9421 = vpop.permute.xlu0 %9420
        %9422 = vrot.lane.b32.xlu0 %v7087, 3
        %v9423 = vpop.permute.xlu0 %9422
        %9424 = vrot.lane.b32.xlu0 %v7089, 3
        %v9425 = vpop.permute.xlu0 %9424
        %9426 = vrot.lane.b32.xlu0 %v7091, 3
        %v9427 = vpop.permute.xlu0 %9426
        %9428 = vrot.lane.b32.xlu0 %v7093, 3
        %v9429 = vpop.permute.xlu0 %9428
        %9430 = vrot.lane.b32.xlu0 %v7095, 3
        %v9431 = vpop.permute.xlu0 %9430
        %9432 = vrot.lane.b32.xlu0 %v7097, 3
        %v9433 = vpop.permute.xlu0 %9432
        %9434 = vrot.lane.b32.xlu0 %v7099, 3
        %v9435 = vpop.permute.xlu0 %9434
        %9436 = vrot.lane.b32.xlu0 %v7101, 3
        %v9437 = vpop.permute.xlu0 %9436
        %9438 = vrot.lane.b32.xlu0 %v7103, 3
        %v9439 = vpop.permute.xlu0 %9438
        %9440 = vrot.lane.b32.xlu0 %v7105, 3
        %v9441 = vpop.permute.xlu0 %9440
        %9442 = vrot.lane.b32.xlu0 %v7107, 3
        %v9443 = vpop.permute.xlu0 %9442
        %v9476 = vmul.f32 %v454, %v9381
        %v9477 = vmul.f32 %v457, %v9383
        %v9478 = vmul.f32 %v460, %v9385
        %v9479 = vmul.f32 %v463, %v9387
        %v9480 = vmul.f32 %v466, %v9389
        %v9481 = vmul.f32 %v469, %v9391
        %v9482 = vmul.f32 %v472, %v9393
        %v9483 = vmul.f32 %v475, %v9395
        %v9484 = vmul.f32 %v478, %v9397
        %v9485 = vmul.f32 %v481, %v9399
        %v9486 = vmul.f32 %v484, %v9401
        %v9487 = vmul.f32 %v487, %v9403
        %v9488 = vmul.f32 %v490, %v9405
        %v9489 = vmul.f32 %v493, %v9407
        %v9490 = vmul.f32 %v496, %v9409
        %v9491 = vmul.f32 %v499, %v9411
        %v9492 = vmul.f32 %v502, %v9413
        %v9493 = vmul.f32 %v505, %v9415
        %v9494 = vmul.f32 %v508, %v9417
        %v9495 = vmul.f32 %v511, %v9419
        %v9496 = vmul.f32 %v514, %v9421
        %v9497 = vmul.f32 %v517, %v9423
        %v9498 = vmul.f32 %v520, %v9425
        %v9499 = vmul.f32 %v523, %v9427
        %v9500 = vmul.f32 %v526, %v9429
        %v9501 = vmul.f32 %v529, %v9431
        %v9502 = vmul.f32 %v532, %v9433
        %v9503 = vmul.f32 %v535, %v9435
        %v9504 = vmul.f32 %v538, %v9437
        %v9505 = vmul.f32 %v541, %v9439
        %v9506 = vmul.f32 %v544, %v9441
        %v9507 = vmul.f32 %v547, %v9443
        %9540 = vrot.lane.b32.xlu0 %v9476, 125
        %v9541 = vpop.permute.xlu0 %9540
        %9542 = vrot.lane.b32.xlu0 %v9477, 125
        %v9543 = vpop.permute.xlu0 %9542
        %9544 = vrot.lane.b32.xlu0 %v9478, 125
        %v9545 = vpop.permute.xlu0 %9544
        %9546 = vrot.lane.b32.xlu0 %v9479, 125
        %v9547 = vpop.permute.xlu0 %9546
        %9548 = vrot.lane.b32.xlu0 %v9480, 125
        %v9549 = vpop.permute.xlu0 %9548
        %9550 = vrot.lane.b32.xlu0 %v9481, 125
        %v9551 = vpop.permute.xlu0 %9550
        %9552 = vrot.lane.b32.xlu0 %v9482, 125
        %v9553 = vpop.permute.xlu0 %9552
        %9554 = vrot.lane.b32.xlu0 %v9483, 125
        %v9555 = vpop.permute.xlu0 %9554
        %9556 = vrot.lane.b32.xlu0 %v9484, 125
        %v9557 = vpop.permute.xlu0 %9556
        %9558 = vrot.lane.b32.xlu0 %v9485, 125
        %v9559 = vpop.permute.xlu0 %9558
        %9560 = vrot.lane.b32.xlu0 %v9486, 125
        %v9561 = vpop.permute.xlu0 %9560
        %9562 = vrot.lane.b32.xlu0 %v9487, 125
        %v9563 = vpop.permute.xlu0 %9562
        %9564 = vrot.lane.b32.xlu0 %v9488, 125
        %v9565 = vpop.permute.xlu0 %9564
        %9566 = vrot.lane.b32.xlu0 %v9489, 125
        %v9567 = vpop.permute.xlu0 %9566
        %9568 = vrot.lane.b32.xlu0 %v9490, 125
        %v9569 = vpop.permute.xlu0 %9568
        %9570 = vrot.lane.b32.xlu0 %v9491, 125
        %v9571 = vpop.permute.xlu0 %9570
        %9572 = vrot.lane.b32.xlu0 %v9492, 125
        %v9573 = vpop.permute.xlu0 %9572
        %9574 = vrot.lane.b32.xlu0 %v9493, 125
        %v9575 = vpop.permute.xlu0 %9574
        %9576 = vrot.lane.b32.xlu0 %v9494, 125
        %v9577 = vpop.permute.xlu0 %9576
        %9578 = vrot.lane.b32.xlu0 %v9495, 125
        %v9579 = vpop.permute.xlu0 %9578
        %9580 = vrot.lane.b32.xlu0 %v9496, 125
        %v9581 = vpop.permute.xlu0 %9580
        %9582 = vrot.lane.b32.xlu0 %v9497, 125
        %v9583 = vpop.permute.xlu0 %9582
        %9584 = vrot.lane.b32.xlu0 %v9498, 125
        %v9585 = vpop.permute.xlu0 %9584
        %9586 = vrot.lane.b32.xlu0 %v9499, 125
        %v9587 = vpop.permute.xlu0 %9586
        %9588 = vrot.lane.b32.xlu0 %v9500, 125
        %v9589 = vpop.permute.xlu0 %9588
        %9590 = vrot.lane.b32.xlu0 %v9501, 125
        %v9591 = vpop.permute.xlu0 %9590
        %9592 = vrot.lane.b32.xlu0 %v9502, 125
        %v9593 = vpop.permute.xlu0 %9592
        %9594 = vrot.lane.b32.xlu0 %v9503, 125
        %v9595 = vpop.permute.xlu0 %9594
        %9596 = vrot.lane.b32.xlu0 %v9504, 125
        %v9597 = vpop.permute.xlu0 %9596
        %9598 = vrot.lane.b32.xlu0 %v9505, 125
        %v9599 = vpop.permute.xlu0 %9598
        %9600 = vrot.lane.b32.xlu0 %v9506, 125
        %v9601 = vpop.permute.xlu0 %9600
        %9602 = vrot.lane.b32.xlu0 %v9507, 125
        %v9603 = vpop.permute.xlu0 %9602
        %v9636 = vadd.f32 %v9348, %v9541
        %v9637 = vadd.f32 %v9349, %v9543
        %v9638 = vadd.f32 %v9350, %v9545
        %v9639 = vadd.f32 %v9351, %v9547
        %v9640 = vadd.f32 %v9352, %v9549
        %v9641 = vadd.f32 %v9353, %v9551
        %v9642 = vadd.f32 %v9354, %v9553
        %v9643 = vadd.f32 %v9355, %v9555
        %v9644 = vadd.f32 %v9356, %v9557
        %v9645 = vadd.f32 %v9357, %v9559
        %v9646 = vadd.f32 %v9358, %v9561
        %v9647 = vadd.f32 %v9359, %v9563
        %v9648 = vadd.f32 %v9360, %v9565
        %v9649 = vadd.f32 %v9361, %v9567
        %v9650 = vadd.f32 %v9362, %v9569
        %v9651 = vadd.f32 %v9363, %v9571
        %v9652 = vadd.f32 %v9364, %v9573
        %v9653 = vadd.f32 %v9365, %v9575
        %v9654 = vadd.f32 %v9366, %v9577
        %v9655 = vadd.f32 %v9367, %v9579
        %v9656 = vadd.f32 %v9368, %v9581
        %v9657 = vadd.f32 %v9369, %v9583
        %v9658 = vadd.f32 %v9370, %v9585
        %v9659 = vadd.f32 %v9371, %v9587
        %v9660 = vadd.f32 %v9372, %v9589
        %v9661 = vadd.f32 %v9373, %v9591
        %v9662 = vadd.f32 %v9374, %v9593
        %v9663 = vadd.f32 %v9375, %v9595
        %v9664 = vadd.f32 %v9376, %v9597
        %v9665 = vadd.f32 %v9377, %v9599
        %v9666 = vadd.f32 %v9378, %v9601
        %v9667 = vadd.f32 %v9379, %v9603
        %v9668 = vadd.f32 %v454, %v6307
        %v9669 = vadd.f32 %v457, %v6308
        %v9670 = vadd.f32 %v460, %v6309
        %v9671 = vadd.f32 %v463, %v6310
        %v9672 = vadd.f32 %v466, %v6311
        %v9673 = vadd.f32 %v469, %v6312
        %v9674 = vadd.f32 %v472, %v6313
        %v9675 = vadd.f32 %v475, %v6314
        %v9676 = vadd.f32 %v478, %v6315
        %v9677 = vadd.f32 %v481, %v6316
        %v9678 = vadd.f32 %v484, %v6317
        %v9679 = vadd.f32 %v487, %v6318
        %v9680 = vadd.f32 %v490, %v6319
        %v9681 = vadd.f32 %v493, %v6320
        %v9682 = vadd.f32 %v496, %v6321
        %v9683 = vadd.f32 %v499, %v6322
        %v9684 = vadd.f32 %v502, %v6323
        %v9685 = vadd.f32 %v505, %v6324
        %v9686 = vadd.f32 %v508, %v6325
        %v9687 = vadd.f32 %v511, %v6326
        %v9688 = vadd.f32 %v514, %v6327
        %v9689 = vadd.f32 %v517, %v6328
        %v9690 = vadd.f32 %v520, %v6329
        %v9691 = vadd.f32 %v523, %v6330
        %v9692 = vadd.f32 %v526, %v6331
        %v9693 = vadd.f32 %v529, %v6332
        %v9694 = vadd.f32 %v532, %v6333
        %v9695 = vadd.f32 %v535, %v6334
        %v9696 = vadd.f32 %v538, %v6335
        %v9697 = vadd.f32 %v541, %v6336
        %v9698 = vadd.f32 %v544, %v6337
        %v9699 = vadd.f32 %v547, %v6338
        %v9700 = vadd.f32 %v454, %v6468
        %v9701 = vadd.f32 %v457, %v6470
        %v9702 = vadd.f32 %v460, %v6472
        %v9703 = vadd.f32 %v463, %v6474
        %v9704 = vadd.f32 %v466, %v6476
        %v9705 = vadd.f32 %v469, %v6478
        %v9706 = vadd.f32 %v472, %v6480
        %v9707 = vadd.f32 %v475, %v6482
        %v9708 = vadd.f32 %v478, %v6484
        %v9709 = vadd.f32 %v481, %v6486
        %v9710 = vadd.f32 %v484, %v6488
        %v9711 = vadd.f32 %v487, %v6490
        %v9712 = vadd.f32 %v490, %v6492
        %v9713 = vadd.f32 %v493, %v6494
        %v9714 = vadd.f32 %v496, %v6496
        %v9715 = vadd.f32 %v499, %v6498
        %v9716 = vadd.f32 %v502, %v6500
        %v9717 = vadd.f32 %v505, %v6502
        %v9718 = vadd.f32 %v508, %v6504
        %v9719 = vadd.f32 %v511, %v6506
        %v9720 = vadd.f32 %v514, %v6508
        %v9721 = vadd.f32 %v517, %v6510
        %v9722 = vadd.f32 %v520, %v6512
        %v9723 = vadd.f32 %v523, %v6514
        %v9724 = vadd.f32 %v526, %v6516
        %v9725 = vadd.f32 %v529, %v6518
        %v9726 = vadd.f32 %v532, %v6520
        %v9727 = vadd.f32 %v535, %v6522
        %v9728 = vadd.f32 %v538, %v6524
        %v9729 = vadd.f32 %v541, %v6526
        %v9730 = vadd.f32 %v544, %v6528
        %v9731 = vadd.f32 %v547, %v6530
        %v9732 = vadd.f32 %v454, %v6117
        %v9733 = vadd.f32 %v457, %v6122
        %v9734 = vadd.f32 %v460, %v6127
        %v9735 = vadd.f32 %v463, %v6132
        %v9736 = vadd.f32 %v466, %v6137
        %v9737 = vadd.f32 %v469, %v6142
        %v9738 = vadd.f32 %v472, %v6147
        %v9739 = vadd.f32 %v475, %v6152
        %v9740 = vadd.f32 %v478, %v6157
        %v9741 = vadd.f32 %v481, %v6162
        %v9742 = vadd.f32 %v484, %v6167
        %v9743 = vadd.f32 %v487, %v6172
        %v9744 = vadd.f32 %v490, %v6177
        %v9745 = vadd.f32 %v493, %v6182
        %v9746 = vadd.f32 %v496, %v6187
        %v9747 = vadd.f32 %v499, %v6192
        %v9748 = vadd.f32 %v502, %v6197
        %v9749 = vadd.f32 %v505, %v6202
        %v9750 = vadd.f32 %v508, %v6207
        %v9751 = vadd.f32 %v511, %v6212
        %v9752 = vadd.f32 %v514, %v6217
        %v9753 = vadd.f32 %v517, %v6222
        %v9754 = vadd.f32 %v520, %v6227
        %v9755 = vadd.f32 %v523, %v6232
        %v9756 = vadd.f32 %v526, %v6237
        %v9757 = vadd.f32 %v529, %v6242
        %v9758 = vadd.f32 %v532, %v6247
        %v9759 = vadd.f32 %v535, %v6252
        %v9760 = vadd.f32 %v538, %v6257
        %v9761 = vadd.f32 %v541, %v6262
        %v9762 = vadd.f32 %v544, %v6267
        %v9763 = vadd.f32 %v547, %v6272
        %9796 = vrot.lane.b32.xlu0 %v8260, 1
        %v9797 = vpop.permute.xlu0 %9796
        %9798 = vrot.lane.b32.xlu0 %v8261, 1
        %v9799 = vpop.permute.xlu0 %9798
        %9800 = vrot.lane.b32.xlu0 %v8262, 1
        %v9801 = vpop.permute.xlu0 %9800
        %9802 = vrot.lane.b32.xlu0 %v8263, 1
        %v9803 = vpop.permute.xlu0 %9802
        %9804 = vrot.lane.b32.xlu0 %v8264, 1
        %v9805 = vpop.permute.xlu0 %9804
        %9806 = vrot.lane.b32.xlu0 %v8265, 1
        %v9807 = vpop.permute.xlu0 %9806
        %9808 = vrot.lane.b32.xlu0 %v8266, 1
        %v9809 = vpop.permute.xlu0 %9808
        %9810 = vrot.lane.b32.xlu0 %v8267, 1
        %v9811 = vpop.permute.xlu0 %9810
        %9812 = vrot.lane.b32.xlu0 %v8268, 1
        %v9813 = vpop.permute.xlu0 %9812
        %9814 = vrot.lane.b32.xlu0 %v8269, 1
        %v9815 = vpop.permute.xlu0 %9814
        %9816 = vrot.lane.b32.xlu0 %v8270, 1
        %v9817 = vpop.permute.xlu0 %9816
        %9818 = vrot.lane.b32.xlu0 %v8271, 1
        %v9819 = vpop.permute.xlu0 %9818
        %9820 = vrot.lane.b32.xlu0 %v8272, 1
        %v9821 = vpop.permute.xlu0 %9820
        %9822 = vrot.lane.b32.xlu0 %v8273, 1
        %v9823 = vpop.permute.xlu0 %9822
        %9824 = vrot.lane.b32.xlu0 %v8274, 1
        %v9825 = vpop.permute.xlu0 %9824
        %9826 = vrot.lane.b32.xlu0 %v8275, 1
        %v9827 = vpop.permute.xlu0 %9826
        %9828 = vrot.lane.b32.xlu0 %v8276, 1
        %v9829 = vpop.permute.xlu0 %9828
        %9830 = vrot.lane.b32.xlu0 %v8277, 1
        %v9831 = vpop.permute.xlu0 %9830
        %9832 = vrot.lane.b32.xlu0 %v8278, 1
        %v9833 = vpop.permute.xlu0 %9832
        %9834 = vrot.lane.b32.xlu0 %v8279, 1
        %v9835 = vpop.permute.xlu0 %9834
        %9836 = vrot.lane.b32.xlu0 %v8280, 1
        %v9837 = vpop.permute.xlu0 %9836
        %9838 = vrot.lane.b32.xlu0 %v8281, 1
        %v9839 = vpop.permute.xlu0 %9838
        %9840 = vrot.lane.b32.xlu0 %v8282, 1
        %v9841 = vpop.permute.xlu0 %9840
        %9842 = vrot.lane.b32.xlu0 %v8283, 1
        %v9843 = vpop.permute.xlu0 %9842
        %9844 = vrot.lane.b32.xlu0 %v8284, 1
        %v9845 = vpop.permute.xlu0 %9844
        %9846 = vrot.lane.b32.xlu0 %v8285, 1
        %v9847 = vpop.permute.xlu0 %9846
        %9848 = vrot.lane.b32.xlu0 %v8286, 1
        %v9849 = vpop.permute.xlu0 %9848
        %9850 = vrot.lane.b32.xlu0 %v8287, 1
        %v9851 = vpop.permute.xlu0 %9850
        %9852 = vrot.lane.b32.xlu0 %v8288, 1
        %v9853 = vpop.permute.xlu0 %9852
        %9854 = vrot.lane.b32.xlu0 %v8289, 1
        %v9855 = vpop.permute.xlu0 %9854
        %9856 = vrot.lane.b32.xlu0 %v8290, 1
        %v9857 = vpop.permute.xlu0 %9856
        %9858 = vrot.lane.b32.xlu0 %v8291, 1
        %v9859 = vpop.permute.xlu0 %9858
        %9924 = vrot.lane.b32.xlu0 %v8964, 2
        %v9925 = vpop.permute.xlu0 %9924
        %9926 = vrot.lane.b32.xlu0 %v8965, 2
        %v9927 = vpop.permute.xlu0 %9926
        %9928 = vrot.lane.b32.xlu0 %v8966, 2
        %v9929 = vpop.permute.xlu0 %9928
        %9930 = vrot.lane.b32.xlu0 %v8967, 2
        %v9931 = vpop.permute.xlu0 %9930
        %9932 = vrot.lane.b32.xlu0 %v8968, 2
        %v9933 = vpop.permute.xlu0 %9932
        %9934 = vrot.lane.b32.xlu0 %v8969, 2
        %v9935 = vpop.permute.xlu0 %9934
        %9936 = vrot.lane.b32.xlu0 %v8970, 2
        %v9937 = vpop.permute.xlu0 %9936
        %9938 = vrot.lane.b32.xlu0 %v8971, 2
        %v9939 = vpop.permute.xlu0 %9938
        %9940 = vrot.lane.b32.xlu0 %v8972, 2
        %v9941 = vpop.permute.xlu0 %9940
        %9942 = vrot.lane.b32.xlu0 %v8973, 2
        %v9943 = vpop.permute.xlu0 %9942
        %9944 = vrot.lane.b32.xlu0 %v8974, 2
        %v9945 = vpop.permute.xlu0 %9944
        %9946 = vrot.lane.b32.xlu0 %v8975, 2
        %v9947 = vpop.permute.xlu0 %9946
        %9948 = vrot.lane.b32.xlu0 %v8976, 2
        %v9949 = vpop.permute.xlu0 %9948
        %9950 = vrot.lane.b32.xlu0 %v8977, 2
        %v9951 = vpop.permute.xlu0 %9950
        %9952 = vrot.lane.b32.xlu0 %v8978, 2
        %v9953 = vpop.permute.xlu0 %9952
        %9954 = vrot.lane.b32.xlu0 %v8979, 2
        %v9955 = vpop.permute.xlu0 %9954
        %9956 = vrot.lane.b32.xlu0 %v8980, 2
        %v9957 = vpop.permute.xlu0 %9956
        %9958 = vrot.lane.b32.xlu0 %v8981, 2
        %v9959 = vpop.permute.xlu0 %9958
        %9960 = vrot.lane.b32.xlu0 %v8982, 2
        %v9961 = vpop.permute.xlu0 %9960
        %9962 = vrot.lane.b32.xlu0 %v8983, 2
        %v9963 = vpop.permute.xlu0 %9962
        %9964 = vrot.lane.b32.xlu0 %v8984, 2
        %v9965 = vpop.permute.xlu0 %9964
        %9966 = vrot.lane.b32.xlu0 %v8985, 2
        %v9967 = vpop.permute.xlu0 %9966
        %9968 = vrot.lane.b32.xlu0 %v8986, 2
        %v9969 = vpop.permute.xlu0 %9968
        %9970 = vrot.lane.b32.xlu0 %v8987, 2
        %v9971 = vpop.permute.xlu0 %9970
        %9972 = vrot.lane.b32.xlu0 %v8988, 2
        %v9973 = vpop.permute.xlu0 %9972
        %9974 = vrot.lane.b32.xlu0 %v8989, 2
        %v9975 = vpop.permute.xlu0 %9974
        %9976 = vrot.lane.b32.xlu0 %v8990, 2
        %v9977 = vpop.permute.xlu0 %9976
        %9978 = vrot.lane.b32.xlu0 %v8991, 2
        %v9979 = vpop.permute.xlu0 %9978
        %9980 = vrot.lane.b32.xlu0 %v8992, 2
        %v9981 = vpop.permute.xlu0 %9980
        %9982 = vrot.lane.b32.xlu0 %v8993, 2
        %v9983 = vpop.permute.xlu0 %9982
        %9984 = vrot.lane.b32.xlu0 %v8994, 2
        %v9985 = vpop.permute.xlu0 %9984
        %9986 = vrot.lane.b32.xlu0 %v8995, 2
        %v9987 = vpop.permute.xlu0 %9986
        %10052 = vrot.lane.b32.xlu0 %v9636, 3
        %v10053 = vpop.permute.xlu0 %10052
        %10054 = vrot.lane.b32.xlu0 %v9637, 3
        %v10055 = vpop.permute.xlu0 %10054
        %10056 = vrot.lane.b32.xlu0 %v9638, 3
        %v10057 = vpop.permute.xlu0 %10056
        %10058 = vrot.lane.b32.xlu0 %v9639, 3
        %v10059 = vpop.permute.xlu0 %10058
        %10060 = vrot.lane.b32.xlu0 %v9640, 3
        %v10061 = vpop.permute.xlu0 %10060
        %10062 = vrot.lane.b32.xlu0 %v9641, 3
        %v10063 = vpop.permute.xlu0 %10062
        %10064 = vrot.lane.b32.xlu0 %v9642, 3
        %v10065 = vpop.permute.xlu0 %10064
        %10066 = vrot.lane.b32.xlu0 %v9643, 3
        %v10067 = vpop.permute.xlu0 %10066
        %10068 = vrot.lane.b32.xlu0 %v9644, 3
        %v10069 = vpop.permute.xlu0 %10068
        %10070 = vrot.lane.b32.xlu0 %v9645, 3
        %v10071 = vpop.permute.xlu0 %10070
        %10072 = vrot.lane.b32.xlu0 %v9646, 3
        %v10073 = vpop.permute.xlu0 %10072
        %10074 = vrot.lane.b32.xlu0 %v9647, 3
        %v10075 = vpop.permute.xlu0 %10074
        %10076 = vrot.lane.b32.xlu0 %v9648, 3
        %v10077 = vpop.permute.xlu0 %10076
        %10078 = vrot.lane.b32.xlu0 %v9649, 3
        %v10079 = vpop.permute.xlu0 %10078
        %10080 = vrot.lane.b32.xlu0 %v9650, 3
        %v10081 = vpop.permute.xlu0 %10080
        %10082 = vrot.lane.b32.xlu0 %v9651, 3
        %v10083 = vpop.permute.xlu0 %10082
        %10084 = vrot.lane.b32.xlu0 %v9652, 3
        %v10085 = vpop.permute.xlu0 %10084
        %10086 = vrot.lane.b32.xlu0 %v9653, 3
        %v10087 = vpop.permute.xlu0 %10086
        %10088 = vrot.lane.b32.xlu0 %v9654, 3
        %v10089 = vpop.permute.xlu0 %10088
        %10090 = vrot.lane.b32.xlu0 %v9655, 3
        %v10091 = vpop.permute.xlu0 %10090
        %10092 = vrot.lane.b32.xlu0 %v9656, 3
        %v10093 = vpop.permute.xlu0 %10092
        %10094 = vrot.lane.b32.xlu0 %v9657, 3
        %v10095 = vpop.permute.xlu0 %10094
        %10096 = vrot.lane.b32.xlu0 %v9658, 3
        %v10097 = vpop.permute.xlu0 %10096
        %10098 = vrot.lane.b32.xlu0 %v9659, 3
        %v10099 = vpop.permute.xlu0 %10098
        %10100 = vrot.lane.b32.xlu0 %v9660, 3
        %v10101 = vpop.permute.xlu0 %10100
        %10102 = vrot.lane.b32.xlu0 %v9661, 3
        %v10103 = vpop.permute.xlu0 %10102
        %10104 = vrot.lane.b32.xlu0 %v9662, 3
        %v10105 = vpop.permute.xlu0 %10104
        %10106 = vrot.lane.b32.xlu0 %v9663, 3
        %v10107 = vpop.permute.xlu0 %10106
        %10108 = vrot.lane.b32.xlu0 %v9664, 3
        %v10109 = vpop.permute.xlu0 %10108
        %10110 = vrot.lane.b32.xlu0 %v9665, 3
        %v10111 = vpop.permute.xlu0 %10110
        %10112 = vrot.lane.b32.xlu0 %v9666, 3
        %v10113 = vpop.permute.xlu0 %10112
        %10114 = vrot.lane.b32.xlu0 %v9667, 3
        %v10115 = vpop.permute.xlu0 %10114
        %vm10148 = vcmask 23552
        %v10149 = vsel %vm10148, %v9668, %v7524
        %v10150 = vsel %vm10148, %v9669, %v7525
        %v10151 = vsel %vm10148, %v9670, %v7526
        %v10152 = vsel %vm10148, %v9671, %v7527
        %v10153 = vsel %vm10148, %v9672, %v7528
        %v10154 = vsel %vm10148, %v9673, %v7529
        %v10155 = vsel %vm10148, %v9674, %v7530
        %v10156 = vsel %vm10148, %v9675, %v7531
        %v10157 = vsel %vm10148, %v9676, %v7532
        %v10158 = vsel %vm10148, %v9677, %v7533
        %v10159 = vsel %vm10148, %v9678, %v7534
        %v10160 = vsel %vm10148, %v9679, %v7535
        %v10161 = vsel %vm10148, %v9680, %v7536
        %v10162 = vsel %vm10148, %v9681, %v7537
        %v10163 = vsel %vm10148, %v9682, %v7538
        %v10164 = vsel %vm10148, %v9683, %v7539
        %v10165 = vsel %vm10148, %v9684, %v7540
        %v10166 = vsel %vm10148, %v9685, %v7541
        %v10167 = vsel %vm10148, %v9686, %v7542
        %v10168 = vsel %vm10148, %v9687, %v7543
        %v10169 = vsel %vm10148, %v9688, %v7544
        %v10170 = vsel %vm10148, %v9689, %v7545
        %v10171 = vsel %vm10148, %v9690, %v7546
        %v10172 = vsel %vm10148, %v9691, %v7547
        %v10173 = vsel %vm10148, %v9692, %v7548
        %v10174 = vsel %vm10148, %v9693, %v7549
        %v10175 = vsel %vm10148, %v9694, %v7550
        %v10176 = vsel %vm10148, %v9695, %v7551
        %v10177 = vsel %vm10148, %v9696, %v7552
        %v10178 = vsel %vm10148, %v9697, %v7553
        %v10179 = vsel %vm10148, %v9698, %v7554
        %v10180 = vsel %vm10148, %v9699, %v7555
        %v10181 = vsel %vm6691, %v10149, %v9797
        %v10182 = vsel %vm6691, %v10150, %v9799
        %v10183 = vsel %vm6691, %v10151, %v9801
        %v10184 = vsel %vm6691, %v10152, %v9803
        %v10185 = vsel %vm6691, %v10153, %v9805
        %v10186 = vsel %vm6691, %v10154, %v9807
        %v10187 = vsel %vm6691, %v10155, %v9809
        %v10188 = vsel %vm6691, %v10156, %v9811
        %v10189 = vsel %vm6691, %v10157, %v9813
        %v10190 = vsel %vm6691, %v10158, %v9815
        %v10191 = vsel %vm6691, %v10159, %v9817
        %v10192 = vsel %vm6691, %v10160, %v9819
        %v10193 = vsel %vm6691, %v10161, %v9821
        %v10194 = vsel %vm6691, %v10162, %v9823
        %v10195 = vsel %vm6691, %v10163, %v9825
        %v10196 = vsel %vm6691, %v10164, %v9827
        %v10197 = vsel %vm6691, %v10165, %v9829
        %v10198 = vsel %vm6691, %v10166, %v9831
        %v10199 = vsel %vm6691, %v10167, %v9833
        %v10200 = vsel %vm6691, %v10168, %v9835
        %v10201 = vsel %vm6691, %v10169, %v9837
        %v10202 = vsel %vm6691, %v10170, %v9839
        %v10203 = vsel %vm6691, %v10171, %v9841
        %v10204 = vsel %vm6691, %v10172, %v9843
        %v10205 = vsel %vm6691, %v10173, %v9845
        %v10206 = vsel %vm6691, %v10174, %v9847
        %v10207 = vsel %vm6691, %v10175, %v9849
        %v10208 = vsel %vm6691, %v10176, %v9851
        %v10209 = vsel %vm6691, %v10177, %v9853
        %v10210 = vsel %vm6691, %v10178, %v9855
        %v10211 = vsel %vm6691, %v10179, %v9857
        %v10212 = vsel %vm6691, %v10180, %v9859
        %vm10213 = vcmask 39936
        %v10214 = vsel %vm10213, %v10181, %v9925
        %v10215 = vsel %vm10213, %v10182, %v9927
        %v10216 = vsel %vm10213, %v10183, %v9929
        %v10217 = vsel %vm10213, %v10184, %v9931
        %v10218 = vsel %vm10213, %v10185, %v9933
        %v10219 = vsel %vm10213, %v10186, %v9935
        %v10220 = vsel %vm10213, %v10187, %v9937
        %v10221 = vsel %vm10213, %v10188, %v9939
        %v10222 = vsel %vm10213, %v10189, %v9941
        %v10223 = vsel %vm10213, %v10190, %v9943
        %v10224 = vsel %vm10213, %v10191, %v9945
        %v10225 = vsel %vm10213, %v10192, %v9947
        %v10226 = vsel %vm10213, %v10193, %v9949
        %v10227 = vsel %vm10213, %v10194, %v9951
        %v10228 = vsel %vm10213, %v10195, %v9953
        %v10229 = vsel %vm10213, %v10196, %v9955
        %v10230 = vsel %vm10213, %v10197, %v9957
        %v10231 = vsel %vm10213, %v10198, %v9959
        %v10232 = vsel %vm10213, %v10199, %v9961
        %v10233 = vsel %vm10213, %v10200, %v9963
        %v10234 = vsel %vm10213, %v10201, %v9965
        %v10235 = vsel %vm10213, %v10202, %v9967
        %v10236 = vsel %vm10213, %v10203, %v9969
        %v10237 = vsel %vm10213, %v10204, %v9971
        %v10238 = vsel %vm10213, %v10205, %v9973
        %v10239 = vsel %vm10213, %v10206, %v9975
        %v10240 = vsel %vm10213, %v10207, %v9977
        %v10241 = vsel %vm10213, %v10208, %v9979
        %v10242 = vsel %vm10213, %v10209, %v9981
        %v10243 = vsel %vm10213, %v10210, %v9983
        %v10244 = vsel %vm10213, %v10211, %v9985
        %v10245 = vsel %vm10213, %v10212, %v9987
        %vm10246 = vcmask 48128
        %v10247 = vsel %vm10246, %v10214, %v10053
        %v10248 = vsel %vm10246, %v10215, %v10055
        %v10249 = vsel %vm10246, %v10216, %v10057
        %v10250 = vsel %vm10246, %v10217, %v10059
        %v10251 = vsel %vm10246, %v10218, %v10061
        %v10252 = vsel %vm10246, %v10219, %v10063
        %v10253 = vsel %vm10246, %v10220, %v10065
        %v10254 = vsel %vm10246, %v10221, %v10067
        %v10255 = vsel %vm10246, %v10222, %v10069
        %v10256 = vsel %vm10246, %v10223, %v10071
        %v10257 = vsel %vm10246, %v10224, %v10073
        %v10258 = vsel %vm10246, %v10225, %v10075
        %v10259 = vsel %vm10246, %v10226, %v10077
        %v10260 = vsel %vm10246, %v10227, %v10079
        %v10261 = vsel %vm10246, %v10228, %v10081
        %v10262 = vsel %vm10246, %v10229, %v10083
        %v10263 = vsel %vm10246, %v10230, %v10085
        %v10264 = vsel %vm10246, %v10231, %v10087
        %v10265 = vsel %vm10246, %v10232, %v10089
        %v10266 = vsel %vm10246, %v10233, %v10091
        %v10267 = vsel %vm10246, %v10234, %v10093
        %v10268 = vsel %vm10246, %v10235, %v10095
        %v10269 = vsel %vm10246, %v10236, %v10097
        %v10270 = vsel %vm10246, %v10237, %v10099
        %v10271 = vsel %vm10246, %v10238, %v10101
        %v10272 = vsel %vm10246, %v10239, %v10103
        %v10273 = vsel %vm10246, %v10240, %v10105
        %v10274 = vsel %vm10246, %v10241, %v10107
        %v10275 = vsel %vm10246, %v10242, %v10109
        %v10276 = vsel %vm10246, %v10243, %v10111
        %v10277 = vsel %vm10246, %v10244, %v10113
        %v10278 = vsel %vm10246, %v10245, %v10115
        %vm10279 = vcmask 56320
        %v10280 = vsel %vm10279, %v10247, %v9700
        %v10281 = vsel %vm10279, %v10248, %v9701
        %v10282 = vsel %vm10279, %v10249, %v9702
        %v10283 = vsel %vm10279, %v10250, %v9703
        %v10284 = vsel %vm10279, %v10251, %v9704
        %v10285 = vsel %vm10279, %v10252, %v9705
        %v10286 = vsel %vm10279, %v10253, %v9706
        %v10287 = vsel %vm10279, %v10254, %v9707
        %v10288 = vsel %vm10279, %v10255, %v9708
        %v10289 = vsel %vm10279, %v10256, %v9709
        %v10290 = vsel %vm10279, %v10257, %v9710
        %v10291 = vsel %vm10279, %v10258, %v9711
        %v10292 = vsel %vm10279, %v10259, %v9712
        %v10293 = vsel %vm10279, %v10260, %v9713
        %v10294 = vsel %vm10279, %v10261, %v9714
        %v10295 = vsel %vm10279, %v10262, %v9715
        %v10296 = vsel %vm10279, %v10263, %v9716
        %v10297 = vsel %vm10279, %v10264, %v9717
        %v10298 = vsel %vm10279, %v10265, %v9718
        %v10299 = vsel %vm10279, %v10266, %v9719
        %v10300 = vsel %vm10279, %v10267, %v9720
        %v10301 = vsel %vm10279, %v10268, %v9721
        %v10302 = vsel %vm10279, %v10269, %v9722
        %v10303 = vsel %vm10279, %v10270, %v9723
        %v10304 = vsel %vm10279, %v10271, %v9724
        %v10305 = vsel %vm10279, %v10272, %v9725
        %v10306 = vsel %vm10279, %v10273, %v9726
        %v10307 = vsel %vm10279, %v10274, %v9727
        %v10308 = vsel %vm10279, %v10275, %v9728
        %v10309 = vsel %vm10279, %v10276, %v9729
        %v10310 = vsel %vm10279, %v10277, %v9730
        %v10311 = vsel %vm10279, %v10278, %v9731
        %vm10312 = vcmask 80896
        %v10313 = vsel %vm10312, %v10280, %v9732
        %v10314 = vsel %vm10312, %v10281, %v9733
        %v10315 = vsel %vm10312, %v10282, %v9734
        %v10316 = vsel %vm10312, %v10283, %v9735
        %v10317 = vsel %vm10312, %v10284, %v9736
        %v10318 = vsel %vm10312, %v10285, %v9737
        %v10319 = vsel %vm10312, %v10286, %v9738
        %v10320 = vsel %vm10312, %v10287, %v9739
        %v10321 = vsel %vm10312, %v10288, %v9740
        %v10322 = vsel %vm10312, %v10289, %v9741
        %v10323 = vsel %vm10312, %v10290, %v9742
        %v10324 = vsel %vm10312, %v10291, %v9743
        %v10325 = vsel %vm10312, %v10292, %v9744
        %v10326 = vsel %vm10312, %v10293, %v9745
        %v10327 = vsel %vm10312, %v10294, %v9746
        %v10328 = vsel %vm10312, %v10295, %v9747
        %v10329 = vsel %vm10312, %v10296, %v9748
        %v10330 = vsel %vm10312, %v10297, %v9749
        %v10331 = vsel %vm10312, %v10298, %v9750
        %v10332 = vsel %vm10312, %v10299, %v9751
        %v10333 = vsel %vm10312, %v10300, %v9752
        %v10334 = vsel %vm10312, %v10301, %v9753
        %v10335 = vsel %vm10312, %v10302, %v9754
        %v10336 = vsel %vm10312, %v10303, %v9755
        %v10337 = vsel %vm10312, %v10304, %v9756
        %v10338 = vsel %vm10312, %v10305, %v9757
        %v10339 = vsel %vm10312, %v10306, %v9758
        %v10340 = vsel %vm10312, %v10307, %v9759
        %v10341 = vsel %vm10312, %v10308, %v9760
        %v10342 = vsel %vm10312, %v10309, %v9761
        %v10343 = vsel %vm10312, %v10310, %v9762
        %v10344 = vsel %vm10312, %v10311, %v9763
        %vm10345 = vcmask 105472
        %v10346 = vsel %vm10345, %v10313, %v9732
        %v10347 = vsel %vm10345, %v10314, %v9733
        %v10348 = vsel %vm10345, %v10315, %v9734
        %v10349 = vsel %vm10345, %v10316, %v9735
        %v10350 = vsel %vm10345, %v10317, %v9736
        %v10351 = vsel %vm10345, %v10318, %v9737
        %v10352 = vsel %vm10345, %v10319, %v9738
        %v10353 = vsel %vm10345, %v10320, %v9739
        %v10354 = vsel %vm10345, %v10321, %v9740
        %v10355 = vsel %vm10345, %v10322, %v9741
        %v10356 = vsel %vm10345, %v10323, %v9742
        %v10357 = vsel %vm10345, %v10324, %v9743
        %v10358 = vsel %vm10345, %v10325, %v9744
        %v10359 = vsel %vm10345, %v10326, %v9745
        %v10360 = vsel %vm10345, %v10327, %v9746
        %v10361 = vsel %vm10345, %v10328, %v9747
        %v10362 = vsel %vm10345, %v10329, %v9748
        %v10363 = vsel %vm10345, %v10330, %v9749
        %v10364 = vsel %vm10345, %v10331, %v9750
        %v10365 = vsel %vm10345, %v10332, %v9751
        %v10366 = vsel %vm10345, %v10333, %v9752
        %v10367 = vsel %vm10345, %v10334, %v9753
        %v10368 = vsel %vm10345, %v10335, %v9754
        %v10369 = vsel %vm10345, %v10336, %v9755
        %v10370 = vsel %vm10345, %v10337, %v9756
        %v10371 = vsel %vm10345, %v10338, %v9757
        %v10372 = vsel %vm10345, %v10339, %v9758
        %v10373 = vsel %vm10345, %v10340, %v9759
        %v10374 = vsel %vm10345, %v10341, %v9760
        %v10375 = vsel %vm10345, %v10342, %v9761
        %v10376 = vsel %vm10345, %v10343, %v9762
        %v10377 = vsel %vm10345, %v10344, %v9763
        %vm10378 = vcmask 113664
        %v10379 = vsel %vm10378, %v10346, 0.0
        %v10380 = vsel %vm10378, %v10347, 0.0
        %v10381 = vsel %vm10378, %v10348, 0.0
        %v10382 = vsel %vm10378, %v10349, 0.0
        %v10383 = vsel %vm10378, %v10350, 0.0
        %v10384 = vsel %vm10378, %v10351, 0.0
        %v10385 = vsel %vm10378, %v10352, 0.0
        %v10386 = vsel %vm10378, %v10353, 0.0
        %v10387 = vsel %vm10378, %v10354, 0.0
        %v10388 = vsel %vm10378, %v10355, 0.0
        %v10389 = vsel %vm10378, %v10356, 0.0
        %v10390 = vsel %vm10378, %v10357, 0.0
        %v10391 = vsel %vm10378, %v10358, 0.0
        %v10392 = vsel %vm10378, %v10359, 0.0
        %v10393 = vsel %vm10378, %v10360, 0.0
        %v10394 = vsel %vm10378, %v10361, 0.0
        %v10395 = vsel %vm10378, %v10362, 0.0
        %v10396 = vsel %vm10378, %v10363, 0.0
        %v10397 = vsel %vm10378, %v10364, 0.0
        %v10398 = vsel %vm10378, %v10365, 0.0
        %v10399 = vsel %vm10378, %v10366, 0.0
        %v10400 = vsel %vm10378, %v10367, 0.0
        %v10401 = vsel %vm10378, %v10368, 0.0
        %v10402 = vsel %vm10378, %v10369, 0.0
        %v10403 = vsel %vm10378, %v10370, 0.0
        %v10404 = vsel %vm10378, %v10371, 0.0
        %v10405 = vsel %vm10378, %v10372, 0.0
        %v10406 = vsel %vm10378, %v10373, 0.0
        %v10407 = vsel %vm10378, %v10374, 0.0
        %v10408 = vsel %vm10378, %v10375, 0.0
        %v10409 = vsel %vm10378, %v10376, 0.0
        %v10410 = vsel %vm10378, %v10377, 0.0
        %10411 = vst [vmem:[%s451] sm:$0xff] %v10379
        %10412 = vst [vmem:[%s451 + $0x8] sm:$0xff] %v10380
        %10413 = vst [vmem:[%s451 + $0x10] sm:$0xff] %v10381
        %10414 = vst [vmem:[%s451 + $0x18] sm:$0xff] %v10382
        %10415 = vst [vmem:[%s451 + $0x20] sm:$0xff] %v10383
        %10416 = vst [vmem:[%s451 + $0x28] sm:$0xff] %v10384
        %10417 = vst [vmem:[%s451 + $0x30] sm:$0xff] %v10385
        %10418 = vst [vmem:[%s451 + $0x38] sm:$0xff] %v10386
        %10419 = vst [vmem:[%s451 + $0x40] sm:$0xff] %v10387
        %10420 = vst [vmem:[%s451 + $0x48] sm:$0xff] %v10388
        %10421 = vst [vmem:[%s451 + $0x50] sm:$0xff] %v10389
        %10422 = vst [vmem:[%s451 + $0x58] sm:$0xff] %v10390
        %10423 = vst [vmem:[%s451 + $0x60] sm:$0xff] %v10391
        %10424 = vst [vmem:[%s451 + $0x68] sm:$0xff] %v10392
        %10425 = vst [vmem:[%s451 + $0x70] sm:$0xff] %v10393
        %10426 = vst [vmem:[%s451 + $0x78] sm:$0xff] %v10394
        %10427 = vst [vmem:[%s451 + $0x80] sm:$0xff] %v10395
        %10428 = vst [vmem:[%s451 + $0x88] sm:$0xff] %v10396
        %10429 = vst [vmem:[%s451 + $0x90] sm:$0xff] %v10397
        %10430 = vst [vmem:[%s451 + $0x98] sm:$0xff] %v10398
        %10431 = vst [vmem:[%s451 + $0xa0] sm:$0xff] %v10399
        %10432 = vst [vmem:[%s451 + $0xa8] sm:$0xff] %v10400
        %10433 = vst [vmem:[%s451 + $0xb0] sm:$0xff] %v10401
        %10434 = vst [vmem:[%s451 + $0xb8] sm:$0xff] %v10402
        %10435 = vst [vmem:[%s451 + $0xc0] sm:$0xff] %v10403
        %10436 = vst [vmem:[%s451 + $0xc8] sm:$0xff] %v10404
        %10437 = vst [vmem:[%s451 + $0xd0] sm:$0xff] %v10405
        %10438 = vst [vmem:[%s451 + $0xd8] sm:$0xff] %v10406
        %10439 = vst [vmem:[%s451 + $0xe0] sm:$0xff] %v10407
        %10440 = vst [vmem:[%s451 + $0xe8] sm:$0xff] %v10408
        %10441 = vst [vmem:[%s451 + $0xf0] sm:$0xff] %v10409
        %10442 = vst [vmem:[%s451 + $0xf8] sm:$0xff] %v10410
        %s10443 = sand.u32 %s253, 1
        %s10444 = scalar_lea.sflag [#allocation4], %s10443
        %s10445 = sand.u32 %s253, 1
        %s10446 = smul.addr %s10445, 256
        %s10447 = scalar_lea.vmem [#allocation13], %s10446
        // Predicated region
        $region85: #{tpu_custom_call.1} parent=59 // pred_check
          %p10448 = pneg %p263
        $region86: #{tpu_custom_call.1} parent=59 // pred_check_branch
          %10450 = sbr.rel (%p10448) target = $region88
        $region87: #{tpu_custom_call.1} parent=59 // pred_region
          %s10451 = smul.u32 32, %s30
          %s10453 = ssub.s32 4096, 4096
          %10454 = vsyncadd %s10444, %s10453
          %s10455 = smul.addr %s10451, 128
          %s10456 = scalar_lea.hbm %s10, %s10455
          %s10457 = sshll.u32 %s10447, 4
          %s10458 = int_to_ptr.vmem [resolvable:$true] %s10457
          %10463 = dma.vmem_to_hbm [thread:$0]  %s10458, 4096, %s10456, %s10444, 128, 128, 8
        $region88: #{tpu_custom_call.1} parent=59 // pred_fallthru
          _
      $region60: #{tpu_custom_call.1} parent=5 // pred_fallthru
        _
      %p10464 = scmp.le.s32.totalorder 2, %s25
      // Predicated region
      $region89: #{tpu_custom_call.1} parent=5 // pred_check
        %p10465 = pneg %p10464
      $region90: #{tpu_custom_call.1} parent=5 // pred_check_branch
        %10467 = sbr.rel (%p10465) target = $region92
      $region91: #{tpu_custom_call.1} parent=5 // pred_region
        %s10468 = ssub.s32 %s25, 2
        // Predicated region
        $region93: #{tpu_custom_call.1} parent=91 // pred_check
          %p10469 = pneg %p269
        $region94: #{tpu_custom_call.1} parent=91 // pred_check_branch
          %10471 = sbr.rel (%p10469) target = $region96
        $region95: #{tpu_custom_call.1} parent=91 // pred_region
          %s10472 = sand.u32 %s254, 1
          %s10473 = scalar_lea.sflag [#allocation4], %s10472
          %s10474 = sand.u32 %s254, 1
          %s10475 = smul.addr %s10474, 256
          %s10476 = scalar_lea.vmem [#allocation13], %s10475
          %10477 = dma.done %s10473, 4096
        $region96: #{tpu_custom_call.1} parent=91 // pred_fallthru
          _
      $region92: #{tpu_custom_call.1} parent=5 // pred_fallthru
        _
    $region6: #{tpu_custom_call.1} parent=1 // loop_footer
      %s29 = sadd.s32 1, %s25
    $region7: #{tpu_custom_call.1} parent=1 // loop_footer_branch
      %24 = sbr.rel target = $region3
    $region8: #{tpu_custom_call.1} parent=1 // loop_exit
      _
    %10478 = vsyncpa [#allocation3], 1
    %s10479 = scalar_lea.sflag [#allocation3], 1
    %10480 = vsyncpa %s10479, 1
    %10481 = vsyncpa [#allocation6], 1
    %10482 = vsyncpa [#allocation9], 1
    %10483 = vsyncpa [#allocation12], 1
    %10484 = vsyncpa [#allocation4], 1
    %s10485 = scalar_lea.sflag [#allocation4], 1
    %10486 = vsyncpa %s10485, 1

</llo_original>
